<compile_context>
chip_gen: v6e
topology: v6e:2x2x1
jax: 0.10.0
libtpu: 0.0.40
codegen_flags: <defaults>
</compile_context>

<pallas_src>
import functools

import numpy as np
import jax
import jax.numpy as jnp
from jax.experimental import pallas as pl
from jax.experimental.pallas import tpu as pltpu


# ----------------------------------------------------------------------------
# position_encoding (same math as the PyTorch reference, vectorized)
# ----------------------------------------------------------------------------
def position_encoding(sentence_size, embedding_dim):
    i = np.arange(1, embedding_dim + 1, dtype=np.float32)[:, None]   # (E, 1)
    j = np.arange(1, sentence_size + 1, dtype=np.float32)[None, :]   # (1, S)
    encoding = (i - (embedding_dim + 1) / 2.0) * (j - (sentence_size + 1) / 2.0)
    encoding = 1.0 + 4.0 * encoding / embedding_dim / sentence_size  # (E, S)
    return np.transpose(encoding).astype(np.float32)                 # (S, E)


# ----------------------------------------------------------------------------
# Pallas kernel: one block of `n_b` batch rows per grid step
# ----------------------------------------------------------------------------
def memn2n_kernel(idx_ref, emb_ref, enc_ref, a_hat_ref, prob_ref,
                  *, n_b, n_mem, sent, e_dim, n_vocab, max_hops):
    M, S, E = n_mem, sent, e_dim
    H1 = max_hops + 1
    vpad = emb_ref.shape[0]
    rows = n_b * (M + 1) * S            # M story sentences + 1 query per row

    emb_all = emb_ref[...]              # (Vp, H1*E)  bf16, all tables side by side
    enc_all = enc_ref[...]              # (S,  H1*E)  f32, encoding tiled per table

    # ---- one-hot from int32 indices: direct bool -> bf16 cast ---------------
    idx = idx_ref[...]                                          # (rows, 1) int32
    iota = jax.lax.broadcasted_iota(jnp.int32, (rows, vpad), 1)
    oh = (idx == iota).astype(jnp.bfloat16)                     # (rows, Vp)

    # ---- ONE fused gather-as-matmul: story + query rows, all hop tables -----
    emb_rows = jnp.dot(oh, emb_all,
                       preferred_element_type=jnp.float32)      # (rows, H1*E)

    # ---- ONE encoding-weighted sentence sum for every table -----------------
    # NOTE: assumes S % 8 == 0 and E % 128 == 0 (pad in the wrapper otherwise).
    weighted = emb_rows.reshape(n_b * (M + 1), S, H1 * E) * enc_all[None, :, :]
    sent_sum = jnp.sum(weighted, axis=1).reshape(n_b, M + 1, H1 * E)

    mems = sent_sum[:, :M, :]                   # (n_b, M, H1*E)  all hop memories
    u = sent_sum[:, M:M + 1, :E]                # (n_b, 1, E)     u_0 from C_0[query]

    for hop in range(max_hops):
        m_A = mems[:, :, hop * E:(hop + 1) * E]          # (n_b, M, E)
        m_C = mems[:, :, (hop + 1) * E:(hop + 2) * E]    # (n_b, M, E)
        # attention over memories: softmax_m( <m_A, u> )
        scores = jnp.sum(m_A * u, axis=2, keepdims=True)            # (n_b, M, 1)
        scores = scores - jnp.max(scores, axis=1, keepdims=True)
        es = jnp.exp(scores)
        p = es * pl.reciprocal(jnp.sum(es, axis=1, keepdims=True), approx=True)
        # u_{k+1} = u_k + sum_m p_m * m_C   (single keepdims reduction)
        u = u + jnp.sum(m_C * p, axis=1, keepdims=True)

    u2 = u[:, 0, :]                                                  # (n_b, E)

    # a_hat = u @ C_H.T : bf16 MXU matmul, f32 accumulation
    w_last = emb_all[:, max_hops * E:(max_hops + 1) * E]             # (Vp, E) bf16
    a_hat = jax.lax.dot_general(u2.astype(jnp.bfloat16), w_last,
                                (((1,), (1,)), ((), ())),
                                preferred_element_type=jnp.float32)  # (n_b, Vp)
    a_hat_ref[...] = a_hat

    # masked softmax over real vocab columns (pad columns -> prob 0);
    # exact divide for the externally returned probabilities.
    col = jax.lax.broadcasted_iota(jnp.int32, (n_b, vpad), 1)
    masked = jnp.where(col < n_vocab, a_hat, -1e30)
    mx = jnp.max(masked, axis=1, keepdims=True)
    ex = jnp.exp(masked - mx)
    prob_ref[...] = ex / jnp.sum(ex, axis=1, keepdims=True)


# ----------------------------------------------------------------------------
# Wrapper: pick block size per TPU generation, pad, pack tables, launch
# ----------------------------------------------------------------------------
def _pick_block_b(batch):
    kind = ""
    try:
        kind = jax.devices()[0].device_kind.lower()
    except Exception:
        pass
    # v7x: 2 TensorCores/chip -> keep >= 2 grid steps so both cores get work.
    # v5e/v6e: 1 TC -> grid=1 removes per-step pipeline overhead and enlarges
    # the one-hot matmul M dimension.
    two_tc = ("v7" in kind) or ("7x" in kind)
    b8 = max(8, ((batch + 7) // 8) * 8)
    if two_tc and b8 >= 16:
        return ((b8 // 2 + 7) // 8) * 8
    return b8


def _const_spec(shape):
    # Grid-invariant input: single-buffer it (index_map is constant (0, 0)).
    try:
        return pl.BlockSpec(shape, lambda b: (0, 0), pipeline_mode=pl.Buffered(1))
    except TypeError:           # older jax without pipeline_mode kwarg
        return pl.BlockSpec(shape, lambda b: (0, 0))


def memn2n_forward(story, query, emb, encoding, max_hops, block_b=None):
    B, M, S = story.shape
    H1, V, E = emb.shape
    assert H1 == max_hops + 1

    if block_b is None:
        block_b = _pick_block_b(B)
    assert block_b % 8 == 0

    Vp = max(128, ((V + 127) // 128) * 128)          # lane-dense outputs
    Bp = ((B + block_b - 1) // block_b) * block_b
    n_blocks = Bp // block_b
    rows_per_b = (M + 1) * S                         # story sentences + query

    # Pack story and query word indices into ONE int32 column per batch block:
    # per batch row -> [M*S story ids, S query ids]. Padding rows use word 0.
    story_p = jnp.pad(story.astype(jnp.int32), ((0, Bp - B), (0, 0), (0, 0)))
    query_p = jnp.pad(query.astype(jnp.int32), ((0, Bp - B), (0, 0)))
    idx = jnp.concatenate([story_p.reshape(Bp, M * S), query_p], axis=1)
    idx_col = idx.reshape(Bp * rows_per_b, 1)

    # All (H+1) embedding tables side by side on the lane axis, bf16, vocab
    # padded with zero rows.
    emb_pad = jnp.pad(emb.astype(jnp.bfloat16), ((0, 0), (0, Vp - V), (0, 0)))
    emb_all = jnp.transpose(emb_pad, (1, 0, 2)).reshape(Vp, H1 * E)

    # Position encoding tiled once per table so the weighted sum is fused.
    enc_tiled = jnp.tile(encoding.astype(jnp.float32), (1, H1))      # (S, H1*E)

    kernel = functools.partial(memn2n_kernel, n_b=block_b, n_mem=M, sent=S,
                               e_dim=E, n_vocab=V, max_hops=max_hops)

    grid_spec = pltpu.PrefetchScalarGridSpec(
        num_scalar_prefetch=0,
        grid=(n_blocks,),
        in_specs=[
            pl.BlockSpec((block_b * rows_per_b, 1), lambda b: (b, 0)),  # indices
            _const_spec((Vp, H1 * E)),                                  # emb tables
            _const_spec((S, H1 * E)),                                   # encoding
        ],
        out_specs=(
            pl.BlockSpec((block_b, Vp), lambda b: (b, 0)),
            pl.BlockSpec((block_b, Vp), lambda b: (b, 0)),
        ),
    )

    flops = 2 * Bp * rows_per_b * Vp * (H1 * E) + 2 * Bp * E * Vp
    bytes_accessed = (idx_col.size * 4 + emb_all.size * 2
                      + enc_tiled.size * 4 + 2 * Bp * Vp * 4)
    cost = pl.CostEstimate(flops=int(flops),
                           transcendentals=int(Bp * (max_hops * M + Vp)),
                           bytes_accessed=int(bytes_accessed))

    a_hat_p, prob_p = pl.pallas_call(
        kernel,
        out_shape=(jax.ShapeDtypeStruct((Bp, Vp), jnp.float32),
                   jax.ShapeDtypeStruct((Bp, Vp), jnp.float32)),
        grid_spec=grid_spec,
        compiler_params=pltpu.CompilerParams(
            dimension_semantics=("parallel",)),
        cost_estimate=cost,
    )(idx_col, emb_all, enc_tiled)

    return a_hat_p[:B, :V], prob_p[:B, :V]


# ----------------------------------------------------------------------------
# Pure-JAX reference (mirrors the PyTorch forward exactly, f32 weights)
# ----------------------------------------------------------------------------
def ref_forward(story, query, emb, encoding, max_hops):
    B, M, S = story.shape
    q_emb = emb[0][query]                                                # (B, S, E)
    u = jnp.sum(q_emb * encoding[None], axis=1)                          # (B, E)
    story_flat = story.reshape(B, -1)
    for hop in range(max_hops):
        a = emb[hop][story_flat].reshape(B, M, S, -1)
        m_A = jnp.sum(a * encoding[None, None], axis=2)                  # (B, M, E)
        p = jax.nn.softmax(jnp.sum(m_A * u[:, None, :], axis=2), axis=1)  # (B, M)
        c = emb[hop + 1][story_flat].reshape(B, M, S, -1)
        m_C = jnp.sum(c * encoding[None, None], axis=2)                  # (B, M, E)
        o = jnp.sum(m_C * p[:, :, None], axis=1)                         # (B, E)
        u = u + o
    a_hat = u @ emb[max_hops].T
    return a_hat, jax.nn.softmax(a_hat, axis=1)


if __name__ == "__main__":
    # Small, TPU-friendly synthetic config (S multiple of 8, E multiple of 128)
    B, M, S = 16, 8, 8           # batch, memories, sentence size
    V, E = 32, 128               # num_vocab, embedding_dim
    MAX_HOPS = 3

    key = jax.random.PRNGKey(0)
    k_emb, k_story, k_query = jax.random.split(key, 3)

    # C_hop.weight.data.normal_(0, 0.1) for hop in 0..max_hops
    # (padding_idx only affects gradients; forward uses the normal-filled rows)
    emb = 0.1 * jax.random.normal(k_emb, (MAX_HOPS + 1, V, E), dtype=jnp.float32)

    story = jax.random.randint(k_story, (B, M, S), 0, V, dtype=jnp.int32)
    query = jax.random.randint(k_query, (B, S), 0, V, dtype=jnp.int32)
    encoding = jnp.asarray(position_encoding(S, E))                      # (S, E)

    a_hat, prob = memn2n_forward(story, query, emb, encoding, MAX_HOPS)
    jax.block_until_ready((a_hat, prob))

    # Kernel uses bf16 embedding tables / bf16 final projection on the MXU
    # (f32 accumulation), so compare against the f32 reference with a
    # tolerance that covers the bf16 rounding (~0.5% relative).
    a_ref, p_ref = ref_forward(story, query, emb, encoding, MAX_HOPS)
    np.testing.assert_allclose(np.asarray(a_hat), np.asarray(a_ref),
                               rtol=2e-2, atol=2e-2)
    np.testing.assert_allclose(np.asarray(prob), np.asarray(p_ref),
                               rtol=2e-2, atol=2e-2)

    print("KERNEL_OK")
</pallas_src>

<mosaic_0001>
module attributes {stable_mosaic.version = 11 : i64} {
  func.func @memn2n_kernel(%arg0: i32, %arg1: memref<1152x1xi32, #tpu.memory_space<vmem>>, %arg2: memref<128x512xbf16, #tpu.memory_space<vmem>>, %arg3: memref<8x512xf32, #tpu.memory_space<vmem>>, %arg4: memref<16x128xf32, #tpu.memory_space<vmem>>, %arg5: memref<16x128xf32, #tpu.memory_space<vmem>>) attributes {dimension_semantics = [#tpu.dimension_semantics<parallel>], iteration_bounds = array<i64: 1>, scalar_prefetch = 0 : i64, scratch_operands = 0 : i64, tpu.core_type = #tpu.core_type<tc>, window_params = [{transform_indices = @transform_0, window_bounds = array<i64: 1152, 1>}, {pipeline_mode = #tpu.pipeline_mode<synchronous>, transform_indices = @transform_1, window_bounds = array<i64: 128, 512>}, {pipeline_mode = #tpu.pipeline_mode<synchronous>, transform_indices = @transform_2, window_bounds = array<i64: 8, 512>}, {transform_indices = @transform_3, window_bounds = array<i64: 16, 128>}, {transform_indices = @transform_4, window_bounds = array<i64: 16, 128>}]} {
    %c0 = arith.constant 0 : index
    %c0_0 = arith.constant 0 : index
    %0 = vector.load %arg2[%c0, %c0_0] : memref<128x512xbf16, #tpu.memory_space<vmem>>, vector<128x512xbf16>
    %c0_1 = arith.constant 0 : index
    %c0_2 = arith.constant 0 : index
    %1 = vector.load %arg3[%c0_1, %c0_2] : memref<8x512xf32, #tpu.memory_space<vmem>>, vector<8x512xf32>
    %c0_3 = arith.constant 0 : index
    %c0_4 = arith.constant 0 : index
    %2 = vector.load %arg1[%c0_3, %c0_4] : memref<1152x1xi32, #tpu.memory_space<vmem>>, vector<1152x1xi32>
    %3 = tpu.iota {dimensions = array<i32: 1>} : vector<1152x128xi32>
    %4 = vector.broadcast %2 : vector<1152x1xi32> to vector<1152x128xi32>
    %5 = arith.cmpi eq, %4, %3 : vector<1152x128xi32>
    %6 = arith.extui %5 : vector<1152x128xi1> to vector<1152x128xi32>
    %7 = arith.sitofp %6 : vector<1152x128xi32> to vector<1152x128xf32>
    %8 = arith.truncf %7 : vector<1152x128xf32> to vector<1152x128xbf16>
    %cst = arith.constant dense<0.000000e+00> : vector<1152x512xf32>
    %9 = tpu.matmul %8, %0, %cst {dimension_numbers = #tpu.dot_dimension_numbers<[1], [0], [0], [1], [0, 0, 1, 1], [], []>} : vector<1152x128xbf16>, vector<128x512xbf16>, vector<1152x512xf32> -> vector<1152x512xf32>
    %10 = vector.shape_cast %9 : vector<1152x512xf32> to vector<144x8x512xf32>
    %11 = vector.shape_cast %1 : vector<8x512xf32> to vector<1x8x512xf32>
    %12 = vector.broadcast %11 : vector<1x8x512xf32> to vector<144x8x512xf32>
    %13 = arith.mulf %10, %12 : vector<144x8x512xf32>
    %cst_5 = arith.constant dense<0.000000e+00> : vector<144x512xf32>
    %14 = vector.multi_reduction <add>, %13, %cst_5 [1] : vector<144x8x512xf32> to vector<144x512xf32>
    %15 = vector.shape_cast %14 : vector<144x512xf32> to vector<16x9x512xf32>
    %16 = vector.extract_strided_slice %15 {offsets = [0, 0, 0], sizes = [16, 8, 512], strides = [1, 1, 1]} : vector<16x9x512xf32> to vector<16x8x512xf32>
    %17 = vector.extract_strided_slice %15 {offsets = [0, 8, 0], sizes = [16, 1, 128], strides = [1, 1, 1]} : vector<16x9x512xf32> to vector<16x1x128xf32>
    %18 = vector.extract_strided_slice %16 {offsets = [0, 0, 0], sizes = [16, 8, 128], strides = [1, 1, 1]} : vector<16x8x512xf32> to vector<16x8x128xf32>
    %19 = vector.extract_strided_slice %16 {offsets = [0, 0, 128], sizes = [16, 8, 128], strides = [1, 1, 1]} : vector<16x8x512xf32> to vector<16x8x128xf32>
    %20 = vector.broadcast %17 : vector<16x1x128xf32> to vector<16x8x128xf32>
    %21 = arith.mulf %18, %20 : vector<16x8x128xf32>
    %cst_6 = arith.constant dense<0.000000e+00> : vector<16x8xf32>
    %22 = vector.multi_reduction <add>, %21, %cst_6 [2] : vector<16x8x128xf32> to vector<16x8xf32>
    %23 = vector.shape_cast %22 : vector<16x8xf32> to vector<16x8x1xf32>
    %cst_7 = arith.constant dense<0xFF800000> : vector<16x1xf32>
    %24 = vector.multi_reduction <maximumf>, %23, %cst_7 [1] : vector<16x8x1xf32> to vector<16x1xf32>
    %25 = vector.shape_cast %24 : vector<16x1xf32> to vector<16x1x1xf32>
    %26 = vector.broadcast %25 : vector<16x1x1xf32> to vector<16x8x1xf32>
    %27 = arith.subf %23, %26 : vector<16x8x1xf32>
    %28 = math.exp %27 : vector<16x8x1xf32>
    %cst_8 = arith.constant dense<0.000000e+00> : vector<16x1xf32>
    %29 = vector.multi_reduction <add>, %28, %cst_8 [1] : vector<16x8x1xf32> to vector<16x1xf32>
    %30 = vector.shape_cast %29 : vector<16x1xf32> to vector<16x1x1xf32>
    %31 = tpu.reciprocal %30 {approx = true} : vector<16x1x1xf32> -> vector<16x1x1xf32>
    %32 = vector.broadcast %31 : vector<16x1x1xf32> to vector<16x8x1xf32>
    %33 = arith.mulf %28, %32 : vector<16x8x1xf32>
    %34 = vector.broadcast %33 : vector<16x8x1xf32> to vector<16x8x128xf32>
    %35 = arith.mulf %19, %34 : vector<16x8x128xf32>
    %cst_9 = arith.constant dense<0.000000e+00> : vector<16x128xf32>
    %36 = vector.multi_reduction <add>, %35, %cst_9 [1] : vector<16x8x128xf32> to vector<16x128xf32>
    %37 = vector.shape_cast %36 : vector<16x128xf32> to vector<16x1x128xf32>
    %38 = arith.addf %17, %37 : vector<16x1x128xf32>
    %39 = vector.extract_strided_slice %16 {offsets = [0, 0, 128], sizes = [16, 8, 128], strides = [1, 1, 1]} : vector<16x8x512xf32> to vector<16x8x128xf32>
    %40 = vector.extract_strided_slice %16 {offsets = [0, 0, 256], sizes = [16, 8, 128], strides = [1, 1, 1]} : vector<16x8x512xf32> to vector<16x8x128xf32>
    %41 = vector.broadcast %38 : vector<16x1x128xf32> to vector<16x8x128xf32>
    %42 = arith.mulf %39, %41 : vector<16x8x128xf32>
    %cst_10 = arith.constant dense<0.000000e+00> : vector<16x8xf32>
    %43 = vector.multi_reduction <add>, %42, %cst_10 [2] : vector<16x8x128xf32> to vector<16x8xf32>
    %44 = vector.shape_cast %43 : vector<16x8xf32> to vector<16x8x1xf32>
    %cst_11 = arith.constant dense<0xFF800000> : vector<16x1xf32>
    %45 = vector.multi_reduction <maximumf>, %44, %cst_11 [1] : vector<16x8x1xf32> to vector<16x1xf32>
    %46 = vector.shape_cast %45 : vector<16x1xf32> to vector<16x1x1xf32>
    %47 = vector.broadcast %46 : vector<16x1x1xf32> to vector<16x8x1xf32>
    %48 = arith.subf %44, %47 : vector<16x8x1xf32>
    %49 = math.exp %48 : vector<16x8x1xf32>
    %cst_12 = arith.constant dense<0.000000e+00> : vector<16x1xf32>
    %50 = vector.multi_reduction <add>, %49, %cst_12 [1] : vector<16x8x1xf32> to vector<16x1xf32>
    %51 = vector.shape_cast %50 : vector<16x1xf32> to vector<16x1x1xf32>
    %52 = tpu.reciprocal %51 {approx = true} : vector<16x1x1xf32> -> vector<16x1x1xf32>
    %53 = vector.broadcast %52 : vector<16x1x1xf32> to vector<16x8x1xf32>
    %54 = arith.mulf %49, %53 : vector<16x8x1xf32>
    %55 = vector.broadcast %54 : vector<16x8x1xf32> to vector<16x8x128xf32>
    %56 = arith.mulf %40, %55 : vector<16x8x128xf32>
    %cst_13 = arith.constant dense<0.000000e+00> : vector<16x128xf32>
    %57 = vector.multi_reduction <add>, %56, %cst_13 [1] : vector<16x8x128xf32> to vector<16x128xf32>
    %58 = vector.shape_cast %57 : vector<16x128xf32> to vector<16x1x128xf32>
    %59 = arith.addf %38, %58 : vector<16x1x128xf32>
    %60 = vector.extract_strided_slice %16 {offsets = [0, 0, 256], sizes = [16, 8, 128], strides = [1, 1, 1]} : vector<16x8x512xf32> to vector<16x8x128xf32>
    %61 = vector.extract_strided_slice %16 {offsets = [0, 0, 384], sizes = [16, 8, 128], strides = [1, 1, 1]} : vector<16x8x512xf32> to vector<16x8x128xf32>
    %62 = vector.broadcast %59 : vector<16x1x128xf32> to vector<16x8x128xf32>
    %63 = arith.mulf %60, %62 : vector<16x8x128xf32>
    %cst_14 = arith.constant dense<0.000000e+00> : vector<16x8xf32>
    %64 = vector.multi_reduction <add>, %63, %cst_14 [2] : vector<16x8x128xf32> to vector<16x8xf32>
    %65 = vector.shape_cast %64 : vector<16x8xf32> to vector<16x8x1xf32>
    %cst_15 = arith.constant dense<0xFF800000> : vector<16x1xf32>
    %66 = vector.multi_reduction <maximumf>, %65, %cst_15 [1] : vector<16x8x1xf32> to vector<16x1xf32>
    %67 = vector.shape_cast %66 : vector<16x1xf32> to vector<16x1x1xf32>
    %68 = vector.broadcast %67 : vector<16x1x1xf32> to vector<16x8x1xf32>
    %69 = arith.subf %65, %68 : vector<16x8x1xf32>
    %70 = math.exp %69 : vector<16x8x1xf32>
    %cst_16 = arith.constant dense<0.000000e+00> : vector<16x1xf32>
    %71 = vector.multi_reduction <add>, %70, %cst_16 [1] : vector<16x8x1xf32> to vector<16x1xf32>
    %72 = vector.shape_cast %71 : vector<16x1xf32> to vector<16x1x1xf32>
    %73 = tpu.reciprocal %72 {approx = true} : vector<16x1x1xf32> -> vector<16x1x1xf32>
    %74 = vector.broadcast %73 : vector<16x1x1xf32> to vector<16x8x1xf32>
    %75 = arith.mulf %70, %74 : vector<16x8x1xf32>
    %76 = vector.broadcast %75 : vector<16x8x1xf32> to vector<16x8x128xf32>
    %77 = arith.mulf %61, %76 : vector<16x8x128xf32>
    %cst_17 = arith.constant dense<0.000000e+00> : vector<16x128xf32>
    %78 = vector.multi_reduction <add>, %77, %cst_17 [1] : vector<16x8x128xf32> to vector<16x128xf32>
    %79 = vector.shape_cast %78 : vector<16x128xf32> to vector<16x1x128xf32>
    %80 = arith.addf %59, %79 : vector<16x1x128xf32>
    %81 = vector.shape_cast %80 : vector<16x1x128xf32> to vector<16x128xf32>
    %82 = vector.extract_strided_slice %0 {offsets = [0, 384], sizes = [128, 128], strides = [1, 1]} : vector<128x512xbf16> to vector<128x128xbf16>
    %83 = arith.truncf %81 : vector<16x128xf32> to vector<16x128xbf16>
    %cst_18 = arith.constant dense<0.000000e+00> : vector<16x128xf32>
    %84 = tpu.matmul %83, %82, %cst_18 {dimension_numbers = #tpu.dot_dimension_numbers<[1], [1], [0], [0], [0, 0, 1, 0], [], []>} : vector<16x128xbf16>, vector<128x128xbf16>, vector<16x128xf32> -> vector<16x128xf32>
    %c0_19 = arith.constant 0 : index
    %c0_20 = arith.constant 0 : index
    %85 = vector.load %arg4[%c0_19, %c0_20] : memref<16x128xf32, #tpu.memory_space<vmem>>, vector<16x128xf32>
    tpu.vector_store %arg4[%c0_19, %c0_20], %84 {strides = array<i32>} : memref<16x128xf32, #tpu.memory_space<vmem>>, vector<16x128xf32>,
    %86 = tpu.iota {dimensions = array<i32: 1>} : vector<16x128xi32>
    %c32_i32 = arith.constant 32 : i32
    %87 = vector.broadcast %c32_i32 : i32 to vector<16x128xi32>
    %88 = arith.cmpi slt, %86, %87 : vector<16x128xi32>
    %cst_21 = arith.constant -1.000000e+30 : f32
    %89 = vector.broadcast %cst_21 : f32 to vector<16x128xf32>
    %90 = arith.select %88, %84, %89 : vector<16x128xi1>, vector<16x128xf32>
    %cst_22 = arith.constant dense<0xFF800000> : vector<16xf32>
    %91 = vector.multi_reduction <maximumf>, %90, %cst_22 [1] : vector<16x128xf32> to vector<16xf32>
    %92 = vector.shape_cast %91 : vector<16xf32> to vector<16x1xf32>
    %93 = vector.broadcast %92 : vector<16x1xf32> to vector<16x128xf32>
    %94 = arith.subf %90, %93 : vector<16x128xf32>
    %95 = math.exp %94 : vector<16x128xf32>
    %cst_23 = arith.constant dense<0.000000e+00> : vector<16xf32>
    %96 = vector.multi_reduction <add>, %95, %cst_23 [1] : vector<16x128xf32> to vector<16xf32>
    %97 = vector.shape_cast %96 : vector<16xf32> to vector<16x1xf32>
    %98 = vector.broadcast %97 : vector<16x1xf32> to vector<16x128xf32>
    %99 = arith.divf %95, %98 : vector<16x128xf32>
    %c0_24 = arith.constant 0 : index
    %c0_25 = arith.constant 0 : index
    %100 = vector.load %arg5[%c0_24, %c0_25] : memref<16x128xf32, #tpu.memory_space<vmem>>, vector<16x128xf32>
    tpu.vector_store %arg5[%c0_24, %c0_25], %99 {strides = array<i32>} : memref<16x128xf32, #tpu.memory_space<vmem>>, vector<16x128xf32>,
    return
  }
  func.func @transform_0(%arg0: i32) -> (i32, i32) {
    %c0_i32 = arith.constant 0 : i32
    %c0_i32_0 = arith.constant 0 : i32
    return %arg0, %c0_i32 : i32, i32
  }
  func.func @transform_1(%arg0: i32) -> (i32, i32) {
    %c0_i32 = arith.constant 0 : i32
    %c0_i32_0 = arith.constant 0 : i32
    %c0_i32_1 = arith.constant 0 : i32
    return %c0_i32, %c0_i32_0 : i32, i32
  }
  func.func @transform_2(%arg0: i32) -> (i32, i32) {
    %c0_i32 = arith.constant 0 : i32
    %c0_i32_0 = arith.constant 0 : i32
    %c0_i32_1 = arith.constant 0 : i32
    return %c0_i32, %c0_i32_0 : i32, i32
  }
  func.func @transform_3(%arg0: i32) -> (i32, i32) {
    %c0_i32 = arith.constant 0 : i32
    %c0_i32_0 = arith.constant 0 : i32
    return %arg0, %c0_i32 : i32, i32
  }
  func.func @transform_4(%arg0: i32) -> (i32, i32) {
    %c0_i32 = arith.constant 0 : i32
    %c0_i32_0 = arith.constant 0 : i32
    return %arg0, %c0_i32 : i32, i32
  }
}

</mosaic_0001>

<llo_original>
// kernel: tpu_custom_call.1
$region0: #{tpu_custom_call.1}
  #allocation0 [shape = 'u32[]', space=smem, size = 0x4, offset = 0x4, fixed_abs, tag = 'smem constant byte address 0x4 - core index']
  #allocation1 [shape = 'u32[144,128]{1,0:T(1,128)}', space=vmem, size = 0x12000, scoped, tag = 'internal scratch']
  %s0 = inlined_call_operand.vmem [shape: s32[1152,1], index: 0, kind: input, shape index: {}]
  %s1 = inlined_call_operand.vmem [shape: bf16[128,512], index: 1, kind: input, shape index: {}]
  %s2 = inlined_call_operand.vmem [shape: f32[8,512], index: 2, kind: input, shape index: {}]
  %s3 = inlined_call_operand.hbm [shape: f32[16,128], index: 3, kind: output, shape index: {0}]
  %s4 = inlined_call_operand.hbm [shape: f32[16,128], index: 4, kind: output, shape index: {1}]
  %5 = xla_tuple %s3, %s4
  %s6 = sld [smem:[#allocation0]]
  $region30: #{tpu_custom_call.1} parent=0
    _
  %s8 = ssub.s32 1, %s6
  %s9 = scalar_select 0, %s8, %s6
  $region1: #{tpu_custom_call.1} parent=0
    #allocation2 [shape = 'u8[8192]{0}', space=vmem, size = 0x2000, scoped, tag = 'output window, operand 0, single buffered']
    #allocation3 [shape = 's32[1]{0}', space=sflag, size = 0x4, scoped, tag = 'scoped memory for tpu_custom_call.1']
    #allocation4 [shape = 'u8[8192]{0}', space=vmem, size = 0x2000, scoped, tag = 'output window, operand 1, single buffered']
    #allocation5 [shape = 's32[1]{0}', space=sflag, size = 0x4, scoped, tag = 'scoped memory for tpu_custom_call.1']
    %10 = vsyncpa [#allocation3], 0
    %11 = vsyncpa [#allocation5], 0
    // Predicated region
    $region2: #{tpu_custom_call.1} parent=1 // pred_check
      _
    $region3: #{tpu_custom_call.1} parent=1 // pred_check_branch
      %13 = sbr.rel (0) target = $region5
    $region4: #{tpu_custom_call.1} parent=1 // pred_region
      _
    $region5: #{tpu_custom_call.1} parent=1 // pred_fallthru
      _
    // Predicated region
    $region6: #{tpu_custom_call.1} parent=1 // pred_check
      _
    $region7: #{tpu_custom_call.1} parent=1 // pred_check_branch
      %15 = sbr.rel (0) target = $region9
    $region8: #{tpu_custom_call.1} parent=1 // pred_region
      _
    $region9: #{tpu_custom_call.1} parent=1 // pred_fallthru
      _
    // Predicated region
    $region10: #{tpu_custom_call.1} parent=1 // pred_check
      _
    $region11: #{tpu_custom_call.1} parent=1 // pred_check_branch
      %17 = sbr.rel (0) target = $region13
    $region12: #{tpu_custom_call.1} parent=1 // pred_region
      _
    $region13: #{tpu_custom_call.1} parent=1 // pred_fallthru
      _
    %v19 = vld [vmem:[%s1] sm:$0xff]
    %v20 = vld [vmem:[%s1 + $0x8] sm:$0xff]
    %v21 = vld [vmem:[%s1 + $0x10] sm:$0xff]
    %v22 = vld [vmem:[%s1 + $0x18] sm:$0xff]
    %v23 = vld [vmem:[%s1 + $0x20] sm:$0xff]
    %v24 = vld [vmem:[%s1 + $0x28] sm:$0xff]
    %v25 = vld [vmem:[%s1 + $0x30] sm:$0xff]
    %v26 = vld [vmem:[%s1 + $0x38] sm:$0xff]
    %v27 = vld [vmem:[%s1 + $0x40] sm:$0xff]
    %v28 = vld [vmem:[%s1 + $0x48] sm:$0xff]
    %v29 = vld [vmem:[%s1 + $0x50] sm:$0xff]
    %v30 = vld [vmem:[%s1 + $0x58] sm:$0xff]
    %v31 = vld [vmem:[%s1 + $0x60] sm:$0xff]
    %v32 = vld [vmem:[%s1 + $0x68] sm:$0xff]
    %v33 = vld [vmem:[%s1 + $0x70] sm:$0xff]
    %v34 = vld [vmem:[%s1 + $0x78] sm:$0xff]
    %v35 = vld [vmem:[%s1 + $0x80] sm:$0xff]
    %v36 = vld [vmem:[%s1 + $0x88] sm:$0xff]
    %v37 = vld [vmem:[%s1 + $0x90] sm:$0xff]
    %v38 = vld [vmem:[%s1 + $0x98] sm:$0xff]
    %v39 = vld [vmem:[%s1 + $0xa0] sm:$0xff]
    %v40 = vld [vmem:[%s1 + $0xa8] sm:$0xff]
    %v41 = vld [vmem:[%s1 + $0xb0] sm:$0xff]
    %v42 = vld [vmem:[%s1 + $0xb8] sm:$0xff]
    %v43 = vld [vmem:[%s1 + $0xc0] sm:$0xff]
    %v44 = vld [vmem:[%s1 + $0xc8] sm:$0xff]
    %v45 = vld [vmem:[%s1 + $0xd0] sm:$0xff]
    %v46 = vld [vmem:[%s1 + $0xd8] sm:$0xff]
    %v47 = vld [vmem:[%s1 + $0xe0] sm:$0xff]
    %v48 = vld [vmem:[%s1 + $0xe8] sm:$0xff]
    %v49 = vld [vmem:[%s1 + $0xf0] sm:$0xff]
    %v50 = vld [vmem:[%s1 + $0xf8] sm:$0xff]
    %v51 = vld [vmem:[%s2] sm:$0xff]
    %v52 = vld [vmem:[%s2 + $0x8] sm:$0xff]
    %v53 = vld [vmem:[%s2 + $0x10] sm:$0xff]
    %v54 = vld [vmem:[%s2 + $0x18] sm:$0xff]
    %v55 = vld [vmem:[%s0] sm:$0xff]
    %v56 = vld [vmem:[%s0 + $0x8] sm:$0xff]
    %v57 = vld [vmem:[%s0 + $0x10] sm:$0xff]
    %v58 = vld [vmem:[%s0 + $0x18] sm:$0xff]
    %v59 = vld [vmem:[%s0 + $0x20] sm:$0xff]
    %v60 = vld [vmem:[%s0 + $0x28] sm:$0xff]
    %v61 = vld [vmem:[%s0 + $0x30] sm:$0xff]
    %v62 = vld [vmem:[%s0 + $0x38] sm:$0xff]
    %v63 = vld [vmem:[%s0 + $0x40] sm:$0xff]
    %v64 = vld [vmem:[%s0 + $0x48] sm:$0xff]
    %v65 = vld [vmem:[%s0 + $0x50] sm:$0xff]
    %v66 = vld [vmem:[%s0 + $0x58] sm:$0xff]
    %v67 = vld [vmem:[%s0 + $0x60] sm:$0xff]
    %v68 = vld [vmem:[%s0 + $0x68] sm:$0xff]
    %v69 = vld [vmem:[%s0 + $0x70] sm:$0xff]
    %v70 = vld [vmem:[%s0 + $0x78] sm:$0xff]
    %v71 = vld [vmem:[%s0 + $0x80] sm:$0xff]
    %v72 = vld [vmem:[%s0 + $0x88] sm:$0xff]
    %v73 = vld [vmem:[%s0 + $0x90] sm:$0xff]
    %v74 = vld [vmem:[%s0 + $0x98] sm:$0xff]
    %v75 = vld [vmem:[%s0 + $0xa0] sm:$0xff]
    %v76 = vld [vmem:[%s0 + $0xa8] sm:$0xff]
    %v77 = vld [vmem:[%s0 + $0xb0] sm:$0xff]
    %v78 = vld [vmem:[%s0 + $0xb8] sm:$0xff]
    %v79 = vld [vmem:[%s0 + $0xc0] sm:$0xff]
    %v80 = vld [vmem:[%s0 + $0xc8] sm:$0xff]
    %v81 = vld [vmem:[%s0 + $0xd0] sm:$0xff]
    %v82 = vld [vmem:[%s0 + $0xd8] sm:$0xff]
    %v83 = vld [vmem:[%s0 + $0xe0] sm:$0xff]
    %v84 = vld [vmem:[%s0 + $0xe8] sm:$0xff]
    %v85 = vld [vmem:[%s0 + $0xf0] sm:$0xff]
    %v86 = vld [vmem:[%s0 + $0xf8] sm:$0xff]
    %v87 = vld [vmem:[%s0 + $0x100] sm:$0xff]
    %v88 = vld [vmem:[%s0 + $0x108] sm:$0xff]
    %v89 = vld [vmem:[%s0 + $0x110] sm:$0xff]
    %v90 = vld [vmem:[%s0 + $0x118] sm:$0xff]
    %v91 = vld [vmem:[%s0 + $0x120] sm:$0xff]
    %v92 = vld [vmem:[%s0 + $0x128] sm:$0xff]
    %v93 = vld [vmem:[%s0 + $0x130] sm:$0xff]
    %v94 = vld [vmem:[%s0 + $0x138] sm:$0xff]
    %v95 = vld [vmem:[%s0 + $0x140] sm:$0xff]
    %v96 = vld [vmem:[%s0 + $0x148] sm:$0xff]
    %v97 = vld [vmem:[%s0 + $0x150] sm:$0xff]
    %v98 = vld [vmem:[%s0 + $0x158] sm:$0xff]
    %v99 = vld [vmem:[%s0 + $0x160] sm:$0xff]
    %v100 = vld [vmem:[%s0 + $0x168] sm:$0xff]
    %v101 = vld [vmem:[%s0 + $0x170] sm:$0xff]
    %v102 = vld [vmem:[%s0 + $0x178] sm:$0xff]
    %v103 = vld [vmem:[%s0 + $0x180] sm:$0xff]
    %v104 = vld [vmem:[%s0 + $0x188] sm:$0xff]
    %v105 = vld [vmem:[%s0 + $0x190] sm:$0xff]
    %v106 = vld [vmem:[%s0 + $0x198] sm:$0xff]
    %v107 = vld [vmem:[%s0 + $0x1a0] sm:$0xff]
    %v108 = vld [vmem:[%s0 + $0x1a8] sm:$0xff]
    %v109 = vld [vmem:[%s0 + $0x1b0] sm:$0xff]
    %v110 = vld [vmem:[%s0 + $0x1b8] sm:$0xff]
    %v111 = vld [vmem:[%s0 + $0x1c0] sm:$0xff]
    %v112 = vld [vmem:[%s0 + $0x1c8] sm:$0xff]
    %v113 = vld [vmem:[%s0 + $0x1d0] sm:$0xff]
    %v114 = vld [vmem:[%s0 + $0x1d8] sm:$0xff]
    %v115 = vld [vmem:[%s0 + $0x1e0] sm:$0xff]
    %v116 = vld [vmem:[%s0 + $0x1e8] sm:$0xff]
    %v117 = vld [vmem:[%s0 + $0x1f0] sm:$0xff]
    %v118 = vld [vmem:[%s0 + $0x1f8] sm:$0xff]
    %v119 = vld [vmem:[%s0 + $0x200] sm:$0xff]
    %v120 = vld [vmem:[%s0 + $0x208] sm:$0xff]
    %v121 = vld [vmem:[%s0 + $0x210] sm:$0xff]
    %v122 = vld [vmem:[%s0 + $0x218] sm:$0xff]
    %v123 = vld [vmem:[%s0 + $0x220] sm:$0xff]
    %v124 = vld [vmem:[%s0 + $0x228] sm:$0xff]
    %v125 = vld [vmem:[%s0 + $0x230] sm:$0xff]
    %v126 = vld [vmem:[%s0 + $0x238] sm:$0xff]
    %v127 = vld [vmem:[%s0 + $0x240] sm:$0xff]
    %v128 = vld [vmem:[%s0 + $0x248] sm:$0xff]
    %v129 = vld [vmem:[%s0 + $0x250] sm:$0xff]
    %v130 = vld [vmem:[%s0 + $0x258] sm:$0xff]
    %v131 = vld [vmem:[%s0 + $0x260] sm:$0xff]
    %v132 = vld [vmem:[%s0 + $0x268] sm:$0xff]
    %v133 = vld [vmem:[%s0 + $0x270] sm:$0xff]
    %v134 = vld [vmem:[%s0 + $0x278] sm:$0xff]
    %v135 = vld [vmem:[%s0 + $0x280] sm:$0xff]
    %v136 = vld [vmem:[%s0 + $0x288] sm:$0xff]
    %v137 = vld [vmem:[%s0 + $0x290] sm:$0xff]
    %v138 = vld [vmem:[%s0 + $0x298] sm:$0xff]
    %v139 = vld [vmem:[%s0 + $0x2a0] sm:$0xff]
    %v140 = vld [vmem:[%s0 + $0x2a8] sm:$0xff]
    %v141 = vld [vmem:[%s0 + $0x2b0] sm:$0xff]
    %v142 = vld [vmem:[%s0 + $0x2b8] sm:$0xff]
    %v143 = vld [vmem:[%s0 + $0x2c0] sm:$0xff]
    %v144 = vld [vmem:[%s0 + $0x2c8] sm:$0xff]
    %v145 = vld [vmem:[%s0 + $0x2d0] sm:$0xff]
    %v146 = vld [vmem:[%s0 + $0x2d8] sm:$0xff]
    %v147 = vld [vmem:[%s0 + $0x2e0] sm:$0xff]
    %v148 = vld [vmem:[%s0 + $0x2e8] sm:$0xff]
    %v149 = vld [vmem:[%s0 + $0x2f0] sm:$0xff]
    %v150 = vld [vmem:[%s0 + $0x2f8] sm:$0xff]
    %v151 = vld [vmem:[%s0 + $0x300] sm:$0xff]
    %v152 = vld [vmem:[%s0 + $0x308] sm:$0xff]
    %v153 = vld [vmem:[%s0 + $0x310] sm:$0xff]
    %v154 = vld [vmem:[%s0 + $0x318] sm:$0xff]
    %v155 = vld [vmem:[%s0 + $0x320] sm:$0xff]
    %v156 = vld [vmem:[%s0 + $0x328] sm:$0xff]
    %v157 = vld [vmem:[%s0 + $0x330] sm:$0xff]
    %v158 = vld [vmem:[%s0 + $0x338] sm:$0xff]
    %v159 = vld [vmem:[%s0 + $0x340] sm:$0xff]
    %v160 = vld [vmem:[%s0 + $0x348] sm:$0xff]
    %v161 = vld [vmem:[%s0 + $0x350] sm:$0xff]
    %v162 = vld [vmem:[%s0 + $0x358] sm:$0xff]
    %v163 = vld [vmem:[%s0 + $0x360] sm:$0xff]
    %v164 = vld [vmem:[%s0 + $0x368] sm:$0xff]
    %v165 = vld [vmem:[%s0 + $0x370] sm:$0xff]
    %v166 = vld [vmem:[%s0 + $0x378] sm:$0xff]
    %v167 = vld [vmem:[%s0 + $0x380] sm:$0xff]
    %v168 = vld [vmem:[%s0 + $0x388] sm:$0xff]
    %v169 = vld [vmem:[%s0 + $0x390] sm:$0xff]
    %v170 = vld [vmem:[%s0 + $0x398] sm:$0xff]
    %v171 = vld [vmem:[%s0 + $0x3a0] sm:$0xff]
    %v172 = vld [vmem:[%s0 + $0x3a8] sm:$0xff]
    %v173 = vld [vmem:[%s0 + $0x3b0] sm:$0xff]
    %v174 = vld [vmem:[%s0 + $0x3b8] sm:$0xff]
    %v175 = vld [vmem:[%s0 + $0x3c0] sm:$0xff]
    %v176 = vld [vmem:[%s0 + $0x3c8] sm:$0xff]
    %v177 = vld [vmem:[%s0 + $0x3d0] sm:$0xff]
    %v178 = vld [vmem:[%s0 + $0x3d8] sm:$0xff]
    %v179 = vld [vmem:[%s0 + $0x3e0] sm:$0xff]
    %v180 = vld [vmem:[%s0 + $0x3e8] sm:$0xff]
    %v181 = vld [vmem:[%s0 + $0x3f0] sm:$0xff]
    %v182 = vld [vmem:[%s0 + $0x3f8] sm:$0xff]
    %v183 = vld [vmem:[%s0 + $0x400] sm:$0xff]
    %v184 = vld [vmem:[%s0 + $0x408] sm:$0xff]
    %v185 = vld [vmem:[%s0 + $0x410] sm:$0xff]
    %v186 = vld [vmem:[%s0 + $0x418] sm:$0xff]
    %v187 = vld [vmem:[%s0 + $0x420] sm:$0xff]
    %v188 = vld [vmem:[%s0 + $0x428] sm:$0xff]
    %v189 = vld [vmem:[%s0 + $0x430] sm:$0xff]
    %v190 = vld [vmem:[%s0 + $0x438] sm:$0xff]
    %v191 = vld [vmem:[%s0 + $0x440] sm:$0xff]
    %v192 = vld [vmem:[%s0 + $0x448] sm:$0xff]
    %v193 = vld [vmem:[%s0 + $0x450] sm:$0xff]
    %v194 = vld [vmem:[%s0 + $0x458] sm:$0xff]
    %v195 = vld [vmem:[%s0 + $0x460] sm:$0xff]
    %v196 = vld [vmem:[%s0 + $0x468] sm:$0xff]
    %v197 = vld [vmem:[%s0 + $0x470] sm:$0xff]
    %v198 = vld [vmem:[%s0 + $0x478] sm:$0xff]
    %v199 = vlaneseq
    %v200 = vand.u32 %v199, 127
    %201 = vset.pattern.permute.xlu0 0
    %202 = vperm.xlu0 %201, %v55
    %v203 = vpop.permute.xlu0 %202
    %204 = vset.pattern.permute.xlu0 0
    %205 = vperm.xlu0 %204, %v56
    %v206 = vpop.permute.xlu0 %205
    %207 = vset.pattern.permute.xlu0 0
    %208 = vperm.xlu0 %207, %v57
    %v209 = vpop.permute.xlu0 %208
    %210 = vset.pattern.permute.xlu0 0
    %211 = vperm.xlu0 %210, %v58
    %v212 = vpop.permute.xlu0 %211
    %213 = vset.pattern.permute.xlu0 0
    %214 = vperm.xlu0 %213, %v59
    %v215 = vpop.permute.xlu0 %214
    %216 = vset.pattern.permute.xlu0 0
    %217 = vperm.xlu0 %216, %v60
    %v218 = vpop.permute.xlu0 %217
    %219 = vset.pattern.permute.xlu0 0
    %220 = vperm.xlu0 %219, %v61
    %v221 = vpop.permute.xlu0 %220
    %222 = vset.pattern.permute.xlu0 0
    %223 = vperm.xlu0 %222, %v62
    %v224 = vpop.permute.xlu0 %223
    %225 = vset.pattern.permute.xlu0 0
    %226 = vperm.xlu0 %225, %v63
    %v227 = vpop.permute.xlu0 %226
    %228 = vset.pattern.permute.xlu0 0
    %229 = vperm.xlu0 %228, %v64
    %v230 = vpop.permute.xlu0 %229
    %231 = vset.pattern.permute.xlu0 0
    %232 = vperm.xlu0 %231, %v65
    %v233 = vpop.permute.xlu0 %232
    %234 = vset.pattern.permute.xlu0 0
    %235 = vperm.xlu0 %234, %v66
    %v236 = vpop.permute.xlu0 %235
    %237 = vset.pattern.permute.xlu0 0
    %238 = vperm.xlu0 %237, %v67
    %v239 = vpop.permute.xlu0 %238
    %240 = vset.pattern.permute.xlu0 0
    %241 = vperm.xlu0 %240, %v68
    %v242 = vpop.permute.xlu0 %241
    %243 = vset.pattern.permute.xlu0 0
    %244 = vperm.xlu0 %243, %v69
    %v245 = vpop.permute.xlu0 %244
    %246 = vset.pattern.permute.xlu0 0
    %247 = vperm.xlu0 %246, %v70
    %v248 = vpop.permute.xlu0 %247
    %249 = vset.pattern.permute.xlu0 0
    %250 = vperm.xlu0 %249, %v71
    %v251 = vpop.permute.xlu0 %250
    %252 = vset.pattern.permute.xlu0 0
    %253 = vperm.xlu0 %252, %v72
    %v254 = vpop.permute.xlu0 %253
    %255 = vset.pattern.permute.xlu0 0
    %256 = vperm.xlu0 %255, %v73
    %v257 = vpop.permute.xlu0 %256
    %258 = vset.pattern.permute.xlu0 0
    %259 = vperm.xlu0 %258, %v74
    %v260 = vpop.permute.xlu0 %259
    %261 = vset.pattern.permute.xlu0 0
    %262 = vperm.xlu0 %261, %v75
    %v263 = vpop.permute.xlu0 %262
    %264 = vset.pattern.permute.xlu0 0
    %265 = vperm.xlu0 %264, %v76
    %v266 = vpop.permute.xlu0 %265
    %267 = vset.pattern.permute.xlu0 0
    %268 = vperm.xlu0 %267, %v77
    %v269 = vpop.permute.xlu0 %268
    %270 = vset.pattern.permute.xlu0 0
    %271 = vperm.xlu0 %270, %v78
    %v272 = vpop.permute.xlu0 %271
    %273 = vset.pattern.permute.xlu0 0
    %274 = vperm.xlu0 %273, %v79
    %v275 = vpop.permute.xlu0 %274
    %276 = vset.pattern.permute.xlu0 0
    %277 = vperm.xlu0 %276, %v80
    %v278 = vpop.permute.xlu0 %277
    %279 = vset.pattern.permute.xlu0 0
    %280 = vperm.xlu0 %279, %v81
    %v281 = vpop.permute.xlu0 %280
    %282 = vset.pattern.permute.xlu0 0
    %283 = vperm.xlu0 %282, %v82
    %v284 = vpop.permute.xlu0 %283
    %285 = vset.pattern.permute.xlu0 0
    %286 = vperm.xlu0 %285, %v83
    %v287 = vpop.permute.xlu0 %286
    %288 = vset.pattern.permute.xlu0 0
    %289 = vperm.xlu0 %288, %v84
    %v290 = vpop.permute.xlu0 %289
    %291 = vset.pattern.permute.xlu0 0
    %292 = vperm.xlu0 %291, %v85
    %v293 = vpop.permute.xlu0 %292
    %294 = vset.pattern.permute.xlu0 0
    %295 = vperm.xlu0 %294, %v86
    %v296 = vpop.permute.xlu0 %295
    %297 = vset.pattern.permute.xlu0 0
    %298 = vperm.xlu0 %297, %v87
    %v299 = vpop.permute.xlu0 %298
    %300 = vset.pattern.permute.xlu0 0
    %301 = vperm.xlu0 %300, %v88
    %v302 = vpop.permute.xlu0 %301
    %303 = vset.pattern.permute.xlu0 0
    %304 = vperm.xlu0 %303, %v89
    %v305 = vpop.permute.xlu0 %304
    %306 = vset.pattern.permute.xlu0 0
    %307 = vperm.xlu0 %306, %v90
    %v308 = vpop.permute.xlu0 %307
    %309 = vset.pattern.permute.xlu0 0
    %310 = vperm.xlu0 %309, %v91
    %v311 = vpop.permute.xlu0 %310
    %312 = vset.pattern.permute.xlu0 0
    %313 = vperm.xlu0 %312, %v92
    %v314 = vpop.permute.xlu0 %313
    %315 = vset.pattern.permute.xlu0 0
    %316 = vperm.xlu0 %315, %v93
    %v317 = vpop.permute.xlu0 %316
    %318 = vset.pattern.permute.xlu0 0
    %319 = vperm.xlu0 %318, %v94
    %v320 = vpop.permute.xlu0 %319
    %321 = vset.pattern.permute.xlu0 0
    %322 = vperm.xlu0 %321, %v95
    %v323 = vpop.permute.xlu0 %322
    %324 = vset.pattern.permute.xlu0 0
    %325 = vperm.xlu0 %324, %v96
    %v326 = vpop.permute.xlu0 %325
    %327 = vset.pattern.permute.xlu0 0
    %328 = vperm.xlu0 %327, %v97
    %v329 = vpop.permute.xlu0 %328
    %330 = vset.pattern.permute.xlu0 0
    %331 = vperm.xlu0 %330, %v98
    %v332 = vpop.permute.xlu0 %331
    %333 = vset.pattern.permute.xlu0 0
    %334 = vperm.xlu0 %333, %v99
    %v335 = vpop.permute.xlu0 %334
    %336 = vset.pattern.permute.xlu0 0
    %337 = vperm.xlu0 %336, %v100
    %v338 = vpop.permute.xlu0 %337
    %339 = vset.pattern.permute.xlu0 0
    %340 = vperm.xlu0 %339, %v101
    %v341 = vpop.permute.xlu0 %340
    %342 = vset.pattern.permute.xlu0 0
    %343 = vperm.xlu0 %342, %v102
    %v344 = vpop.permute.xlu0 %343
    %345 = vset.pattern.permute.xlu0 0
    %346 = vperm.xlu0 %345, %v103
    %v347 = vpop.permute.xlu0 %346
    %348 = vset.pattern.permute.xlu0 0
    %349 = vperm.xlu0 %348, %v104
    %v350 = vpop.permute.xlu0 %349
    %351 = vset.pattern.permute.xlu0 0
    %352 = vperm.xlu0 %351, %v105
    %v353 = vpop.permute.xlu0 %352
    %354 = vset.pattern.permute.xlu0 0
    %355 = vperm.xlu0 %354, %v106
    %v356 = vpop.permute.xlu0 %355
    %357 = vset.pattern.permute.xlu0 0
    %358 = vperm.xlu0 %357, %v107
    %v359 = vpop.permute.xlu0 %358
    %360 = vset.pattern.permute.xlu0 0
    %361 = vperm.xlu0 %360, %v108
    %v362 = vpop.permute.xlu0 %361
    %363 = vset.pattern.permute.xlu0 0
    %364 = vperm.xlu0 %363, %v109
    %v365 = vpop.permute.xlu0 %364
    %366 = vset.pattern.permute.xlu0 0
    %367 = vperm.xlu0 %366, %v110
    %v368 = vpop.permute.xlu0 %367
    %369 = vset.pattern.permute.xlu0 0
    %370 = vperm.xlu0 %369, %v111
    %v371 = vpop.permute.xlu0 %370
    %372 = vset.pattern.permute.xlu0 0
    %373 = vperm.xlu0 %372, %v112
    %v374 = vpop.permute.xlu0 %373
    %375 = vset.pattern.permute.xlu0 0
    %376 = vperm.xlu0 %375, %v113
    %v377 = vpop.permute.xlu0 %376
    %378 = vset.pattern.permute.xlu0 0
    %379 = vperm.xlu0 %378, %v114
    %v380 = vpop.permute.xlu0 %379
    %381 = vset.pattern.permute.xlu0 0
    %382 = vperm.xlu0 %381, %v115
    %v383 = vpop.permute.xlu0 %382
    %384 = vset.pattern.permute.xlu0 0
    %385 = vperm.xlu0 %384, %v116
    %v386 = vpop.permute.xlu0 %385
    %387 = vset.pattern.permute.xlu0 0
    %388 = vperm.xlu0 %387, %v117
    %v389 = vpop.permute.xlu0 %388
    %390 = vset.pattern.permute.xlu0 0
    %391 = vperm.xlu0 %390, %v118
    %v392 = vpop.permute.xlu0 %391
    %393 = vset.pattern.permute.xlu0 0
    %394 = vperm.xlu0 %393, %v119
    %v395 = vpop.permute.xlu0 %394
    %396 = vset.pattern.permute.xlu0 0
    %397 = vperm.xlu0 %396, %v120
    %v398 = vpop.permute.xlu0 %397
    %399 = vset.pattern.permute.xlu0 0
    %400 = vperm.xlu0 %399, %v121
    %v401 = vpop.permute.xlu0 %400
    %402 = vset.pattern.permute.xlu0 0
    %403 = vperm.xlu0 %402, %v122
    %v404 = vpop.permute.xlu0 %403
    %405 = vset.pattern.permute.xlu0 0
    %406 = vperm.xlu0 %405, %v123
    %v407 = vpop.permute.xlu0 %406
    %408 = vset.pattern.permute.xlu0 0
    %409 = vperm.xlu0 %408, %v124
    %v410 = vpop.permute.xlu0 %409
    %411 = vset.pattern.permute.xlu0 0
    %412 = vperm.xlu0 %411, %v125
    %v413 = vpop.permute.xlu0 %412
    %414 = vset.pattern.permute.xlu0 0
    %415 = vperm.xlu0 %414, %v126
    %v416 = vpop.permute.xlu0 %415
    %417 = vset.pattern.permute.xlu0 0
    %418 = vperm.xlu0 %417, %v127
    %v419 = vpop.permute.xlu0 %418
    %420 = vset.pattern.permute.xlu0 0
    %421 = vperm.xlu0 %420, %v128
    %v422 = vpop.permute.xlu0 %421
    %423 = vset.pattern.permute.xlu0 0
    %424 = vperm.xlu0 %423, %v129
    %v425 = vpop.permute.xlu0 %424
    %426 = vset.pattern.permute.xlu0 0
    %427 = vperm.xlu0 %426, %v130
    %v428 = vpop.permute.xlu0 %427
    %429 = vset.pattern.permute.xlu0 0
    %430 = vperm.xlu0 %429, %v131
    %v431 = vpop.permute.xlu0 %430
    %432 = vset.pattern.permute.xlu0 0
    %433 = vperm.xlu0 %432, %v132
    %v434 = vpop.permute.xlu0 %433
    %435 = vset.pattern.permute.xlu0 0
    %436 = vperm.xlu0 %435, %v133
    %v437 = vpop.permute.xlu0 %436
    %438 = vset.pattern.permute.xlu0 0
    %439 = vperm.xlu0 %438, %v134
    %v440 = vpop.permute.xlu0 %439
    %441 = vset.pattern.permute.xlu0 0
    %442 = vperm.xlu0 %441, %v135
    %v443 = vpop.permute.xlu0 %442
    %444 = vset.pattern.permute.xlu0 0
    %445 = vperm.xlu0 %444, %v136
    %v446 = vpop.permute.xlu0 %445
    %447 = vset.pattern.permute.xlu0 0
    %448 = vperm.xlu0 %447, %v137
    %v449 = vpop.permute.xlu0 %448
    %450 = vset.pattern.permute.xlu0 0
    %451 = vperm.xlu0 %450, %v138
    %v452 = vpop.permute.xlu0 %451
    %453 = vset.pattern.permute.xlu0 0
    %454 = vperm.xlu0 %453, %v139
    %v455 = vpop.permute.xlu0 %454
    %456 = vset.pattern.permute.xlu0 0
    %457 = vperm.xlu0 %456, %v140
    %v458 = vpop.permute.xlu0 %457
    %459 = vset.pattern.permute.xlu0 0
    %460 = vperm.xlu0 %459, %v141
    %v461 = vpop.permute.xlu0 %460
    %462 = vset.pattern.permute.xlu0 0
    %463 = vperm.xlu0 %462, %v142
    %v464 = vpop.permute.xlu0 %463
    %465 = vset.pattern.permute.xlu0 0
    %466 = vperm.xlu0 %465, %v143
    %v467 = vpop.permute.xlu0 %466
    %468 = vset.pattern.permute.xlu0 0
    %469 = vperm.xlu0 %468, %v144
    %v470 = vpop.permute.xlu0 %469
    %471 = vset.pattern.permute.xlu0 0
    %472 = vperm.xlu0 %471, %v145
    %v473 = vpop.permute.xlu0 %472
    %474 = vset.pattern.permute.xlu0 0
    %475 = vperm.xlu0 %474, %v146
    %v476 = vpop.permute.xlu0 %475
    %477 = vset.pattern.permute.xlu0 0
    %478 = vperm.xlu0 %477, %v147
    %v479 = vpop.permute.xlu0 %478
    %480 = vset.pattern.permute.xlu0 0
    %481 = vperm.xlu0 %480, %v148
    %v482 = vpop.permute.xlu0 %481
    %483 = vset.pattern.permute.xlu0 0
    %484 = vperm.xlu0 %483, %v149
    %v485 = vpop.permute.xlu0 %484
    %486 = vset.pattern.permute.xlu0 0
    %487 = vperm.xlu0 %486, %v150
    %v488 = vpop.permute.xlu0 %487
    %489 = vset.pattern.permute.xlu0 0
    %490 = vperm.xlu0 %489, %v151
    %v491 = vpop.permute.xlu0 %490
    %492 = vset.pattern.permute.xlu0 0
    %493 = vperm.xlu0 %492, %v152
    %v494 = vpop.permute.xlu0 %493
    %495 = vset.pattern.permute.xlu0 0
    %496 = vperm.xlu0 %495, %v153
    %v497 = vpop.permute.xlu0 %496
    %498 = vset.pattern.permute.xlu0 0
    %499 = vperm.xlu0 %498, %v154
    %v500 = vpop.permute.xlu0 %499
    %501 = vset.pattern.permute.xlu0 0
    %502 = vperm.xlu0 %501, %v155
    %v503 = vpop.permute.xlu0 %502
    %504 = vset.pattern.permute.xlu0 0
    %505 = vperm.xlu0 %504, %v156
    %v506 = vpop.permute.xlu0 %505
    %507 = vset.pattern.permute.xlu0 0
    %508 = vperm.xlu0 %507, %v157
    %v509 = vpop.permute.xlu0 %508
    %510 = vset.pattern.permute.xlu0 0
    %511 = vperm.xlu0 %510, %v158
    %v512 = vpop.permute.xlu0 %511
    %513 = vset.pattern.permute.xlu0 0
    %514 = vperm.xlu0 %513, %v159
    %v515 = vpop.permute.xlu0 %514
    %516 = vset.pattern.permute.xlu0 0
    %517 = vperm.xlu0 %516, %v160
    %v518 = vpop.permute.xlu0 %517
    %519 = vset.pattern.permute.xlu0 0
    %520 = vperm.xlu0 %519, %v161
    %v521 = vpop.permute.xlu0 %520
    %522 = vset.pattern.permute.xlu0 0
    %523 = vperm.xlu0 %522, %v162
    %v524 = vpop.permute.xlu0 %523
    %525 = vset.pattern.permute.xlu0 0
    %526 = vperm.xlu0 %525, %v163
    %v527 = vpop.permute.xlu0 %526
    %528 = vset.pattern.permute.xlu0 0
    %529 = vperm.xlu0 %528, %v164
    %v530 = vpop.permute.xlu0 %529
    %531 = vset.pattern.permute.xlu0 0
    %532 = vperm.xlu0 %531, %v165
    %v533 = vpop.permute.xlu0 %532
    %534 = vset.pattern.permute.xlu0 0
    %535 = vperm.xlu0 %534, %v166
    %v536 = vpop.permute.xlu0 %535
    %537 = vset.pattern.permute.xlu0 0
    %538 = vperm.xlu0 %537, %v167
    %v539 = vpop.permute.xlu0 %538
    %540 = vset.pattern.permute.xlu0 0
    %541 = vperm.xlu0 %540, %v168
    %v542 = vpop.permute.xlu0 %541
    %543 = vset.pattern.permute.xlu0 0
    %544 = vperm.xlu0 %543, %v169
    %v545 = vpop.permute.xlu0 %544
    %546 = vset.pattern.permute.xlu0 0
    %547 = vperm.xlu0 %546, %v170
    %v548 = vpop.permute.xlu0 %547
    %549 = vset.pattern.permute.xlu0 0
    %550 = vperm.xlu0 %549, %v171
    %v551 = vpop.permute.xlu0 %550
    %552 = vset.pattern.permute.xlu0 0
    %553 = vperm.xlu0 %552, %v172
    %v554 = vpop.permute.xlu0 %553
    %555 = vset.pattern.permute.xlu0 0
    %556 = vperm.xlu0 %555, %v173
    %v557 = vpop.permute.xlu0 %556
    %558 = vset.pattern.permute.xlu0 0
    %559 = vperm.xlu0 %558, %v174
    %v560 = vpop.permute.xlu0 %559
    %561 = vset.pattern.permute.xlu0 0
    %562 = vperm.xlu0 %561, %v175
    %v563 = vpop.permute.xlu0 %562
    %564 = vset.pattern.permute.xlu0 0
    %565 = vperm.xlu0 %564, %v176
    %v566 = vpop.permute.xlu0 %565
    %567 = vset.pattern.permute.xlu0 0
    %568 = vperm.xlu0 %567, %v177
    %v569 = vpop.permute.xlu0 %568
    %570 = vset.pattern.permute.xlu0 0
    %571 = vperm.xlu0 %570, %v178
    %v572 = vpop.permute.xlu0 %571
    %573 = vset.pattern.permute.xlu0 0
    %574 = vperm.xlu0 %573, %v179
    %v575 = vpop.permute.xlu0 %574
    %576 = vset.pattern.permute.xlu0 0
    %577 = vperm.xlu0 %576, %v180
    %v578 = vpop.permute.xlu0 %577
    %579 = vset.pattern.permute.xlu0 0
    %580 = vperm.xlu0 %579, %v181
    %v581 = vpop.permute.xlu0 %580
    %582 = vset.pattern.permute.xlu0 0
    %583 = vperm.xlu0 %582, %v182
    %v584 = vpop.permute.xlu0 %583
    %585 = vset.pattern.permute.xlu0 0
    %586 = vperm.xlu0 %585, %v183
    %v587 = vpop.permute.xlu0 %586
    %588 = vset.pattern.permute.xlu0 0
    %589 = vperm.xlu0 %588, %v184
    %v590 = vpop.permute.xlu0 %589
    %591 = vset.pattern.permute.xlu0 0
    %592 = vperm.xlu0 %591, %v185
    %v593 = vpop.permute.xlu0 %592
    %594 = vset.pattern.permute.xlu0 0
    %595 = vperm.xlu0 %594, %v186
    %v596 = vpop.permute.xlu0 %595
    %597 = vset.pattern.permute.xlu0 0
    %598 = vperm.xlu0 %597, %v187
    %v599 = vpop.permute.xlu0 %598
    %600 = vset.pattern.permute.xlu0 0
    %601 = vperm.xlu0 %600, %v188
    %v602 = vpop.permute.xlu0 %601
    %603 = vset.pattern.permute.xlu0 0
    %604 = vperm.xlu0 %603, %v189
    %v605 = vpop.permute.xlu0 %604
    %606 = vset.pattern.permute.xlu0 0
    %607 = vperm.xlu0 %606, %v190
    %v608 = vpop.permute.xlu0 %607
    %609 = vset.pattern.permute.xlu0 0
    %610 = vperm.xlu0 %609, %v191
    %v611 = vpop.permute.xlu0 %610
    %612 = vset.pattern.permute.xlu0 0
    %613 = vperm.xlu0 %612, %v192
    %v614 = vpop.permute.xlu0 %613
    %615 = vset.pattern.permute.xlu0 0
    %616 = vperm.xlu0 %615, %v193
    %v617 = vpop.permute.xlu0 %616
    %618 = vset.pattern.permute.xlu0 0
    %619 = vperm.xlu0 %618, %v194
    %v620 = vpop.permute.xlu0 %619
    %621 = vset.pattern.permute.xlu0 0
    %622 = vperm.xlu0 %621, %v195
    %v623 = vpop.permute.xlu0 %622
    %624 = vset.pattern.permute.xlu0 0
    %625 = vperm.xlu0 %624, %v196
    %v626 = vpop.permute.xlu0 %625
    %627 = vset.pattern.permute.xlu0 0
    %628 = vperm.xlu0 %627, %v197
    %v629 = vpop.permute.xlu0 %628
    %630 = vset.pattern.permute.xlu0 0
    %631 = vperm.xlu0 %630, %v198
    %v632 = vpop.permute.xlu0 %631
    %vm633 = vcmp.eq.s32.totalorder %v203, %v200
    %vm634 = vcmp.eq.s32.totalorder %v206, %v200
    %vm635 = vcmp.eq.s32.totalorder %v209, %v200
    %vm636 = vcmp.eq.s32.totalorder %v212, %v200
    %vm637 = vcmp.eq.s32.totalorder %v215, %v200
    %vm638 = vcmp.eq.s32.totalorder %v218, %v200
    %vm639 = vcmp.eq.s32.totalorder %v221, %v200
    %vm640 = vcmp.eq.s32.totalorder %v224, %v200
    %vm641 = vcmp.eq.s32.totalorder %v227, %v200
    %vm642 = vcmp.eq.s32.totalorder %v230, %v200
    %vm643 = vcmp.eq.s32.totalorder %v233, %v200
    %vm644 = vcmp.eq.s32.totalorder %v236, %v200
    %vm645 = vcmp.eq.s32.totalorder %v239, %v200
    %vm646 = vcmp.eq.s32.totalorder %v242, %v200
    %vm647 = vcmp.eq.s32.totalorder %v245, %v200
    %vm648 = vcmp.eq.s32.totalorder %v248, %v200
    %vm649 = vcmp.eq.s32.totalorder %v251, %v200
    %vm650 = vcmp.eq.s32.totalorder %v254, %v200
    %vm651 = vcmp.eq.s32.totalorder %v257, %v200
    %vm652 = vcmp.eq.s32.totalorder %v260, %v200
    %vm653 = vcmp.eq.s32.totalorder %v263, %v200
    %vm654 = vcmp.eq.s32.totalorder %v266, %v200
    %vm655 = vcmp.eq.s32.totalorder %v269, %v200
    %vm656 = vcmp.eq.s32.totalorder %v272, %v200
    %vm657 = vcmp.eq.s32.totalorder %v275, %v200
    %vm658 = vcmp.eq.s32.totalorder %v278, %v200
    %vm659 = vcmp.eq.s32.totalorder %v281, %v200
    %vm660 = vcmp.eq.s32.totalorder %v284, %v200
    %vm661 = vcmp.eq.s32.totalorder %v287, %v200
    %vm662 = vcmp.eq.s32.totalorder %v290, %v200
    %vm663 = vcmp.eq.s32.totalorder %v293, %v200
    %vm664 = vcmp.eq.s32.totalorder %v296, %v200
    %vm665 = vcmp.eq.s32.totalorder %v299, %v200
    %vm666 = vcmp.eq.s32.totalorder %v302, %v200
    %vm667 = vcmp.eq.s32.totalorder %v305, %v200
    %vm668 = vcmp.eq.s32.totalorder %v308, %v200
    %vm669 = vcmp.eq.s32.totalorder %v311, %v200
    %vm670 = vcmp.eq.s32.totalorder %v314, %v200
    %vm671 = vcmp.eq.s32.totalorder %v317, %v200
    %vm672 = vcmp.eq.s32.totalorder %v320, %v200
    %vm673 = vcmp.eq.s32.totalorder %v323, %v200
    %vm674 = vcmp.eq.s32.totalorder %v326, %v200
    %vm675 = vcmp.eq.s32.totalorder %v329, %v200
    %vm676 = vcmp.eq.s32.totalorder %v332, %v200
    %vm677 = vcmp.eq.s32.totalorder %v335, %v200
    %vm678 = vcmp.eq.s32.totalorder %v338, %v200
    %vm679 = vcmp.eq.s32.totalorder %v341, %v200
    %vm680 = vcmp.eq.s32.totalorder %v344, %v200
    %vm681 = vcmp.eq.s32.totalorder %v347, %v200
    %vm682 = vcmp.eq.s32.totalorder %v350, %v200
    %vm683 = vcmp.eq.s32.totalorder %v353, %v200
    %vm684 = vcmp.eq.s32.totalorder %v356, %v200
    %vm685 = vcmp.eq.s32.totalorder %v359, %v200
    %vm686 = vcmp.eq.s32.totalorder %v362, %v200
    %vm687 = vcmp.eq.s32.totalorder %v365, %v200
    %vm688 = vcmp.eq.s32.totalorder %v368, %v200
    %vm689 = vcmp.eq.s32.totalorder %v371, %v200
    %vm690 = vcmp.eq.s32.totalorder %v374, %v200
    %vm691 = vcmp.eq.s32.totalorder %v377, %v200
    %vm692 = vcmp.eq.s32.totalorder %v380, %v200
    %vm693 = vcmp.eq.s32.totalorder %v383, %v200
    %vm694 = vcmp.eq.s32.totalorder %v386, %v200
    %vm695 = vcmp.eq.s32.totalorder %v389, %v200
    %vm696 = vcmp.eq.s32.totalorder %v392, %v200
    %vm697 = vcmp.eq.s32.totalorder %v395, %v200
    %vm698 = vcmp.eq.s32.totalorder %v398, %v200
    %vm699 = vcmp.eq.s32.totalorder %v401, %v200
    %vm700 = vcmp.eq.s32.totalorder %v404, %v200
    %vm701 = vcmp.eq.s32.totalorder %v407, %v200
    %vm702 = vcmp.eq.s32.totalorder %v410, %v200
    %vm703 = vcmp.eq.s32.totalorder %v413, %v200
    %vm704 = vcmp.eq.s32.totalorder %v416, %v200
    %vm705 = vcmp.eq.s32.totalorder %v419, %v200
    %vm706 = vcmp.eq.s32.totalorder %v422, %v200
    %vm707 = vcmp.eq.s32.totalorder %v425, %v200
    %vm708 = vcmp.eq.s32.totalorder %v428, %v200
    %vm709 = vcmp.eq.s32.totalorder %v431, %v200
    %vm710 = vcmp.eq.s32.totalorder %v434, %v200
    %vm711 = vcmp.eq.s32.totalorder %v437, %v200
    %vm712 = vcmp.eq.s32.totalorder %v440, %v200
    %vm713 = vcmp.eq.s32.totalorder %v443, %v200
    %vm714 = vcmp.eq.s32.totalorder %v446, %v200
    %vm715 = vcmp.eq.s32.totalorder %v449, %v200
    %vm716 = vcmp.eq.s32.totalorder %v452, %v200
    %vm717 = vcmp.eq.s32.totalorder %v455, %v200
    %vm718 = vcmp.eq.s32.totalorder %v458, %v200
    %vm719 = vcmp.eq.s32.totalorder %v461, %v200
    %vm720 = vcmp.eq.s32.totalorder %v464, %v200
    %vm721 = vcmp.eq.s32.totalorder %v467, %v200
    %vm722 = vcmp.eq.s32.totalorder %v470, %v200
    %vm723 = vcmp.eq.s32.totalorder %v473, %v200
    %vm724 = vcmp.eq.s32.totalorder %v476, %v200
    %vm725 = vcmp.eq.s32.totalorder %v479, %v200
    %vm726 = vcmp.eq.s32.totalorder %v482, %v200
    %vm727 = vcmp.eq.s32.totalorder %v485, %v200
    %vm728 = vcmp.eq.s32.totalorder %v488, %v200
    %vm729 = vcmp.eq.s32.totalorder %v491, %v200
    %vm730 = vcmp.eq.s32.totalorder %v494, %v200
    %vm731 = vcmp.eq.s32.totalorder %v497, %v200
    %vm732 = vcmp.eq.s32.totalorder %v500, %v200
    %vm733 = vcmp.eq.s32.totalorder %v503, %v200
    %vm734 = vcmp.eq.s32.totalorder %v506, %v200
    %vm735 = vcmp.eq.s32.totalorder %v509, %v200
    %vm736 = vcmp.eq.s32.totalorder %v512, %v200
    %vm737 = vcmp.eq.s32.totalorder %v515, %v200
    %vm738 = vcmp.eq.s32.totalorder %v518, %v200
    %vm739 = vcmp.eq.s32.totalorder %v521, %v200
    %vm740 = vcmp.eq.s32.totalorder %v524, %v200
    %vm741 = vcmp.eq.s32.totalorder %v527, %v200
    %vm742 = vcmp.eq.s32.totalorder %v530, %v200
    %vm743 = vcmp.eq.s32.totalorder %v533, %v200
    %vm744 = vcmp.eq.s32.totalorder %v536, %v200
    %vm745 = vcmp.eq.s32.totalorder %v539, %v200
    %vm746 = vcmp.eq.s32.totalorder %v542, %v200
    %vm747 = vcmp.eq.s32.totalorder %v545, %v200
    %vm748 = vcmp.eq.s32.totalorder %v548, %v200
    %vm749 = vcmp.eq.s32.totalorder %v551, %v200
    %vm750 = vcmp.eq.s32.totalorder %v554, %v200
    %vm751 = vcmp.eq.s32.totalorder %v557, %v200
    %vm752 = vcmp.eq.s32.totalorder %v560, %v200
    %vm753 = vcmp.eq.s32.totalorder %v563, %v200
    %vm754 = vcmp.eq.s32.totalorder %v566, %v200
    %vm755 = vcmp.eq.s32.totalorder %v569, %v200
    %vm756 = vcmp.eq.s32.totalorder %v572, %v200
    %vm757 = vcmp.eq.s32.totalorder %v575, %v200
    %vm758 = vcmp.eq.s32.totalorder %v578, %v200
    %vm759 = vcmp.eq.s32.totalorder %v581, %v200
    %vm760 = vcmp.eq.s32.totalorder %v584, %v200
    %vm761 = vcmp.eq.s32.totalorder %v587, %v200
    %vm762 = vcmp.eq.s32.totalorder %v590, %v200
    %vm763 = vcmp.eq.s32.totalorder %v593, %v200
    %vm764 = vcmp.eq.s32.totalorder %v596, %v200
    %vm765 = vcmp.eq.s32.totalorder %v599, %v200
    %vm766 = vcmp.eq.s32.totalorder %v602, %v200
    %vm767 = vcmp.eq.s32.totalorder %v605, %v200
    %vm768 = vcmp.eq.s32.totalorder %v608, %v200
    %vm769 = vcmp.eq.s32.totalorder %v611, %v200
    %vm770 = vcmp.eq.s32.totalorder %v614, %v200
    %vm771 = vcmp.eq.s32.totalorder %v617, %v200
    %vm772 = vcmp.eq.s32.totalorder %v620, %v200
    %vm773 = vcmp.eq.s32.totalorder %v623, %v200
    %vm774 = vcmp.eq.s32.totalorder %v626, %v200
    %vm775 = vcmp.eq.s32.totalorder %v629, %v200
    %vm776 = vcmp.eq.s32.totalorder %v632, %v200
    %v777 = vsel %vm633, 1, 0
    %v778 = vsel %vm634, 1, 0
    %v779 = vsel %vm635, 1, 0
    %v780 = vsel %vm636, 1, 0
    %v781 = vsel %vm637, 1, 0
    %v782 = vsel %vm638, 1, 0
    %v783 = vsel %vm639, 1, 0
    %v784 = vsel %vm640, 1, 0
    %v785 = vsel %vm641, 1, 0
    %v786 = vsel %vm642, 1, 0
    %v787 = vsel %vm643, 1, 0
    %v788 = vsel %vm644, 1, 0
    %v789 = vsel %vm645, 1, 0
    %v790 = vsel %vm646, 1, 0
    %v791 = vsel %vm647, 1, 0
    %v792 = vsel %vm648, 1, 0
    %v793 = vsel %vm649, 1, 0
    %v794 = vsel %vm650, 1, 0
    %v795 = vsel %vm651, 1, 0
    %v796 = vsel %vm652, 1, 0
    %v797 = vsel %vm653, 1, 0
    %v798 = vsel %vm654, 1, 0
    %v799 = vsel %vm655, 1, 0
    %v800 = vsel %vm656, 1, 0
    %v801 = vsel %vm657, 1, 0
    %v802 = vsel %vm658, 1, 0
    %v803 = vsel %vm659, 1, 0
    %v804 = vsel %vm660, 1, 0
    %v805 = vsel %vm661, 1, 0
    %v806 = vsel %vm662, 1, 0
    %v807 = vsel %vm663, 1, 0
    %v808 = vsel %vm664, 1, 0
    %v809 = vsel %vm665, 1, 0
    %v810 = vsel %vm666, 1, 0
    %v811 = vsel %vm667, 1, 0
    %v812 = vsel %vm668, 1, 0
    %v813 = vsel %vm669, 1, 0
    %v814 = vsel %vm670, 1, 0
    %v815 = vsel %vm671, 1, 0
    %v816 = vsel %vm672, 1, 0
    %v817 = vsel %vm673, 1, 0
    %v818 = vsel %vm674, 1, 0
    %v819 = vsel %vm675, 1, 0
    %v820 = vsel %vm676, 1, 0
    %v821 = vsel %vm677, 1, 0
    %v822 = vsel %vm678, 1, 0
    %v823 = vsel %vm679, 1, 0
    %v824 = vsel %vm680, 1, 0
    %v825 = vsel %vm681, 1, 0
    %v826 = vsel %vm682, 1, 0
    %v827 = vsel %vm683, 1, 0
    %v828 = vsel %vm684, 1, 0
    %v829 = vsel %vm685, 1, 0
    %v830 = vsel %vm686, 1, 0
    %v831 = vsel %vm687, 1, 0
    %v832 = vsel %vm688, 1, 0
    %v833 = vsel %vm689, 1, 0
    %v834 = vsel %vm690, 1, 0
    %v835 = vsel %vm691, 1, 0
    %v836 = vsel %vm692, 1, 0
    %v837 = vsel %vm693, 1, 0
    %v838 = vsel %vm694, 1, 0
    %v839 = vsel %vm695, 1, 0
    %v840 = vsel %vm696, 1, 0
    %v841 = vsel %vm697, 1, 0
    %v842 = vsel %vm698, 1, 0
    %v843 = vsel %vm699, 1, 0
    %v844 = vsel %vm700, 1, 0
    %v845 = vsel %vm701, 1, 0
    %v846 = vsel %vm702, 1, 0
    %v847 = vsel %vm703, 1, 0
    %v848 = vsel %vm704, 1, 0
    %v849 = vsel %vm705, 1, 0
    %v850 = vsel %vm706, 1, 0
    %v851 = vsel %vm707, 1, 0
    %v852 = vsel %vm708, 1, 0
    %v853 = vsel %vm709, 1, 0
    %v854 = vsel %vm710, 1, 0
    %v855 = vsel %vm711, 1, 0
    %v856 = vsel %vm712, 1, 0
    %v857 = vsel %vm713, 1, 0
    %v858 = vsel %vm714, 1, 0
    %v859 = vsel %vm715, 1, 0
    %v860 = vsel %vm716, 1, 0
    %v861 = vsel %vm717, 1, 0
    %v862 = vsel %vm718, 1, 0
    %v863 = vsel %vm719, 1, 0
    %v864 = vsel %vm720, 1, 0
    %v865 = vsel %vm721, 1, 0
    %v866 = vsel %vm722, 1, 0
    %v867 = vsel %vm723, 1, 0
    %v868 = vsel %vm724, 1, 0
    %v869 = vsel %vm725, 1, 0
    %v870 = vsel %vm726, 1, 0
    %v871 = vsel %vm727, 1, 0
    %v872 = vsel %vm728, 1, 0
    %v873 = vsel %vm729, 1, 0
    %v874 = vsel %vm730, 1, 0
    %v875 = vsel %vm731, 1, 0
    %v876 = vsel %vm732, 1, 0
    %v877 = vsel %vm733, 1, 0
    %v878 = vsel %vm734, 1, 0
    %v879 = vsel %vm735, 1, 0
    %v880 = vsel %vm736, 1, 0
    %v881 = vsel %vm737, 1, 0
    %v882 = vsel %vm738, 1, 0
    %v883 = vsel %vm739, 1, 0
    %v884 = vsel %vm740, 1, 0
    %v885 = vsel %vm741, 1, 0
    %v886 = vsel %vm742, 1, 0
    %v887 = vsel %vm743, 1, 0
    %v888 = vsel %vm744, 1, 0
    %v889 = vsel %vm745, 1, 0
    %v890 = vsel %vm746, 1, 0
    %v891 = vsel %vm747, 1, 0
    %v892 = vsel %vm748, 1, 0
    %v893 = vsel %vm749, 1, 0
    %v894 = vsel %vm750, 1, 0
    %v895 = vsel %vm751, 1, 0
    %v896 = vsel %vm752, 1, 0
    %v897 = vsel %vm753, 1, 0
    %v898 = vsel %vm754, 1, 0
    %v899 = vsel %vm755, 1, 0
    %v900 = vsel %vm756, 1, 0
    %v901 = vsel %vm757, 1, 0
    %v902 = vsel %vm758, 1, 0
    %v903 = vsel %vm759, 1, 0
    %v904 = vsel %vm760, 1, 0
    %v905 = vsel %vm761, 1, 0
    %v906 = vsel %vm762, 1, 0
    %v907 = vsel %vm763, 1, 0
    %v908 = vsel %vm764, 1, 0
    %v909 = vsel %vm765, 1, 0
    %v910 = vsel %vm766, 1, 0
    %v911 = vsel %vm767, 1, 0
    %v912 = vsel %vm768, 1, 0
    %v913 = vsel %vm769, 1, 0
    %v914 = vsel %vm770, 1, 0
    %v915 = vsel %vm771, 1, 0
    %v916 = vsel %vm772, 1, 0
    %v917 = vsel %vm773, 1, 0
    %v918 = vsel %vm774, 1, 0
    %v919 = vsel %vm775, 1, 0
    %v920 = vsel %vm776, 1, 0
    %v921 = vcvt.s32.f32 %v777
    %v922 = vcvt.s32.f32 %v778
    %v923 = vcvt.s32.f32 %v779
    %v924 = vcvt.s32.f32 %v780
    %v925 = vcvt.s32.f32 %v781
    %v926 = vcvt.s32.f32 %v782
    %v927 = vcvt.s32.f32 %v783
    %v928 = vcvt.s32.f32 %v784
    %v929 = vcvt.s32.f32 %v785
    %v930 = vcvt.s32.f32 %v786
    %v931 = vcvt.s32.f32 %v787
    %v932 = vcvt.s32.f32 %v788
    %v933 = vcvt.s32.f32 %v789
    %v934 = vcvt.s32.f32 %v790
    %v935 = vcvt.s32.f32 %v791
    %v936 = vcvt.s32.f32 %v792
    %v937 = vcvt.s32.f32 %v793
    %v938 = vcvt.s32.f32 %v794
    %v939 = vcvt.s32.f32 %v795
    %v940 = vcvt.s32.f32 %v796
    %v941 = vcvt.s32.f32 %v797
    %v942 = vcvt.s32.f32 %v798
    %v943 = vcvt.s32.f32 %v799
    %v944 = vcvt.s32.f32 %v800
    %v945 = vcvt.s32.f32 %v801
    %v946 = vcvt.s32.f32 %v802
    %v947 = vcvt.s32.f32 %v803
    %v948 = vcvt.s32.f32 %v804
    %v949 = vcvt.s32.f32 %v805
    %v950 = vcvt.s32.f32 %v806
    %v951 = vcvt.s32.f32 %v807
    %v952 = vcvt.s32.f32 %v808
    %v953 = vcvt.s32.f32 %v809
    %v954 = vcvt.s32.f32 %v810
    %v955 = vcvt.s32.f32 %v811
    %v956 = vcvt.s32.f32 %v812
    %v957 = vcvt.s32.f32 %v813
    %v958 = vcvt.s32.f32 %v814
    %v959 = vcvt.s32.f32 %v815
    %v960 = vcvt.s32.f32 %v816
    %v961 = vcvt.s32.f32 %v817
    %v962 = vcvt.s32.f32 %v818
    %v963 = vcvt.s32.f32 %v819
    %v964 = vcvt.s32.f32 %v820
    %v965 = vcvt.s32.f32 %v821
    %v966 = vcvt.s32.f32 %v822
    %v967 = vcvt.s32.f32 %v823
    %v968 = vcvt.s32.f32 %v824
    %v969 = vcvt.s32.f32 %v825
    %v970 = vcvt.s32.f32 %v826
    %v971 = vcvt.s32.f32 %v827
    %v972 = vcvt.s32.f32 %v828
    %v973 = vcvt.s32.f32 %v829
    %v974 = vcvt.s32.f32 %v830
    %v975 = vcvt.s32.f32 %v831
    %v976 = vcvt.s32.f32 %v832
    %v977 = vcvt.s32.f32 %v833
    %v978 = vcvt.s32.f32 %v834
    %v979 = vcvt.s32.f32 %v835
    %v980 = vcvt.s32.f32 %v836
    %v981 = vcvt.s32.f32 %v837
    %v982 = vcvt.s32.f32 %v838
    %v983 = vcvt.s32.f32 %v839
    %v984 = vcvt.s32.f32 %v840
    %v985 = vcvt.s32.f32 %v841
    %v986 = vcvt.s32.f32 %v842
    %v987 = vcvt.s32.f32 %v843
    %v988 = vcvt.s32.f32 %v844
    %v989 = vcvt.s32.f32 %v845
    %v990 = vcvt.s32.f32 %v846
    %v991 = vcvt.s32.f32 %v847
    %v992 = vcvt.s32.f32 %v848
    %v993 = vcvt.s32.f32 %v849
    %v994 = vcvt.s32.f32 %v850
    %v995 = vcvt.s32.f32 %v851
    %v996 = vcvt.s32.f32 %v852
    %v997 = vcvt.s32.f32 %v853
    %v998 = vcvt.s32.f32 %v854
    %v999 = vcvt.s32.f32 %v855
    %v1000 = vcvt.s32.f32 %v856
    %v1001 = vcvt.s32.f32 %v857
    %v1002 = vcvt.s32.f32 %v858
    %v1003 = vcvt.s32.f32 %v859
    %v1004 = vcvt.s32.f32 %v860
    %v1005 = vcvt.s32.f32 %v861
    %v1006 = vcvt.s32.f32 %v862
    %v1007 = vcvt.s32.f32 %v863
    %v1008 = vcvt.s32.f32 %v864
    %v1009 = vcvt.s32.f32 %v865
    %v1010 = vcvt.s32.f32 %v866
    %v1011 = vcvt.s32.f32 %v867
    %v1012 = vcvt.s32.f32 %v868
    %v1013 = vcvt.s32.f32 %v869
    %v1014 = vcvt.s32.f32 %v870
    %v1015 = vcvt.s32.f32 %v871
    %v1016 = vcvt.s32.f32 %v872
    %v1017 = vcvt.s32.f32 %v873
    %v1018 = vcvt.s32.f32 %v874
    %v1019 = vcvt.s32.f32 %v875
    %v1020 = vcvt.s32.f32 %v876
    %v1021 = vcvt.s32.f32 %v877
    %v1022 = vcvt.s32.f32 %v878
    %v1023 = vcvt.s32.f32 %v879
    %v1024 = vcvt.s32.f32 %v880
    %v1025 = vcvt.s32.f32 %v881
    %v1026 = vcvt.s32.f32 %v882
    %v1027 = vcvt.s32.f32 %v883
    %v1028 = vcvt.s32.f32 %v884
    %v1029 = vcvt.s32.f32 %v885
    %v1030 = vcvt.s32.f32 %v886
    %v1031 = vcvt.s32.f32 %v887
    %v1032 = vcvt.s32.f32 %v888
    %v1033 = vcvt.s32.f32 %v889
    %v1034 = vcvt.s32.f32 %v890
    %v1035 = vcvt.s32.f32 %v891
    %v1036 = vcvt.s32.f32 %v892
    %v1037 = vcvt.s32.f32 %v893
    %v1038 = vcvt.s32.f32 %v894
    %v1039 = vcvt.s32.f32 %v895
    %v1040 = vcvt.s32.f32 %v896
    %v1041 = vcvt.s32.f32 %v897
    %v1042 = vcvt.s32.f32 %v898
    %v1043 = vcvt.s32.f32 %v899
    %v1044 = vcvt.s32.f32 %v900
    %v1045 = vcvt.s32.f32 %v901
    %v1046 = vcvt.s32.f32 %v902
    %v1047 = vcvt.s32.f32 %v903
    %v1048 = vcvt.s32.f32 %v904
    %v1049 = vcvt.s32.f32 %v905
    %v1050 = vcvt.s32.f32 %v906
    %v1051 = vcvt.s32.f32 %v907
    %v1052 = vcvt.s32.f32 %v908
    %v1053 = vcvt.s32.f32 %v909
    %v1054 = vcvt.s32.f32 %v910
    %v1055 = vcvt.s32.f32 %v911
    %v1056 = vcvt.s32.f32 %v912
    %v1057 = vcvt.s32.f32 %v913
    %v1058 = vcvt.s32.f32 %v914
    %v1059 = vcvt.s32.f32 %v915
    %v1060 = vcvt.s32.f32 %v916
    %v1061 = vcvt.s32.f32 %v917
    %v1062 = vcvt.s32.f32 %v918
    %v1063 = vcvt.s32.f32 %v919
    %v1064 = vcvt.s32.f32 %v920
    %v1065 = vpack.c.bf16 %v922, %v921
    %v1066 = vpack.c.bf16 %v924, %v923
    %v1067 = vpack.c.bf16 %v926, %v925
    %v1068 = vpack.c.bf16 %v928, %v927
    %v1069 = vpack.c.bf16 %v930, %v929
    %v1070 = vpack.c.bf16 %v932, %v931
    %v1071 = vpack.c.bf16 %v934, %v933
    %v1072 = vpack.c.bf16 %v936, %v935
    %v1073 = vpack.c.bf16 %v938, %v937
    %v1074 = vpack.c.bf16 %v940, %v939
    %v1075 = vpack.c.bf16 %v942, %v941
    %v1076 = vpack.c.bf16 %v944, %v943
    %v1077 = vpack.c.bf16 %v946, %v945
    %v1078 = vpack.c.bf16 %v948, %v947
    %v1079 = vpack.c.bf16 %v950, %v949
    %v1080 = vpack.c.bf16 %v952, %v951
    %v1081 = vpack.c.bf16 %v954, %v953
    %v1082 = vpack.c.bf16 %v956, %v955
    %v1083 = vpack.c.bf16 %v958, %v957
    %v1084 = vpack.c.bf16 %v960, %v959
    %v1085 = vpack.c.bf16 %v962, %v961
    %v1086 = vpack.c.bf16 %v964, %v963
    %v1087 = vpack.c.bf16 %v966, %v965
    %v1088 = vpack.c.bf16 %v968, %v967
    %v1089 = vpack.c.bf16 %v970, %v969
    %v1090 = vpack.c.bf16 %v972, %v971
    %v1091 = vpack.c.bf16 %v974, %v973
    %v1092 = vpack.c.bf16 %v976, %v975
    %v1093 = vpack.c.bf16 %v978, %v977
    %v1094 = vpack.c.bf16 %v980, %v979
    %v1095 = vpack.c.bf16 %v982, %v981
    %v1096 = vpack.c.bf16 %v984, %v983
    %v1097 = vpack.c.bf16 %v986, %v985
    %v1098 = vpack.c.bf16 %v988, %v987
    %v1099 = vpack.c.bf16 %v990, %v989
    %v1100 = vpack.c.bf16 %v992, %v991
    %v1101 = vpack.c.bf16 %v994, %v993
    %v1102 = vpack.c.bf16 %v996, %v995
    %v1103 = vpack.c.bf16 %v998, %v997
    %v1104 = vpack.c.bf16 %v1000, %v999
    %v1105 = vpack.c.bf16 %v1002, %v1001
    %v1106 = vpack.c.bf16 %v1004, %v1003
    %v1107 = vpack.c.bf16 %v1006, %v1005
    %v1108 = vpack.c.bf16 %v1008, %v1007
    %v1109 = vpack.c.bf16 %v1010, %v1009
    %v1110 = vpack.c.bf16 %v1012, %v1011
    %v1111 = vpack.c.bf16 %v1014, %v1013
    %v1112 = vpack.c.bf16 %v1016, %v1015
    %v1113 = vpack.c.bf16 %v1018, %v1017
    %v1114 = vpack.c.bf16 %v1020, %v1019
    %v1115 = vpack.c.bf16 %v1022, %v1021
    %v1116 = vpack.c.bf16 %v1024, %v1023
    %v1117 = vpack.c.bf16 %v1026, %v1025
    %v1118 = vpack.c.bf16 %v1028, %v1027
    %v1119 = vpack.c.bf16 %v1030, %v1029
    %v1120 = vpack.c.bf16 %v1032, %v1031
    %v1121 = vpack.c.bf16 %v1034, %v1033
    %v1122 = vpack.c.bf16 %v1036, %v1035
    %v1123 = vpack.c.bf16 %v1038, %v1037
    %v1124 = vpack.c.bf16 %v1040, %v1039
    %v1125 = vpack.c.bf16 %v1042, %v1041
    %v1126 = vpack.c.bf16 %v1044, %v1043
    %v1127 = vpack.c.bf16 %v1046, %v1045
    %v1128 = vpack.c.bf16 %v1048, %v1047
    %v1129 = vpack.c.bf16 %v1050, %v1049
    %v1130 = vpack.c.bf16 %v1052, %v1051
    %v1131 = vpack.c.bf16 %v1054, %v1053
    %v1132 = vpack.c.bf16 %v1056, %v1055
    %v1133 = vpack.c.bf16 %v1058, %v1057
    %v1134 = vpack.c.bf16 %v1060, %v1059
    %v1135 = vpack.c.bf16 %v1062, %v1061
    %v1136 = vpack.c.bf16 %v1064, %v1063
    %v1169 = vunpack.c.l.b16 %v19
    %v1170 = vunpack.c.h.b16 %v19
    %v1171 = vunpack.c.l.b16 %v20
    %v1172 = vunpack.c.h.b16 %v20
    %v1173 = vunpack.c.l.b16 %v21
    %v1174 = vunpack.c.h.b16 %v21
    %v1175 = vunpack.c.l.b16 %v22
    %v1176 = vunpack.c.h.b16 %v22
    %v1177 = vunpack.c.l.b16 %v23
    %v1178 = vunpack.c.h.b16 %v23
    %v1179 = vunpack.c.l.b16 %v24
    %v1180 = vunpack.c.h.b16 %v24
    %v1181 = vunpack.c.l.b16 %v25
    %v1182 = vunpack.c.h.b16 %v25
    %v1183 = vunpack.c.l.b16 %v26
    %v1184 = vunpack.c.h.b16 %v26
    %v1185 = vunpack.c.l.b16 %v27
    %v1186 = vunpack.c.h.b16 %v27
    %v1187 = vunpack.c.l.b16 %v28
    %v1188 = vunpack.c.h.b16 %v28
    %v1189 = vunpack.c.l.b16 %v29
    %v1190 = vunpack.c.h.b16 %v29
    %v1191 = vunpack.c.l.b16 %v30
    %v1192 = vunpack.c.h.b16 %v30
    %v1193 = vunpack.c.l.b16 %v31
    %v1194 = vunpack.c.h.b16 %v31
    %v1195 = vunpack.c.l.b16 %v32
    %v1196 = vunpack.c.h.b16 %v32
    %v1197 = vunpack.c.l.b16 %v33
    %v1198 = vunpack.c.h.b16 %v33
    %v1199 = vunpack.c.l.b16 %v34
    %v1200 = vunpack.c.h.b16 %v34
    %v1201 = vunpack.c.l.b16 %v35
    %v1202 = vunpack.c.h.b16 %v35
    %v1203 = vunpack.c.l.b16 %v36
    %v1204 = vunpack.c.h.b16 %v36
    %v1205 = vunpack.c.l.b16 %v37
    %v1206 = vunpack.c.h.b16 %v37
    %v1207 = vunpack.c.l.b16 %v38
    %v1208 = vunpack.c.h.b16 %v38
    %v1209 = vunpack.c.l.b16 %v39
    %v1210 = vunpack.c.h.b16 %v39
    %v1211 = vunpack.c.l.b16 %v40
    %v1212 = vunpack.c.h.b16 %v40
    %v1213 = vunpack.c.l.b16 %v41
    %v1214 = vunpack.c.h.b16 %v41
    %v1215 = vunpack.c.l.b16 %v42
    %v1216 = vunpack.c.h.b16 %v42
    %v1217 = vunpack.c.l.b16 %v43
    %v1218 = vunpack.c.h.b16 %v43
    %v1219 = vunpack.c.l.b16 %v44
    %v1220 = vunpack.c.h.b16 %v44
    %v1221 = vunpack.c.l.b16 %v45
    %v1222 = vunpack.c.h.b16 %v45
    %v1223 = vunpack.c.l.b16 %v46
    %v1224 = vunpack.c.h.b16 %v46
    %v1225 = vunpack.c.l.b16 %v47
    %v1226 = vunpack.c.h.b16 %v47
    %v1227 = vunpack.c.l.b16 %v48
    %v1228 = vunpack.c.h.b16 %v48
    %v1229 = vunpack.c.l.b16 %v49
    %v1230 = vunpack.c.h.b16 %v49
    %v1231 = vunpack.c.l.b16 %v50
    %v1232 = vunpack.c.h.b16 %v50
    %v1233 = vpack.c.b16 %v1173, %v1169
    %v1234 = vpack.c.b16 %v1174, %v1170
    %v1235 = vpack.c.b16 %v1175, %v1171
    %v1236 = vpack.c.b16 %v1176, %v1172
    %v1237 = vpack.c.b16 %v1181, %v1177
    %v1238 = vpack.c.b16 %v1182, %v1178
    %v1239 = vpack.c.b16 %v1183, %v1179
    %v1240 = vpack.c.b16 %v1184, %v1180
    %v1241 = vpack.c.b16 %v1189, %v1185
    %v1242 = vpack.c.b16 %v1190, %v1186
    %v1243 = vpack.c.b16 %v1191, %v1187
    %v1244 = vpack.c.b16 %v1192, %v1188
    %v1245 = vpack.c.b16 %v1197, %v1193
    %v1246 = vpack.c.b16 %v1198, %v1194
    %v1247 = vpack.c.b16 %v1199, %v1195
    %v1248 = vpack.c.b16 %v1200, %v1196
    %v1249 = vpack.c.b16 %v1205, %v1201
    %v1250 = vpack.c.b16 %v1206, %v1202
    %v1251 = vpack.c.b16 %v1207, %v1203
    %v1252 = vpack.c.b16 %v1208, %v1204
    %v1253 = vpack.c.b16 %v1213, %v1209
    %v1254 = vpack.c.b16 %v1214, %v1210
    %v1255 = vpack.c.b16 %v1215, %v1211
    %v1256 = vpack.c.b16 %v1216, %v1212
    %v1257 = vpack.c.b16 %v1221, %v1217
    %v1258 = vpack.c.b16 %v1222, %v1218
    %v1259 = vpack.c.b16 %v1223, %v1219
    %v1260 = vpack.c.b16 %v1224, %v1220
    %v1261 = vpack.c.b16 %v1229, %v1225
    %v1262 = vpack.c.b16 %v1230, %v1226
    %v1263 = vpack.c.b16 %v1231, %v1227
    %v1264 = vpack.c.b16 %v1232, %v1228
    %1297 = vmatprep.subr.bf16.mxu0 %v1262
    %1298 = vmatpush1.bf16.msra.mxu0 %v1261
    %1299 = vmatprep.subr.bf16.mxu0 %v1258
    %1300 = vmatpush1.bf16.msra.mxu0 %v1257
    %1301 = vmatprep.subr.bf16.mxu0 %v1254
    %1302 = vmatpush1.bf16.msra.mxu0 %v1253
    %1303 = vmatprep.subr.bf16.mxu0 %v1250
    %1304 = vmatpush1.bf16.msra.mxu0 %v1249
    %1305 = vmatprep.subr.bf16.mxu0 %v1246
    %1306 = vmatpush1.bf16.msra.mxu0 %v1245
    %1307 = vmatprep.subr.bf16.mxu0 %v1242
    %1308 = vmatpush1.bf16.msra.mxu0 %v1241
    %1309 = vmatprep.subr.bf16.mxu0 %v1238
    %1310 = vmatpush1.bf16.msra.mxu0 %v1237
    %1311 = vmatprep.subr.bf16.mxu0 %v1234
    %1312 = vmatpush1.bf16.msra.mxu0 %v1233
    %1313 = vmatprep.subr.bf16.mxu0 0
    %1314 = vmatpush2.bf16.msra.mxu0 0
    %1315 = vmatprep.subr.bf16.mxu0 0
    %1316 = vmatpush2.bf16.msra.mxu0 0
    %1317 = vmatprep.subr.bf16.mxu0 0
    %1318 = vmatpush2.bf16.msra.mxu0 0
    %1319 = vmatprep.subr.bf16.mxu0 0
    %1320 = vmatpush2.bf16.msra.mxu0 0
    %1321 = vmatprep.subr.bf16.mxu0 0
    %1322 = vmatpush2.bf16.msra.mxu0 0
    %1323 = vmatprep.subr.bf16.mxu0 0
    %1324 = vmatpush2.bf16.msra.mxu0 0
    %1325 = vmatprep.subr.bf16.mxu0 0
    %1326 = vmatpush2.bf16.msra.mxu0 0
    %1327 = vmatprep.subr.bf16.mxu0 0
    %1328 = vmatpush2.bf16.msra.mxu0 0
    %1329 = vmatprep.mubr.bf16.mxu0 0
    %1330 = vmatmul.mubr.bf16.gmra.mxu0 %v1065
    %v1331 = vpop.f32.mrf.mxu0
    %v1332 = vadd.f32 0.0, %v1331
    %v1333 = vpop.f32.mrf.mxu0
    %v1334 = vadd.f32 0.0, %v1333
    %v1335 = vpop.f32.mrf.mxu0
    %v1336 = vadd.f32 0.0, %v1335
    %v1337 = vpop.f32.mrf.mxu0
    %v1338 = vadd.f32 0.0, %v1337
    %1339 = vmatprep.mubr.bf16.mxu0 0
    %1340 = vmatmul.mubr.bf16.gmra.mxu0 %v1066
    %v1341 = vpop.f32.mrf.mxu0
    %v1342 = vadd.f32 0.0, %v1341
    %v1343 = vpop.f32.mrf.mxu0
    %v1344 = vadd.f32 0.0, %v1343
    %v1345 = vpop.f32.mrf.mxu0
    %v1346 = vadd.f32 0.0, %v1345
    %v1347 = vpop.f32.mrf.mxu0
    %v1348 = vadd.f32 0.0, %v1347
    %1349 = vmatprep.mubr.bf16.mxu0 0
    %1350 = vmatmul.mubr.bf16.gmra.mxu0 %v1067
    %v1351 = vpop.f32.mrf.mxu0
    %v1352 = vadd.f32 0.0, %v1351
    %v1353 = vpop.f32.mrf.mxu0
    %v1354 = vadd.f32 0.0, %v1353
    %v1355 = vpop.f32.mrf.mxu0
    %v1356 = vadd.f32 0.0, %v1355
    %v1357 = vpop.f32.mrf.mxu0
    %v1358 = vadd.f32 0.0, %v1357
    %1359 = vmatprep.mubr.bf16.mxu0 0
    %1360 = vmatmul.mubr.bf16.gmra.mxu0 %v1068
    %v1361 = vpop.f32.mrf.mxu0
    %v1362 = vadd.f32 0.0, %v1361
    %v1363 = vpop.f32.mrf.mxu0
    %v1364 = vadd.f32 0.0, %v1363
    %v1365 = vpop.f32.mrf.mxu0
    %v1366 = vadd.f32 0.0, %v1365
    %v1367 = vpop.f32.mrf.mxu0
    %v1368 = vadd.f32 0.0, %v1367
    %1369 = vmatprep.mubr.bf16.mxu0 0
    %1370 = vmatmul.mubr.bf16.gmra.mxu0 %v1069
    %v1371 = vpop.f32.mrf.mxu0
    %v1372 = vadd.f32 0.0, %v1371
    %v1373 = vpop.f32.mrf.mxu0
    %v1374 = vpop.f32.mrf.mxu0
    %v1375 = vadd.f32 0.0, %v1374
    %v1376 = vpop.f32.mrf.mxu0
    %v1377 = vadd.f32 0.0, %v1376
    %1378 = vmatprep.mubr.bf16.mxu0 0
    %1379 = vmatmul.mubr.bf16.gmra.mxu0 %v1070
    %v1380 = vpop.f32.mrf.mxu0
    %v1381 = vadd.f32 0.0, %v1380
    %v1382 = vpop.f32.mrf.mxu0
    %v1383 = vadd.f32 0.0, %v1382
    %v1384 = vpop.f32.mrf.mxu0
    %v1385 = vadd.f32 0.0, %v1384
    %v1386 = vpop.f32.mrf.mxu0
    %v1387 = vadd.f32 0.0, %v1386
    %1388 = vmatprep.mubr.bf16.mxu0 0
    %1389 = vmatmul.mubr.bf16.gmra.mxu0 %v1071
    %v1390 = vpop.f32.mrf.mxu0
    %v1391 = vadd.f32 0.0, %v1390
    %v1392 = vpop.f32.mrf.mxu0
    %v1393 = vadd.f32 0.0, %v1392
    %v1394 = vpop.f32.mrf.mxu0
    %v1395 = vadd.f32 0.0, %v1394
    %v1396 = vpop.f32.mrf.mxu0
    %v1397 = vadd.f32 0.0, %v1396
    %1398 = vmatprep.mubr.bf16.mxu0 0
    %1399 = vmatmul.mubr.bf16.gmra.mxu0 %v1072
    %v1400 = vpop.f32.mrf.mxu0
    %v1401 = vadd.f32 0.0, %v1400
    %v1402 = vpop.f32.mrf.mxu0
    %v1403 = vadd.f32 0.0, %v1402
    %v1404 = vpop.f32.mrf.mxu0
    %v1405 = vadd.f32 0.0, %v1404
    %v1406 = vpop.f32.mrf.mxu0
    %v1407 = vadd.f32 0.0, %v1406
    %1408 = vmatprep.mubr.bf16.mxu0 0
    %1409 = vmatmul.mubr.bf16.gmra.mxu0 %v1073
    %v1410 = vpop.f32.mrf.mxu0
    %v1411 = vadd.f32 0.0, %v1410
    %v1412 = vpop.f32.mrf.mxu0
    %v1413 = vadd.f32 0.0, %v1412
    %v1414 = vpop.f32.mrf.mxu0
    %v1415 = vadd.f32 0.0, %v1414
    %v1416 = vpop.f32.mrf.mxu0
    %1417 = vmatprep.mubr.bf16.mxu0 0
    %1418 = vmatmul.mubr.bf16.gmra.mxu0 %v1074
    %v1419 = vpop.f32.mrf.mxu0
    %v1420 = vadd.f32 0.0, %v1419
    %v1421 = vpop.f32.mrf.mxu0
    %v1422 = vadd.f32 0.0, %v1421
    %v1423 = vpop.f32.mrf.mxu0
    %v1424 = vadd.f32 0.0, %v1423
    %v1425 = vpop.f32.mrf.mxu0
    %v1426 = vadd.f32 0.0, %v1425
    %1427 = vmatprep.mubr.bf16.mxu0 0
    %1428 = vmatmul.mubr.bf16.gmra.mxu0 %v1075
    %v1429 = vpop.f32.mrf.mxu0
    %v1430 = vadd.f32 0.0, %v1429
    %v1431 = vpop.f32.mrf.mxu0
    %v1432 = vadd.f32 0.0, %v1431
    %v1433 = vpop.f32.mrf.mxu0
    %v1434 = vadd.f32 0.0, %v1433
    %v1435 = vpop.f32.mrf.mxu0
    %v1436 = vadd.f32 0.0, %v1435
    %1437 = vmatprep.mubr.bf16.mxu0 0
    %1438 = vmatmul.mubr.bf16.gmra.mxu0 %v1076
    %v1439 = vpop.f32.mrf.mxu0
    %v1440 = vadd.f32 0.0, %v1439
    %v1441 = vpop.f32.mrf.mxu0
    %v1442 = vadd.f32 0.0, %v1441
    %v1443 = vpop.f32.mrf.mxu0
    %v1444 = vadd.f32 0.0, %v1443
    %v1445 = vpop.f32.mrf.mxu0
    %v1446 = vadd.f32 0.0, %v1445
    %1447 = vmatprep.mubr.bf16.mxu0 0
    %1448 = vmatmul.mubr.bf16.gmra.mxu0 %v1077
    %v1449 = vpop.f32.mrf.mxu0
    %v1450 = vadd.f32 0.0, %v1449
    %v1451 = vpop.f32.mrf.mxu0
    %v1452 = vadd.f32 0.0, %v1451
    %v1453 = vpop.f32.mrf.mxu0
    %v1454 = vadd.f32 0.0, %v1453
    %v1455 = vpop.f32.mrf.mxu0
    %v1456 = vadd.f32 0.0, %v1455
    %1457 = vmatprep.mubr.bf16.mxu0 0
    %1458 = vmatmul.mubr.bf16.gmra.mxu0 %v1078
    %v1459 = vpop.f32.mrf.mxu0
    %v1460 = vadd.f32 0.0, %v1459
    %v1461 = vpop.f32.mrf.mxu0
    %v1462 = vpop.f32.mrf.mxu0
    %v1463 = vadd.f32 0.0, %v1462
    %v1464 = vpop.f32.mrf.mxu0
    %v1465 = vadd.f32 0.0, %v1464
    %1466 = vmatprep.mubr.bf16.mxu0 0
    %1467 = vmatmul.mubr.bf16.gmra.mxu0 %v1079
    %v1468 = vpop.f32.mrf.mxu0
    %v1469 = vadd.f32 0.0, %v1468
    %v1470 = vpop.f32.mrf.mxu0
    %v1471 = vadd.f32 0.0, %v1470
    %v1472 = vpop.f32.mrf.mxu0
    %v1473 = vadd.f32 0.0, %v1472
    %v1474 = vpop.f32.mrf.mxu0
    %v1475 = vadd.f32 0.0, %v1474
    %1476 = vmatprep.mubr.bf16.mxu0 0
    %1477 = vmatmul.mubr.bf16.gmra.mxu0 %v1080
    %v1478 = vpop.f32.mrf.mxu0
    %v1479 = vadd.f32 0.0, %v1478
    %v1480 = vpop.f32.mrf.mxu0
    %v1481 = vadd.f32 0.0, %v1480
    %v1482 = vpop.f32.mrf.mxu0
    %v1483 = vadd.f32 0.0, %v1482
    %v1484 = vpop.f32.mrf.mxu0
    %v1485 = vadd.f32 0.0, %v1484
    %1486 = vmatprep.mubr.bf16.mxu0 0
    %1487 = vmatmul.mubr.bf16.gmra.mxu0 %v1081
    %v1488 = vpop.f32.mrf.mxu0
    %v1489 = vadd.f32 0.0, %v1488
    %v1490 = vpop.f32.mrf.mxu0
    %v1491 = vadd.f32 0.0, %v1490
    %v1492 = vpop.f32.mrf.mxu0
    %v1493 = vadd.f32 0.0, %v1492
    %v1494 = vpop.f32.mrf.mxu0
    %v1495 = vadd.f32 0.0, %v1494
    %1496 = vmatprep.mubr.bf16.mxu0 0
    %1497 = vmatmul.mubr.bf16.gmra.mxu0 %v1082
    %v1498 = vpop.f32.mrf.mxu0
    %v1499 = vadd.f32 0.0, %v1498
    %v1500 = vpop.f32.mrf.mxu0
    %v1501 = vadd.f32 0.0, %v1500
    %v1502 = vpop.f32.mrf.mxu0
    %v1503 = vadd.f32 0.0, %v1502
    %v1504 = vpop.f32.mrf.mxu0
    %1505 = vmatprep.mubr.bf16.mxu0 0
    %1506 = vmatmul.mubr.bf16.gmra.mxu0 %v1083
    %v1507 = vpop.f32.mrf.mxu0
    %v1508 = vadd.f32 0.0, %v1507
    %v1509 = vpop.f32.mrf.mxu0
    %v1510 = vadd.f32 0.0, %v1509
    %v1511 = vpop.f32.mrf.mxu0
    %v1512 = vadd.f32 0.0, %v1511
    %v1513 = vpop.f32.mrf.mxu0
    %v1514 = vadd.f32 0.0, %v1513
    %1515 = vmatprep.mubr.bf16.mxu0 0
    %1516 = vmatmul.mubr.bf16.gmra.mxu0 %v1084
    %v1517 = vpop.f32.mrf.mxu0
    %v1518 = vadd.f32 0.0, %v1517
    %v1519 = vpop.f32.mrf.mxu0
    %v1520 = vadd.f32 0.0, %v1519
    %v1521 = vpop.f32.mrf.mxu0
    %v1522 = vadd.f32 0.0, %v1521
    %v1523 = vpop.f32.mrf.mxu0
    %v1524 = vadd.f32 0.0, %v1523
    %1525 = vmatprep.mubr.bf16.mxu0 0
    %1526 = vmatmul.mubr.bf16.gmra.mxu0 %v1085
    %v1527 = vpop.f32.mrf.mxu0
    %v1528 = vadd.f32 0.0, %v1527
    %v1529 = vpop.f32.mrf.mxu0
    %v1530 = vadd.f32 0.0, %v1529
    %v1531 = vpop.f32.mrf.mxu0
    %v1532 = vadd.f32 0.0, %v1531
    %v1533 = vpop.f32.mrf.mxu0
    %v1534 = vadd.f32 0.0, %v1533
    %1535 = vmatprep.mubr.bf16.mxu0 0
    %1536 = vmatmul.mubr.bf16.gmra.mxu0 %v1086
    %v1537 = vpop.f32.mrf.mxu0
    %v1538 = vadd.f32 0.0, %v1537
    %v1539 = vpop.f32.mrf.mxu0
    %v1540 = vadd.f32 0.0, %v1539
    %v1541 = vpop.f32.mrf.mxu0
    %v1542 = vadd.f32 0.0, %v1541
    %v1543 = vpop.f32.mrf.mxu0
    %v1544 = vadd.f32 0.0, %v1543
    %1545 = vmatprep.mubr.bf16.mxu0 0
    %1546 = vmatmul.mubr.bf16.gmra.mxu0 %v1087
    %v1547 = vpop.f32.mrf.mxu0
    %v1548 = vadd.f32 0.0, %v1547
    %v1549 = vpop.f32.mrf.mxu0
    %v1550 = vpop.f32.mrf.mxu0
    %v1551 = vadd.f32 0.0, %v1550
    %v1552 = vpop.f32.mrf.mxu0
    %v1553 = vadd.f32 0.0, %v1552
    %1554 = vmatprep.mubr.bf16.mxu0 0
    %1555 = vmatmul.mubr.bf16.gmra.mxu0 %v1088
    %v1556 = vpop.f32.mrf.mxu0
    %v1557 = vadd.f32 0.0, %v1556
    %v1558 = vpop.f32.mrf.mxu0
    %v1559 = vadd.f32 0.0, %v1558
    %v1560 = vpop.f32.mrf.mxu0
    %v1561 = vadd.f32 0.0, %v1560
    %v1562 = vpop.f32.mrf.mxu0
    %v1563 = vadd.f32 0.0, %v1562
    %1564 = vmatprep.mubr.bf16.mxu0 0
    %1565 = vmatmul.mubr.bf16.gmra.mxu0 %v1089
    %v1566 = vpop.f32.mrf.mxu0
    %v1567 = vadd.f32 0.0, %v1566
    %v1568 = vpop.f32.mrf.mxu0
    %v1569 = vadd.f32 0.0, %v1568
    %v1570 = vpop.f32.mrf.mxu0
    %v1571 = vadd.f32 0.0, %v1570
    %v1572 = vpop.f32.mrf.mxu0
    %v1573 = vadd.f32 0.0, %v1572
    %1574 = vmatprep.mubr.bf16.mxu0 0
    %1575 = vmatmul.mubr.bf16.gmra.mxu0 %v1090
    %v1576 = vpop.f32.mrf.mxu0
    %v1577 = vadd.f32 0.0, %v1576
    %v1578 = vpop.f32.mrf.mxu0
    %v1579 = vadd.f32 0.0, %v1578
    %v1580 = vpop.f32.mrf.mxu0
    %v1581 = vadd.f32 0.0, %v1580
    %v1582 = vpop.f32.mrf.mxu0
    %v1583 = vadd.f32 0.0, %v1582
    %1584 = vmatprep.mubr.bf16.mxu0 0
    %1585 = vmatmul.mubr.bf16.gmra.mxu0 %v1091
    %v1586 = vpop.f32.mrf.mxu0
    %v1587 = vadd.f32 0.0, %v1586
    %v1588 = vpop.f32.mrf.mxu0
    %v1589 = vadd.f32 0.0, %v1588
    %v1590 = vpop.f32.mrf.mxu0
    %v1591 = vadd.f32 0.0, %v1590
    %v1592 = vpop.f32.mrf.mxu0
    %1593 = vmatprep.mubr.bf16.mxu0 0
    %1594 = vmatmul.mubr.bf16.gmra.mxu0 %v1092
    %v1595 = vpop.f32.mrf.mxu0
    %v1596 = vadd.f32 0.0, %v1595
    %v1597 = vpop.f32.mrf.mxu0
    %v1598 = vadd.f32 0.0, %v1597
    %v1599 = vpop.f32.mrf.mxu0
    %v1600 = vadd.f32 0.0, %v1599
    %v1601 = vpop.f32.mrf.mxu0
    %v1602 = vadd.f32 0.0, %v1601
    %1603 = vmatprep.mubr.bf16.mxu0 0
    %1604 = vmatmul.mubr.bf16.gmra.mxu0 %v1093
    %v1605 = vpop.f32.mrf.mxu0
    %v1606 = vadd.f32 0.0, %v1605
    %v1607 = vpop.f32.mrf.mxu0
    %v1608 = vadd.f32 0.0, %v1607
    %v1609 = vpop.f32.mrf.mxu0
    %v1610 = vadd.f32 0.0, %v1609
    %v1611 = vpop.f32.mrf.mxu0
    %v1612 = vadd.f32 0.0, %v1611
    %1613 = vmatprep.mubr.bf16.mxu0 0
    %1614 = vmatmul.mubr.bf16.gmra.mxu0 %v1094
    %v1615 = vpop.f32.mrf.mxu0
    %v1616 = vadd.f32 0.0, %v1615
    %v1617 = vpop.f32.mrf.mxu0
    %v1618 = vadd.f32 0.0, %v1617
    %v1619 = vpop.f32.mrf.mxu0
    %v1620 = vadd.f32 0.0, %v1619
    %v1621 = vpop.f32.mrf.mxu0
    %v1622 = vadd.f32 0.0, %v1621
    %1623 = vmatprep.mubr.bf16.mxu0 0
    %1624 = vmatmul.mubr.bf16.gmra.mxu0 %v1095
    %v1625 = vpop.f32.mrf.mxu0
    %v1626 = vadd.f32 0.0, %v1625
    %v1627 = vpop.f32.mrf.mxu0
    %v1628 = vadd.f32 0.0, %v1627
    %v1629 = vpop.f32.mrf.mxu0
    %v1630 = vadd.f32 0.0, %v1629
    %v1631 = vpop.f32.mrf.mxu0
    %v1632 = vadd.f32 0.0, %v1631
    %1633 = vmatprep.mubr.bf16.mxu0 0
    %1634 = vmatmul.mubr.bf16.gmra.mxu0 %v1096
    %v1635 = vpop.f32.mrf.mxu0
    %v1636 = vadd.f32 0.0, %v1635
    %v1637 = vpop.f32.mrf.mxu0
    %v1638 = vpop.f32.mrf.mxu0
    %v1639 = vadd.f32 0.0, %v1638
    %v1640 = vpop.f32.mrf.mxu0
    %v1641 = vadd.f32 0.0, %v1640
    %1642 = vmatprep.mubr.bf16.mxu0 0
    %1643 = vmatmul.mubr.bf16.gmra.mxu0 %v1097
    %v1644 = vpop.f32.mrf.mxu0
    %v1645 = vadd.f32 0.0, %v1644
    %v1646 = vpop.f32.mrf.mxu0
    %v1647 = vadd.f32 0.0, %v1646
    %v1648 = vpop.f32.mrf.mxu0
    %v1649 = vadd.f32 0.0, %v1648
    %v1650 = vpop.f32.mrf.mxu0
    %v1651 = vadd.f32 0.0, %v1650
    %1652 = vmatprep.mubr.bf16.mxu0 0
    %1653 = vmatmul.mubr.bf16.gmra.mxu0 %v1098
    %v1654 = vpop.f32.mrf.mxu0
    %v1655 = vadd.f32 0.0, %v1654
    %v1656 = vpop.f32.mrf.mxu0
    %v1657 = vadd.f32 0.0, %v1656
    %v1658 = vpop.f32.mrf.mxu0
    %v1659 = vadd.f32 0.0, %v1658
    %v1660 = vpop.f32.mrf.mxu0
    %v1661 = vadd.f32 0.0, %v1660
    %1662 = vmatprep.mubr.bf16.mxu0 0
    %1663 = vmatmul.mubr.bf16.gmra.mxu0 %v1099
    %v1664 = vpop.f32.mrf.mxu0
    %v1665 = vadd.f32 0.0, %v1664
    %v1666 = vpop.f32.mrf.mxu0
    %v1667 = vadd.f32 0.0, %v1666
    %v1668 = vpop.f32.mrf.mxu0
    %v1669 = vadd.f32 0.0, %v1668
    %v1670 = vpop.f32.mrf.mxu0
    %v1671 = vadd.f32 0.0, %v1670
    %1672 = vmatprep.mubr.bf16.mxu0 0
    %1673 = vmatmul.mubr.bf16.gmra.mxu0 %v1100
    %v1674 = vpop.f32.mrf.mxu0
    %v1675 = vadd.f32 0.0, %v1674
    %v1676 = vpop.f32.mrf.mxu0
    %v1677 = vadd.f32 0.0, %v1676
    %v1678 = vpop.f32.mrf.mxu0
    %v1679 = vadd.f32 0.0, %v1678
    %v1680 = vpop.f32.mrf.mxu0
    %1681 = vmatprep.mubr.bf16.mxu0 0
    %1682 = vmatmul.mubr.bf16.gmra.mxu0 %v1101
    %v1683 = vpop.f32.mrf.mxu0
    %v1684 = vadd.f32 0.0, %v1683
    %v1685 = vpop.f32.mrf.mxu0
    %v1686 = vadd.f32 0.0, %v1685
    %v1687 = vpop.f32.mrf.mxu0
    %v1688 = vadd.f32 0.0, %v1687
    %v1689 = vpop.f32.mrf.mxu0
    %v1690 = vadd.f32 0.0, %v1689
    %1691 = vmatprep.mubr.bf16.mxu0 0
    %1692 = vmatmul.mubr.bf16.gmra.mxu0 %v1102
    %v1693 = vpop.f32.mrf.mxu0
    %v1694 = vadd.f32 0.0, %v1693
    %v1695 = vpop.f32.mrf.mxu0
    %v1696 = vadd.f32 0.0, %v1695
    %v1697 = vpop.f32.mrf.mxu0
    %v1698 = vadd.f32 0.0, %v1697
    %v1699 = vpop.f32.mrf.mxu0
    %v1700 = vadd.f32 0.0, %v1699
    %1701 = vmatprep.mubr.bf16.mxu0 0
    %1702 = vmatmul.mubr.bf16.gmra.mxu0 %v1103
    %v1703 = vpop.f32.mrf.mxu0
    %v1704 = vadd.f32 0.0, %v1703
    %v1705 = vpop.f32.mrf.mxu0
    %v1706 = vadd.f32 0.0, %v1705
    %v1707 = vpop.f32.mrf.mxu0
    %v1708 = vadd.f32 0.0, %v1707
    %v1709 = vpop.f32.mrf.mxu0
    %v1710 = vadd.f32 0.0, %v1709
    %1711 = vmatprep.mubr.bf16.mxu0 0
    %1712 = vmatmul.mubr.bf16.gmra.mxu0 %v1104
    %v1713 = vpop.f32.mrf.mxu0
    %v1714 = vadd.f32 0.0, %v1713
    %v1715 = vpop.f32.mrf.mxu0
    %v1716 = vadd.f32 0.0, %v1715
    %v1717 = vpop.f32.mrf.mxu0
    %v1718 = vadd.f32 0.0, %v1717
    %v1719 = vpop.f32.mrf.mxu0
    %v1720 = vadd.f32 0.0, %v1719
    %1721 = vmatprep.mubr.bf16.mxu0 0
    %1722 = vmatmul.mubr.bf16.gmra.mxu0 %v1105
    %v1723 = vpop.f32.mrf.mxu0
    %v1724 = vadd.f32 0.0, %v1723
    %v1725 = vpop.f32.mrf.mxu0
    %v1726 = vpop.f32.mrf.mxu0
    %v1727 = vadd.f32 0.0, %v1726
    %v1728 = vpop.f32.mrf.mxu0
    %v1729 = vadd.f32 0.0, %v1728
    %1730 = vmatprep.mubr.bf16.mxu0 0
    %1731 = vmatmul.mubr.bf16.gmra.mxu0 %v1106
    %v1732 = vpop.f32.mrf.mxu0
    %v1733 = vadd.f32 0.0, %v1732
    %v1734 = vpop.f32.mrf.mxu0
    %v1735 = vadd.f32 0.0, %v1734
    %v1736 = vpop.f32.mrf.mxu0
    %v1737 = vadd.f32 0.0, %v1736
    %v1738 = vpop.f32.mrf.mxu0
    %v1739 = vadd.f32 0.0, %v1738
    %1740 = vmatprep.mubr.bf16.mxu0 0
    %1741 = vmatmul.mubr.bf16.gmra.mxu0 %v1107
    %v1742 = vpop.f32.mrf.mxu0
    %v1743 = vadd.f32 0.0, %v1742
    %v1744 = vpop.f32.mrf.mxu0
    %v1745 = vadd.f32 0.0, %v1744
    %v1746 = vpop.f32.mrf.mxu0
    %v1747 = vadd.f32 0.0, %v1746
    %v1748 = vpop.f32.mrf.mxu0
    %v1749 = vadd.f32 0.0, %v1748
    %1750 = vmatprep.mubr.bf16.mxu0 0
    %1751 = vmatmul.mubr.bf16.gmra.mxu0 %v1108
    %v1752 = vpop.f32.mrf.mxu0
    %v1753 = vadd.f32 0.0, %v1752
    %v1754 = vpop.f32.mrf.mxu0
    %v1755 = vadd.f32 0.0, %v1754
    %v1756 = vpop.f32.mrf.mxu0
    %v1757 = vadd.f32 0.0, %v1756
    %v1758 = vpop.f32.mrf.mxu0
    %v1759 = vadd.f32 0.0, %v1758
    %1760 = vmatprep.mubr.bf16.mxu0 0
    %1761 = vmatmul.mubr.bf16.gmra.mxu0 %v1109
    %v1762 = vpop.f32.mrf.mxu0
    %v1763 = vadd.f32 0.0, %v1762
    %v1764 = vpop.f32.mrf.mxu0
    %v1765 = vadd.f32 0.0, %v1764
    %v1766 = vpop.f32.mrf.mxu0
    %v1767 = vadd.f32 0.0, %v1766
    %v1768 = vpop.f32.mrf.mxu0
    %1769 = vmatprep.mubr.bf16.mxu0 0
    %1770 = vmatmul.mubr.bf16.gmra.mxu0 %v1110
    %v1771 = vpop.f32.mrf.mxu0
    %v1772 = vadd.f32 0.0, %v1771
    %v1773 = vpop.f32.mrf.mxu0
    %v1774 = vadd.f32 0.0, %v1773
    %v1775 = vpop.f32.mrf.mxu0
    %v1776 = vadd.f32 0.0, %v1775
    %v1777 = vpop.f32.mrf.mxu0
    %v1778 = vadd.f32 0.0, %v1777
    %1779 = vmatprep.mubr.bf16.mxu0 0
    %1780 = vmatmul.mubr.bf16.gmra.mxu0 %v1111
    %v1781 = vpop.f32.mrf.mxu0
    %v1782 = vadd.f32 0.0, %v1781
    %v1783 = vpop.f32.mrf.mxu0
    %v1784 = vadd.f32 0.0, %v1783
    %v1785 = vpop.f32.mrf.mxu0
    %v1786 = vadd.f32 0.0, %v1785
    %v1787 = vpop.f32.mrf.mxu0
    %v1788 = vadd.f32 0.0, %v1787
    %1789 = vmatprep.mubr.bf16.mxu0 0
    %1790 = vmatmul.mubr.bf16.gmra.mxu0 %v1112
    %v1791 = vpop.f32.mrf.mxu0
    %v1792 = vadd.f32 0.0, %v1791
    %v1793 = vpop.f32.mrf.mxu0
    %v1794 = vadd.f32 0.0, %v1793
    %v1795 = vpop.f32.mrf.mxu0
    %v1796 = vadd.f32 0.0, %v1795
    %v1797 = vpop.f32.mrf.mxu0
    %v1798 = vadd.f32 0.0, %v1797
    %1799 = vmatprep.mubr.bf16.mxu0 0
    %1800 = vmatmul.mubr.bf16.gmra.mxu0 %v1113
    %v1801 = vpop.f32.mrf.mxu0
    %v1802 = vadd.f32 0.0, %v1801
    %v1803 = vpop.f32.mrf.mxu0
    %v1804 = vadd.f32 0.0, %v1803
    %v1805 = vpop.f32.mrf.mxu0
    %v1806 = vadd.f32 0.0, %v1805
    %v1807 = vpop.f32.mrf.mxu0
    %v1808 = vadd.f32 0.0, %v1807
    %1809 = vmatprep.mubr.bf16.mxu0 0
    %1810 = vmatmul.mubr.bf16.gmra.mxu0 %v1114
    %v1811 = vpop.f32.mrf.mxu0
    %v1812 = vadd.f32 0.0, %v1811
    %v1813 = vpop.f32.mrf.mxu0
    %v1814 = vpop.f32.mrf.mxu0
    %v1815 = vadd.f32 0.0, %v1814
    %v1816 = vpop.f32.mrf.mxu0
    %v1817 = vadd.f32 0.0, %v1816
    %1818 = vmatprep.mubr.bf16.mxu0 0
    %1819 = vmatmul.mubr.bf16.gmra.mxu0 %v1115
    %v1820 = vpop.f32.mrf.mxu0
    %v1821 = vadd.f32 0.0, %v1820
    %v1822 = vpop.f32.mrf.mxu0
    %v1823 = vadd.f32 0.0, %v1822
    %v1824 = vpop.f32.mrf.mxu0
    %v1825 = vadd.f32 0.0, %v1824
    %v1826 = vpop.f32.mrf.mxu0
    %v1827 = vadd.f32 0.0, %v1826
    %1828 = vmatprep.mubr.bf16.mxu0 0
    %1829 = vmatmul.mubr.bf16.gmra.mxu0 %v1116
    %v1830 = vpop.f32.mrf.mxu0
    %v1831 = vadd.f32 0.0, %v1830
    %v1832 = vpop.f32.mrf.mxu0
    %v1833 = vadd.f32 0.0, %v1832
    %v1834 = vpop.f32.mrf.mxu0
    %v1835 = vadd.f32 0.0, %v1834
    %v1836 = vpop.f32.mrf.mxu0
    %v1837 = vadd.f32 0.0, %v1836
    %1838 = vmatprep.mubr.bf16.mxu0 0
    %1839 = vmatmul.mubr.bf16.gmra.mxu0 %v1117
    %v1840 = vpop.f32.mrf.mxu0
    %v1841 = vadd.f32 0.0, %v1840
    %v1842 = vpop.f32.mrf.mxu0
    %v1843 = vadd.f32 0.0, %v1842
    %v1844 = vpop.f32.mrf.mxu0
    %v1845 = vadd.f32 0.0, %v1844
    %v1846 = vpop.f32.mrf.mxu0
    %v1847 = vadd.f32 0.0, %v1846
    %1848 = vmatprep.mubr.bf16.mxu0 0
    %1849 = vmatmul.mubr.bf16.gmra.mxu0 %v1118
    %v1850 = vpop.f32.mrf.mxu0
    %v1851 = vadd.f32 0.0, %v1850
    %v1852 = vpop.f32.mrf.mxu0
    %v1853 = vadd.f32 0.0, %v1852
    %v1854 = vpop.f32.mrf.mxu0
    %v1855 = vadd.f32 0.0, %v1854
    %v1856 = vpop.f32.mrf.mxu0
    %1857 = vmatprep.mubr.bf16.mxu0 0
    %1858 = vmatmul.mubr.bf16.gmra.mxu0 %v1119
    %v1859 = vpop.f32.mrf.mxu0
    %v1860 = vadd.f32 0.0, %v1859
    %v1861 = vpop.f32.mrf.mxu0
    %v1862 = vadd.f32 0.0, %v1861
    %v1863 = vpop.f32.mrf.mxu0
    %v1864 = vadd.f32 0.0, %v1863
    %v1865 = vpop.f32.mrf.mxu0
    %v1866 = vadd.f32 0.0, %v1865
    %1867 = vmatprep.mubr.bf16.mxu0 0
    %1868 = vmatmul.mubr.bf16.gmra.mxu0 %v1120
    %v1869 = vpop.f32.mrf.mxu0
    %v1870 = vadd.f32 0.0, %v1869
    %v1871 = vpop.f32.mrf.mxu0
    %v1872 = vadd.f32 0.0, %v1871
    %v1873 = vpop.f32.mrf.mxu0
    %v1874 = vadd.f32 0.0, %v1873
    %v1875 = vpop.f32.mrf.mxu0
    %v1876 = vadd.f32 0.0, %v1875
    %1877 = vmatprep.mubr.bf16.mxu0 0
    %1878 = vmatmul.mubr.bf16.gmra.mxu0 %v1121
    %v1879 = vpop.f32.mrf.mxu0
    %v1880 = vadd.f32 0.0, %v1879
    %v1881 = vpop.f32.mrf.mxu0
    %v1882 = vadd.f32 0.0, %v1881
    %v1883 = vpop.f32.mrf.mxu0
    %v1884 = vadd.f32 0.0, %v1883
    %v1885 = vpop.f32.mrf.mxu0
    %v1886 = vadd.f32 0.0, %v1885
    %1887 = vmatprep.mubr.bf16.mxu0 0
    %1888 = vmatmul.mubr.bf16.gmra.mxu0 %v1122
    %v1889 = vpop.f32.mrf.mxu0
    %v1890 = vadd.f32 0.0, %v1889
    %v1891 = vpop.f32.mrf.mxu0
    %v1892 = vadd.f32 0.0, %v1891
    %v1893 = vpop.f32.mrf.mxu0
    %v1894 = vadd.f32 0.0, %v1893
    %v1895 = vpop.f32.mrf.mxu0
    %v1896 = vadd.f32 0.0, %v1895
    %1897 = vmatprep.mubr.bf16.mxu0 0
    %1898 = vmatmul.mubr.bf16.gmra.mxu0 %v1123
    %v1899 = vpop.f32.mrf.mxu0
    %v1900 = vadd.f32 0.0, %v1899
    %v1901 = vpop.f32.mrf.mxu0
    %v1902 = vpop.f32.mrf.mxu0
    %v1903 = vadd.f32 0.0, %v1902
    %v1904 = vpop.f32.mrf.mxu0
    %v1905 = vadd.f32 0.0, %v1904
    %1906 = vmatprep.mubr.bf16.mxu0 0
    %1907 = vmatmul.mubr.bf16.gmra.mxu0 %v1124
    %v1908 = vpop.f32.mrf.mxu0
    %v1909 = vadd.f32 0.0, %v1908
    %v1910 = vpop.f32.mrf.mxu0
    %v1911 = vadd.f32 0.0, %v1910
    %v1912 = vpop.f32.mrf.mxu0
    %v1913 = vadd.f32 0.0, %v1912
    %v1914 = vpop.f32.mrf.mxu0
    %v1915 = vadd.f32 0.0, %v1914
    %1916 = vmatprep.mubr.bf16.mxu0 0
    %1917 = vmatmul.mubr.bf16.gmra.mxu0 %v1125
    %v1918 = vpop.f32.mrf.mxu0
    %v1919 = vadd.f32 0.0, %v1918
    %v1920 = vpop.f32.mrf.mxu0
    %v1921 = vadd.f32 0.0, %v1920
    %v1922 = vpop.f32.mrf.mxu0
    %v1923 = vadd.f32 0.0, %v1922
    %v1924 = vpop.f32.mrf.mxu0
    %v1925 = vadd.f32 0.0, %v1924
    %1926 = vmatprep.mubr.bf16.mxu0 0
    %1927 = vmatmul.mubr.bf16.gmra.mxu0 %v1126
    %v1928 = vpop.f32.mrf.mxu0
    %v1929 = vadd.f32 0.0, %v1928
    %v1930 = vpop.f32.mrf.mxu0
    %v1931 = vadd.f32 0.0, %v1930
    %v1932 = vpop.f32.mrf.mxu0
    %v1933 = vadd.f32 0.0, %v1932
    %v1934 = vpop.f32.mrf.mxu0
    %v1935 = vadd.f32 0.0, %v1934
    %1936 = vmatprep.mubr.bf16.mxu0 0
    %1937 = vmatmul.mubr.bf16.gmra.mxu0 %v1127
    %v1938 = vpop.f32.mrf.mxu0
    %v1939 = vadd.f32 0.0, %v1938
    %v1940 = vpop.f32.mrf.mxu0
    %v1941 = vadd.f32 0.0, %v1940
    %v1942 = vpop.f32.mrf.mxu0
    %v1943 = vadd.f32 0.0, %v1942
    %v1944 = vpop.f32.mrf.mxu0
    %1945 = vmatprep.mubr.bf16.mxu0 0
    %1946 = vmatmul.mubr.bf16.gmra.mxu0 %v1128
    %v1947 = vpop.f32.mrf.mxu0
    %v1948 = vadd.f32 0.0, %v1947
    %v1949 = vpop.f32.mrf.mxu0
    %v1950 = vadd.f32 0.0, %v1949
    %v1951 = vpop.f32.mrf.mxu0
    %v1952 = vadd.f32 0.0, %v1951
    %v1953 = vpop.f32.mrf.mxu0
    %v1954 = vadd.f32 0.0, %v1953
    %1955 = vmatprep.mubr.bf16.mxu0 0
    %1956 = vmatmul.mubr.bf16.gmra.mxu0 %v1129
    %v1957 = vpop.f32.mrf.mxu0
    %v1958 = vadd.f32 0.0, %v1957
    %v1959 = vpop.f32.mrf.mxu0
    %v1960 = vadd.f32 0.0, %v1959
    %v1961 = vpop.f32.mrf.mxu0
    %v1962 = vadd.f32 0.0, %v1961
    %v1963 = vpop.f32.mrf.mxu0
    %v1964 = vadd.f32 0.0, %v1963
    %1965 = vmatprep.mubr.bf16.mxu0 0
    %1966 = vmatmul.mubr.bf16.gmra.mxu0 %v1130
    %v1967 = vpop.f32.mrf.mxu0
    %v1968 = vadd.f32 0.0, %v1967
    %v1969 = vpop.f32.mrf.mxu0
    %v1970 = vadd.f32 0.0, %v1969
    %v1971 = vpop.f32.mrf.mxu0
    %v1972 = vadd.f32 0.0, %v1971
    %v1973 = vpop.f32.mrf.mxu0
    %v1974 = vadd.f32 0.0, %v1973
    %1975 = vmatprep.mubr.bf16.mxu0 0
    %1976 = vmatmul.mubr.bf16.gmra.mxu0 %v1131
    %v1977 = vpop.f32.mrf.mxu0
    %v1978 = vadd.f32 0.0, %v1977
    %v1979 = vpop.f32.mrf.mxu0
    %v1980 = vadd.f32 0.0, %v1979
    %v1981 = vpop.f32.mrf.mxu0
    %v1982 = vadd.f32 0.0, %v1981
    %v1983 = vpop.f32.mrf.mxu0
    %v1984 = vadd.f32 0.0, %v1983
    %1985 = vmatprep.mubr.bf16.mxu0 0
    %1986 = vmatmul.mubr.bf16.gmra.mxu0 %v1132
    %v1987 = vpop.f32.mrf.mxu0
    %v1988 = vadd.f32 0.0, %v1987
    %v1989 = vpop.f32.mrf.mxu0
    %v1990 = vpop.f32.mrf.mxu0
    %v1991 = vadd.f32 0.0, %v1990
    %v1992 = vpop.f32.mrf.mxu0
    %v1993 = vadd.f32 0.0, %v1992
    %1994 = vmatprep.mubr.bf16.mxu0 0
    %1995 = vmatmul.mubr.bf16.gmra.mxu0 %v1133
    %v1996 = vpop.f32.mrf.mxu0
    %v1997 = vadd.f32 0.0, %v1996
    %v1998 = vpop.f32.mrf.mxu0
    %v1999 = vadd.f32 0.0, %v1998
    %v2000 = vpop.f32.mrf.mxu0
    %v2001 = vadd.f32 0.0, %v2000
    %v2002 = vpop.f32.mrf.mxu0
    %v2003 = vadd.f32 0.0, %v2002
    %2004 = vmatprep.mubr.bf16.mxu0 0
    %2005 = vmatmul.mubr.bf16.gmra.mxu0 %v1134
    %v2006 = vpop.f32.mrf.mxu0
    %v2007 = vadd.f32 0.0, %v2006
    %v2008 = vpop.f32.mrf.mxu0
    %v2009 = vadd.f32 0.0, %v2008
    %v2010 = vpop.f32.mrf.mxu0
    %v2011 = vadd.f32 0.0, %v2010
    %v2012 = vpop.f32.mrf.mxu0
    %v2013 = vadd.f32 0.0, %v2012
    %2014 = vmatprep.mubr.bf16.mxu0 0
    %2015 = vmatmul.mubr.bf16.gmra.mxu0 %v1135
    %v2016 = vpop.f32.mrf.mxu0
    %v2017 = vadd.f32 0.0, %v2016
    %v2018 = vpop.f32.mrf.mxu0
    %v2019 = vadd.f32 0.0, %v2018
    %v2020 = vpop.f32.mrf.mxu0
    %v2021 = vadd.f32 0.0, %v2020
    %v2022 = vpop.f32.mrf.mxu0
    %v2023 = vadd.f32 0.0, %v2022
    %2024 = vmatprep.mubr.bf16.mxu0 0
    %2025 = vmatmul.mubr.bf16.gmra.mxu0 %v1136
    %v2026 = vpop.f32.mrf.mxu0
    %v2027 = vadd.f32 0.0, %v2026
    %v2028 = vpop.f32.mrf.mxu0
    %v2029 = vadd.f32 0.0, %v2028
    %v2030 = vpop.f32.mrf.mxu0
    %v2031 = vadd.f32 0.0, %v2030
    %v2032 = vpop.f32.mrf.mxu0
    %2033 = vdwg.mxu0
    %2034 = vmatprep.subr.bf16.mxu0 %v1264
    %2035 = vmatpush1.bf16.msra.mxu0 %v1263
    %2036 = vmatprep.subr.bf16.mxu0 %v1260
    %2037 = vmatpush1.bf16.msra.mxu0 %v1259
    %2038 = vmatprep.subr.bf16.mxu0 %v1256
    %2039 = vmatpush1.bf16.msra.mxu0 %v1255
    %2040 = vmatprep.subr.bf16.mxu0 %v1252
    %2041 = vmatpush1.bf16.msra.mxu0 %v1251
    %2042 = vmatprep.subr.bf16.mxu0 %v1248
    %2043 = vmatpush1.bf16.msra.mxu0 %v1247
    %2044 = vmatprep.subr.bf16.mxu0 %v1244
    %2045 = vmatpush1.bf16.msra.mxu0 %v1243
    %2046 = vmatprep.subr.bf16.mxu0 %v1240
    %2047 = vmatpush1.bf16.msra.mxu0 %v1239
    %2048 = vmatprep.subr.bf16.mxu0 %v1236
    %2049 = vmatpush1.bf16.msra.mxu0 %v1235
    %2050 = vmatprep.subr.bf16.mxu0 0
    %2051 = vmatpush2.bf16.msra.mxu0 0
    %2052 = vmatprep.subr.bf16.mxu0 0
    %2053 = vmatpush2.bf16.msra.mxu0 0
    %2054 = vmatprep.subr.bf16.mxu0 0
    %2055 = vmatpush2.bf16.msra.mxu0 0
    %2056 = vmatprep.subr.bf16.mxu0 0
    %2057 = vmatpush2.bf16.msra.mxu0 0
    %2058 = vmatprep.subr.bf16.mxu0 0
    %2059 = vmatpush2.bf16.msra.mxu0 0
    %2060 = vmatprep.subr.bf16.mxu0 0
    %2061 = vmatpush2.bf16.msra.mxu0 0
    %2062 = vmatprep.subr.bf16.mxu0 0
    %2063 = vmatpush2.bf16.msra.mxu0 0
    %2064 = vmatprep.subr.bf16.mxu0 0
    %2065 = vmatpush2.bf16.msra.mxu0 0
    %2066 = vmatprep.mubr.bf16.mxu0 0
    %2067 = vmatmul.mubr.bf16.gmra.mxu0 %v1065
    %v2068 = vpop.f32.mrf.mxu0
    %v2069 = vadd.f32 0.0, %v2068
    %v2070 = vpop.f32.mrf.mxu0
    %v2071 = vadd.f32 0.0, %v2070
    %v2072 = vpop.f32.mrf.mxu0
    %v2073 = vadd.f32 0.0, %v2072
    %v2074 = vpop.f32.mrf.mxu0
    %v2075 = vadd.f32 0.0, %v2074
    %2076 = vmatprep.mubr.bf16.mxu0 0
    %2077 = vmatmul.mubr.bf16.gmra.mxu0 %v1066
    %v2078 = vpop.f32.mrf.mxu0
    %v2079 = vadd.f32 0.0, %v2078
    %v2080 = vpop.f32.mrf.mxu0
    %v2081 = vadd.f32 0.0, %v2080
    %v2082 = vpop.f32.mrf.mxu0
    %v2083 = vadd.f32 0.0, %v2082
    %v2084 = vpop.f32.mrf.mxu0
    %v2085 = vadd.f32 0.0, %v2084
    %2086 = vmatprep.mubr.bf16.mxu0 0
    %2087 = vmatmul.mubr.bf16.gmra.mxu0 %v1067
    %v2088 = vpop.f32.mrf.mxu0
    %v2089 = vadd.f32 0.0, %v2088
    %v2090 = vpop.f32.mrf.mxu0
    %v2091 = vadd.f32 0.0, %v2090
    %v2092 = vpop.f32.mrf.mxu0
    %v2093 = vadd.f32 0.0, %v2092
    %v2094 = vpop.f32.mrf.mxu0
    %v2095 = vadd.f32 0.0, %v2094
    %2096 = vmatprep.mubr.bf16.mxu0 0
    %2097 = vmatmul.mubr.bf16.gmra.mxu0 %v1068
    %v2098 = vpop.f32.mrf.mxu0
    %v2099 = vadd.f32 0.0, %v2098
    %v2100 = vpop.f32.mrf.mxu0
    %v2101 = vadd.f32 0.0, %v2100
    %v2102 = vpop.f32.mrf.mxu0
    %v2103 = vadd.f32 0.0, %v2102
    %v2104 = vpop.f32.mrf.mxu0
    %v2105 = vadd.f32 0.0, %v2104
    %2106 = vmatprep.mubr.bf16.mxu0 0
    %2107 = vmatmul.mubr.bf16.gmra.mxu0 %v1069
    %v2108 = vpop.f32.mrf.mxu0
    %v2109 = vpop.f32.mrf.mxu0
    %v2110 = vpop.f32.mrf.mxu0
    %v2111 = vadd.f32 0.0, %v2110
    %v2112 = vpop.f32.mrf.mxu0
    %v2113 = vadd.f32 0.0, %v2112
    %2114 = vmatprep.mubr.bf16.mxu0 0
    %2115 = vmatmul.mubr.bf16.gmra.mxu0 %v1070
    %v2116 = vpop.f32.mrf.mxu0
    %v2117 = vadd.f32 0.0, %v2116
    %v2118 = vpop.f32.mrf.mxu0
    %v2119 = vadd.f32 0.0, %v2118
    %v2120 = vpop.f32.mrf.mxu0
    %v2121 = vadd.f32 0.0, %v2120
    %v2122 = vpop.f32.mrf.mxu0
    %v2123 = vadd.f32 0.0, %v2122
    %2124 = vmatprep.mubr.bf16.mxu0 0
    %2125 = vmatmul.mubr.bf16.gmra.mxu0 %v1071
    %v2126 = vpop.f32.mrf.mxu0
    %v2127 = vadd.f32 0.0, %v2126
    %v2128 = vpop.f32.mrf.mxu0
    %v2129 = vadd.f32 0.0, %v2128
    %v2130 = vpop.f32.mrf.mxu0
    %v2131 = vadd.f32 0.0, %v2130
    %v2132 = vpop.f32.mrf.mxu0
    %v2133 = vadd.f32 0.0, %v2132
    %2134 = vmatprep.mubr.bf16.mxu0 0
    %2135 = vmatmul.mubr.bf16.gmra.mxu0 %v1072
    %v2136 = vpop.f32.mrf.mxu0
    %v2137 = vadd.f32 0.0, %v2136
    %v2138 = vpop.f32.mrf.mxu0
    %v2139 = vadd.f32 0.0, %v2138
    %v2140 = vpop.f32.mrf.mxu0
    %v2141 = vadd.f32 0.0, %v2140
    %v2142 = vpop.f32.mrf.mxu0
    %v2143 = vadd.f32 0.0, %v2142
    %2144 = vmatprep.mubr.bf16.mxu0 0
    %2145 = vmatmul.mubr.bf16.gmra.mxu0 %v1073
    %v2146 = vpop.f32.mrf.mxu0
    %v2147 = vadd.f32 0.0, %v2146
    %v2148 = vpop.f32.mrf.mxu0
    %v2149 = vadd.f32 0.0, %v2148
    %v2150 = vpop.f32.mrf.mxu0
    %v2151 = vpop.f32.mrf.mxu0
    %2152 = vmatprep.mubr.bf16.mxu0 0
    %2153 = vmatmul.mubr.bf16.gmra.mxu0 %v1074
    %v2154 = vpop.f32.mrf.mxu0
    %v2155 = vadd.f32 0.0, %v2154
    %v2156 = vpop.f32.mrf.mxu0
    %v2157 = vadd.f32 0.0, %v2156
    %v2158 = vpop.f32.mrf.mxu0
    %v2159 = vadd.f32 0.0, %v2158
    %v2160 = vpop.f32.mrf.mxu0
    %v2161 = vadd.f32 0.0, %v2160
    %2162 = vmatprep.mubr.bf16.mxu0 0
    %2163 = vmatmul.mubr.bf16.gmra.mxu0 %v1075
    %v2164 = vpop.f32.mrf.mxu0
    %v2165 = vadd.f32 0.0, %v2164
    %v2166 = vpop.f32.mrf.mxu0
    %v2167 = vadd.f32 0.0, %v2166
    %v2168 = vpop.f32.mrf.mxu0
    %v2169 = vadd.f32 0.0, %v2168
    %v2170 = vpop.f32.mrf.mxu0
    %v2171 = vadd.f32 0.0, %v2170
    %2172 = vmatprep.mubr.bf16.mxu0 0
    %2173 = vmatmul.mubr.bf16.gmra.mxu0 %v1076
    %v2174 = vpop.f32.mrf.mxu0
    %v2175 = vadd.f32 0.0, %v2174
    %v2176 = vpop.f32.mrf.mxu0
    %v2177 = vadd.f32 0.0, %v2176
    %v2178 = vpop.f32.mrf.mxu0
    %v2179 = vadd.f32 0.0, %v2178
    %v2180 = vpop.f32.mrf.mxu0
    %v2181 = vadd.f32 0.0, %v2180
    %2182 = vmatprep.mubr.bf16.mxu0 0
    %2183 = vmatmul.mubr.bf16.gmra.mxu0 %v1077
    %v2184 = vpop.f32.mrf.mxu0
    %v2185 = vadd.f32 0.0, %v2184
    %v2186 = vpop.f32.mrf.mxu0
    %v2187 = vadd.f32 0.0, %v2186
    %v2188 = vpop.f32.mrf.mxu0
    %v2189 = vadd.f32 0.0, %v2188
    %v2190 = vpop.f32.mrf.mxu0
    %v2191 = vadd.f32 0.0, %v2190
    %2192 = vmatprep.mubr.bf16.mxu0 0
    %2193 = vmatmul.mubr.bf16.gmra.mxu0 %v1078
    %v2194 = vpop.f32.mrf.mxu0
    %v2195 = vpop.f32.mrf.mxu0
    %v2196 = vpop.f32.mrf.mxu0
    %v2197 = vadd.f32 0.0, %v2196
    %v2198 = vpop.f32.mrf.mxu0
    %v2199 = vadd.f32 0.0, %v2198
    %2200 = vmatprep.mubr.bf16.mxu0 0
    %2201 = vmatmul.mubr.bf16.gmra.mxu0 %v1079
    %v2202 = vpop.f32.mrf.mxu0
    %v2203 = vadd.f32 0.0, %v2202
    %v2204 = vpop.f32.mrf.mxu0
    %v2205 = vadd.f32 0.0, %v2204
    %v2206 = vpop.f32.mrf.mxu0
    %v2207 = vadd.f32 0.0, %v2206
    %v2208 = vpop.f32.mrf.mxu0
    %v2209 = vadd.f32 0.0, %v2208
    %2210 = vmatprep.mubr.bf16.mxu0 0
    %2211 = vmatmul.mubr.bf16.gmra.mxu0 %v1080
    %v2212 = vpop.f32.mrf.mxu0
    %v2213 = vadd.f32 0.0, %v2212
    %v2214 = vpop.f32.mrf.mxu0
    %v2215 = vadd.f32 0.0, %v2214
    %v2216 = vpop.f32.mrf.mxu0
    %v2217 = vadd.f32 0.0, %v2216
    %v2218 = vpop.f32.mrf.mxu0
    %v2219 = vadd.f32 0.0, %v2218
    %2220 = vmatprep.mubr.bf16.mxu0 0
    %2221 = vmatmul.mubr.bf16.gmra.mxu0 %v1081
    %v2222 = vpop.f32.mrf.mxu0
    %v2223 = vadd.f32 0.0, %v2222
    %v2224 = vpop.f32.mrf.mxu0
    %v2225 = vadd.f32 0.0, %v2224
    %v2226 = vpop.f32.mrf.mxu0
    %v2227 = vadd.f32 0.0, %v2226
    %v2228 = vpop.f32.mrf.mxu0
    %v2229 = vadd.f32 0.0, %v2228
    %2230 = vmatprep.mubr.bf16.mxu0 0
    %2231 = vmatmul.mubr.bf16.gmra.mxu0 %v1082
    %v2232 = vpop.f32.mrf.mxu0
    %v2233 = vadd.f32 0.0, %v2232
    %v2234 = vpop.f32.mrf.mxu0
    %v2235 = vadd.f32 0.0, %v2234
    %v2236 = vpop.f32.mrf.mxu0
    %v2237 = vpop.f32.mrf.mxu0
    %2238 = vmatprep.mubr.bf16.mxu0 0
    %2239 = vmatmul.mubr.bf16.gmra.mxu0 %v1083
    %v2240 = vpop.f32.mrf.mxu0
    %v2241 = vadd.f32 0.0, %v2240
    %v2242 = vpop.f32.mrf.mxu0
    %v2243 = vadd.f32 0.0, %v2242
    %v2244 = vpop.f32.mrf.mxu0
    %v2245 = vadd.f32 0.0, %v2244
    %v2246 = vpop.f32.mrf.mxu0
    %v2247 = vadd.f32 0.0, %v2246
    %2248 = vmatprep.mubr.bf16.mxu0 0
    %2249 = vmatmul.mubr.bf16.gmra.mxu0 %v1084
    %v2250 = vpop.f32.mrf.mxu0
    %v2251 = vadd.f32 0.0, %v2250
    %v2252 = vpop.f32.mrf.mxu0
    %v2253 = vadd.f32 0.0, %v2252
    %v2254 = vpop.f32.mrf.mxu0
    %v2255 = vadd.f32 0.0, %v2254
    %v2256 = vpop.f32.mrf.mxu0
    %v2257 = vadd.f32 0.0, %v2256
    %2258 = vmatprep.mubr.bf16.mxu0 0
    %2259 = vmatmul.mubr.bf16.gmra.mxu0 %v1085
    %v2260 = vpop.f32.mrf.mxu0
    %v2261 = vadd.f32 0.0, %v2260
    %v2262 = vpop.f32.mrf.mxu0
    %v2263 = vadd.f32 0.0, %v2262
    %v2264 = vpop.f32.mrf.mxu0
    %v2265 = vadd.f32 0.0, %v2264
    %v2266 = vpop.f32.mrf.mxu0
    %v2267 = vadd.f32 0.0, %v2266
    %2268 = vmatprep.mubr.bf16.mxu0 0
    %2269 = vmatmul.mubr.bf16.gmra.mxu0 %v1086
    %v2270 = vpop.f32.mrf.mxu0
    %v2271 = vadd.f32 0.0, %v2270
    %v2272 = vpop.f32.mrf.mxu0
    %v2273 = vadd.f32 0.0, %v2272
    %v2274 = vpop.f32.mrf.mxu0
    %v2275 = vadd.f32 0.0, %v2274
    %v2276 = vpop.f32.mrf.mxu0
    %v2277 = vadd.f32 0.0, %v2276
    %2278 = vmatprep.mubr.bf16.mxu0 0
    %2279 = vmatmul.mubr.bf16.gmra.mxu0 %v1087
    %v2280 = vpop.f32.mrf.mxu0
    %v2281 = vpop.f32.mrf.mxu0
    %v2282 = vpop.f32.mrf.mxu0
    %v2283 = vadd.f32 0.0, %v2282
    %v2284 = vpop.f32.mrf.mxu0
    %v2285 = vadd.f32 0.0, %v2284
    %2286 = vmatprep.mubr.bf16.mxu0 0
    %2287 = vmatmul.mubr.bf16.gmra.mxu0 %v1088
    %v2288 = vpop.f32.mrf.mxu0
    %v2289 = vadd.f32 0.0, %v2288
    %v2290 = vpop.f32.mrf.mxu0
    %v2291 = vadd.f32 0.0, %v2290
    %v2292 = vpop.f32.mrf.mxu0
    %v2293 = vadd.f32 0.0, %v2292
    %v2294 = vpop.f32.mrf.mxu0
    %v2295 = vadd.f32 0.0, %v2294
    %2296 = vmatprep.mubr.bf16.mxu0 0
    %2297 = vmatmul.mubr.bf16.gmra.mxu0 %v1089
    %v2298 = vpop.f32.mrf.mxu0
    %v2299 = vadd.f32 0.0, %v2298
    %v2300 = vpop.f32.mrf.mxu0
    %v2301 = vadd.f32 0.0, %v2300
    %v2302 = vpop.f32.mrf.mxu0
    %v2303 = vadd.f32 0.0, %v2302
    %v2304 = vpop.f32.mrf.mxu0
    %v2305 = vadd.f32 0.0, %v2304
    %2306 = vmatprep.mubr.bf16.mxu0 0
    %2307 = vmatmul.mubr.bf16.gmra.mxu0 %v1090
    %v2308 = vpop.f32.mrf.mxu0
    %v2309 = vadd.f32 0.0, %v2308
    %v2310 = vpop.f32.mrf.mxu0
    %v2311 = vadd.f32 0.0, %v2310
    %v2312 = vpop.f32.mrf.mxu0
    %v2313 = vadd.f32 0.0, %v2312
    %v2314 = vpop.f32.mrf.mxu0
    %v2315 = vadd.f32 0.0, %v2314
    %2316 = vmatprep.mubr.bf16.mxu0 0
    %2317 = vmatmul.mubr.bf16.gmra.mxu0 %v1091
    %v2318 = vpop.f32.mrf.mxu0
    %v2319 = vadd.f32 0.0, %v2318
    %v2320 = vpop.f32.mrf.mxu0
    %v2321 = vadd.f32 0.0, %v2320
    %v2322 = vpop.f32.mrf.mxu0
    %v2323 = vpop.f32.mrf.mxu0
    %2324 = vmatprep.mubr.bf16.mxu0 0
    %2325 = vmatmul.mubr.bf16.gmra.mxu0 %v1092
    %v2326 = vpop.f32.mrf.mxu0
    %v2327 = vadd.f32 0.0, %v2326
    %v2328 = vpop.f32.mrf.mxu0
    %v2329 = vadd.f32 0.0, %v2328
    %v2330 = vpop.f32.mrf.mxu0
    %v2331 = vadd.f32 0.0, %v2330
    %v2332 = vpop.f32.mrf.mxu0
    %v2333 = vadd.f32 0.0, %v2332
    %2334 = vmatprep.mubr.bf16.mxu0 0
    %2335 = vmatmul.mubr.bf16.gmra.mxu0 %v1093
    %v2336 = vpop.f32.mrf.mxu0
    %v2337 = vadd.f32 0.0, %v2336
    %v2338 = vpop.f32.mrf.mxu0
    %v2339 = vadd.f32 0.0, %v2338
    %v2340 = vpop.f32.mrf.mxu0
    %v2341 = vadd.f32 0.0, %v2340
    %v2342 = vpop.f32.mrf.mxu0
    %v2343 = vadd.f32 0.0, %v2342
    %2344 = vmatprep.mubr.bf16.mxu0 0
    %2345 = vmatmul.mubr.bf16.gmra.mxu0 %v1094
    %v2346 = vpop.f32.mrf.mxu0
    %v2347 = vadd.f32 0.0, %v2346
    %v2348 = vpop.f32.mrf.mxu0
    %v2349 = vadd.f32 0.0, %v2348
    %v2350 = vpop.f32.mrf.mxu0
    %v2351 = vadd.f32 0.0, %v2350
    %v2352 = vpop.f32.mrf.mxu0
    %v2353 = vadd.f32 0.0, %v2352
    %2354 = vmatprep.mubr.bf16.mxu0 0
    %2355 = vmatmul.mubr.bf16.gmra.mxu0 %v1095
    %v2356 = vpop.f32.mrf.mxu0
    %v2357 = vadd.f32 0.0, %v2356
    %v2358 = vpop.f32.mrf.mxu0
    %v2359 = vadd.f32 0.0, %v2358
    %v2360 = vpop.f32.mrf.mxu0
    %v2361 = vadd.f32 0.0, %v2360
    %v2362 = vpop.f32.mrf.mxu0
    %v2363 = vadd.f32 0.0, %v2362
    %2364 = vmatprep.mubr.bf16.mxu0 0
    %2365 = vmatmul.mubr.bf16.gmra.mxu0 %v1096
    %v2366 = vpop.f32.mrf.mxu0
    %v2367 = vpop.f32.mrf.mxu0
    %v2368 = vpop.f32.mrf.mxu0
    %v2369 = vadd.f32 0.0, %v2368
    %v2370 = vpop.f32.mrf.mxu0
    %v2371 = vadd.f32 0.0, %v2370
    %2372 = vmatprep.mubr.bf16.mxu0 0
    %2373 = vmatmul.mubr.bf16.gmra.mxu0 %v1097
    %v2374 = vpop.f32.mrf.mxu0
    %v2375 = vadd.f32 0.0, %v2374
    %v2376 = vpop.f32.mrf.mxu0
    %v2377 = vadd.f32 0.0, %v2376
    %v2378 = vpop.f32.mrf.mxu0
    %v2379 = vadd.f32 0.0, %v2378
    %v2380 = vpop.f32.mrf.mxu0
    %v2381 = vadd.f32 0.0, %v2380
    %2382 = vmatprep.mubr.bf16.mxu0 0
    %2383 = vmatmul.mubr.bf16.gmra.mxu0 %v1098
    %v2384 = vpop.f32.mrf.mxu0
    %v2385 = vadd.f32 0.0, %v2384
    %v2386 = vpop.f32.mrf.mxu0
    %v2387 = vadd.f32 0.0, %v2386
    %v2388 = vpop.f32.mrf.mxu0
    %v2389 = vadd.f32 0.0, %v2388
    %v2390 = vpop.f32.mrf.mxu0
    %v2391 = vadd.f32 0.0, %v2390
    %2392 = vmatprep.mubr.bf16.mxu0 0
    %2393 = vmatmul.mubr.bf16.gmra.mxu0 %v1099
    %v2394 = vpop.f32.mrf.mxu0
    %v2395 = vadd.f32 0.0, %v2394
    %v2396 = vpop.f32.mrf.mxu0
    %v2397 = vadd.f32 0.0, %v2396
    %v2398 = vpop.f32.mrf.mxu0
    %v2399 = vadd.f32 0.0, %v2398
    %v2400 = vpop.f32.mrf.mxu0
    %v2401 = vadd.f32 0.0, %v2400
    %2402 = vmatprep.mubr.bf16.mxu0 0
    %2403 = vmatmul.mubr.bf16.gmra.mxu0 %v1100
    %v2404 = vpop.f32.mrf.mxu0
    %v2405 = vadd.f32 0.0, %v2404
    %v2406 = vpop.f32.mrf.mxu0
    %v2407 = vadd.f32 0.0, %v2406
    %v2408 = vpop.f32.mrf.mxu0
    %v2409 = vpop.f32.mrf.mxu0
    %2410 = vmatprep.mubr.bf16.mxu0 0
    %2411 = vmatmul.mubr.bf16.gmra.mxu0 %v1101
    %v2412 = vpop.f32.mrf.mxu0
    %v2413 = vadd.f32 0.0, %v2412
    %v2414 = vpop.f32.mrf.mxu0
    %v2415 = vadd.f32 0.0, %v2414
    %v2416 = vpop.f32.mrf.mxu0
    %v2417 = vadd.f32 0.0, %v2416
    %v2418 = vpop.f32.mrf.mxu0
    %v2419 = vadd.f32 0.0, %v2418
    %2420 = vmatprep.mubr.bf16.mxu0 0
    %2421 = vmatmul.mubr.bf16.gmra.mxu0 %v1102
    %v2422 = vpop.f32.mrf.mxu0
    %v2423 = vadd.f32 0.0, %v2422
    %v2424 = vpop.f32.mrf.mxu0
    %v2425 = vadd.f32 0.0, %v2424
    %v2426 = vpop.f32.mrf.mxu0
    %v2427 = vadd.f32 0.0, %v2426
    %v2428 = vpop.f32.mrf.mxu0
    %v2429 = vadd.f32 0.0, %v2428
    %2430 = vmatprep.mubr.bf16.mxu0 0
    %2431 = vmatmul.mubr.bf16.gmra.mxu0 %v1103
    %v2432 = vpop.f32.mrf.mxu0
    %v2433 = vadd.f32 0.0, %v2432
    %v2434 = vpop.f32.mrf.mxu0
    %v2435 = vadd.f32 0.0, %v2434
    %v2436 = vpop.f32.mrf.mxu0
    %v2437 = vadd.f32 0.0, %v2436
    %v2438 = vpop.f32.mrf.mxu0
    %v2439 = vadd.f32 0.0, %v2438
    %2440 = vmatprep.mubr.bf16.mxu0 0
    %2441 = vmatmul.mubr.bf16.gmra.mxu0 %v1104
    %v2442 = vpop.f32.mrf.mxu0
    %v2443 = vadd.f32 0.0, %v2442
    %v2444 = vpop.f32.mrf.mxu0
    %v2445 = vadd.f32 0.0, %v2444
    %v2446 = vpop.f32.mrf.mxu0
    %v2447 = vadd.f32 0.0, %v2446
    %v2448 = vpop.f32.mrf.mxu0
    %v2449 = vadd.f32 0.0, %v2448
    %2450 = vmatprep.mubr.bf16.mxu0 0
    %2451 = vmatmul.mubr.bf16.gmra.mxu0 %v1105
    %v2452 = vpop.f32.mrf.mxu0
    %v2453 = vpop.f32.mrf.mxu0
    %v2454 = vpop.f32.mrf.mxu0
    %v2455 = vadd.f32 0.0, %v2454
    %v2456 = vpop.f32.mrf.mxu0
    %v2457 = vadd.f32 0.0, %v2456
    %2458 = vmatprep.mubr.bf16.mxu0 0
    %2459 = vmatmul.mubr.bf16.gmra.mxu0 %v1106
    %v2460 = vpop.f32.mrf.mxu0
    %v2461 = vadd.f32 0.0, %v2460
    %v2462 = vpop.f32.mrf.mxu0
    %v2463 = vadd.f32 0.0, %v2462
    %v2464 = vpop.f32.mrf.mxu0
    %v2465 = vadd.f32 0.0, %v2464
    %v2466 = vpop.f32.mrf.mxu0
    %v2467 = vadd.f32 0.0, %v2466
    %2468 = vmatprep.mubr.bf16.mxu0 0
    %2469 = vmatmul.mubr.bf16.gmra.mxu0 %v1107
    %v2470 = vpop.f32.mrf.mxu0
    %v2471 = vadd.f32 0.0, %v2470
    %v2472 = vpop.f32.mrf.mxu0
    %v2473 = vadd.f32 0.0, %v2472
    %v2474 = vpop.f32.mrf.mxu0
    %v2475 = vadd.f32 0.0, %v2474
    %v2476 = vpop.f32.mrf.mxu0
    %v2477 = vadd.f32 0.0, %v2476
    %2478 = vmatprep.mubr.bf16.mxu0 0
    %2479 = vmatmul.mubr.bf16.gmra.mxu0 %v1108
    %v2480 = vpop.f32.mrf.mxu0
    %v2481 = vadd.f32 0.0, %v2480
    %v2482 = vpop.f32.mrf.mxu0
    %v2483 = vadd.f32 0.0, %v2482
    %v2484 = vpop.f32.mrf.mxu0
    %v2485 = vadd.f32 0.0, %v2484
    %v2486 = vpop.f32.mrf.mxu0
    %v2487 = vadd.f32 0.0, %v2486
    %2488 = vmatprep.mubr.bf16.mxu0 0
    %2489 = vmatmul.mubr.bf16.gmra.mxu0 %v1109
    %v2490 = vpop.f32.mrf.mxu0
    %v2491 = vadd.f32 0.0, %v2490
    %v2492 = vpop.f32.mrf.mxu0
    %v2493 = vadd.f32 0.0, %v2492
    %v2494 = vpop.f32.mrf.mxu0
    %v2495 = vpop.f32.mrf.mxu0
    %2496 = vmatprep.mubr.bf16.mxu0 0
    %2497 = vmatmul.mubr.bf16.gmra.mxu0 %v1110
    %v2498 = vpop.f32.mrf.mxu0
    %v2499 = vadd.f32 0.0, %v2498
    %v2500 = vpop.f32.mrf.mxu0
    %v2501 = vadd.f32 0.0, %v2500
    %v2502 = vpop.f32.mrf.mxu0
    %v2503 = vadd.f32 0.0, %v2502
    %v2504 = vpop.f32.mrf.mxu0
    %v2505 = vadd.f32 0.0, %v2504
    %2506 = vmatprep.mubr.bf16.mxu0 0
    %2507 = vmatmul.mubr.bf16.gmra.mxu0 %v1111
    %v2508 = vpop.f32.mrf.mxu0
    %v2509 = vadd.f32 0.0, %v2508
    %v2510 = vpop.f32.mrf.mxu0
    %v2511 = vadd.f32 0.0, %v2510
    %v2512 = vpop.f32.mrf.mxu0
    %v2513 = vadd.f32 0.0, %v2512
    %v2514 = vpop.f32.mrf.mxu0
    %v2515 = vadd.f32 0.0, %v2514
    %2516 = vmatprep.mubr.bf16.mxu0 0
    %2517 = vmatmul.mubr.bf16.gmra.mxu0 %v1112
    %v2518 = vpop.f32.mrf.mxu0
    %v2519 = vadd.f32 0.0, %v2518
    %v2520 = vpop.f32.mrf.mxu0
    %v2521 = vadd.f32 0.0, %v2520
    %v2522 = vpop.f32.mrf.mxu0
    %v2523 = vadd.f32 0.0, %v2522
    %v2524 = vpop.f32.mrf.mxu0
    %v2525 = vadd.f32 0.0, %v2524
    %2526 = vmatprep.mubr.bf16.mxu0 0
    %2527 = vmatmul.mubr.bf16.gmra.mxu0 %v1113
    %v2528 = vpop.f32.mrf.mxu0
    %v2529 = vadd.f32 0.0, %v2528
    %v2530 = vpop.f32.mrf.mxu0
    %v2531 = vadd.f32 0.0, %v2530
    %v2532 = vpop.f32.mrf.mxu0
    %v2533 = vadd.f32 0.0, %v2532
    %v2534 = vpop.f32.mrf.mxu0
    %v2535 = vadd.f32 0.0, %v2534
    %2536 = vmatprep.mubr.bf16.mxu0 0
    %2537 = vmatmul.mubr.bf16.gmra.mxu0 %v1114
    %v2538 = vpop.f32.mrf.mxu0
    %v2539 = vpop.f32.mrf.mxu0
    %v2540 = vpop.f32.mrf.mxu0
    %v2541 = vadd.f32 0.0, %v2540
    %v2542 = vpop.f32.mrf.mxu0
    %v2543 = vadd.f32 0.0, %v2542
    %2544 = vmatprep.mubr.bf16.mxu0 0
    %2545 = vmatmul.mubr.bf16.gmra.mxu0 %v1115
    %v2546 = vpop.f32.mrf.mxu0
    %v2547 = vadd.f32 0.0, %v2546
    %v2548 = vpop.f32.mrf.mxu0
    %v2549 = vadd.f32 0.0, %v2548
    %v2550 = vpop.f32.mrf.mxu0
    %v2551 = vadd.f32 0.0, %v2550
    %v2552 = vpop.f32.mrf.mxu0
    %v2553 = vadd.f32 0.0, %v2552
    %2554 = vmatprep.mubr.bf16.mxu0 0
    %2555 = vmatmul.mubr.bf16.gmra.mxu0 %v1116
    %v2556 = vpop.f32.mrf.mxu0
    %v2557 = vadd.f32 0.0, %v2556
    %v2558 = vpop.f32.mrf.mxu0
    %v2559 = vadd.f32 0.0, %v2558
    %v2560 = vpop.f32.mrf.mxu0
    %v2561 = vadd.f32 0.0, %v2560
    %v2562 = vpop.f32.mrf.mxu0
    %v2563 = vadd.f32 0.0, %v2562
    %2564 = vmatprep.mubr.bf16.mxu0 0
    %2565 = vmatmul.mubr.bf16.gmra.mxu0 %v1117
    %v2566 = vpop.f32.mrf.mxu0
    %v2567 = vadd.f32 0.0, %v2566
    %v2568 = vpop.f32.mrf.mxu0
    %v2569 = vadd.f32 0.0, %v2568
    %v2570 = vpop.f32.mrf.mxu0
    %v2571 = vadd.f32 0.0, %v2570
    %v2572 = vpop.f32.mrf.mxu0
    %v2573 = vadd.f32 0.0, %v2572
    %2574 = vmatprep.mubr.bf16.mxu0 0
    %2575 = vmatmul.mubr.bf16.gmra.mxu0 %v1118
    %v2576 = vpop.f32.mrf.mxu0
    %v2577 = vadd.f32 0.0, %v2576
    %v2578 = vpop.f32.mrf.mxu0
    %v2579 = vadd.f32 0.0, %v2578
    %v2580 = vpop.f32.mrf.mxu0
    %v2581 = vpop.f32.mrf.mxu0
    %2582 = vmatprep.mubr.bf16.mxu0 0
    %2583 = vmatmul.mubr.bf16.gmra.mxu0 %v1119
    %v2584 = vpop.f32.mrf.mxu0
    %v2585 = vadd.f32 0.0, %v2584
    %v2586 = vpop.f32.mrf.mxu0
    %v2587 = vadd.f32 0.0, %v2586
    %v2588 = vpop.f32.mrf.mxu0
    %v2589 = vadd.f32 0.0, %v2588
    %v2590 = vpop.f32.mrf.mxu0
    %v2591 = vadd.f32 0.0, %v2590
    %2592 = vmatprep.mubr.bf16.mxu0 0
    %2593 = vmatmul.mubr.bf16.gmra.mxu0 %v1120
    %v2594 = vpop.f32.mrf.mxu0
    %v2595 = vadd.f32 0.0, %v2594
    %v2596 = vpop.f32.mrf.mxu0
    %v2597 = vadd.f32 0.0, %v2596
    %v2598 = vpop.f32.mrf.mxu0
    %v2599 = vadd.f32 0.0, %v2598
    %v2600 = vpop.f32.mrf.mxu0
    %v2601 = vadd.f32 0.0, %v2600
    %2602 = vmatprep.mubr.bf16.mxu0 0
    %2603 = vmatmul.mubr.bf16.gmra.mxu0 %v1121
    %v2604 = vpop.f32.mrf.mxu0
    %v2605 = vadd.f32 0.0, %v2604
    %v2606 = vpop.f32.mrf.mxu0
    %v2607 = vadd.f32 0.0, %v2606
    %v2608 = vpop.f32.mrf.mxu0
    %v2609 = vadd.f32 0.0, %v2608
    %v2610 = vpop.f32.mrf.mxu0
    %v2611 = vadd.f32 0.0, %v2610
    %2612 = vmatprep.mubr.bf16.mxu0 0
    %2613 = vmatmul.mubr.bf16.gmra.mxu0 %v1122
    %v2614 = vpop.f32.mrf.mxu0
    %v2615 = vadd.f32 0.0, %v2614
    %v2616 = vpop.f32.mrf.mxu0
    %v2617 = vadd.f32 0.0, %v2616
    %v2618 = vpop.f32.mrf.mxu0
    %v2619 = vadd.f32 0.0, %v2618
    %v2620 = vpop.f32.mrf.mxu0
    %v2621 = vadd.f32 0.0, %v2620
    %2622 = vmatprep.mubr.bf16.mxu0 0
    %2623 = vmatmul.mubr.bf16.gmra.mxu0 %v1123
    %v2624 = vpop.f32.mrf.mxu0
    %v2625 = vpop.f32.mrf.mxu0
    %v2626 = vpop.f32.mrf.mxu0
    %v2627 = vadd.f32 0.0, %v2626
    %v2628 = vpop.f32.mrf.mxu0
    %v2629 = vadd.f32 0.0, %v2628
    %2630 = vmatprep.mubr.bf16.mxu0 0
    %2631 = vmatmul.mubr.bf16.gmra.mxu0 %v1124
    %v2632 = vpop.f32.mrf.mxu0
    %v2633 = vadd.f32 0.0, %v2632
    %v2634 = vpop.f32.mrf.mxu0
    %v2635 = vadd.f32 0.0, %v2634
    %v2636 = vpop.f32.mrf.mxu0
    %v2637 = vadd.f32 0.0, %v2636
    %v2638 = vpop.f32.mrf.mxu0
    %v2639 = vadd.f32 0.0, %v2638
    %2640 = vmatprep.mubr.bf16.mxu0 0
    %2641 = vmatmul.mubr.bf16.gmra.mxu0 %v1125
    %v2642 = vpop.f32.mrf.mxu0
    %v2643 = vadd.f32 0.0, %v2642
    %v2644 = vpop.f32.mrf.mxu0
    %v2645 = vadd.f32 0.0, %v2644
    %v2646 = vpop.f32.mrf.mxu0
    %v2647 = vadd.f32 0.0, %v2646
    %v2648 = vpop.f32.mrf.mxu0
    %v2649 = vadd.f32 0.0, %v2648
    %2650 = vmatprep.mubr.bf16.mxu0 0
    %2651 = vmatmul.mubr.bf16.gmra.mxu0 %v1126
    %v2652 = vpop.f32.mrf.mxu0
    %v2653 = vadd.f32 0.0, %v2652
    %v2654 = vpop.f32.mrf.mxu0
    %v2655 = vadd.f32 0.0, %v2654
    %v2656 = vpop.f32.mrf.mxu0
    %v2657 = vadd.f32 0.0, %v2656
    %v2658 = vpop.f32.mrf.mxu0
    %v2659 = vadd.f32 0.0, %v2658
    %2660 = vmatprep.mubr.bf16.mxu0 0
    %2661 = vmatmul.mubr.bf16.gmra.mxu0 %v1127
    %v2662 = vpop.f32.mrf.mxu0
    %v2663 = vadd.f32 0.0, %v2662
    %v2664 = vpop.f32.mrf.mxu0
    %v2665 = vadd.f32 0.0, %v2664
    %v2666 = vpop.f32.mrf.mxu0
    %v2667 = vpop.f32.mrf.mxu0
    %2668 = vmatprep.mubr.bf16.mxu0 0
    %2669 = vmatmul.mubr.bf16.gmra.mxu0 %v1128
    %v2670 = vpop.f32.mrf.mxu0
    %v2671 = vadd.f32 0.0, %v2670
    %v2672 = vpop.f32.mrf.mxu0
    %v2673 = vadd.f32 0.0, %v2672
    %v2674 = vpop.f32.mrf.mxu0
    %v2675 = vadd.f32 0.0, %v2674
    %v2676 = vpop.f32.mrf.mxu0
    %v2677 = vadd.f32 0.0, %v2676
    %2678 = vmatprep.mubr.bf16.mxu0 0
    %2679 = vmatmul.mubr.bf16.gmra.mxu0 %v1129
    %v2680 = vpop.f32.mrf.mxu0
    %v2681 = vadd.f32 0.0, %v2680
    %v2682 = vpop.f32.mrf.mxu0
    %v2683 = vadd.f32 0.0, %v2682
    %v2684 = vpop.f32.mrf.mxu0
    %v2685 = vadd.f32 0.0, %v2684
    %v2686 = vpop.f32.mrf.mxu0
    %v2687 = vadd.f32 0.0, %v2686
    %2688 = vmatprep.mubr.bf16.mxu0 0
    %2689 = vmatmul.mubr.bf16.gmra.mxu0 %v1130
    %v2690 = vpop.f32.mrf.mxu0
    %v2691 = vadd.f32 0.0, %v2690
    %v2692 = vpop.f32.mrf.mxu0
    %v2693 = vadd.f32 0.0, %v2692
    %v2694 = vpop.f32.mrf.mxu0
    %v2695 = vadd.f32 0.0, %v2694
    %v2696 = vpop.f32.mrf.mxu0
    %v2697 = vadd.f32 0.0, %v2696
    %2698 = vmatprep.mubr.bf16.mxu0 0
    %2699 = vmatmul.mubr.bf16.gmra.mxu0 %v1131
    %v2700 = vpop.f32.mrf.mxu0
    %v2701 = vadd.f32 0.0, %v2700
    %v2702 = vpop.f32.mrf.mxu0
    %v2703 = vadd.f32 0.0, %v2702
    %v2704 = vpop.f32.mrf.mxu0
    %v2705 = vadd.f32 0.0, %v2704
    %v2706 = vpop.f32.mrf.mxu0
    %v2707 = vadd.f32 0.0, %v2706
    %2708 = vmatprep.mubr.bf16.mxu0 0
    %2709 = vmatmul.mubr.bf16.gmra.mxu0 %v1132
    %v2710 = vpop.f32.mrf.mxu0
    %v2711 = vpop.f32.mrf.mxu0
    %v2712 = vpop.f32.mrf.mxu0
    %v2713 = vadd.f32 0.0, %v2712
    %v2714 = vpop.f32.mrf.mxu0
    %v2715 = vadd.f32 0.0, %v2714
    %2716 = vmatprep.mubr.bf16.mxu0 0
    %2717 = vmatmul.mubr.bf16.gmra.mxu0 %v1133
    %v2718 = vpop.f32.mrf.mxu0
    %v2719 = vadd.f32 0.0, %v2718
    %v2720 = vpop.f32.mrf.mxu0
    %v2721 = vadd.f32 0.0, %v2720
    %v2722 = vpop.f32.mrf.mxu0
    %v2723 = vadd.f32 0.0, %v2722
    %v2724 = vpop.f32.mrf.mxu0
    %v2725 = vadd.f32 0.0, %v2724
    %2726 = vmatprep.mubr.bf16.mxu0 0
    %2727 = vmatmul.mubr.bf16.gmra.mxu0 %v1134
    %v2728 = vpop.f32.mrf.mxu0
    %v2729 = vadd.f32 0.0, %v2728
    %v2730 = vpop.f32.mrf.mxu0
    %v2731 = vadd.f32 0.0, %v2730
    %v2732 = vpop.f32.mrf.mxu0
    %v2733 = vadd.f32 0.0, %v2732
    %v2734 = vpop.f32.mrf.mxu0
    %v2735 = vadd.f32 0.0, %v2734
    %2736 = vmatprep.mubr.bf16.mxu0 0
    %2737 = vmatmul.mubr.bf16.gmra.mxu0 %v1135
    %v2738 = vpop.f32.mrf.mxu0
    %v2739 = vadd.f32 0.0, %v2738
    %v2740 = vpop.f32.mrf.mxu0
    %v2741 = vadd.f32 0.0, %v2740
    %v2742 = vpop.f32.mrf.mxu0
    %v2743 = vadd.f32 0.0, %v2742
    %v2744 = vpop.f32.mrf.mxu0
    %v2745 = vadd.f32 0.0, %v2744
    %2746 = vmatprep.mubr.bf16.mxu0 0
    %2747 = vmatmul.mubr.bf16.gmra.mxu0 %v1136
    %v2748 = vpop.f32.mrf.mxu0
    %v2749 = vadd.f32 0.0, %v2748
    %v2750 = vpop.f32.mrf.mxu0
    %v2751 = vadd.f32 0.0, %v2750
    %v2752 = vpop.f32.mrf.mxu0
    %v2753 = vpop.f32.mrf.mxu0
    %2754 = vdwg.mxu0
    %v2755 = vmul.f32 %v1332, %v51
    %v2756 = vmul.f32 %v1334, %v52
    %v2757 = vmul.f32 %v2069, %v53
    %v2758 = vmul.f32 %v2071, %v54
    %v2759 = vmul.f32 %v1336, %v51
    %v2760 = vmul.f32 %v1338, %v52
    %v2761 = vmul.f32 %v2073, %v53
    %v2762 = vmul.f32 %v2075, %v54
    %v2763 = vmul.f32 %v1342, %v51
    %v2764 = vmul.f32 %v1344, %v52
    %v2765 = vmul.f32 %v2079, %v53
    %v2766 = vmul.f32 %v2081, %v54
    %v2767 = vmul.f32 %v1346, %v51
    %v2768 = vmul.f32 %v1348, %v52
    %v2769 = vmul.f32 %v2083, %v53
    %v2770 = vmul.f32 %v2085, %v54
    %v2771 = vmul.f32 %v1352, %v51
    %v2772 = vmul.f32 %v1354, %v52
    %v2773 = vmul.f32 %v2089, %v53
    %v2774 = vmul.f32 %v2091, %v54
    %v2775 = vmul.f32 %v1356, %v51
    %v2776 = vmul.f32 %v1358, %v52
    %v2777 = vmul.f32 %v2093, %v53
    %v2778 = vmul.f32 %v2095, %v54
    %v2779 = vmul.f32 %v1362, %v51
    %v2780 = vmul.f32 %v1364, %v52
    %v2781 = vmul.f32 %v2099, %v53
    %v2782 = vmul.f32 %v2101, %v54
    %v2783 = vmul.f32 %v1366, %v51
    %v2784 = vmul.f32 %v1368, %v52
    %v2785 = vmul.f32 %v2103, %v53
    %v2786 = vmul.f32 %v2105, %v54
    %v2787 = vmul.f32 %v1372, %v51
    %v2788 = vmul.f32 %v1375, %v51
    %v2789 = vmul.f32 %v1377, %v52
    %v2790 = vmul.f32 %v2111, %v53
    %v2791 = vmul.f32 %v2113, %v54
    %v2792 = vmul.f32 %v1381, %v51
    %v2793 = vmul.f32 %v1383, %v52
    %v2794 = vmul.f32 %v2117, %v53
    %v2795 = vmul.f32 %v2119, %v54
    %v2796 = vmul.f32 %v1385, %v51
    %v2797 = vmul.f32 %v1387, %v52
    %v2798 = vmul.f32 %v2121, %v53
    %v2799 = vmul.f32 %v2123, %v54
    %v2800 = vmul.f32 %v1391, %v51
    %v2801 = vmul.f32 %v1393, %v52
    %v2802 = vmul.f32 %v2127, %v53
    %v2803 = vmul.f32 %v2129, %v54
    %v2804 = vmul.f32 %v1395, %v51
    %v2805 = vmul.f32 %v1397, %v52
    %v2806 = vmul.f32 %v2131, %v53
    %v2807 = vmul.f32 %v2133, %v54
    %v2808 = vmul.f32 %v1401, %v51
    %v2809 = vmul.f32 %v1403, %v52
    %v2810 = vmul.f32 %v2137, %v53
    %v2811 = vmul.f32 %v2139, %v54
    %v2812 = vmul.f32 %v1405, %v51
    %v2813 = vmul.f32 %v1407, %v52
    %v2814 = vmul.f32 %v2141, %v53
    %v2815 = vmul.f32 %v2143, %v54
    %v2816 = vmul.f32 %v1411, %v51
    %v2817 = vmul.f32 %v1413, %v52
    %v2818 = vmul.f32 %v2147, %v53
    %v2819 = vmul.f32 %v2149, %v54
    %v2820 = vmul.f32 %v1415, %v51
    %v2821 = vmul.f32 %v1420, %v51
    %v2822 = vmul.f32 %v1422, %v52
    %v2823 = vmul.f32 %v2155, %v53
    %v2824 = vmul.f32 %v2157, %v54
    %v2825 = vmul.f32 %v1424, %v51
    %v2826 = vmul.f32 %v1426, %v52
    %v2827 = vmul.f32 %v2159, %v53
    %v2828 = vmul.f32 %v2161, %v54
    %v2829 = vmul.f32 %v1430, %v51
    %v2830 = vmul.f32 %v1432, %v52
    %v2831 = vmul.f32 %v2165, %v53
    %v2832 = vmul.f32 %v2167, %v54
    %v2833 = vmul.f32 %v1434, %v51
    %v2834 = vmul.f32 %v1436, %v52
    %v2835 = vmul.f32 %v2169, %v53
    %v2836 = vmul.f32 %v2171, %v54
    %v2837 = vmul.f32 %v1440, %v51
    %v2838 = vmul.f32 %v1442, %v52
    %v2839 = vmul.f32 %v2175, %v53
    %v2840 = vmul.f32 %v2177, %v54
    %v2841 = vmul.f32 %v1444, %v51
    %v2842 = vmul.f32 %v1446, %v52
    %v2843 = vmul.f32 %v2179, %v53
    %v2844 = vmul.f32 %v2181, %v54
    %v2845 = vmul.f32 %v1450, %v51
    %v2846 = vmul.f32 %v1452, %v52
    %v2847 = vmul.f32 %v2185, %v53
    %v2848 = vmul.f32 %v2187, %v54
    %v2849 = vmul.f32 %v1454, %v51
    %v2850 = vmul.f32 %v1456, %v52
    %v2851 = vmul.f32 %v2189, %v53
    %v2852 = vmul.f32 %v2191, %v54
    %v2853 = vmul.f32 %v1460, %v51
    %v2854 = vmul.f32 %v1463, %v51
    %v2855 = vmul.f32 %v1465, %v52
    %v2856 = vmul.f32 %v2197, %v53
    %v2857 = vmul.f32 %v2199, %v54
    %v2858 = vmul.f32 %v1469, %v51
    %v2859 = vmul.f32 %v1471, %v52
    %v2860 = vmul.f32 %v2203, %v53
    %v2861 = vmul.f32 %v2205, %v54
    %v2862 = vmul.f32 %v1473, %v51
    %v2863 = vmul.f32 %v1475, %v52
    %v2864 = vmul.f32 %v2207, %v53
    %v2865 = vmul.f32 %v2209, %v54
    %v2866 = vmul.f32 %v1479, %v51
    %v2867 = vmul.f32 %v1481, %v52
    %v2868 = vmul.f32 %v2213, %v53
    %v2869 = vmul.f32 %v2215, %v54
    %v2870 = vmul.f32 %v1483, %v51
    %v2871 = vmul.f32 %v1485, %v52
    %v2872 = vmul.f32 %v2217, %v53
    %v2873 = vmul.f32 %v2219, %v54
    %v2874 = vmul.f32 %v1489, %v51
    %v2875 = vmul.f32 %v1491, %v52
    %v2876 = vmul.f32 %v2223, %v53
    %v2877 = vmul.f32 %v2225, %v54
    %v2878 = vmul.f32 %v1493, %v51
    %v2879 = vmul.f32 %v1495, %v52
    %v2880 = vmul.f32 %v2227, %v53
    %v2881 = vmul.f32 %v2229, %v54
    %v2882 = vmul.f32 %v1499, %v51
    %v2883 = vmul.f32 %v1501, %v52
    %v2884 = vmul.f32 %v2233, %v53
    %v2885 = vmul.f32 %v2235, %v54
    %v2886 = vmul.f32 %v1503, %v51
    %v2887 = vmul.f32 %v1508, %v51
    %v2888 = vmul.f32 %v1510, %v52
    %v2889 = vmul.f32 %v2241, %v53
    %v2890 = vmul.f32 %v2243, %v54
    %v2891 = vmul.f32 %v1512, %v51
    %v2892 = vmul.f32 %v1514, %v52
    %v2893 = vmul.f32 %v2245, %v53
    %v2894 = vmul.f32 %v2247, %v54
    %v2895 = vmul.f32 %v1518, %v51
    %v2896 = vmul.f32 %v1520, %v52
    %v2897 = vmul.f32 %v2251, %v53
    %v2898 = vmul.f32 %v2253, %v54
    %v2899 = vmul.f32 %v1522, %v51
    %v2900 = vmul.f32 %v1524, %v52
    %v2901 = vmul.f32 %v2255, %v53
    %v2902 = vmul.f32 %v2257, %v54
    %v2903 = vmul.f32 %v1528, %v51
    %v2904 = vmul.f32 %v1530, %v52
    %v2905 = vmul.f32 %v2261, %v53
    %v2906 = vmul.f32 %v2263, %v54
    %v2907 = vmul.f32 %v1532, %v51
    %v2908 = vmul.f32 %v1534, %v52
    %v2909 = vmul.f32 %v2265, %v53
    %v2910 = vmul.f32 %v2267, %v54
    %v2911 = vmul.f32 %v1538, %v51
    %v2912 = vmul.f32 %v1540, %v52
    %v2913 = vmul.f32 %v2271, %v53
    %v2914 = vmul.f32 %v2273, %v54
    %v2915 = vmul.f32 %v1542, %v51
    %v2916 = vmul.f32 %v1544, %v52
    %v2917 = vmul.f32 %v2275, %v53
    %v2918 = vmul.f32 %v2277, %v54
    %v2919 = vmul.f32 %v1548, %v51
    %v2920 = vmul.f32 %v1551, %v51
    %v2921 = vmul.f32 %v1553, %v52
    %v2922 = vmul.f32 %v2283, %v53
    %v2923 = vmul.f32 %v2285, %v54
    %v2924 = vmul.f32 %v1557, %v51
    %v2925 = vmul.f32 %v1559, %v52
    %v2926 = vmul.f32 %v2289, %v53
    %v2927 = vmul.f32 %v2291, %v54
    %v2928 = vmul.f32 %v1561, %v51
    %v2929 = vmul.f32 %v1563, %v52
    %v2930 = vmul.f32 %v2293, %v53
    %v2931 = vmul.f32 %v2295, %v54
    %v2932 = vmul.f32 %v1567, %v51
    %v2933 = vmul.f32 %v1569, %v52
    %v2934 = vmul.f32 %v2299, %v53
    %v2935 = vmul.f32 %v2301, %v54
    %v2936 = vmul.f32 %v1571, %v51
    %v2937 = vmul.f32 %v1573, %v52
    %v2938 = vmul.f32 %v2303, %v53
    %v2939 = vmul.f32 %v2305, %v54
    %v2940 = vmul.f32 %v1577, %v51
    %v2941 = vmul.f32 %v1579, %v52
    %v2942 = vmul.f32 %v2309, %v53
    %v2943 = vmul.f32 %v2311, %v54
    %v2944 = vmul.f32 %v1581, %v51
    %v2945 = vmul.f32 %v1583, %v52
    %v2946 = vmul.f32 %v2313, %v53
    %v2947 = vmul.f32 %v2315, %v54
    %v2948 = vmul.f32 %v1587, %v51
    %v2949 = vmul.f32 %v1589, %v52
    %v2950 = vmul.f32 %v2319, %v53
    %v2951 = vmul.f32 %v2321, %v54
    %v2952 = vmul.f32 %v1591, %v51
    %v2953 = vmul.f32 %v1596, %v51
    %v2954 = vmul.f32 %v1598, %v52
    %v2955 = vmul.f32 %v2327, %v53
    %v2956 = vmul.f32 %v2329, %v54
    %v2957 = vmul.f32 %v1600, %v51
    %v2958 = vmul.f32 %v1602, %v52
    %v2959 = vmul.f32 %v2331, %v53
    %v2960 = vmul.f32 %v2333, %v54
    %v2961 = vmul.f32 %v1606, %v51
    %v2962 = vmul.f32 %v1608, %v52
    %v2963 = vmul.f32 %v2337, %v53
    %v2964 = vmul.f32 %v2339, %v54
    %v2965 = vmul.f32 %v1610, %v51
    %v2966 = vmul.f32 %v1612, %v52
    %v2967 = vmul.f32 %v2341, %v53
    %v2968 = vmul.f32 %v2343, %v54
    %v2969 = vmul.f32 %v1616, %v51
    %v2970 = vmul.f32 %v1618, %v52
    %v2971 = vmul.f32 %v2347, %v53
    %v2972 = vmul.f32 %v2349, %v54
    %v2973 = vmul.f32 %v1620, %v51
    %v2974 = vmul.f32 %v1622, %v52
    %v2975 = vmul.f32 %v2351, %v53
    %v2976 = vmul.f32 %v2353, %v54
    %v2977 = vmul.f32 %v1626, %v51
    %v2978 = vmul.f32 %v1628, %v52
    %v2979 = vmul.f32 %v2357, %v53
    %v2980 = vmul.f32 %v2359, %v54
    %v2981 = vmul.f32 %v1630, %v51
    %v2982 = vmul.f32 %v1632, %v52
    %v2983 = vmul.f32 %v2361, %v53
    %v2984 = vmul.f32 %v2363, %v54
    %v2985 = vmul.f32 %v1636, %v51
    %v2986 = vmul.f32 %v1639, %v51
    %v2987 = vmul.f32 %v1641, %v52
    %v2988 = vmul.f32 %v2369, %v53
    %v2989 = vmul.f32 %v2371, %v54
    %v2990 = vmul.f32 %v1645, %v51
    %v2991 = vmul.f32 %v1647, %v52
    %v2992 = vmul.f32 %v2375, %v53
    %v2993 = vmul.f32 %v2377, %v54
    %v2994 = vmul.f32 %v1649, %v51
    %v2995 = vmul.f32 %v1651, %v52
    %v2996 = vmul.f32 %v2379, %v53
    %v2997 = vmul.f32 %v2381, %v54
    %v2998 = vmul.f32 %v1655, %v51
    %v2999 = vmul.f32 %v1657, %v52
    %v3000 = vmul.f32 %v2385, %v53
    %v3001 = vmul.f32 %v2387, %v54
    %v3002 = vmul.f32 %v1659, %v51
    %v3003 = vmul.f32 %v1661, %v52
    %v3004 = vmul.f32 %v2389, %v53
    %v3005 = vmul.f32 %v2391, %v54
    %v3006 = vmul.f32 %v1665, %v51
    %v3007 = vmul.f32 %v1667, %v52
    %v3008 = vmul.f32 %v2395, %v53
    %v3009 = vmul.f32 %v2397, %v54
    %v3010 = vmul.f32 %v1669, %v51
    %v3011 = vmul.f32 %v1671, %v52
    %v3012 = vmul.f32 %v2399, %v53
    %v3013 = vmul.f32 %v2401, %v54
    %v3014 = vmul.f32 %v1675, %v51
    %v3015 = vmul.f32 %v1677, %v52
    %v3016 = vmul.f32 %v2405, %v53
    %v3017 = vmul.f32 %v2407, %v54
    %v3018 = vmul.f32 %v1679, %v51
    %v3019 = vmul.f32 %v1684, %v51
    %v3020 = vmul.f32 %v1686, %v52
    %v3021 = vmul.f32 %v2413, %v53
    %v3022 = vmul.f32 %v2415, %v54
    %v3023 = vmul.f32 %v1688, %v51
    %v3024 = vmul.f32 %v1690, %v52
    %v3025 = vmul.f32 %v2417, %v53
    %v3026 = vmul.f32 %v2419, %v54
    %v3027 = vmul.f32 %v1694, %v51
    %v3028 = vmul.f32 %v1696, %v52
    %v3029 = vmul.f32 %v2423, %v53
    %v3030 = vmul.f32 %v2425, %v54
    %v3031 = vmul.f32 %v1698, %v51
    %v3032 = vmul.f32 %v1700, %v52
    %v3033 = vmul.f32 %v2427, %v53
    %v3034 = vmul.f32 %v2429, %v54
    %v3035 = vmul.f32 %v1704, %v51
    %v3036 = vmul.f32 %v1706, %v52
    %v3037 = vmul.f32 %v2433, %v53
    %v3038 = vmul.f32 %v2435, %v54
    %v3039 = vmul.f32 %v1708, %v51
    %v3040 = vmul.f32 %v1710, %v52
    %v3041 = vmul.f32 %v2437, %v53
    %v3042 = vmul.f32 %v2439, %v54
    %v3043 = vmul.f32 %v1714, %v51
    %v3044 = vmul.f32 %v1716, %v52
    %v3045 = vmul.f32 %v2443, %v53
    %v3046 = vmul.f32 %v2445, %v54
    %v3047 = vmul.f32 %v1718, %v51
    %v3048 = vmul.f32 %v1720, %v52
    %v3049 = vmul.f32 %v2447, %v53
    %v3050 = vmul.f32 %v2449, %v54
    %v3051 = vmul.f32 %v1724, %v51
    %v3052 = vmul.f32 %v1727, %v51
    %v3053 = vmul.f32 %v1729, %v52
    %v3054 = vmul.f32 %v2455, %v53
    %v3055 = vmul.f32 %v2457, %v54
    %v3056 = vmul.f32 %v1733, %v51
    %v3057 = vmul.f32 %v1735, %v52
    %v3058 = vmul.f32 %v2461, %v53
    %v3059 = vmul.f32 %v2463, %v54
    %v3060 = vmul.f32 %v1737, %v51
    %v3061 = vmul.f32 %v1739, %v52
    %v3062 = vmul.f32 %v2465, %v53
    %v3063 = vmul.f32 %v2467, %v54
    %v3064 = vmul.f32 %v1743, %v51
    %v3065 = vmul.f32 %v1745, %v52
    %v3066 = vmul.f32 %v2471, %v53
    %v3067 = vmul.f32 %v2473, %v54
    %v3068 = vmul.f32 %v1747, %v51
    %v3069 = vmul.f32 %v1749, %v52
    %v3070 = vmul.f32 %v2475, %v53
    %v3071 = vmul.f32 %v2477, %v54
    %v3072 = vmul.f32 %v1753, %v51
    %v3073 = vmul.f32 %v1755, %v52
    %v3074 = vmul.f32 %v2481, %v53
    %v3075 = vmul.f32 %v2483, %v54
    %v3076 = vmul.f32 %v1757, %v51
    %v3077 = vmul.f32 %v1759, %v52
    %v3078 = vmul.f32 %v2485, %v53
    %v3079 = vmul.f32 %v2487, %v54
    %v3080 = vmul.f32 %v1763, %v51
    %v3081 = vmul.f32 %v1765, %v52
    %v3082 = vmul.f32 %v2491, %v53
    %v3083 = vmul.f32 %v2493, %v54
    %v3084 = vmul.f32 %v1767, %v51
    %v3085 = vmul.f32 %v1772, %v51
    %v3086 = vmul.f32 %v1774, %v52
    %v3087 = vmul.f32 %v2499, %v53
    %v3088 = vmul.f32 %v2501, %v54
    %v3089 = vmul.f32 %v1776, %v51
    %v3090 = vmul.f32 %v1778, %v52
    %v3091 = vmul.f32 %v2503, %v53
    %v3092 = vmul.f32 %v2505, %v54
    %v3093 = vmul.f32 %v1782, %v51
    %v3094 = vmul.f32 %v1784, %v52
    %v3095 = vmul.f32 %v2509, %v53
    %v3096 = vmul.f32 %v2511, %v54
    %v3097 = vmul.f32 %v1786, %v51
    %v3098 = vmul.f32 %v1788, %v52
    %v3099 = vmul.f32 %v2513, %v53
    %v3100 = vmul.f32 %v2515, %v54
    %v3101 = vmul.f32 %v1792, %v51
    %v3102 = vmul.f32 %v1794, %v52
    %v3103 = vmul.f32 %v2519, %v53
    %v3104 = vmul.f32 %v2521, %v54
    %v3105 = vmul.f32 %v1796, %v51
    %v3106 = vmul.f32 %v1798, %v52
    %v3107 = vmul.f32 %v2523, %v53
    %v3108 = vmul.f32 %v2525, %v54
    %v3109 = vmul.f32 %v1802, %v51
    %v3110 = vmul.f32 %v1804, %v52
    %v3111 = vmul.f32 %v2529, %v53
    %v3112 = vmul.f32 %v2531, %v54
    %v3113 = vmul.f32 %v1806, %v51
    %v3114 = vmul.f32 %v1808, %v52
    %v3115 = vmul.f32 %v2533, %v53
    %v3116 = vmul.f32 %v2535, %v54
    %v3117 = vmul.f32 %v1812, %v51
    %v3118 = vmul.f32 %v1815, %v51
    %v3119 = vmul.f32 %v1817, %v52
    %v3120 = vmul.f32 %v2541, %v53
    %v3121 = vmul.f32 %v2543, %v54
    %v3122 = vmul.f32 %v1821, %v51
    %v3123 = vmul.f32 %v1823, %v52
    %v3124 = vmul.f32 %v2547, %v53
    %v3125 = vmul.f32 %v2549, %v54
    %v3126 = vmul.f32 %v1825, %v51
    %v3127 = vmul.f32 %v1827, %v52
    %v3128 = vmul.f32 %v2551, %v53
    %v3129 = vmul.f32 %v2553, %v54
    %v3130 = vmul.f32 %v1831, %v51
    %v3131 = vmul.f32 %v1833, %v52
    %v3132 = vmul.f32 %v2557, %v53
    %v3133 = vmul.f32 %v2559, %v54
    %v3134 = vmul.f32 %v1835, %v51
    %v3135 = vmul.f32 %v1837, %v52
    %v3136 = vmul.f32 %v2561, %v53
    %v3137 = vmul.f32 %v2563, %v54
    %v3138 = vmul.f32 %v1841, %v51
    %v3139 = vmul.f32 %v1843, %v52
    %v3140 = vmul.f32 %v2567, %v53
    %v3141 = vmul.f32 %v2569, %v54
    %v3142 = vmul.f32 %v1845, %v51
    %v3143 = vmul.f32 %v1847, %v52
    %v3144 = vmul.f32 %v2571, %v53
    %v3145 = vmul.f32 %v2573, %v54
    %v3146 = vmul.f32 %v1851, %v51
    %v3147 = vmul.f32 %v1853, %v52
    %v3148 = vmul.f32 %v2577, %v53
    %v3149 = vmul.f32 %v2579, %v54
    %v3150 = vmul.f32 %v1855, %v51
    %v3151 = vmul.f32 %v1860, %v51
    %v3152 = vmul.f32 %v1862, %v52
    %v3153 = vmul.f32 %v2585, %v53
    %v3154 = vmul.f32 %v2587, %v54
    %v3155 = vmul.f32 %v1864, %v51
    %v3156 = vmul.f32 %v1866, %v52
    %v3157 = vmul.f32 %v2589, %v53
    %v3158 = vmul.f32 %v2591, %v54
    %v3159 = vmul.f32 %v1870, %v51
    %v3160 = vmul.f32 %v1872, %v52
    %v3161 = vmul.f32 %v2595, %v53
    %v3162 = vmul.f32 %v2597, %v54
    %v3163 = vmul.f32 %v1874, %v51
    %v3164 = vmul.f32 %v1876, %v52
    %v3165 = vmul.f32 %v2599, %v53
    %v3166 = vmul.f32 %v2601, %v54
    %v3167 = vmul.f32 %v1880, %v51
    %v3168 = vmul.f32 %v1882, %v52
    %v3169 = vmul.f32 %v2605, %v53
    %v3170 = vmul.f32 %v2607, %v54
    %v3171 = vmul.f32 %v1884, %v51
    %v3172 = vmul.f32 %v1886, %v52
    %v3173 = vmul.f32 %v2609, %v53
    %v3174 = vmul.f32 %v2611, %v54
    %v3175 = vmul.f32 %v1890, %v51
    %v3176 = vmul.f32 %v1892, %v52
    %v3177 = vmul.f32 %v2615, %v53
    %v3178 = vmul.f32 %v2617, %v54
    %v3179 = vmul.f32 %v1894, %v51
    %v3180 = vmul.f32 %v1896, %v52
    %v3181 = vmul.f32 %v2619, %v53
    %v3182 = vmul.f32 %v2621, %v54
    %v3183 = vmul.f32 %v1900, %v51
    %v3184 = vmul.f32 %v1903, %v51
    %v3185 = vmul.f32 %v1905, %v52
    %v3186 = vmul.f32 %v2627, %v53
    %v3187 = vmul.f32 %v2629, %v54
    %v3188 = vmul.f32 %v1909, %v51
    %v3189 = vmul.f32 %v1911, %v52
    %v3190 = vmul.f32 %v2633, %v53
    %v3191 = vmul.f32 %v2635, %v54
    %v3192 = vmul.f32 %v1913, %v51
    %v3193 = vmul.f32 %v1915, %v52
    %v3194 = vmul.f32 %v2637, %v53
    %v3195 = vmul.f32 %v2639, %v54
    %v3196 = vmul.f32 %v1919, %v51
    %v3197 = vmul.f32 %v1921, %v52
    %v3198 = vmul.f32 %v2643, %v53
    %v3199 = vmul.f32 %v2645, %v54
    %v3200 = vmul.f32 %v1923, %v51
    %v3201 = vmul.f32 %v1925, %v52
    %v3202 = vmul.f32 %v2647, %v53
    %v3203 = vmul.f32 %v2649, %v54
    %v3204 = vmul.f32 %v1929, %v51
    %v3205 = vmul.f32 %v1931, %v52
    %v3206 = vmul.f32 %v2653, %v53
    %v3207 = vmul.f32 %v2655, %v54
    %v3208 = vmul.f32 %v1933, %v51
    %v3209 = vmul.f32 %v1935, %v52
    %v3210 = vmul.f32 %v2657, %v53
    %v3211 = vmul.f32 %v2659, %v54
    %v3212 = vmul.f32 %v1939, %v51
    %v3213 = vmul.f32 %v1941, %v52
    %v3214 = vmul.f32 %v2663, %v53
    %v3215 = vmul.f32 %v2665, %v54
    %v3216 = vmul.f32 %v1943, %v51
    %v3217 = vmul.f32 %v1948, %v51
    %v3218 = vmul.f32 %v1950, %v52
    %v3219 = vmul.f32 %v2671, %v53
    %v3220 = vmul.f32 %v2673, %v54
    %v3221 = vmul.f32 %v1952, %v51
    %v3222 = vmul.f32 %v1954, %v52
    %v3223 = vmul.f32 %v2675, %v53
    %v3224 = vmul.f32 %v2677, %v54
    %v3225 = vmul.f32 %v1958, %v51
    %v3226 = vmul.f32 %v1960, %v52
    %v3227 = vmul.f32 %v2681, %v53
    %v3228 = vmul.f32 %v2683, %v54
    %v3229 = vmul.f32 %v1962, %v51
    %v3230 = vmul.f32 %v1964, %v52
    %v3231 = vmul.f32 %v2685, %v53
    %v3232 = vmul.f32 %v2687, %v54
    %v3233 = vmul.f32 %v1968, %v51
    %v3234 = vmul.f32 %v1970, %v52
    %v3235 = vmul.f32 %v2691, %v53
    %v3236 = vmul.f32 %v2693, %v54
    %v3237 = vmul.f32 %v1972, %v51
    %v3238 = vmul.f32 %v1974, %v52
    %v3239 = vmul.f32 %v2695, %v53
    %v3240 = vmul.f32 %v2697, %v54
    %v3241 = vmul.f32 %v1978, %v51
    %v3242 = vmul.f32 %v1980, %v52
    %v3243 = vmul.f32 %v2701, %v53
    %v3244 = vmul.f32 %v2703, %v54
    %v3245 = vmul.f32 %v1982, %v51
    %v3246 = vmul.f32 %v1984, %v52
    %v3247 = vmul.f32 %v2705, %v53
    %v3248 = vmul.f32 %v2707, %v54
    %v3249 = vmul.f32 %v1988, %v51
    %v3250 = vmul.f32 %v1991, %v51
    %v3251 = vmul.f32 %v1993, %v52
    %v3252 = vmul.f32 %v2713, %v53
    %v3253 = vmul.f32 %v2715, %v54
    %v3254 = vmul.f32 %v1997, %v51
    %v3255 = vmul.f32 %v1999, %v52
    %v3256 = vmul.f32 %v2719, %v53
    %v3257 = vmul.f32 %v2721, %v54
    %v3258 = vmul.f32 %v2001, %v51
    %v3259 = vmul.f32 %v2003, %v52
    %v3260 = vmul.f32 %v2723, %v53
    %v3261 = vmul.f32 %v2725, %v54
    %v3262 = vmul.f32 %v2007, %v51
    %v3263 = vmul.f32 %v2009, %v52
    %v3264 = vmul.f32 %v2729, %v53
    %v3265 = vmul.f32 %v2731, %v54
    %v3266 = vmul.f32 %v2011, %v51
    %v3267 = vmul.f32 %v2013, %v52
    %v3268 = vmul.f32 %v2733, %v53
    %v3269 = vmul.f32 %v2735, %v54
    %v3270 = vmul.f32 %v2017, %v51
    %v3271 = vmul.f32 %v2019, %v52
    %v3272 = vmul.f32 %v2739, %v53
    %v3273 = vmul.f32 %v2741, %v54
    %v3274 = vmul.f32 %v2021, %v51
    %v3275 = vmul.f32 %v2023, %v52
    %v3276 = vmul.f32 %v2743, %v53
    %v3277 = vmul.f32 %v2745, %v54
    %v3278 = vmul.f32 %v2027, %v51
    %v3279 = vmul.f32 %v2029, %v52
    %v3280 = vmul.f32 %v2749, %v53
    %v3281 = vmul.f32 %v2751, %v54
    %v3282 = vmul.f32 %v2031, %v51
    %v3283 = vrot.slane %v2755, 4
    %v3284 = vadd.f32 %v2755, %v3283
    %v3285 = vrot.slane %v3284, 2
    %v3286 = vadd.f32 %v3284, %v3285
    %v3287 = vrot.slane %v3286, 1
    %v3288 = vadd.f32 %v3286, %v3287
    %v3289 = vrot.slane %v2756, 4
    %v3290 = vadd.f32 %v2756, %v3289
    %v3291 = vrot.slane %v3290, 2
    %v3292 = vadd.f32 %v3290, %v3291
    %v3293 = vrot.slane %v3292, 1
    %v3294 = vadd.f32 %v3292, %v3293
    %v3295 = vrot.slane %v2757, 4
    %v3296 = vadd.f32 %v2757, %v3295
    %v3297 = vrot.slane %v3296, 2
    %v3298 = vadd.f32 %v3296, %v3297
    %v3299 = vrot.slane %v3298, 1
    %v3300 = vadd.f32 %v3298, %v3299
    %v3301 = vrot.slane %v2758, 4
    %v3302 = vadd.f32 %v2758, %v3301
    %v3303 = vrot.slane %v3302, 2
    %v3304 = vadd.f32 %v3302, %v3303
    %v3305 = vrot.slane %v3304, 1
    %v3306 = vadd.f32 %v3304, %v3305
    %v3307 = vrot.slane %v2759, 4
    %v3308 = vadd.f32 %v2759, %v3307
    %v3309 = vrot.slane %v3308, 2
    %v3310 = vadd.f32 %v3308, %v3309
    %v3311 = vrot.slane %v3310, 1
    %v3312 = vadd.f32 %v3310, %v3311
    %v3313 = vrot.slane %v2760, 4
    %v3314 = vadd.f32 %v2760, %v3313
    %v3315 = vrot.slane %v3314, 2
    %v3316 = vadd.f32 %v3314, %v3315
    %v3317 = vrot.slane %v3316, 1
    %v3318 = vadd.f32 %v3316, %v3317
    %v3319 = vrot.slane %v2761, 4
    %v3320 = vadd.f32 %v2761, %v3319
    %v3321 = vrot.slane %v3320, 2
    %v3322 = vadd.f32 %v3320, %v3321
    %v3323 = vrot.slane %v3322, 1
    %v3324 = vadd.f32 %v3322, %v3323
    %v3325 = vrot.slane %v2762, 4
    %v3326 = vadd.f32 %v2762, %v3325
    %v3327 = vrot.slane %v3326, 2
    %v3328 = vadd.f32 %v3326, %v3327
    %v3329 = vrot.slane %v3328, 1
    %v3330 = vadd.f32 %v3328, %v3329
    %v3331 = vrot.slane %v2763, 4
    %v3332 = vadd.f32 %v2763, %v3331
    %v3333 = vrot.slane %v3332, 2
    %v3334 = vadd.f32 %v3332, %v3333
    %v3335 = vrot.slane %v3334, 1
    %v3336 = vadd.f32 %v3334, %v3335
    %v3337 = vrot.slane %v2764, 4
    %v3338 = vadd.f32 %v2764, %v3337
    %v3339 = vrot.slane %v3338, 2
    %v3340 = vadd.f32 %v3338, %v3339
    %v3341 = vrot.slane %v3340, 1
    %v3342 = vadd.f32 %v3340, %v3341
    %v3343 = vrot.slane %v2765, 4
    %v3344 = vadd.f32 %v2765, %v3343
    %v3345 = vrot.slane %v3344, 2
    %v3346 = vadd.f32 %v3344, %v3345
    %v3347 = vrot.slane %v3346, 1
    %v3348 = vadd.f32 %v3346, %v3347
    %v3349 = vrot.slane %v2766, 4
    %v3350 = vadd.f32 %v2766, %v3349
    %v3351 = vrot.slane %v3350, 2
    %v3352 = vadd.f32 %v3350, %v3351
    %v3353 = vrot.slane %v3352, 1
    %v3354 = vadd.f32 %v3352, %v3353
    %v3355 = vrot.slane %v2767, 4
    %v3356 = vadd.f32 %v2767, %v3355
    %v3357 = vrot.slane %v3356, 2
    %v3358 = vadd.f32 %v3356, %v3357
    %v3359 = vrot.slane %v3358, 1
    %v3360 = vadd.f32 %v3358, %v3359
    %v3361 = vrot.slane %v2768, 4
    %v3362 = vadd.f32 %v2768, %v3361
    %v3363 = vrot.slane %v3362, 2
    %v3364 = vadd.f32 %v3362, %v3363
    %v3365 = vrot.slane %v3364, 1
    %v3366 = vadd.f32 %v3364, %v3365
    %v3367 = vrot.slane %v2769, 4
    %v3368 = vadd.f32 %v2769, %v3367
    %v3369 = vrot.slane %v3368, 2
    %v3370 = vadd.f32 %v3368, %v3369
    %v3371 = vrot.slane %v3370, 1
    %v3372 = vadd.f32 %v3370, %v3371
    %v3373 = vrot.slane %v2770, 4
    %v3374 = vadd.f32 %v2770, %v3373
    %v3375 = vrot.slane %v3374, 2
    %v3376 = vadd.f32 %v3374, %v3375
    %v3377 = vrot.slane %v3376, 1
    %v3378 = vadd.f32 %v3376, %v3377
    %v3379 = vrot.slane %v2771, 4
    %v3380 = vadd.f32 %v2771, %v3379
    %v3381 = vrot.slane %v3380, 2
    %v3382 = vadd.f32 %v3380, %v3381
    %v3383 = vrot.slane %v3382, 1
    %v3384 = vadd.f32 %v3382, %v3383
    %v3385 = vrot.slane %v2772, 4
    %v3386 = vadd.f32 %v2772, %v3385
    %v3387 = vrot.slane %v3386, 2
    %v3388 = vadd.f32 %v3386, %v3387
    %v3389 = vrot.slane %v3388, 1
    %v3390 = vadd.f32 %v3388, %v3389
    %v3391 = vrot.slane %v2773, 4
    %v3392 = vadd.f32 %v2773, %v3391
    %v3393 = vrot.slane %v3392, 2
    %v3394 = vadd.f32 %v3392, %v3393
    %v3395 = vrot.slane %v3394, 1
    %v3396 = vadd.f32 %v3394, %v3395
    %v3397 = vrot.slane %v2774, 4
    %v3398 = vadd.f32 %v2774, %v3397
    %v3399 = vrot.slane %v3398, 2
    %v3400 = vadd.f32 %v3398, %v3399
    %v3401 = vrot.slane %v3400, 1
    %v3402 = vadd.f32 %v3400, %v3401
    %v3403 = vrot.slane %v2775, 4
    %v3404 = vadd.f32 %v2775, %v3403
    %v3405 = vrot.slane %v3404, 2
    %v3406 = vadd.f32 %v3404, %v3405
    %v3407 = vrot.slane %v3406, 1
    %v3408 = vadd.f32 %v3406, %v3407
    %v3409 = vrot.slane %v2776, 4
    %v3410 = vadd.f32 %v2776, %v3409
    %v3411 = vrot.slane %v3410, 2
    %v3412 = vadd.f32 %v3410, %v3411
    %v3413 = vrot.slane %v3412, 1
    %v3414 = vadd.f32 %v3412, %v3413
    %v3415 = vrot.slane %v2777, 4
    %v3416 = vadd.f32 %v2777, %v3415
    %v3417 = vrot.slane %v3416, 2
    %v3418 = vadd.f32 %v3416, %v3417
    %v3419 = vrot.slane %v3418, 1
    %v3420 = vadd.f32 %v3418, %v3419
    %v3421 = vrot.slane %v2778, 4
    %v3422 = vadd.f32 %v2778, %v3421
    %v3423 = vrot.slane %v3422, 2
    %v3424 = vadd.f32 %v3422, %v3423
    %v3425 = vrot.slane %v3424, 1
    %v3426 = vadd.f32 %v3424, %v3425
    %v3427 = vrot.slane %v2779, 4
    %v3428 = vadd.f32 %v2779, %v3427
    %v3429 = vrot.slane %v3428, 2
    %v3430 = vadd.f32 %v3428, %v3429
    %v3431 = vrot.slane %v3430, 1
    %v3432 = vadd.f32 %v3430, %v3431
    %v3433 = vrot.slane %v2780, 4
    %v3434 = vadd.f32 %v2780, %v3433
    %v3435 = vrot.slane %v3434, 2
    %v3436 = vadd.f32 %v3434, %v3435
    %v3437 = vrot.slane %v3436, 1
    %v3438 = vadd.f32 %v3436, %v3437
    %v3439 = vrot.slane %v2781, 4
    %v3440 = vadd.f32 %v2781, %v3439
    %v3441 = vrot.slane %v3440, 2
    %v3442 = vadd.f32 %v3440, %v3441
    %v3443 = vrot.slane %v3442, 1
    %v3444 = vadd.f32 %v3442, %v3443
    %v3445 = vrot.slane %v2782, 4
    %v3446 = vadd.f32 %v2782, %v3445
    %v3447 = vrot.slane %v3446, 2
    %v3448 = vadd.f32 %v3446, %v3447
    %v3449 = vrot.slane %v3448, 1
    %v3450 = vadd.f32 %v3448, %v3449
    %v3451 = vrot.slane %v2783, 4
    %v3452 = vadd.f32 %v2783, %v3451
    %v3453 = vrot.slane %v3452, 2
    %v3454 = vadd.f32 %v3452, %v3453
    %v3455 = vrot.slane %v3454, 1
    %v3456 = vadd.f32 %v3454, %v3455
    %v3457 = vrot.slane %v2784, 4
    %v3458 = vadd.f32 %v2784, %v3457
    %v3459 = vrot.slane %v3458, 2
    %v3460 = vadd.f32 %v3458, %v3459
    %v3461 = vrot.slane %v3460, 1
    %v3462 = vadd.f32 %v3460, %v3461
    %v3463 = vrot.slane %v2785, 4
    %v3464 = vadd.f32 %v2785, %v3463
    %v3465 = vrot.slane %v3464, 2
    %v3466 = vadd.f32 %v3464, %v3465
    %v3467 = vrot.slane %v3466, 1
    %v3468 = vadd.f32 %v3466, %v3467
    %v3469 = vrot.slane %v2786, 4
    %v3470 = vadd.f32 %v2786, %v3469
    %v3471 = vrot.slane %v3470, 2
    %v3472 = vadd.f32 %v3470, %v3471
    %v3473 = vrot.slane %v3472, 1
    %v3474 = vadd.f32 %v3472, %v3473
    %v3475 = vrot.slane %v2787, 4
    %v3476 = vadd.f32 %v2787, %v3475
    %v3477 = vrot.slane %v3476, 2
    %v3478 = vadd.f32 %v3476, %v3477
    %v3479 = vrot.slane %v3478, 1
    %v3480 = vadd.f32 %v3478, %v3479
    %v3481 = vrot.slane %v2788, 4
    %v3482 = vadd.f32 %v2788, %v3481
    %v3483 = vrot.slane %v3482, 2
    %v3484 = vadd.f32 %v3482, %v3483
    %v3485 = vrot.slane %v3484, 1
    %v3486 = vadd.f32 %v3484, %v3485
    %v3487 = vrot.slane %v2789, 4
    %v3488 = vadd.f32 %v2789, %v3487
    %v3489 = vrot.slane %v3488, 2
    %v3490 = vadd.f32 %v3488, %v3489
    %v3491 = vrot.slane %v3490, 1
    %v3492 = vadd.f32 %v3490, %v3491
    %v3493 = vrot.slane %v2790, 4
    %v3494 = vadd.f32 %v2790, %v3493
    %v3495 = vrot.slane %v3494, 2
    %v3496 = vadd.f32 %v3494, %v3495
    %v3497 = vrot.slane %v3496, 1
    %v3498 = vadd.f32 %v3496, %v3497
    %v3499 = vrot.slane %v2791, 4
    %v3500 = vadd.f32 %v2791, %v3499
    %v3501 = vrot.slane %v3500, 2
    %v3502 = vadd.f32 %v3500, %v3501
    %v3503 = vrot.slane %v3502, 1
    %v3504 = vadd.f32 %v3502, %v3503
    %v3505 = vrot.slane %v2792, 4
    %v3506 = vadd.f32 %v2792, %v3505
    %v3507 = vrot.slane %v3506, 2
    %v3508 = vadd.f32 %v3506, %v3507
    %v3509 = vrot.slane %v3508, 1
    %v3510 = vadd.f32 %v3508, %v3509
    %v3511 = vrot.slane %v2793, 4
    %v3512 = vadd.f32 %v2793, %v3511
    %v3513 = vrot.slane %v3512, 2
    %v3514 = vadd.f32 %v3512, %v3513
    %v3515 = vrot.slane %v3514, 1
    %v3516 = vadd.f32 %v3514, %v3515
    %v3517 = vrot.slane %v2794, 4
    %v3518 = vadd.f32 %v2794, %v3517
    %v3519 = vrot.slane %v3518, 2
    %v3520 = vadd.f32 %v3518, %v3519
    %v3521 = vrot.slane %v3520, 1
    %v3522 = vadd.f32 %v3520, %v3521
    %v3523 = vrot.slane %v2795, 4
    %v3524 = vadd.f32 %v2795, %v3523
    %v3525 = vrot.slane %v3524, 2
    %v3526 = vadd.f32 %v3524, %v3525
    %v3527 = vrot.slane %v3526, 1
    %v3528 = vadd.f32 %v3526, %v3527
    %v3529 = vrot.slane %v2796, 4
    %v3530 = vadd.f32 %v2796, %v3529
    %v3531 = vrot.slane %v3530, 2
    %v3532 = vadd.f32 %v3530, %v3531
    %v3533 = vrot.slane %v3532, 1
    %v3534 = vadd.f32 %v3532, %v3533
    %v3535 = vrot.slane %v2797, 4
    %v3536 = vadd.f32 %v2797, %v3535
    %v3537 = vrot.slane %v3536, 2
    %v3538 = vadd.f32 %v3536, %v3537
    %v3539 = vrot.slane %v3538, 1
    %v3540 = vadd.f32 %v3538, %v3539
    %v3541 = vrot.slane %v2798, 4
    %v3542 = vadd.f32 %v2798, %v3541
    %v3543 = vrot.slane %v3542, 2
    %v3544 = vadd.f32 %v3542, %v3543
    %v3545 = vrot.slane %v3544, 1
    %v3546 = vadd.f32 %v3544, %v3545
    %v3547 = vrot.slane %v2799, 4
    %v3548 = vadd.f32 %v2799, %v3547
    %v3549 = vrot.slane %v3548, 2
    %v3550 = vadd.f32 %v3548, %v3549
    %v3551 = vrot.slane %v3550, 1
    %v3552 = vadd.f32 %v3550, %v3551
    %v3553 = vrot.slane %v2800, 4
    %v3554 = vadd.f32 %v2800, %v3553
    %v3555 = vrot.slane %v3554, 2
    %v3556 = vadd.f32 %v3554, %v3555
    %v3557 = vrot.slane %v3556, 1
    %v3558 = vadd.f32 %v3556, %v3557
    %v3559 = vrot.slane %v2801, 4
    %v3560 = vadd.f32 %v2801, %v3559
    %v3561 = vrot.slane %v3560, 2
    %v3562 = vadd.f32 %v3560, %v3561
    %v3563 = vrot.slane %v3562, 1
    %v3564 = vadd.f32 %v3562, %v3563
    %v3565 = vrot.slane %v2802, 4
    %v3566 = vadd.f32 %v2802, %v3565
    %v3567 = vrot.slane %v3566, 2
    %v3568 = vadd.f32 %v3566, %v3567
    %v3569 = vrot.slane %v3568, 1
    %v3570 = vadd.f32 %v3568, %v3569
    %v3571 = vrot.slane %v2803, 4
    %v3572 = vadd.f32 %v2803, %v3571
    %v3573 = vrot.slane %v3572, 2
    %v3574 = vadd.f32 %v3572, %v3573
    %v3575 = vrot.slane %v3574, 1
    %v3576 = vadd.f32 %v3574, %v3575
    %v3577 = vrot.slane %v2804, 4
    %v3578 = vadd.f32 %v2804, %v3577
    %v3579 = vrot.slane %v3578, 2
    %v3580 = vadd.f32 %v3578, %v3579
    %v3581 = vrot.slane %v3580, 1
    %v3582 = vadd.f32 %v3580, %v3581
    %v3583 = vrot.slane %v2805, 4
    %v3584 = vadd.f32 %v2805, %v3583
    %v3585 = vrot.slane %v3584, 2
    %v3586 = vadd.f32 %v3584, %v3585
    %v3587 = vrot.slane %v3586, 1
    %v3588 = vadd.f32 %v3586, %v3587
    %v3589 = vrot.slane %v2806, 4
    %v3590 = vadd.f32 %v2806, %v3589
    %v3591 = vrot.slane %v3590, 2
    %v3592 = vadd.f32 %v3590, %v3591
    %v3593 = vrot.slane %v3592, 1
    %v3594 = vadd.f32 %v3592, %v3593
    %v3595 = vrot.slane %v2807, 4
    %v3596 = vadd.f32 %v2807, %v3595
    %v3597 = vrot.slane %v3596, 2
    %v3598 = vadd.f32 %v3596, %v3597
    %v3599 = vrot.slane %v3598, 1
    %v3600 = vadd.f32 %v3598, %v3599
    %v3601 = vrot.slane %v2808, 4
    %v3602 = vadd.f32 %v2808, %v3601
    %v3603 = vrot.slane %v3602, 2
    %v3604 = vadd.f32 %v3602, %v3603
    %v3605 = vrot.slane %v3604, 1
    %v3606 = vadd.f32 %v3604, %v3605
    %v3607 = vrot.slane %v2809, 4
    %v3608 = vadd.f32 %v2809, %v3607
    %v3609 = vrot.slane %v3608, 2
    %v3610 = vadd.f32 %v3608, %v3609
    %v3611 = vrot.slane %v3610, 1
    %v3612 = vadd.f32 %v3610, %v3611
    %v3613 = vrot.slane %v2810, 4
    %v3614 = vadd.f32 %v2810, %v3613
    %v3615 = vrot.slane %v3614, 2
    %v3616 = vadd.f32 %v3614, %v3615
    %v3617 = vrot.slane %v3616, 1
    %v3618 = vadd.f32 %v3616, %v3617
    %v3619 = vrot.slane %v2811, 4
    %v3620 = vadd.f32 %v2811, %v3619
    %v3621 = vrot.slane %v3620, 2
    %v3622 = vadd.f32 %v3620, %v3621
    %v3623 = vrot.slane %v3622, 1
    %v3624 = vadd.f32 %v3622, %v3623
    %v3625 = vrot.slane %v2812, 4
    %v3626 = vadd.f32 %v2812, %v3625
    %v3627 = vrot.slane %v3626, 2
    %v3628 = vadd.f32 %v3626, %v3627
    %v3629 = vrot.slane %v3628, 1
    %v3630 = vadd.f32 %v3628, %v3629
    %v3631 = vrot.slane %v2813, 4
    %v3632 = vadd.f32 %v2813, %v3631
    %v3633 = vrot.slane %v3632, 2
    %v3634 = vadd.f32 %v3632, %v3633
    %v3635 = vrot.slane %v3634, 1
    %v3636 = vadd.f32 %v3634, %v3635
    %v3637 = vrot.slane %v2814, 4
    %v3638 = vadd.f32 %v2814, %v3637
    %v3639 = vrot.slane %v3638, 2
    %v3640 = vadd.f32 %v3638, %v3639
    %v3641 = vrot.slane %v3640, 1
    %v3642 = vadd.f32 %v3640, %v3641
    %v3643 = vrot.slane %v2815, 4
    %v3644 = vadd.f32 %v2815, %v3643
    %v3645 = vrot.slane %v3644, 2
    %v3646 = vadd.f32 %v3644, %v3645
    %v3647 = vrot.slane %v3646, 1
    %v3648 = vadd.f32 %v3646, %v3647
    %v3649 = vrot.slane %v2816, 4
    %v3650 = vadd.f32 %v2816, %v3649
    %v3651 = vrot.slane %v3650, 2
    %v3652 = vadd.f32 %v3650, %v3651
    %v3653 = vrot.slane %v3652, 1
    %v3654 = vadd.f32 %v3652, %v3653
    %v3655 = vrot.slane %v2817, 4
    %v3656 = vadd.f32 %v2817, %v3655
    %v3657 = vrot.slane %v3656, 2
    %v3658 = vadd.f32 %v3656, %v3657
    %v3659 = vrot.slane %v3658, 1
    %v3660 = vadd.f32 %v3658, %v3659
    %v3661 = vrot.slane %v2818, 4
    %v3662 = vadd.f32 %v2818, %v3661
    %v3663 = vrot.slane %v3662, 2
    %v3664 = vadd.f32 %v3662, %v3663
    %v3665 = vrot.slane %v3664, 1
    %v3666 = vadd.f32 %v3664, %v3665
    %v3667 = vrot.slane %v2819, 4
    %v3668 = vadd.f32 %v2819, %v3667
    %v3669 = vrot.slane %v3668, 2
    %v3670 = vadd.f32 %v3668, %v3669
    %v3671 = vrot.slane %v3670, 1
    %v3672 = vadd.f32 %v3670, %v3671
    %v3673 = vrot.slane %v2820, 4
    %v3674 = vadd.f32 %v2820, %v3673
    %v3675 = vrot.slane %v3674, 2
    %v3676 = vadd.f32 %v3674, %v3675
    %v3677 = vrot.slane %v3676, 1
    %v3678 = vadd.f32 %v3676, %v3677
    %v3679 = vrot.slane %v2821, 4
    %v3680 = vadd.f32 %v2821, %v3679
    %v3681 = vrot.slane %v3680, 2
    %v3682 = vadd.f32 %v3680, %v3681
    %v3683 = vrot.slane %v3682, 1
    %v3684 = vadd.f32 %v3682, %v3683
    %v3685 = vrot.slane %v2822, 4
    %v3686 = vadd.f32 %v2822, %v3685
    %v3687 = vrot.slane %v3686, 2
    %v3688 = vadd.f32 %v3686, %v3687
    %v3689 = vrot.slane %v3688, 1
    %v3690 = vadd.f32 %v3688, %v3689
    %v3691 = vrot.slane %v2823, 4
    %v3692 = vadd.f32 %v2823, %v3691
    %v3693 = vrot.slane %v3692, 2
    %v3694 = vadd.f32 %v3692, %v3693
    %v3695 = vrot.slane %v3694, 1
    %v3696 = vadd.f32 %v3694, %v3695
    %v3697 = vrot.slane %v2824, 4
    %v3698 = vadd.f32 %v2824, %v3697
    %v3699 = vrot.slane %v3698, 2
    %v3700 = vadd.f32 %v3698, %v3699
    %v3701 = vrot.slane %v3700, 1
    %v3702 = vadd.f32 %v3700, %v3701
    %v3703 = vrot.slane %v2825, 4
    %v3704 = vadd.f32 %v2825, %v3703
    %v3705 = vrot.slane %v3704, 2
    %v3706 = vadd.f32 %v3704, %v3705
    %v3707 = vrot.slane %v3706, 1
    %v3708 = vadd.f32 %v3706, %v3707
    %v3709 = vrot.slane %v2826, 4
    %v3710 = vadd.f32 %v2826, %v3709
    %v3711 = vrot.slane %v3710, 2
    %v3712 = vadd.f32 %v3710, %v3711
    %v3713 = vrot.slane %v3712, 1
    %v3714 = vadd.f32 %v3712, %v3713
    %v3715 = vrot.slane %v2827, 4
    %v3716 = vadd.f32 %v2827, %v3715
    %v3717 = vrot.slane %v3716, 2
    %v3718 = vadd.f32 %v3716, %v3717
    %v3719 = vrot.slane %v3718, 1
    %v3720 = vadd.f32 %v3718, %v3719
    %v3721 = vrot.slane %v2828, 4
    %v3722 = vadd.f32 %v2828, %v3721
    %v3723 = vrot.slane %v3722, 2
    %v3724 = vadd.f32 %v3722, %v3723
    %v3725 = vrot.slane %v3724, 1
    %v3726 = vadd.f32 %v3724, %v3725
    %v3727 = vrot.slane %v2829, 4
    %v3728 = vadd.f32 %v2829, %v3727
    %v3729 = vrot.slane %v3728, 2
    %v3730 = vadd.f32 %v3728, %v3729
    %v3731 = vrot.slane %v3730, 1
    %v3732 = vadd.f32 %v3730, %v3731
    %v3733 = vrot.slane %v2830, 4
    %v3734 = vadd.f32 %v2830, %v3733
    %v3735 = vrot.slane %v3734, 2
    %v3736 = vadd.f32 %v3734, %v3735
    %v3737 = vrot.slane %v3736, 1
    %v3738 = vadd.f32 %v3736, %v3737
    %v3739 = vrot.slane %v2831, 4
    %v3740 = vadd.f32 %v2831, %v3739
    %v3741 = vrot.slane %v3740, 2
    %v3742 = vadd.f32 %v3740, %v3741
    %v3743 = vrot.slane %v3742, 1
    %v3744 = vadd.f32 %v3742, %v3743
    %v3745 = vrot.slane %v2832, 4
    %v3746 = vadd.f32 %v2832, %v3745
    %v3747 = vrot.slane %v3746, 2
    %v3748 = vadd.f32 %v3746, %v3747
    %v3749 = vrot.slane %v3748, 1
    %v3750 = vadd.f32 %v3748, %v3749
    %v3751 = vrot.slane %v2833, 4
    %v3752 = vadd.f32 %v2833, %v3751
    %v3753 = vrot.slane %v3752, 2
    %v3754 = vadd.f32 %v3752, %v3753
    %v3755 = vrot.slane %v3754, 1
    %v3756 = vadd.f32 %v3754, %v3755
    %v3757 = vrot.slane %v2834, 4
    %v3758 = vadd.f32 %v2834, %v3757
    %v3759 = vrot.slane %v3758, 2
    %v3760 = vadd.f32 %v3758, %v3759
    %v3761 = vrot.slane %v3760, 1
    %v3762 = vadd.f32 %v3760, %v3761
    %v3763 = vrot.slane %v2835, 4
    %v3764 = vadd.f32 %v2835, %v3763
    %v3765 = vrot.slane %v3764, 2
    %v3766 = vadd.f32 %v3764, %v3765
    %v3767 = vrot.slane %v3766, 1
    %v3768 = vadd.f32 %v3766, %v3767
    %v3769 = vrot.slane %v2836, 4
    %v3770 = vadd.f32 %v2836, %v3769
    %v3771 = vrot.slane %v3770, 2
    %v3772 = vadd.f32 %v3770, %v3771
    %v3773 = vrot.slane %v3772, 1
    %v3774 = vadd.f32 %v3772, %v3773
    %v3775 = vrot.slane %v2837, 4
    %v3776 = vadd.f32 %v2837, %v3775
    %v3777 = vrot.slane %v3776, 2
    %v3778 = vadd.f32 %v3776, %v3777
    %v3779 = vrot.slane %v3778, 1
    %v3780 = vadd.f32 %v3778, %v3779
    %v3781 = vrot.slane %v2838, 4
    %v3782 = vadd.f32 %v2838, %v3781
    %v3783 = vrot.slane %v3782, 2
    %v3784 = vadd.f32 %v3782, %v3783
    %v3785 = vrot.slane %v3784, 1
    %v3786 = vadd.f32 %v3784, %v3785
    %v3787 = vrot.slane %v2839, 4
    %v3788 = vadd.f32 %v2839, %v3787
    %v3789 = vrot.slane %v3788, 2
    %v3790 = vadd.f32 %v3788, %v3789
    %v3791 = vrot.slane %v3790, 1
    %v3792 = vadd.f32 %v3790, %v3791
    %v3793 = vrot.slane %v2840, 4
    %v3794 = vadd.f32 %v2840, %v3793
    %v3795 = vrot.slane %v3794, 2
    %v3796 = vadd.f32 %v3794, %v3795
    %v3797 = vrot.slane %v3796, 1
    %v3798 = vadd.f32 %v3796, %v3797
    %v3799 = vrot.slane %v2841, 4
    %v3800 = vadd.f32 %v2841, %v3799
    %v3801 = vrot.slane %v3800, 2
    %v3802 = vadd.f32 %v3800, %v3801
    %v3803 = vrot.slane %v3802, 1
    %v3804 = vadd.f32 %v3802, %v3803
    %v3805 = vrot.slane %v2842, 4
    %v3806 = vadd.f32 %v2842, %v3805
    %v3807 = vrot.slane %v3806, 2
    %v3808 = vadd.f32 %v3806, %v3807
    %v3809 = vrot.slane %v3808, 1
    %v3810 = vadd.f32 %v3808, %v3809
    %v3811 = vrot.slane %v2843, 4
    %v3812 = vadd.f32 %v2843, %v3811
    %v3813 = vrot.slane %v3812, 2
    %v3814 = vadd.f32 %v3812, %v3813
    %v3815 = vrot.slane %v3814, 1
    %v3816 = vadd.f32 %v3814, %v3815
    %v3817 = vrot.slane %v2844, 4
    %v3818 = vadd.f32 %v2844, %v3817
    %v3819 = vrot.slane %v3818, 2
    %v3820 = vadd.f32 %v3818, %v3819
    %v3821 = vrot.slane %v3820, 1
    %v3822 = vadd.f32 %v3820, %v3821
    %v3823 = vrot.slane %v2845, 4
    %v3824 = vadd.f32 %v2845, %v3823
    %v3825 = vrot.slane %v3824, 2
    %v3826 = vadd.f32 %v3824, %v3825
    %v3827 = vrot.slane %v3826, 1
    %v3828 = vadd.f32 %v3826, %v3827
    %v3829 = vrot.slane %v2846, 4
    %v3830 = vadd.f32 %v2846, %v3829
    %v3831 = vrot.slane %v3830, 2
    %v3832 = vadd.f32 %v3830, %v3831
    %v3833 = vrot.slane %v3832, 1
    %v3834 = vadd.f32 %v3832, %v3833
    %v3835 = vrot.slane %v2847, 4
    %v3836 = vadd.f32 %v2847, %v3835
    %v3837 = vrot.slane %v3836, 2
    %v3838 = vadd.f32 %v3836, %v3837
    %v3839 = vrot.slane %v3838, 1
    %v3840 = vadd.f32 %v3838, %v3839
    %v3841 = vrot.slane %v2848, 4
    %v3842 = vadd.f32 %v2848, %v3841
    %v3843 = vrot.slane %v3842, 2
    %v3844 = vadd.f32 %v3842, %v3843
    %v3845 = vrot.slane %v3844, 1
    %v3846 = vadd.f32 %v3844, %v3845
    %v3847 = vrot.slane %v2849, 4
    %v3848 = vadd.f32 %v2849, %v3847
    %v3849 = vrot.slane %v3848, 2
    %v3850 = vadd.f32 %v3848, %v3849
    %v3851 = vrot.slane %v3850, 1
    %v3852 = vadd.f32 %v3850, %v3851
    %v3853 = vrot.slane %v2850, 4
    %v3854 = vadd.f32 %v2850, %v3853
    %v3855 = vrot.slane %v3854, 2
    %v3856 = vadd.f32 %v3854, %v3855
    %v3857 = vrot.slane %v3856, 1
    %v3858 = vadd.f32 %v3856, %v3857
    %v3859 = vrot.slane %v2851, 4
    %v3860 = vadd.f32 %v2851, %v3859
    %v3861 = vrot.slane %v3860, 2
    %v3862 = vadd.f32 %v3860, %v3861
    %v3863 = vrot.slane %v3862, 1
    %v3864 = vadd.f32 %v3862, %v3863
    %v3865 = vrot.slane %v2852, 4
    %v3866 = vadd.f32 %v2852, %v3865
    %v3867 = vrot.slane %v3866, 2
    %v3868 = vadd.f32 %v3866, %v3867
    %v3869 = vrot.slane %v3868, 1
    %v3870 = vadd.f32 %v3868, %v3869
    %v3871 = vrot.slane %v2853, 4
    %v3872 = vadd.f32 %v2853, %v3871
    %v3873 = vrot.slane %v3872, 2
    %v3874 = vadd.f32 %v3872, %v3873
    %v3875 = vrot.slane %v3874, 1
    %v3876 = vadd.f32 %v3874, %v3875
    %v3877 = vrot.slane %v2854, 4
    %v3878 = vadd.f32 %v2854, %v3877
    %v3879 = vrot.slane %v3878, 2
    %v3880 = vadd.f32 %v3878, %v3879
    %v3881 = vrot.slane %v3880, 1
    %v3882 = vadd.f32 %v3880, %v3881
    %v3883 = vrot.slane %v2855, 4
    %v3884 = vadd.f32 %v2855, %v3883
    %v3885 = vrot.slane %v3884, 2
    %v3886 = vadd.f32 %v3884, %v3885
    %v3887 = vrot.slane %v3886, 1
    %v3888 = vadd.f32 %v3886, %v3887
    %v3889 = vrot.slane %v2856, 4
    %v3890 = vadd.f32 %v2856, %v3889
    %v3891 = vrot.slane %v3890, 2
    %v3892 = vadd.f32 %v3890, %v3891
    %v3893 = vrot.slane %v3892, 1
    %v3894 = vadd.f32 %v3892, %v3893
    %v3895 = vrot.slane %v2857, 4
    %v3896 = vadd.f32 %v2857, %v3895
    %v3897 = vrot.slane %v3896, 2
    %v3898 = vadd.f32 %v3896, %v3897
    %v3899 = vrot.slane %v3898, 1
    %v3900 = vadd.f32 %v3898, %v3899
    %v3901 = vrot.slane %v2858, 4
    %v3902 = vadd.f32 %v2858, %v3901
    %v3903 = vrot.slane %v3902, 2
    %v3904 = vadd.f32 %v3902, %v3903
    %v3905 = vrot.slane %v3904, 1
    %v3906 = vadd.f32 %v3904, %v3905
    %v3907 = vrot.slane %v2859, 4
    %v3908 = vadd.f32 %v2859, %v3907
    %v3909 = vrot.slane %v3908, 2
    %v3910 = vadd.f32 %v3908, %v3909
    %v3911 = vrot.slane %v3910, 1
    %v3912 = vadd.f32 %v3910, %v3911
    %v3913 = vrot.slane %v2860, 4
    %v3914 = vadd.f32 %v2860, %v3913
    %v3915 = vrot.slane %v3914, 2
    %v3916 = vadd.f32 %v3914, %v3915
    %v3917 = vrot.slane %v3916, 1
    %v3918 = vadd.f32 %v3916, %v3917
    %v3919 = vrot.slane %v2861, 4
    %v3920 = vadd.f32 %v2861, %v3919
    %v3921 = vrot.slane %v3920, 2
    %v3922 = vadd.f32 %v3920, %v3921
    %v3923 = vrot.slane %v3922, 1
    %v3924 = vadd.f32 %v3922, %v3923
    %v3925 = vrot.slane %v2862, 4
    %v3926 = vadd.f32 %v2862, %v3925
    %v3927 = vrot.slane %v3926, 2
    %v3928 = vadd.f32 %v3926, %v3927
    %v3929 = vrot.slane %v3928, 1
    %v3930 = vadd.f32 %v3928, %v3929
    %v3931 = vrot.slane %v2863, 4
    %v3932 = vadd.f32 %v2863, %v3931
    %v3933 = vrot.slane %v3932, 2
    %v3934 = vadd.f32 %v3932, %v3933
    %v3935 = vrot.slane %v3934, 1
    %v3936 = vadd.f32 %v3934, %v3935
    %v3937 = vrot.slane %v2864, 4
    %v3938 = vadd.f32 %v2864, %v3937
    %v3939 = vrot.slane %v3938, 2
    %v3940 = vadd.f32 %v3938, %v3939
    %v3941 = vrot.slane %v3940, 1
    %v3942 = vadd.f32 %v3940, %v3941
    %v3943 = vrot.slane %v2865, 4
    %v3944 = vadd.f32 %v2865, %v3943
    %v3945 = vrot.slane %v3944, 2
    %v3946 = vadd.f32 %v3944, %v3945
    %v3947 = vrot.slane %v3946, 1
    %v3948 = vadd.f32 %v3946, %v3947
    %v3949 = vrot.slane %v2866, 4
    %v3950 = vadd.f32 %v2866, %v3949
    %v3951 = vrot.slane %v3950, 2
    %v3952 = vadd.f32 %v3950, %v3951
    %v3953 = vrot.slane %v3952, 1
    %v3954 = vadd.f32 %v3952, %v3953
    %v3955 = vrot.slane %v2867, 4
    %v3956 = vadd.f32 %v2867, %v3955
    %v3957 = vrot.slane %v3956, 2
    %v3958 = vadd.f32 %v3956, %v3957
    %v3959 = vrot.slane %v3958, 1
    %v3960 = vadd.f32 %v3958, %v3959
    %v3961 = vrot.slane %v2868, 4
    %v3962 = vadd.f32 %v2868, %v3961
    %v3963 = vrot.slane %v3962, 2
    %v3964 = vadd.f32 %v3962, %v3963
    %v3965 = vrot.slane %v3964, 1
    %v3966 = vadd.f32 %v3964, %v3965
    %v3967 = vrot.slane %v2869, 4
    %v3968 = vadd.f32 %v2869, %v3967
    %v3969 = vrot.slane %v3968, 2
    %v3970 = vadd.f32 %v3968, %v3969
    %v3971 = vrot.slane %v3970, 1
    %v3972 = vadd.f32 %v3970, %v3971
    %v3973 = vrot.slane %v2870, 4
    %v3974 = vadd.f32 %v2870, %v3973
    %v3975 = vrot.slane %v3974, 2
    %v3976 = vadd.f32 %v3974, %v3975
    %v3977 = vrot.slane %v3976, 1
    %v3978 = vadd.f32 %v3976, %v3977
    %v3979 = vrot.slane %v2871, 4
    %v3980 = vadd.f32 %v2871, %v3979
    %v3981 = vrot.slane %v3980, 2
    %v3982 = vadd.f32 %v3980, %v3981
    %v3983 = vrot.slane %v3982, 1
    %v3984 = vadd.f32 %v3982, %v3983
    %v3985 = vrot.slane %v2872, 4
    %v3986 = vadd.f32 %v2872, %v3985
    %v3987 = vrot.slane %v3986, 2
    %v3988 = vadd.f32 %v3986, %v3987
    %v3989 = vrot.slane %v3988, 1
    %v3990 = vadd.f32 %v3988, %v3989
    %v3991 = vrot.slane %v2873, 4
    %v3992 = vadd.f32 %v2873, %v3991
    %v3993 = vrot.slane %v3992, 2
    %v3994 = vadd.f32 %v3992, %v3993
    %v3995 = vrot.slane %v3994, 1
    %v3996 = vadd.f32 %v3994, %v3995
    %v3997 = vrot.slane %v2874, 4
    %v3998 = vadd.f32 %v2874, %v3997
    %v3999 = vrot.slane %v3998, 2
    %v4000 = vadd.f32 %v3998, %v3999
    %v4001 = vrot.slane %v4000, 1
    %v4002 = vadd.f32 %v4000, %v4001
    %v4003 = vrot.slane %v2875, 4
    %v4004 = vadd.f32 %v2875, %v4003
    %v4005 = vrot.slane %v4004, 2
    %v4006 = vadd.f32 %v4004, %v4005
    %v4007 = vrot.slane %v4006, 1
    %v4008 = vadd.f32 %v4006, %v4007
    %v4009 = vrot.slane %v2876, 4
    %v4010 = vadd.f32 %v2876, %v4009
    %v4011 = vrot.slane %v4010, 2
    %v4012 = vadd.f32 %v4010, %v4011
    %v4013 = vrot.slane %v4012, 1
    %v4014 = vadd.f32 %v4012, %v4013
    %v4015 = vrot.slane %v2877, 4
    %v4016 = vadd.f32 %v2877, %v4015
    %v4017 = vrot.slane %v4016, 2
    %v4018 = vadd.f32 %v4016, %v4017
    %v4019 = vrot.slane %v4018, 1
    %v4020 = vadd.f32 %v4018, %v4019
    %v4021 = vrot.slane %v2878, 4
    %v4022 = vadd.f32 %v2878, %v4021
    %v4023 = vrot.slane %v4022, 2
    %v4024 = vadd.f32 %v4022, %v4023
    %v4025 = vrot.slane %v4024, 1
    %v4026 = vadd.f32 %v4024, %v4025
    %v4027 = vrot.slane %v2879, 4
    %v4028 = vadd.f32 %v2879, %v4027
    %v4029 = vrot.slane %v4028, 2
    %v4030 = vadd.f32 %v4028, %v4029
    %v4031 = vrot.slane %v4030, 1
    %v4032 = vadd.f32 %v4030, %v4031
    %v4033 = vrot.slane %v2880, 4
    %v4034 = vadd.f32 %v2880, %v4033
    %v4035 = vrot.slane %v4034, 2
    %v4036 = vadd.f32 %v4034, %v4035
    %v4037 = vrot.slane %v4036, 1
    %v4038 = vadd.f32 %v4036, %v4037
    %v4039 = vrot.slane %v2881, 4
    %v4040 = vadd.f32 %v2881, %v4039
    %v4041 = vrot.slane %v4040, 2
    %v4042 = vadd.f32 %v4040, %v4041
    %v4043 = vrot.slane %v4042, 1
    %v4044 = vadd.f32 %v4042, %v4043
    %v4045 = vrot.slane %v2882, 4
    %v4046 = vadd.f32 %v2882, %v4045
    %v4047 = vrot.slane %v4046, 2
    %v4048 = vadd.f32 %v4046, %v4047
    %v4049 = vrot.slane %v4048, 1
    %v4050 = vadd.f32 %v4048, %v4049
    %v4051 = vrot.slane %v2883, 4
    %v4052 = vadd.f32 %v2883, %v4051
    %v4053 = vrot.slane %v4052, 2
    %v4054 = vadd.f32 %v4052, %v4053
    %v4055 = vrot.slane %v4054, 1
    %v4056 = vadd.f32 %v4054, %v4055
    %v4057 = vrot.slane %v2884, 4
    %v4058 = vadd.f32 %v2884, %v4057
    %v4059 = vrot.slane %v4058, 2
    %v4060 = vadd.f32 %v4058, %v4059
    %v4061 = vrot.slane %v4060, 1
    %v4062 = vadd.f32 %v4060, %v4061
    %v4063 = vrot.slane %v2885, 4
    %v4064 = vadd.f32 %v2885, %v4063
    %v4065 = vrot.slane %v4064, 2
    %v4066 = vadd.f32 %v4064, %v4065
    %v4067 = vrot.slane %v4066, 1
    %v4068 = vadd.f32 %v4066, %v4067
    %v4069 = vrot.slane %v2886, 4
    %v4070 = vadd.f32 %v2886, %v4069
    %v4071 = vrot.slane %v4070, 2
    %v4072 = vadd.f32 %v4070, %v4071
    %v4073 = vrot.slane %v4072, 1
    %v4074 = vadd.f32 %v4072, %v4073
    %v4075 = vrot.slane %v2887, 4
    %v4076 = vadd.f32 %v2887, %v4075
    %v4077 = vrot.slane %v4076, 2
    %v4078 = vadd.f32 %v4076, %v4077
    %v4079 = vrot.slane %v4078, 1
    %v4080 = vadd.f32 %v4078, %v4079
    %v4081 = vrot.slane %v2888, 4
    %v4082 = vadd.f32 %v2888, %v4081
    %v4083 = vrot.slane %v4082, 2
    %v4084 = vadd.f32 %v4082, %v4083
    %v4085 = vrot.slane %v4084, 1
    %v4086 = vadd.f32 %v4084, %v4085
    %v4087 = vrot.slane %v2889, 4
    %v4088 = vadd.f32 %v2889, %v4087
    %v4089 = vrot.slane %v4088, 2
    %v4090 = vadd.f32 %v4088, %v4089
    %v4091 = vrot.slane %v4090, 1
    %v4092 = vadd.f32 %v4090, %v4091
    %v4093 = vrot.slane %v2890, 4
    %v4094 = vadd.f32 %v2890, %v4093
    %v4095 = vrot.slane %v4094, 2
    %v4096 = vadd.f32 %v4094, %v4095
    %v4097 = vrot.slane %v4096, 1
    %v4098 = vadd.f32 %v4096, %v4097
    %v4099 = vrot.slane %v2891, 4
    %v4100 = vadd.f32 %v2891, %v4099
    %v4101 = vrot.slane %v4100, 2
    %v4102 = vadd.f32 %v4100, %v4101
    %v4103 = vrot.slane %v4102, 1
    %v4104 = vadd.f32 %v4102, %v4103
    %v4105 = vrot.slane %v2892, 4
    %v4106 = vadd.f32 %v2892, %v4105
    %v4107 = vrot.slane %v4106, 2
    %v4108 = vadd.f32 %v4106, %v4107
    %v4109 = vrot.slane %v4108, 1
    %v4110 = vadd.f32 %v4108, %v4109
    %v4111 = vrot.slane %v2893, 4
    %v4112 = vadd.f32 %v2893, %v4111
    %v4113 = vrot.slane %v4112, 2
    %v4114 = vadd.f32 %v4112, %v4113
    %v4115 = vrot.slane %v4114, 1
    %v4116 = vadd.f32 %v4114, %v4115
    %v4117 = vrot.slane %v2894, 4
    %v4118 = vadd.f32 %v2894, %v4117
    %v4119 = vrot.slane %v4118, 2
    %v4120 = vadd.f32 %v4118, %v4119
    %v4121 = vrot.slane %v4120, 1
    %v4122 = vadd.f32 %v4120, %v4121
    %v4123 = vrot.slane %v2895, 4
    %v4124 = vadd.f32 %v2895, %v4123
    %v4125 = vrot.slane %v4124, 2
    %v4126 = vadd.f32 %v4124, %v4125
    %v4127 = vrot.slane %v4126, 1
    %v4128 = vadd.f32 %v4126, %v4127
    %v4129 = vrot.slane %v2896, 4
    %v4130 = vadd.f32 %v2896, %v4129
    %v4131 = vrot.slane %v4130, 2
    %v4132 = vadd.f32 %v4130, %v4131
    %v4133 = vrot.slane %v4132, 1
    %v4134 = vadd.f32 %v4132, %v4133
    %v4135 = vrot.slane %v2897, 4
    %v4136 = vadd.f32 %v2897, %v4135
    %v4137 = vrot.slane %v4136, 2
    %v4138 = vadd.f32 %v4136, %v4137
    %v4139 = vrot.slane %v4138, 1
    %v4140 = vadd.f32 %v4138, %v4139
    %v4141 = vrot.slane %v2898, 4
    %v4142 = vadd.f32 %v2898, %v4141
    %v4143 = vrot.slane %v4142, 2
    %v4144 = vadd.f32 %v4142, %v4143
    %v4145 = vrot.slane %v4144, 1
    %v4146 = vadd.f32 %v4144, %v4145
    %v4147 = vrot.slane %v2899, 4
    %v4148 = vadd.f32 %v2899, %v4147
    %v4149 = vrot.slane %v4148, 2
    %v4150 = vadd.f32 %v4148, %v4149
    %v4151 = vrot.slane %v4150, 1
    %v4152 = vadd.f32 %v4150, %v4151
    %v4153 = vrot.slane %v2900, 4
    %v4154 = vadd.f32 %v2900, %v4153
    %v4155 = vrot.slane %v4154, 2
    %v4156 = vadd.f32 %v4154, %v4155
    %v4157 = vrot.slane %v4156, 1
    %v4158 = vadd.f32 %v4156, %v4157
    %v4159 = vrot.slane %v2901, 4
    %v4160 = vadd.f32 %v2901, %v4159
    %v4161 = vrot.slane %v4160, 2
    %v4162 = vadd.f32 %v4160, %v4161
    %v4163 = vrot.slane %v4162, 1
    %v4164 = vadd.f32 %v4162, %v4163
    %v4165 = vrot.slane %v2902, 4
    %v4166 = vadd.f32 %v2902, %v4165
    %v4167 = vrot.slane %v4166, 2
    %v4168 = vadd.f32 %v4166, %v4167
    %v4169 = vrot.slane %v4168, 1
    %v4170 = vadd.f32 %v4168, %v4169
    %v4171 = vrot.slane %v2903, 4
    %v4172 = vadd.f32 %v2903, %v4171
    %v4173 = vrot.slane %v4172, 2
    %v4174 = vadd.f32 %v4172, %v4173
    %v4175 = vrot.slane %v4174, 1
    %v4176 = vadd.f32 %v4174, %v4175
    %v4177 = vrot.slane %v2904, 4
    %v4178 = vadd.f32 %v2904, %v4177
    %v4179 = vrot.slane %v4178, 2
    %v4180 = vadd.f32 %v4178, %v4179
    %v4181 = vrot.slane %v4180, 1
    %v4182 = vadd.f32 %v4180, %v4181
    %v4183 = vrot.slane %v2905, 4
    %v4184 = vadd.f32 %v2905, %v4183
    %v4185 = vrot.slane %v4184, 2
    %v4186 = vadd.f32 %v4184, %v4185
    %v4187 = vrot.slane %v4186, 1
    %v4188 = vadd.f32 %v4186, %v4187
    %v4189 = vrot.slane %v2906, 4
    %v4190 = vadd.f32 %v2906, %v4189
    %v4191 = vrot.slane %v4190, 2
    %v4192 = vadd.f32 %v4190, %v4191
    %v4193 = vrot.slane %v4192, 1
    %v4194 = vadd.f32 %v4192, %v4193
    %v4195 = vrot.slane %v2907, 4
    %v4196 = vadd.f32 %v2907, %v4195
    %v4197 = vrot.slane %v4196, 2
    %v4198 = vadd.f32 %v4196, %v4197
    %v4199 = vrot.slane %v4198, 1
    %v4200 = vadd.f32 %v4198, %v4199
    %v4201 = vrot.slane %v2908, 4
    %v4202 = vadd.f32 %v2908, %v4201
    %v4203 = vrot.slane %v4202, 2
    %v4204 = vadd.f32 %v4202, %v4203
    %v4205 = vrot.slane %v4204, 1
    %v4206 = vadd.f32 %v4204, %v4205
    %v4207 = vrot.slane %v2909, 4
    %v4208 = vadd.f32 %v2909, %v4207
    %v4209 = vrot.slane %v4208, 2
    %v4210 = vadd.f32 %v4208, %v4209
    %v4211 = vrot.slane %v4210, 1
    %v4212 = vadd.f32 %v4210, %v4211
    %v4213 = vrot.slane %v2910, 4
    %v4214 = vadd.f32 %v2910, %v4213
    %v4215 = vrot.slane %v4214, 2
    %v4216 = vadd.f32 %v4214, %v4215
    %v4217 = vrot.slane %v4216, 1
    %v4218 = vadd.f32 %v4216, %v4217
    %v4219 = vrot.slane %v2911, 4
    %v4220 = vadd.f32 %v2911, %v4219
    %v4221 = vrot.slane %v4220, 2
    %v4222 = vadd.f32 %v4220, %v4221
    %v4223 = vrot.slane %v4222, 1
    %v4224 = vadd.f32 %v4222, %v4223
    %v4225 = vrot.slane %v2912, 4
    %v4226 = vadd.f32 %v2912, %v4225
    %v4227 = vrot.slane %v4226, 2
    %v4228 = vadd.f32 %v4226, %v4227
    %v4229 = vrot.slane %v4228, 1
    %v4230 = vadd.f32 %v4228, %v4229
    %v4231 = vrot.slane %v2913, 4
    %v4232 = vadd.f32 %v2913, %v4231
    %v4233 = vrot.slane %v4232, 2
    %v4234 = vadd.f32 %v4232, %v4233
    %v4235 = vrot.slane %v4234, 1
    %v4236 = vadd.f32 %v4234, %v4235
    %v4237 = vrot.slane %v2914, 4
    %v4238 = vadd.f32 %v2914, %v4237
    %v4239 = vrot.slane %v4238, 2
    %v4240 = vadd.f32 %v4238, %v4239
    %v4241 = vrot.slane %v4240, 1
    %v4242 = vadd.f32 %v4240, %v4241
    %v4243 = vrot.slane %v2915, 4
    %v4244 = vadd.f32 %v2915, %v4243
    %v4245 = vrot.slane %v4244, 2
    %v4246 = vadd.f32 %v4244, %v4245
    %v4247 = vrot.slane %v4246, 1
    %v4248 = vadd.f32 %v4246, %v4247
    %v4249 = vrot.slane %v2916, 4
    %v4250 = vadd.f32 %v2916, %v4249
    %v4251 = vrot.slane %v4250, 2
    %v4252 = vadd.f32 %v4250, %v4251
    %v4253 = vrot.slane %v4252, 1
    %v4254 = vadd.f32 %v4252, %v4253
    %v4255 = vrot.slane %v2917, 4
    %v4256 = vadd.f32 %v2917, %v4255
    %v4257 = vrot.slane %v4256, 2
    %v4258 = vadd.f32 %v4256, %v4257
    %v4259 = vrot.slane %v4258, 1
    %v4260 = vadd.f32 %v4258, %v4259
    %v4261 = vrot.slane %v2918, 4
    %v4262 = vadd.f32 %v2918, %v4261
    %v4263 = vrot.slane %v4262, 2
    %v4264 = vadd.f32 %v4262, %v4263
    %v4265 = vrot.slane %v4264, 1
    %v4266 = vadd.f32 %v4264, %v4265
    %v4267 = vrot.slane %v2919, 4
    %v4268 = vadd.f32 %v2919, %v4267
    %v4269 = vrot.slane %v4268, 2
    %v4270 = vadd.f32 %v4268, %v4269
    %v4271 = vrot.slane %v4270, 1
    %v4272 = vadd.f32 %v4270, %v4271
    %v4273 = vrot.slane %v2920, 4
    %v4274 = vadd.f32 %v2920, %v4273
    %v4275 = vrot.slane %v4274, 2
    %v4276 = vadd.f32 %v4274, %v4275
    %v4277 = vrot.slane %v4276, 1
    %v4278 = vadd.f32 %v4276, %v4277
    %v4279 = vrot.slane %v2921, 4
    %v4280 = vadd.f32 %v2921, %v4279
    %v4281 = vrot.slane %v4280, 2
    %v4282 = vadd.f32 %v4280, %v4281
    %v4283 = vrot.slane %v4282, 1
    %v4284 = vadd.f32 %v4282, %v4283
    %v4285 = vrot.slane %v2922, 4
    %v4286 = vadd.f32 %v2922, %v4285
    %v4287 = vrot.slane %v4286, 2
    %v4288 = vadd.f32 %v4286, %v4287
    %v4289 = vrot.slane %v4288, 1
    %v4290 = vadd.f32 %v4288, %v4289
    %v4291 = vrot.slane %v2923, 4
    %v4292 = vadd.f32 %v2923, %v4291
    %v4293 = vrot.slane %v4292, 2
    %v4294 = vadd.f32 %v4292, %v4293
    %v4295 = vrot.slane %v4294, 1
    %v4296 = vadd.f32 %v4294, %v4295
    %v4297 = vrot.slane %v2924, 4
    %v4298 = vadd.f32 %v2924, %v4297
    %v4299 = vrot.slane %v4298, 2
    %v4300 = vadd.f32 %v4298, %v4299
    %v4301 = vrot.slane %v4300, 1
    %v4302 = vadd.f32 %v4300, %v4301
    %v4303 = vrot.slane %v2925, 4
    %v4304 = vadd.f32 %v2925, %v4303
    %v4305 = vrot.slane %v4304, 2
    %v4306 = vadd.f32 %v4304, %v4305
    %v4307 = vrot.slane %v4306, 1
    %v4308 = vadd.f32 %v4306, %v4307
    %v4309 = vrot.slane %v2926, 4
    %v4310 = vadd.f32 %v2926, %v4309
    %v4311 = vrot.slane %v4310, 2
    %v4312 = vadd.f32 %v4310, %v4311
    %v4313 = vrot.slane %v4312, 1
    %v4314 = vadd.f32 %v4312, %v4313
    %v4315 = vrot.slane %v2927, 4
    %v4316 = vadd.f32 %v2927, %v4315
    %v4317 = vrot.slane %v4316, 2
    %v4318 = vadd.f32 %v4316, %v4317
    %v4319 = vrot.slane %v4318, 1
    %v4320 = vadd.f32 %v4318, %v4319
    %v4321 = vrot.slane %v2928, 4
    %v4322 = vadd.f32 %v2928, %v4321
    %v4323 = vrot.slane %v4322, 2
    %v4324 = vadd.f32 %v4322, %v4323
    %v4325 = vrot.slane %v4324, 1
    %v4326 = vadd.f32 %v4324, %v4325
    %v4327 = vrot.slane %v2929, 4
    %v4328 = vadd.f32 %v2929, %v4327
    %v4329 = vrot.slane %v4328, 2
    %v4330 = vadd.f32 %v4328, %v4329
    %v4331 = vrot.slane %v4330, 1
    %v4332 = vadd.f32 %v4330, %v4331
    %v4333 = vrot.slane %v2930, 4
    %v4334 = vadd.f32 %v2930, %v4333
    %v4335 = vrot.slane %v4334, 2
    %v4336 = vadd.f32 %v4334, %v4335
    %v4337 = vrot.slane %v4336, 1
    %v4338 = vadd.f32 %v4336, %v4337
    %v4339 = vrot.slane %v2931, 4
    %v4340 = vadd.f32 %v2931, %v4339
    %v4341 = vrot.slane %v4340, 2
    %v4342 = vadd.f32 %v4340, %v4341
    %v4343 = vrot.slane %v4342, 1
    %v4344 = vadd.f32 %v4342, %v4343
    %v4345 = vrot.slane %v2932, 4
    %v4346 = vadd.f32 %v2932, %v4345
    %v4347 = vrot.slane %v4346, 2
    %v4348 = vadd.f32 %v4346, %v4347
    %v4349 = vrot.slane %v4348, 1
    %v4350 = vadd.f32 %v4348, %v4349
    %v4351 = vrot.slane %v2933, 4
    %v4352 = vadd.f32 %v2933, %v4351
    %v4353 = vrot.slane %v4352, 2
    %v4354 = vadd.f32 %v4352, %v4353
    %v4355 = vrot.slane %v4354, 1
    %v4356 = vadd.f32 %v4354, %v4355
    %v4357 = vrot.slane %v2934, 4
    %v4358 = vadd.f32 %v2934, %v4357
    %v4359 = vrot.slane %v4358, 2
    %v4360 = vadd.f32 %v4358, %v4359
    %v4361 = vrot.slane %v4360, 1
    %v4362 = vadd.f32 %v4360, %v4361
    %v4363 = vrot.slane %v2935, 4
    %v4364 = vadd.f32 %v2935, %v4363
    %v4365 = vrot.slane %v4364, 2
    %v4366 = vadd.f32 %v4364, %v4365
    %v4367 = vrot.slane %v4366, 1
    %v4368 = vadd.f32 %v4366, %v4367
    %v4369 = vrot.slane %v2936, 4
    %v4370 = vadd.f32 %v2936, %v4369
    %v4371 = vrot.slane %v4370, 2
    %v4372 = vadd.f32 %v4370, %v4371
    %v4373 = vrot.slane %v4372, 1
    %v4374 = vadd.f32 %v4372, %v4373
    %v4375 = vrot.slane %v2937, 4
    %v4376 = vadd.f32 %v2937, %v4375
    %v4377 = vrot.slane %v4376, 2
    %v4378 = vadd.f32 %v4376, %v4377
    %v4379 = vrot.slane %v4378, 1
    %v4380 = vadd.f32 %v4378, %v4379
    %v4381 = vrot.slane %v2938, 4
    %v4382 = vadd.f32 %v2938, %v4381
    %v4383 = vrot.slane %v4382, 2
    %v4384 = vadd.f32 %v4382, %v4383
    %v4385 = vrot.slane %v4384, 1
    %v4386 = vadd.f32 %v4384, %v4385
    %v4387 = vrot.slane %v2939, 4
    %v4388 = vadd.f32 %v2939, %v4387
    %v4389 = vrot.slane %v4388, 2
    %v4390 = vadd.f32 %v4388, %v4389
    %v4391 = vrot.slane %v4390, 1
    %v4392 = vadd.f32 %v4390, %v4391
    %v4393 = vrot.slane %v2940, 4
    %v4394 = vadd.f32 %v2940, %v4393
    %v4395 = vrot.slane %v4394, 2
    %v4396 = vadd.f32 %v4394, %v4395
    %v4397 = vrot.slane %v4396, 1
    %v4398 = vadd.f32 %v4396, %v4397
    %v4399 = vrot.slane %v2941, 4
    %v4400 = vadd.f32 %v2941, %v4399
    %v4401 = vrot.slane %v4400, 2
    %v4402 = vadd.f32 %v4400, %v4401
    %v4403 = vrot.slane %v4402, 1
    %v4404 = vadd.f32 %v4402, %v4403
    %v4405 = vrot.slane %v2942, 4
    %v4406 = vadd.f32 %v2942, %v4405
    %v4407 = vrot.slane %v4406, 2
    %v4408 = vadd.f32 %v4406, %v4407
    %v4409 = vrot.slane %v4408, 1
    %v4410 = vadd.f32 %v4408, %v4409
    %v4411 = vrot.slane %v2943, 4
    %v4412 = vadd.f32 %v2943, %v4411
    %v4413 = vrot.slane %v4412, 2
    %v4414 = vadd.f32 %v4412, %v4413
    %v4415 = vrot.slane %v4414, 1
    %v4416 = vadd.f32 %v4414, %v4415
    %v4417 = vrot.slane %v2944, 4
    %v4418 = vadd.f32 %v2944, %v4417
    %v4419 = vrot.slane %v4418, 2
    %v4420 = vadd.f32 %v4418, %v4419
    %v4421 = vrot.slane %v4420, 1
    %v4422 = vadd.f32 %v4420, %v4421
    %v4423 = vrot.slane %v2945, 4
    %v4424 = vadd.f32 %v2945, %v4423
    %v4425 = vrot.slane %v4424, 2
    %v4426 = vadd.f32 %v4424, %v4425
    %v4427 = vrot.slane %v4426, 1
    %v4428 = vadd.f32 %v4426, %v4427
    %v4429 = vrot.slane %v2946, 4
    %v4430 = vadd.f32 %v2946, %v4429
    %v4431 = vrot.slane %v4430, 2
    %v4432 = vadd.f32 %v4430, %v4431
    %v4433 = vrot.slane %v4432, 1
    %v4434 = vadd.f32 %v4432, %v4433
    %v4435 = vrot.slane %v2947, 4
    %v4436 = vadd.f32 %v2947, %v4435
    %v4437 = vrot.slane %v4436, 2
    %v4438 = vadd.f32 %v4436, %v4437
    %v4439 = vrot.slane %v4438, 1
    %v4440 = vadd.f32 %v4438, %v4439
    %v4441 = vrot.slane %v2948, 4
    %v4442 = vadd.f32 %v2948, %v4441
    %v4443 = vrot.slane %v4442, 2
    %v4444 = vadd.f32 %v4442, %v4443
    %v4445 = vrot.slane %v4444, 1
    %v4446 = vadd.f32 %v4444, %v4445
    %v4447 = vrot.slane %v2949, 4
    %v4448 = vadd.f32 %v2949, %v4447
    %v4449 = vrot.slane %v4448, 2
    %v4450 = vadd.f32 %v4448, %v4449
    %v4451 = vrot.slane %v4450, 1
    %v4452 = vadd.f32 %v4450, %v4451
    %v4453 = vrot.slane %v2950, 4
    %v4454 = vadd.f32 %v2950, %v4453
    %v4455 = vrot.slane %v4454, 2
    %v4456 = vadd.f32 %v4454, %v4455
    %v4457 = vrot.slane %v4456, 1
    %v4458 = vadd.f32 %v4456, %v4457
    %v4459 = vrot.slane %v2951, 4
    %v4460 = vadd.f32 %v2951, %v4459
    %v4461 = vrot.slane %v4460, 2
    %v4462 = vadd.f32 %v4460, %v4461
    %v4463 = vrot.slane %v4462, 1
    %v4464 = vadd.f32 %v4462, %v4463
    %v4465 = vrot.slane %v2952, 4
    %v4466 = vadd.f32 %v2952, %v4465
    %v4467 = vrot.slane %v4466, 2
    %v4468 = vadd.f32 %v4466, %v4467
    %v4469 = vrot.slane %v4468, 1
    %v4470 = vadd.f32 %v4468, %v4469
    %v4471 = vrot.slane %v2953, 4
    %v4472 = vadd.f32 %v2953, %v4471
    %v4473 = vrot.slane %v4472, 2
    %v4474 = vadd.f32 %v4472, %v4473
    %v4475 = vrot.slane %v4474, 1
    %v4476 = vadd.f32 %v4474, %v4475
    %v4477 = vrot.slane %v2954, 4
    %v4478 = vadd.f32 %v2954, %v4477
    %v4479 = vrot.slane %v4478, 2
    %v4480 = vadd.f32 %v4478, %v4479
    %v4481 = vrot.slane %v4480, 1
    %v4482 = vadd.f32 %v4480, %v4481
    %v4483 = vrot.slane %v2955, 4
    %v4484 = vadd.f32 %v2955, %v4483
    %v4485 = vrot.slane %v4484, 2
    %v4486 = vadd.f32 %v4484, %v4485
    %v4487 = vrot.slane %v4486, 1
    %v4488 = vadd.f32 %v4486, %v4487
    %v4489 = vrot.slane %v2956, 4
    %v4490 = vadd.f32 %v2956, %v4489
    %v4491 = vrot.slane %v4490, 2
    %v4492 = vadd.f32 %v4490, %v4491
    %v4493 = vrot.slane %v4492, 1
    %v4494 = vadd.f32 %v4492, %v4493
    %v4495 = vrot.slane %v2957, 4
    %v4496 = vadd.f32 %v2957, %v4495
    %v4497 = vrot.slane %v4496, 2
    %v4498 = vadd.f32 %v4496, %v4497
    %v4499 = vrot.slane %v4498, 1
    %v4500 = vadd.f32 %v4498, %v4499
    %v4501 = vrot.slane %v2958, 4
    %v4502 = vadd.f32 %v2958, %v4501
    %v4503 = vrot.slane %v4502, 2
    %v4504 = vadd.f32 %v4502, %v4503
    %v4505 = vrot.slane %v4504, 1
    %v4506 = vadd.f32 %v4504, %v4505
    %v4507 = vrot.slane %v2959, 4
    %v4508 = vadd.f32 %v2959, %v4507
    %v4509 = vrot.slane %v4508, 2
    %v4510 = vadd.f32 %v4508, %v4509
    %v4511 = vrot.slane %v4510, 1
    %v4512 = vadd.f32 %v4510, %v4511
    %v4513 = vrot.slane %v2960, 4
    %v4514 = vadd.f32 %v2960, %v4513
    %v4515 = vrot.slane %v4514, 2
    %v4516 = vadd.f32 %v4514, %v4515
    %v4517 = vrot.slane %v4516, 1
    %v4518 = vadd.f32 %v4516, %v4517
    %v4519 = vrot.slane %v2961, 4
    %v4520 = vadd.f32 %v2961, %v4519
    %v4521 = vrot.slane %v4520, 2
    %v4522 = vadd.f32 %v4520, %v4521
    %v4523 = vrot.slane %v4522, 1
    %v4524 = vadd.f32 %v4522, %v4523
    %v4525 = vrot.slane %v2962, 4
    %v4526 = vadd.f32 %v2962, %v4525
    %v4527 = vrot.slane %v4526, 2
    %v4528 = vadd.f32 %v4526, %v4527
    %v4529 = vrot.slane %v4528, 1
    %v4530 = vadd.f32 %v4528, %v4529
    %v4531 = vrot.slane %v2963, 4
    %v4532 = vadd.f32 %v2963, %v4531
    %v4533 = vrot.slane %v4532, 2
    %v4534 = vadd.f32 %v4532, %v4533
    %v4535 = vrot.slane %v4534, 1
    %v4536 = vadd.f32 %v4534, %v4535
    %v4537 = vrot.slane %v2964, 4
    %v4538 = vadd.f32 %v2964, %v4537
    %v4539 = vrot.slane %v4538, 2
    %v4540 = vadd.f32 %v4538, %v4539
    %v4541 = vrot.slane %v4540, 1
    %v4542 = vadd.f32 %v4540, %v4541
    %v4543 = vrot.slane %v2965, 4
    %v4544 = vadd.f32 %v2965, %v4543
    %v4545 = vrot.slane %v4544, 2
    %v4546 = vadd.f32 %v4544, %v4545
    %v4547 = vrot.slane %v4546, 1
    %v4548 = vadd.f32 %v4546, %v4547
    %v4549 = vrot.slane %v2966, 4
    %v4550 = vadd.f32 %v2966, %v4549
    %v4551 = vrot.slane %v4550, 2
    %v4552 = vadd.f32 %v4550, %v4551
    %v4553 = vrot.slane %v4552, 1
    %v4554 = vadd.f32 %v4552, %v4553
    %v4555 = vrot.slane %v2967, 4
    %v4556 = vadd.f32 %v2967, %v4555
    %v4557 = vrot.slane %v4556, 2
    %v4558 = vadd.f32 %v4556, %v4557
    %v4559 = vrot.slane %v4558, 1
    %v4560 = vadd.f32 %v4558, %v4559
    %v4561 = vrot.slane %v2968, 4
    %v4562 = vadd.f32 %v2968, %v4561
    %v4563 = vrot.slane %v4562, 2
    %v4564 = vadd.f32 %v4562, %v4563
    %v4565 = vrot.slane %v4564, 1
    %v4566 = vadd.f32 %v4564, %v4565
    %v4567 = vrot.slane %v2969, 4
    %v4568 = vadd.f32 %v2969, %v4567
    %v4569 = vrot.slane %v4568, 2
    %v4570 = vadd.f32 %v4568, %v4569
    %v4571 = vrot.slane %v4570, 1
    %v4572 = vadd.f32 %v4570, %v4571
    %v4573 = vrot.slane %v2970, 4
    %v4574 = vadd.f32 %v2970, %v4573
    %v4575 = vrot.slane %v4574, 2
    %v4576 = vadd.f32 %v4574, %v4575
    %v4577 = vrot.slane %v4576, 1
    %v4578 = vadd.f32 %v4576, %v4577
    %v4579 = vrot.slane %v2971, 4
    %v4580 = vadd.f32 %v2971, %v4579
    %v4581 = vrot.slane %v4580, 2
    %v4582 = vadd.f32 %v4580, %v4581
    %v4583 = vrot.slane %v4582, 1
    %v4584 = vadd.f32 %v4582, %v4583
    %v4585 = vrot.slane %v2972, 4
    %v4586 = vadd.f32 %v2972, %v4585
    %v4587 = vrot.slane %v4586, 2
    %v4588 = vadd.f32 %v4586, %v4587
    %v4589 = vrot.slane %v4588, 1
    %v4590 = vadd.f32 %v4588, %v4589
    %v4591 = vrot.slane %v2973, 4
    %v4592 = vadd.f32 %v2973, %v4591
    %v4593 = vrot.slane %v4592, 2
    %v4594 = vadd.f32 %v4592, %v4593
    %v4595 = vrot.slane %v4594, 1
    %v4596 = vadd.f32 %v4594, %v4595
    %v4597 = vrot.slane %v2974, 4
    %v4598 = vadd.f32 %v2974, %v4597
    %v4599 = vrot.slane %v4598, 2
    %v4600 = vadd.f32 %v4598, %v4599
    %v4601 = vrot.slane %v4600, 1
    %v4602 = vadd.f32 %v4600, %v4601
    %v4603 = vrot.slane %v2975, 4
    %v4604 = vadd.f32 %v2975, %v4603
    %v4605 = vrot.slane %v4604, 2
    %v4606 = vadd.f32 %v4604, %v4605
    %v4607 = vrot.slane %v4606, 1
    %v4608 = vadd.f32 %v4606, %v4607
    %v4609 = vrot.slane %v2976, 4
    %v4610 = vadd.f32 %v2976, %v4609
    %v4611 = vrot.slane %v4610, 2
    %v4612 = vadd.f32 %v4610, %v4611
    %v4613 = vrot.slane %v4612, 1
    %v4614 = vadd.f32 %v4612, %v4613
    %v4615 = vrot.slane %v2977, 4
    %v4616 = vadd.f32 %v2977, %v4615
    %v4617 = vrot.slane %v4616, 2
    %v4618 = vadd.f32 %v4616, %v4617
    %v4619 = vrot.slane %v4618, 1
    %v4620 = vadd.f32 %v4618, %v4619
    %v4621 = vrot.slane %v2978, 4
    %v4622 = vadd.f32 %v2978, %v4621
    %v4623 = vrot.slane %v4622, 2
    %v4624 = vadd.f32 %v4622, %v4623
    %v4625 = vrot.slane %v4624, 1
    %v4626 = vadd.f32 %v4624, %v4625
    %v4627 = vrot.slane %v2979, 4
    %v4628 = vadd.f32 %v2979, %v4627
    %v4629 = vrot.slane %v4628, 2
    %v4630 = vadd.f32 %v4628, %v4629
    %v4631 = vrot.slane %v4630, 1
    %v4632 = vadd.f32 %v4630, %v4631
    %v4633 = vrot.slane %v2980, 4
    %v4634 = vadd.f32 %v2980, %v4633
    %v4635 = vrot.slane %v4634, 2
    %v4636 = vadd.f32 %v4634, %v4635
    %v4637 = vrot.slane %v4636, 1
    %v4638 = vadd.f32 %v4636, %v4637
    %v4639 = vrot.slane %v2981, 4
    %v4640 = vadd.f32 %v2981, %v4639
    %v4641 = vrot.slane %v4640, 2
    %v4642 = vadd.f32 %v4640, %v4641
    %v4643 = vrot.slane %v4642, 1
    %v4644 = vadd.f32 %v4642, %v4643
    %v4645 = vrot.slane %v2982, 4
    %v4646 = vadd.f32 %v2982, %v4645
    %v4647 = vrot.slane %v4646, 2
    %v4648 = vadd.f32 %v4646, %v4647
    %v4649 = vrot.slane %v4648, 1
    %v4650 = vadd.f32 %v4648, %v4649
    %v4651 = vrot.slane %v2983, 4
    %v4652 = vadd.f32 %v2983, %v4651
    %v4653 = vrot.slane %v4652, 2
    %v4654 = vadd.f32 %v4652, %v4653
    %v4655 = vrot.slane %v4654, 1
    %v4656 = vadd.f32 %v4654, %v4655
    %v4657 = vrot.slane %v2984, 4
    %v4658 = vadd.f32 %v2984, %v4657
    %v4659 = vrot.slane %v4658, 2
    %v4660 = vadd.f32 %v4658, %v4659
    %v4661 = vrot.slane %v4660, 1
    %v4662 = vadd.f32 %v4660, %v4661
    %v4663 = vrot.slane %v2985, 4
    %v4664 = vadd.f32 %v2985, %v4663
    %v4665 = vrot.slane %v4664, 2
    %v4666 = vadd.f32 %v4664, %v4665
    %v4667 = vrot.slane %v4666, 1
    %v4668 = vadd.f32 %v4666, %v4667
    %v4669 = vrot.slane %v2986, 4
    %v4670 = vadd.f32 %v2986, %v4669
    %v4671 = vrot.slane %v4670, 2
    %v4672 = vadd.f32 %v4670, %v4671
    %v4673 = vrot.slane %v4672, 1
    %v4674 = vadd.f32 %v4672, %v4673
    %v4675 = vrot.slane %v2987, 4
    %v4676 = vadd.f32 %v2987, %v4675
    %v4677 = vrot.slane %v4676, 2
    %v4678 = vadd.f32 %v4676, %v4677
    %v4679 = vrot.slane %v4678, 1
    %v4680 = vadd.f32 %v4678, %v4679
    %v4681 = vrot.slane %v2988, 4
    %v4682 = vadd.f32 %v2988, %v4681
    %v4683 = vrot.slane %v4682, 2
    %v4684 = vadd.f32 %v4682, %v4683
    %v4685 = vrot.slane %v4684, 1
    %v4686 = vadd.f32 %v4684, %v4685
    %v4687 = vrot.slane %v2989, 4
    %v4688 = vadd.f32 %v2989, %v4687
    %v4689 = vrot.slane %v4688, 2
    %v4690 = vadd.f32 %v4688, %v4689
    %v4691 = vrot.slane %v4690, 1
    %v4692 = vadd.f32 %v4690, %v4691
    %v4693 = vrot.slane %v2990, 4
    %v4694 = vadd.f32 %v2990, %v4693
    %v4695 = vrot.slane %v4694, 2
    %v4696 = vadd.f32 %v4694, %v4695
    %v4697 = vrot.slane %v4696, 1
    %v4698 = vadd.f32 %v4696, %v4697
    %v4699 = vrot.slane %v2991, 4
    %v4700 = vadd.f32 %v2991, %v4699
    %v4701 = vrot.slane %v4700, 2
    %v4702 = vadd.f32 %v4700, %v4701
    %v4703 = vrot.slane %v4702, 1
    %v4704 = vadd.f32 %v4702, %v4703
    %v4705 = vrot.slane %v2992, 4
    %v4706 = vadd.f32 %v2992, %v4705
    %v4707 = vrot.slane %v4706, 2
    %v4708 = vadd.f32 %v4706, %v4707
    %v4709 = vrot.slane %v4708, 1
    %v4710 = vadd.f32 %v4708, %v4709
    %v4711 = vrot.slane %v2993, 4
    %v4712 = vadd.f32 %v2993, %v4711
    %v4713 = vrot.slane %v4712, 2
    %v4714 = vadd.f32 %v4712, %v4713
    %v4715 = vrot.slane %v4714, 1
    %v4716 = vadd.f32 %v4714, %v4715
    %v4717 = vrot.slane %v2994, 4
    %v4718 = vadd.f32 %v2994, %v4717
    %v4719 = vrot.slane %v4718, 2
    %v4720 = vadd.f32 %v4718, %v4719
    %v4721 = vrot.slane %v4720, 1
    %v4722 = vadd.f32 %v4720, %v4721
    %v4723 = vrot.slane %v2995, 4
    %v4724 = vadd.f32 %v2995, %v4723
    %v4725 = vrot.slane %v4724, 2
    %v4726 = vadd.f32 %v4724, %v4725
    %v4727 = vrot.slane %v4726, 1
    %v4728 = vadd.f32 %v4726, %v4727
    %v4729 = vrot.slane %v2996, 4
    %v4730 = vadd.f32 %v2996, %v4729
    %v4731 = vrot.slane %v4730, 2
    %v4732 = vadd.f32 %v4730, %v4731
    %v4733 = vrot.slane %v4732, 1
    %v4734 = vadd.f32 %v4732, %v4733
    %v4735 = vrot.slane %v2997, 4
    %v4736 = vadd.f32 %v2997, %v4735
    %v4737 = vrot.slane %v4736, 2
    %v4738 = vadd.f32 %v4736, %v4737
    %v4739 = vrot.slane %v4738, 1
    %v4740 = vadd.f32 %v4738, %v4739
    %v4741 = vrot.slane %v2998, 4
    %v4742 = vadd.f32 %v2998, %v4741
    %v4743 = vrot.slane %v4742, 2
    %v4744 = vadd.f32 %v4742, %v4743
    %v4745 = vrot.slane %v4744, 1
    %v4746 = vadd.f32 %v4744, %v4745
    %v4747 = vrot.slane %v2999, 4
    %v4748 = vadd.f32 %v2999, %v4747
    %v4749 = vrot.slane %v4748, 2
    %v4750 = vadd.f32 %v4748, %v4749
    %v4751 = vrot.slane %v4750, 1
    %v4752 = vadd.f32 %v4750, %v4751
    %v4753 = vrot.slane %v3000, 4
    %v4754 = vadd.f32 %v3000, %v4753
    %v4755 = vrot.slane %v4754, 2
    %v4756 = vadd.f32 %v4754, %v4755
    %v4757 = vrot.slane %v4756, 1
    %v4758 = vadd.f32 %v4756, %v4757
    %v4759 = vrot.slane %v3001, 4
    %v4760 = vadd.f32 %v3001, %v4759
    %v4761 = vrot.slane %v4760, 2
    %v4762 = vadd.f32 %v4760, %v4761
    %v4763 = vrot.slane %v4762, 1
    %v4764 = vadd.f32 %v4762, %v4763
    %v4765 = vrot.slane %v3002, 4
    %v4766 = vadd.f32 %v3002, %v4765
    %v4767 = vrot.slane %v4766, 2
    %v4768 = vadd.f32 %v4766, %v4767
    %v4769 = vrot.slane %v4768, 1
    %v4770 = vadd.f32 %v4768, %v4769
    %v4771 = vrot.slane %v3003, 4
    %v4772 = vadd.f32 %v3003, %v4771
    %v4773 = vrot.slane %v4772, 2
    %v4774 = vadd.f32 %v4772, %v4773
    %v4775 = vrot.slane %v4774, 1
    %v4776 = vadd.f32 %v4774, %v4775
    %v4777 = vrot.slane %v3004, 4
    %v4778 = vadd.f32 %v3004, %v4777
    %v4779 = vrot.slane %v4778, 2
    %v4780 = vadd.f32 %v4778, %v4779
    %v4781 = vrot.slane %v4780, 1
    %v4782 = vadd.f32 %v4780, %v4781
    %v4783 = vrot.slane %v3005, 4
    %v4784 = vadd.f32 %v3005, %v4783
    %v4785 = vrot.slane %v4784, 2
    %v4786 = vadd.f32 %v4784, %v4785
    %v4787 = vrot.slane %v4786, 1
    %v4788 = vadd.f32 %v4786, %v4787
    %v4789 = vrot.slane %v3006, 4
    %v4790 = vadd.f32 %v3006, %v4789
    %v4791 = vrot.slane %v4790, 2
    %v4792 = vadd.f32 %v4790, %v4791
    %v4793 = vrot.slane %v4792, 1
    %v4794 = vadd.f32 %v4792, %v4793
    %v4795 = vrot.slane %v3007, 4
    %v4796 = vadd.f32 %v3007, %v4795
    %v4797 = vrot.slane %v4796, 2
    %v4798 = vadd.f32 %v4796, %v4797
    %v4799 = vrot.slane %v4798, 1
    %v4800 = vadd.f32 %v4798, %v4799
    %v4801 = vrot.slane %v3008, 4
    %v4802 = vadd.f32 %v3008, %v4801
    %v4803 = vrot.slane %v4802, 2
    %v4804 = vadd.f32 %v4802, %v4803
    %v4805 = vrot.slane %v4804, 1
    %v4806 = vadd.f32 %v4804, %v4805
    %v4807 = vrot.slane %v3009, 4
    %v4808 = vadd.f32 %v3009, %v4807
    %v4809 = vrot.slane %v4808, 2
    %v4810 = vadd.f32 %v4808, %v4809
    %v4811 = vrot.slane %v4810, 1
    %v4812 = vadd.f32 %v4810, %v4811
    %v4813 = vrot.slane %v3010, 4
    %v4814 = vadd.f32 %v3010, %v4813
    %v4815 = vrot.slane %v4814, 2
    %v4816 = vadd.f32 %v4814, %v4815
    %v4817 = vrot.slane %v4816, 1
    %v4818 = vadd.f32 %v4816, %v4817
    %v4819 = vrot.slane %v3011, 4
    %v4820 = vadd.f32 %v3011, %v4819
    %v4821 = vrot.slane %v4820, 2
    %v4822 = vadd.f32 %v4820, %v4821
    %v4823 = vrot.slane %v4822, 1
    %v4824 = vadd.f32 %v4822, %v4823
    %v4825 = vrot.slane %v3012, 4
    %v4826 = vadd.f32 %v3012, %v4825
    %v4827 = vrot.slane %v4826, 2
    %v4828 = vadd.f32 %v4826, %v4827
    %v4829 = vrot.slane %v4828, 1
    %v4830 = vadd.f32 %v4828, %v4829
    %v4831 = vrot.slane %v3013, 4
    %v4832 = vadd.f32 %v3013, %v4831
    %v4833 = vrot.slane %v4832, 2
    %v4834 = vadd.f32 %v4832, %v4833
    %v4835 = vrot.slane %v4834, 1
    %v4836 = vadd.f32 %v4834, %v4835
    %v4837 = vrot.slane %v3014, 4
    %v4838 = vadd.f32 %v3014, %v4837
    %v4839 = vrot.slane %v4838, 2
    %v4840 = vadd.f32 %v4838, %v4839
    %v4841 = vrot.slane %v4840, 1
    %v4842 = vadd.f32 %v4840, %v4841
    %v4843 = vrot.slane %v3015, 4
    %v4844 = vadd.f32 %v3015, %v4843
    %v4845 = vrot.slane %v4844, 2
    %v4846 = vadd.f32 %v4844, %v4845
    %v4847 = vrot.slane %v4846, 1
    %v4848 = vadd.f32 %v4846, %v4847
    %v4849 = vrot.slane %v3016, 4
    %v4850 = vadd.f32 %v3016, %v4849
    %v4851 = vrot.slane %v4850, 2
    %v4852 = vadd.f32 %v4850, %v4851
    %v4853 = vrot.slane %v4852, 1
    %v4854 = vadd.f32 %v4852, %v4853
    %v4855 = vrot.slane %v3017, 4
    %v4856 = vadd.f32 %v3017, %v4855
    %v4857 = vrot.slane %v4856, 2
    %v4858 = vadd.f32 %v4856, %v4857
    %v4859 = vrot.slane %v4858, 1
    %v4860 = vadd.f32 %v4858, %v4859
    %v4861 = vrot.slane %v3018, 4
    %v4862 = vadd.f32 %v3018, %v4861
    %v4863 = vrot.slane %v4862, 2
    %v4864 = vadd.f32 %v4862, %v4863
    %v4865 = vrot.slane %v4864, 1
    %v4866 = vadd.f32 %v4864, %v4865
    %v4867 = vrot.slane %v3019, 4
    %v4868 = vadd.f32 %v3019, %v4867
    %v4869 = vrot.slane %v4868, 2
    %v4870 = vadd.f32 %v4868, %v4869
    %v4871 = vrot.slane %v4870, 1
    %v4872 = vadd.f32 %v4870, %v4871
    %v4873 = vrot.slane %v3020, 4
    %v4874 = vadd.f32 %v3020, %v4873
    %v4875 = vrot.slane %v4874, 2
    %v4876 = vadd.f32 %v4874, %v4875
    %v4877 = vrot.slane %v4876, 1
    %v4878 = vadd.f32 %v4876, %v4877
    %v4879 = vrot.slane %v3021, 4
    %v4880 = vadd.f32 %v3021, %v4879
    %v4881 = vrot.slane %v4880, 2
    %v4882 = vadd.f32 %v4880, %v4881
    %v4883 = vrot.slane %v4882, 1
    %v4884 = vadd.f32 %v4882, %v4883
    %v4885 = vrot.slane %v3022, 4
    %v4886 = vadd.f32 %v3022, %v4885
    %v4887 = vrot.slane %v4886, 2
    %v4888 = vadd.f32 %v4886, %v4887
    %v4889 = vrot.slane %v4888, 1
    %v4890 = vadd.f32 %v4888, %v4889
    %v4891 = vrot.slane %v3023, 4
    %v4892 = vadd.f32 %v3023, %v4891
    %v4893 = vrot.slane %v4892, 2
    %v4894 = vadd.f32 %v4892, %v4893
    %v4895 = vrot.slane %v4894, 1
    %v4896 = vadd.f32 %v4894, %v4895
    %v4897 = vrot.slane %v3024, 4
    %v4898 = vadd.f32 %v3024, %v4897
    %v4899 = vrot.slane %v4898, 2
    %v4900 = vadd.f32 %v4898, %v4899
    %v4901 = vrot.slane %v4900, 1
    %v4902 = vadd.f32 %v4900, %v4901
    %v4903 = vrot.slane %v3025, 4
    %v4904 = vadd.f32 %v3025, %v4903
    %v4905 = vrot.slane %v4904, 2
    %v4906 = vadd.f32 %v4904, %v4905
    %v4907 = vrot.slane %v4906, 1
    %v4908 = vadd.f32 %v4906, %v4907
    %v4909 = vrot.slane %v3026, 4
    %v4910 = vadd.f32 %v3026, %v4909
    %v4911 = vrot.slane %v4910, 2
    %v4912 = vadd.f32 %v4910, %v4911
    %v4913 = vrot.slane %v4912, 1
    %v4914 = vadd.f32 %v4912, %v4913
    %v4915 = vrot.slane %v3027, 4
    %v4916 = vadd.f32 %v3027, %v4915
    %v4917 = vrot.slane %v4916, 2
    %v4918 = vadd.f32 %v4916, %v4917
    %v4919 = vrot.slane %v4918, 1
    %v4920 = vadd.f32 %v4918, %v4919
    %v4921 = vrot.slane %v3028, 4
    %v4922 = vadd.f32 %v3028, %v4921
    %v4923 = vrot.slane %v4922, 2
    %v4924 = vadd.f32 %v4922, %v4923
    %v4925 = vrot.slane %v4924, 1
    %v4926 = vadd.f32 %v4924, %v4925
    %v4927 = vrot.slane %v3029, 4
    %v4928 = vadd.f32 %v3029, %v4927
    %v4929 = vrot.slane %v4928, 2
    %v4930 = vadd.f32 %v4928, %v4929
    %v4931 = vrot.slane %v4930, 1
    %v4932 = vadd.f32 %v4930, %v4931
    %v4933 = vrot.slane %v3030, 4
    %v4934 = vadd.f32 %v3030, %v4933
    %v4935 = vrot.slane %v4934, 2
    %v4936 = vadd.f32 %v4934, %v4935
    %v4937 = vrot.slane %v4936, 1
    %v4938 = vadd.f32 %v4936, %v4937
    %v4939 = vrot.slane %v3031, 4
    %v4940 = vadd.f32 %v3031, %v4939
    %v4941 = vrot.slane %v4940, 2
    %v4942 = vadd.f32 %v4940, %v4941
    %v4943 = vrot.slane %v4942, 1
    %v4944 = vadd.f32 %v4942, %v4943
    %v4945 = vrot.slane %v3032, 4
    %v4946 = vadd.f32 %v3032, %v4945
    %v4947 = vrot.slane %v4946, 2
    %v4948 = vadd.f32 %v4946, %v4947
    %v4949 = vrot.slane %v4948, 1
    %v4950 = vadd.f32 %v4948, %v4949
    %v4951 = vrot.slane %v3033, 4
    %v4952 = vadd.f32 %v3033, %v4951
    %v4953 = vrot.slane %v4952, 2
    %v4954 = vadd.f32 %v4952, %v4953
    %v4955 = vrot.slane %v4954, 1
    %v4956 = vadd.f32 %v4954, %v4955
    %v4957 = vrot.slane %v3034, 4
    %v4958 = vadd.f32 %v3034, %v4957
    %v4959 = vrot.slane %v4958, 2
    %v4960 = vadd.f32 %v4958, %v4959
    %v4961 = vrot.slane %v4960, 1
    %v4962 = vadd.f32 %v4960, %v4961
    %v4963 = vrot.slane %v3035, 4
    %v4964 = vadd.f32 %v3035, %v4963
    %v4965 = vrot.slane %v4964, 2
    %v4966 = vadd.f32 %v4964, %v4965
    %v4967 = vrot.slane %v4966, 1
    %v4968 = vadd.f32 %v4966, %v4967
    %v4969 = vrot.slane %v3036, 4
    %v4970 = vadd.f32 %v3036, %v4969
    %v4971 = vrot.slane %v4970, 2
    %v4972 = vadd.f32 %v4970, %v4971
    %v4973 = vrot.slane %v4972, 1
    %v4974 = vadd.f32 %v4972, %v4973
    %v4975 = vrot.slane %v3037, 4
    %v4976 = vadd.f32 %v3037, %v4975
    %v4977 = vrot.slane %v4976, 2
    %v4978 = vadd.f32 %v4976, %v4977
    %v4979 = vrot.slane %v4978, 1
    %v4980 = vadd.f32 %v4978, %v4979
    %v4981 = vrot.slane %v3038, 4
    %v4982 = vadd.f32 %v3038, %v4981
    %v4983 = vrot.slane %v4982, 2
    %v4984 = vadd.f32 %v4982, %v4983
    %v4985 = vrot.slane %v4984, 1
    %v4986 = vadd.f32 %v4984, %v4985
    %v4987 = vrot.slane %v3039, 4
    %v4988 = vadd.f32 %v3039, %v4987
    %v4989 = vrot.slane %v4988, 2
    %v4990 = vadd.f32 %v4988, %v4989
    %v4991 = vrot.slane %v4990, 1
    %v4992 = vadd.f32 %v4990, %v4991
    %v4993 = vrot.slane %v3040, 4
    %v4994 = vadd.f32 %v3040, %v4993
    %v4995 = vrot.slane %v4994, 2
    %v4996 = vadd.f32 %v4994, %v4995
    %v4997 = vrot.slane %v4996, 1
    %v4998 = vadd.f32 %v4996, %v4997
    %v4999 = vrot.slane %v3041, 4
    %v5000 = vadd.f32 %v3041, %v4999
    %v5001 = vrot.slane %v5000, 2
    %v5002 = vadd.f32 %v5000, %v5001
    %v5003 = vrot.slane %v5002, 1
    %v5004 = vadd.f32 %v5002, %v5003
    %v5005 = vrot.slane %v3042, 4
    %v5006 = vadd.f32 %v3042, %v5005
    %v5007 = vrot.slane %v5006, 2
    %v5008 = vadd.f32 %v5006, %v5007
    %v5009 = vrot.slane %v5008, 1
    %v5010 = vadd.f32 %v5008, %v5009
    %v5011 = vrot.slane %v3043, 4
    %v5012 = vadd.f32 %v3043, %v5011
    %v5013 = vrot.slane %v5012, 2
    %v5014 = vadd.f32 %v5012, %v5013
    %v5015 = vrot.slane %v5014, 1
    %v5016 = vadd.f32 %v5014, %v5015
    %v5017 = vrot.slane %v3044, 4
    %v5018 = vadd.f32 %v3044, %v5017
    %v5019 = vrot.slane %v5018, 2
    %v5020 = vadd.f32 %v5018, %v5019
    %v5021 = vrot.slane %v5020, 1
    %v5022 = vadd.f32 %v5020, %v5021
    %v5023 = vrot.slane %v3045, 4
    %v5024 = vadd.f32 %v3045, %v5023
    %v5025 = vrot.slane %v5024, 2
    %v5026 = vadd.f32 %v5024, %v5025
    %v5027 = vrot.slane %v5026, 1
    %v5028 = vadd.f32 %v5026, %v5027
    %v5029 = vrot.slane %v3046, 4
    %v5030 = vadd.f32 %v3046, %v5029
    %v5031 = vrot.slane %v5030, 2
    %v5032 = vadd.f32 %v5030, %v5031
    %v5033 = vrot.slane %v5032, 1
    %v5034 = vadd.f32 %v5032, %v5033
    %v5035 = vrot.slane %v3047, 4
    %v5036 = vadd.f32 %v3047, %v5035
    %v5037 = vrot.slane %v5036, 2
    %v5038 = vadd.f32 %v5036, %v5037
    %v5039 = vrot.slane %v5038, 1
    %v5040 = vadd.f32 %v5038, %v5039
    %v5041 = vrot.slane %v3048, 4
    %v5042 = vadd.f32 %v3048, %v5041
    %v5043 = vrot.slane %v5042, 2
    %v5044 = vadd.f32 %v5042, %v5043
    %v5045 = vrot.slane %v5044, 1
    %v5046 = vadd.f32 %v5044, %v5045
    %v5047 = vrot.slane %v3049, 4
    %v5048 = vadd.f32 %v3049, %v5047
    %v5049 = vrot.slane %v5048, 2
    %v5050 = vadd.f32 %v5048, %v5049
    %v5051 = vrot.slane %v5050, 1
    %v5052 = vadd.f32 %v5050, %v5051
    %v5053 = vrot.slane %v3050, 4
    %v5054 = vadd.f32 %v3050, %v5053
    %v5055 = vrot.slane %v5054, 2
    %v5056 = vadd.f32 %v5054, %v5055
    %v5057 = vrot.slane %v5056, 1
    %v5058 = vadd.f32 %v5056, %v5057
    %v5059 = vrot.slane %v3051, 4
    %v5060 = vadd.f32 %v3051, %v5059
    %v5061 = vrot.slane %v5060, 2
    %v5062 = vadd.f32 %v5060, %v5061
    %v5063 = vrot.slane %v5062, 1
    %v5064 = vadd.f32 %v5062, %v5063
    %v5065 = vrot.slane %v3052, 4
    %v5066 = vadd.f32 %v3052, %v5065
    %v5067 = vrot.slane %v5066, 2
    %v5068 = vadd.f32 %v5066, %v5067
    %v5069 = vrot.slane %v5068, 1
    %v5070 = vadd.f32 %v5068, %v5069
    %v5071 = vrot.slane %v3053, 4
    %v5072 = vadd.f32 %v3053, %v5071
    %v5073 = vrot.slane %v5072, 2
    %v5074 = vadd.f32 %v5072, %v5073
    %v5075 = vrot.slane %v5074, 1
    %v5076 = vadd.f32 %v5074, %v5075
    %v5077 = vrot.slane %v3054, 4
    %v5078 = vadd.f32 %v3054, %v5077
    %v5079 = vrot.slane %v5078, 2
    %v5080 = vadd.f32 %v5078, %v5079
    %v5081 = vrot.slane %v5080, 1
    %v5082 = vadd.f32 %v5080, %v5081
    %v5083 = vrot.slane %v3055, 4
    %v5084 = vadd.f32 %v3055, %v5083
    %v5085 = vrot.slane %v5084, 2
    %v5086 = vadd.f32 %v5084, %v5085
    %v5087 = vrot.slane %v5086, 1
    %v5088 = vadd.f32 %v5086, %v5087
    %v5089 = vrot.slane %v3056, 4
    %v5090 = vadd.f32 %v3056, %v5089
    %v5091 = vrot.slane %v5090, 2
    %v5092 = vadd.f32 %v5090, %v5091
    %v5093 = vrot.slane %v5092, 1
    %v5094 = vadd.f32 %v5092, %v5093
    %v5095 = vrot.slane %v3057, 4
    %v5096 = vadd.f32 %v3057, %v5095
    %v5097 = vrot.slane %v5096, 2
    %v5098 = vadd.f32 %v5096, %v5097
    %v5099 = vrot.slane %v5098, 1
    %v5100 = vadd.f32 %v5098, %v5099
    %v5101 = vrot.slane %v3058, 4
    %v5102 = vadd.f32 %v3058, %v5101
    %v5103 = vrot.slane %v5102, 2
    %v5104 = vadd.f32 %v5102, %v5103
    %v5105 = vrot.slane %v5104, 1
    %v5106 = vadd.f32 %v5104, %v5105
    %v5107 = vrot.slane %v3059, 4
    %v5108 = vadd.f32 %v3059, %v5107
    %v5109 = vrot.slane %v5108, 2
    %v5110 = vadd.f32 %v5108, %v5109
    %v5111 = vrot.slane %v5110, 1
    %v5112 = vadd.f32 %v5110, %v5111
    %v5113 = vrot.slane %v3060, 4
    %v5114 = vadd.f32 %v3060, %v5113
    %v5115 = vrot.slane %v5114, 2
    %v5116 = vadd.f32 %v5114, %v5115
    %v5117 = vrot.slane %v5116, 1
    %v5118 = vadd.f32 %v5116, %v5117
    %v5119 = vrot.slane %v3061, 4
    %v5120 = vadd.f32 %v3061, %v5119
    %v5121 = vrot.slane %v5120, 2
    %v5122 = vadd.f32 %v5120, %v5121
    %v5123 = vrot.slane %v5122, 1
    %v5124 = vadd.f32 %v5122, %v5123
    %v5125 = vrot.slane %v3062, 4
    %v5126 = vadd.f32 %v3062, %v5125
    %v5127 = vrot.slane %v5126, 2
    %v5128 = vadd.f32 %v5126, %v5127
    %v5129 = vrot.slane %v5128, 1
    %v5130 = vadd.f32 %v5128, %v5129
    %v5131 = vrot.slane %v3063, 4
    %v5132 = vadd.f32 %v3063, %v5131
    %v5133 = vrot.slane %v5132, 2
    %v5134 = vadd.f32 %v5132, %v5133
    %v5135 = vrot.slane %v5134, 1
    %v5136 = vadd.f32 %v5134, %v5135
    %v5137 = vrot.slane %v3064, 4
    %v5138 = vadd.f32 %v3064, %v5137
    %v5139 = vrot.slane %v5138, 2
    %v5140 = vadd.f32 %v5138, %v5139
    %v5141 = vrot.slane %v5140, 1
    %v5142 = vadd.f32 %v5140, %v5141
    %v5143 = vrot.slane %v3065, 4
    %v5144 = vadd.f32 %v3065, %v5143
    %v5145 = vrot.slane %v5144, 2
    %v5146 = vadd.f32 %v5144, %v5145
    %v5147 = vrot.slane %v5146, 1
    %v5148 = vadd.f32 %v5146, %v5147
    %v5149 = vrot.slane %v3066, 4
    %v5150 = vadd.f32 %v3066, %v5149
    %v5151 = vrot.slane %v5150, 2
    %v5152 = vadd.f32 %v5150, %v5151
    %v5153 = vrot.slane %v5152, 1
    %v5154 = vadd.f32 %v5152, %v5153
    %v5155 = vrot.slane %v3067, 4
    %v5156 = vadd.f32 %v3067, %v5155
    %v5157 = vrot.slane %v5156, 2
    %v5158 = vadd.f32 %v5156, %v5157
    %v5159 = vrot.slane %v5158, 1
    %v5160 = vadd.f32 %v5158, %v5159
    %v5161 = vrot.slane %v3068, 4
    %v5162 = vadd.f32 %v3068, %v5161
    %v5163 = vrot.slane %v5162, 2
    %v5164 = vadd.f32 %v5162, %v5163
    %v5165 = vrot.slane %v5164, 1
    %v5166 = vadd.f32 %v5164, %v5165
    %v5167 = vrot.slane %v3069, 4
    %v5168 = vadd.f32 %v3069, %v5167
    %v5169 = vrot.slane %v5168, 2
    %v5170 = vadd.f32 %v5168, %v5169
    %v5171 = vrot.slane %v5170, 1
    %v5172 = vadd.f32 %v5170, %v5171
    %v5173 = vrot.slane %v3070, 4
    %v5174 = vadd.f32 %v3070, %v5173
    %v5175 = vrot.slane %v5174, 2
    %v5176 = vadd.f32 %v5174, %v5175
    %v5177 = vrot.slane %v5176, 1
    %v5178 = vadd.f32 %v5176, %v5177
    %v5179 = vrot.slane %v3071, 4
    %v5180 = vadd.f32 %v3071, %v5179
    %v5181 = vrot.slane %v5180, 2
    %v5182 = vadd.f32 %v5180, %v5181
    %v5183 = vrot.slane %v5182, 1
    %v5184 = vadd.f32 %v5182, %v5183
    %v5185 = vrot.slane %v3072, 4
    %v5186 = vadd.f32 %v3072, %v5185
    %v5187 = vrot.slane %v5186, 2
    %v5188 = vadd.f32 %v5186, %v5187
    %v5189 = vrot.slane %v5188, 1
    %v5190 = vadd.f32 %v5188, %v5189
    %v5191 = vrot.slane %v3073, 4
    %v5192 = vadd.f32 %v3073, %v5191
    %v5193 = vrot.slane %v5192, 2
    %v5194 = vadd.f32 %v5192, %v5193
    %v5195 = vrot.slane %v5194, 1
    %v5196 = vadd.f32 %v5194, %v5195
    %v5197 = vrot.slane %v3074, 4
    %v5198 = vadd.f32 %v3074, %v5197
    %v5199 = vrot.slane %v5198, 2
    %v5200 = vadd.f32 %v5198, %v5199
    %v5201 = vrot.slane %v5200, 1
    %v5202 = vadd.f32 %v5200, %v5201
    %v5203 = vrot.slane %v3075, 4
    %v5204 = vadd.f32 %v3075, %v5203
    %v5205 = vrot.slane %v5204, 2
    %v5206 = vadd.f32 %v5204, %v5205
    %v5207 = vrot.slane %v5206, 1
    %v5208 = vadd.f32 %v5206, %v5207
    %v5209 = vrot.slane %v3076, 4
    %v5210 = vadd.f32 %v3076, %v5209
    %v5211 = vrot.slane %v5210, 2
    %v5212 = vadd.f32 %v5210, %v5211
    %v5213 = vrot.slane %v5212, 1
    %v5214 = vadd.f32 %v5212, %v5213
    %v5215 = vrot.slane %v3077, 4
    %v5216 = vadd.f32 %v3077, %v5215
    %v5217 = vrot.slane %v5216, 2
    %v5218 = vadd.f32 %v5216, %v5217
    %v5219 = vrot.slane %v5218, 1
    %v5220 = vadd.f32 %v5218, %v5219
    %v5221 = vrot.slane %v3078, 4
    %v5222 = vadd.f32 %v3078, %v5221
    %v5223 = vrot.slane %v5222, 2
    %v5224 = vadd.f32 %v5222, %v5223
    %v5225 = vrot.slane %v5224, 1
    %v5226 = vadd.f32 %v5224, %v5225
    %v5227 = vrot.slane %v3079, 4
    %v5228 = vadd.f32 %v3079, %v5227
    %v5229 = vrot.slane %v5228, 2
    %v5230 = vadd.f32 %v5228, %v5229
    %v5231 = vrot.slane %v5230, 1
    %v5232 = vadd.f32 %v5230, %v5231
    %v5233 = vrot.slane %v3080, 4
    %v5234 = vadd.f32 %v3080, %v5233
    %v5235 = vrot.slane %v5234, 2
    %v5236 = vadd.f32 %v5234, %v5235
    %v5237 = vrot.slane %v5236, 1
    %v5238 = vadd.f32 %v5236, %v5237
    %v5239 = vrot.slane %v3081, 4
    %v5240 = vadd.f32 %v3081, %v5239
    %v5241 = vrot.slane %v5240, 2
    %v5242 = vadd.f32 %v5240, %v5241
    %v5243 = vrot.slane %v5242, 1
    %v5244 = vadd.f32 %v5242, %v5243
    %v5245 = vrot.slane %v3082, 4
    %v5246 = vadd.f32 %v3082, %v5245
    %v5247 = vrot.slane %v5246, 2
    %v5248 = vadd.f32 %v5246, %v5247
    %v5249 = vrot.slane %v5248, 1
    %v5250 = vadd.f32 %v5248, %v5249
    %v5251 = vrot.slane %v3083, 4
    %v5252 = vadd.f32 %v3083, %v5251
    %v5253 = vrot.slane %v5252, 2
    %v5254 = vadd.f32 %v5252, %v5253
    %v5255 = vrot.slane %v5254, 1
    %v5256 = vadd.f32 %v5254, %v5255
    %v5257 = vrot.slane %v3084, 4
    %v5258 = vadd.f32 %v3084, %v5257
    %v5259 = vrot.slane %v5258, 2
    %v5260 = vadd.f32 %v5258, %v5259
    %v5261 = vrot.slane %v5260, 1
    %v5262 = vadd.f32 %v5260, %v5261
    %v5263 = vrot.slane %v3085, 4
    %v5264 = vadd.f32 %v3085, %v5263
    %v5265 = vrot.slane %v5264, 2
    %v5266 = vadd.f32 %v5264, %v5265
    %v5267 = vrot.slane %v5266, 1
    %v5268 = vadd.f32 %v5266, %v5267
    %v5269 = vrot.slane %v3086, 4
    %v5270 = vadd.f32 %v3086, %v5269
    %v5271 = vrot.slane %v5270, 2
    %v5272 = vadd.f32 %v5270, %v5271
    %v5273 = vrot.slane %v5272, 1
    %v5274 = vadd.f32 %v5272, %v5273
    %v5275 = vrot.slane %v3087, 4
    %v5276 = vadd.f32 %v3087, %v5275
    %v5277 = vrot.slane %v5276, 2
    %v5278 = vadd.f32 %v5276, %v5277
    %v5279 = vrot.slane %v5278, 1
    %v5280 = vadd.f32 %v5278, %v5279
    %v5281 = vrot.slane %v3088, 4
    %v5282 = vadd.f32 %v3088, %v5281
    %v5283 = vrot.slane %v5282, 2
    %v5284 = vadd.f32 %v5282, %v5283
    %v5285 = vrot.slane %v5284, 1
    %v5286 = vadd.f32 %v5284, %v5285
    %v5287 = vrot.slane %v3089, 4
    %v5288 = vadd.f32 %v3089, %v5287
    %v5289 = vrot.slane %v5288, 2
    %v5290 = vadd.f32 %v5288, %v5289
    %v5291 = vrot.slane %v5290, 1
    %v5292 = vadd.f32 %v5290, %v5291
    %v5293 = vrot.slane %v3090, 4
    %v5294 = vadd.f32 %v3090, %v5293
    %v5295 = vrot.slane %v5294, 2
    %v5296 = vadd.f32 %v5294, %v5295
    %v5297 = vrot.slane %v5296, 1
    %v5298 = vadd.f32 %v5296, %v5297
    %v5299 = vrot.slane %v3091, 4
    %v5300 = vadd.f32 %v3091, %v5299
    %v5301 = vrot.slane %v5300, 2
    %v5302 = vadd.f32 %v5300, %v5301
    %v5303 = vrot.slane %v5302, 1
    %v5304 = vadd.f32 %v5302, %v5303
    %v5305 = vrot.slane %v3092, 4
    %v5306 = vadd.f32 %v3092, %v5305
    %v5307 = vrot.slane %v5306, 2
    %v5308 = vadd.f32 %v5306, %v5307
    %v5309 = vrot.slane %v5308, 1
    %v5310 = vadd.f32 %v5308, %v5309
    %v5311 = vrot.slane %v3093, 4
    %v5312 = vadd.f32 %v3093, %v5311
    %v5313 = vrot.slane %v5312, 2
    %v5314 = vadd.f32 %v5312, %v5313
    %v5315 = vrot.slane %v5314, 1
    %v5316 = vadd.f32 %v5314, %v5315
    %v5317 = vrot.slane %v3094, 4
    %v5318 = vadd.f32 %v3094, %v5317
    %v5319 = vrot.slane %v5318, 2
    %v5320 = vadd.f32 %v5318, %v5319
    %v5321 = vrot.slane %v5320, 1
    %v5322 = vadd.f32 %v5320, %v5321
    %v5323 = vrot.slane %v3095, 4
    %v5324 = vadd.f32 %v3095, %v5323
    %v5325 = vrot.slane %v5324, 2
    %v5326 = vadd.f32 %v5324, %v5325
    %v5327 = vrot.slane %v5326, 1
    %v5328 = vadd.f32 %v5326, %v5327
    %v5329 = vrot.slane %v3096, 4
    %v5330 = vadd.f32 %v3096, %v5329
    %v5331 = vrot.slane %v5330, 2
    %v5332 = vadd.f32 %v5330, %v5331
    %v5333 = vrot.slane %v5332, 1
    %v5334 = vadd.f32 %v5332, %v5333
    %v5335 = vrot.slane %v3097, 4
    %v5336 = vadd.f32 %v3097, %v5335
    %v5337 = vrot.slane %v5336, 2
    %v5338 = vadd.f32 %v5336, %v5337
    %v5339 = vrot.slane %v5338, 1
    %v5340 = vadd.f32 %v5338, %v5339
    %v5341 = vrot.slane %v3098, 4
    %v5342 = vadd.f32 %v3098, %v5341
    %v5343 = vrot.slane %v5342, 2
    %v5344 = vadd.f32 %v5342, %v5343
    %v5345 = vrot.slane %v5344, 1
    %v5346 = vadd.f32 %v5344, %v5345
    %v5347 = vrot.slane %v3099, 4
    %v5348 = vadd.f32 %v3099, %v5347
    %v5349 = vrot.slane %v5348, 2
    %v5350 = vadd.f32 %v5348, %v5349
    %v5351 = vrot.slane %v5350, 1
    %v5352 = vadd.f32 %v5350, %v5351
    %v5353 = vrot.slane %v3100, 4
    %v5354 = vadd.f32 %v3100, %v5353
    %v5355 = vrot.slane %v5354, 2
    %v5356 = vadd.f32 %v5354, %v5355
    %v5357 = vrot.slane %v5356, 1
    %v5358 = vadd.f32 %v5356, %v5357
    %v5359 = vrot.slane %v3101, 4
    %v5360 = vadd.f32 %v3101, %v5359
    %v5361 = vrot.slane %v5360, 2
    %v5362 = vadd.f32 %v5360, %v5361
    %v5363 = vrot.slane %v5362, 1
    %v5364 = vadd.f32 %v5362, %v5363
    %v5365 = vrot.slane %v3102, 4
    %v5366 = vadd.f32 %v3102, %v5365
    %v5367 = vrot.slane %v5366, 2
    %v5368 = vadd.f32 %v5366, %v5367
    %v5369 = vrot.slane %v5368, 1
    %v5370 = vadd.f32 %v5368, %v5369
    %v5371 = vrot.slane %v3103, 4
    %v5372 = vadd.f32 %v3103, %v5371
    %v5373 = vrot.slane %v5372, 2
    %v5374 = vadd.f32 %v5372, %v5373
    %v5375 = vrot.slane %v5374, 1
    %v5376 = vadd.f32 %v5374, %v5375
    %v5377 = vrot.slane %v3104, 4
    %v5378 = vadd.f32 %v3104, %v5377
    %v5379 = vrot.slane %v5378, 2
    %v5380 = vadd.f32 %v5378, %v5379
    %v5381 = vrot.slane %v5380, 1
    %v5382 = vadd.f32 %v5380, %v5381
    %v5383 = vrot.slane %v3105, 4
    %v5384 = vadd.f32 %v3105, %v5383
    %v5385 = vrot.slane %v5384, 2
    %v5386 = vadd.f32 %v5384, %v5385
    %v5387 = vrot.slane %v5386, 1
    %v5388 = vadd.f32 %v5386, %v5387
    %v5389 = vrot.slane %v3106, 4
    %v5390 = vadd.f32 %v3106, %v5389
    %v5391 = vrot.slane %v5390, 2
    %v5392 = vadd.f32 %v5390, %v5391
    %v5393 = vrot.slane %v5392, 1
    %v5394 = vadd.f32 %v5392, %v5393
    %v5395 = vrot.slane %v3107, 4
    %v5396 = vadd.f32 %v3107, %v5395
    %v5397 = vrot.slane %v5396, 2
    %v5398 = vadd.f32 %v5396, %v5397
    %v5399 = vrot.slane %v5398, 1
    %v5400 = vadd.f32 %v5398, %v5399
    %v5401 = vrot.slane %v3108, 4
    %v5402 = vadd.f32 %v3108, %v5401
    %v5403 = vrot.slane %v5402, 2
    %v5404 = vadd.f32 %v5402, %v5403
    %v5405 = vrot.slane %v5404, 1
    %v5406 = vadd.f32 %v5404, %v5405
    %v5407 = vrot.slane %v3109, 4
    %v5408 = vadd.f32 %v3109, %v5407
    %v5409 = vrot.slane %v5408, 2
    %v5410 = vadd.f32 %v5408, %v5409
    %v5411 = vrot.slane %v5410, 1
    %v5412 = vadd.f32 %v5410, %v5411
    %v5413 = vrot.slane %v3110, 4
    %v5414 = vadd.f32 %v3110, %v5413
    %v5415 = vrot.slane %v5414, 2
    %v5416 = vadd.f32 %v5414, %v5415
    %v5417 = vrot.slane %v5416, 1
    %v5418 = vadd.f32 %v5416, %v5417
    %v5419 = vrot.slane %v3111, 4
    %v5420 = vadd.f32 %v3111, %v5419
    %v5421 = vrot.slane %v5420, 2
    %v5422 = vadd.f32 %v5420, %v5421
    %v5423 = vrot.slane %v5422, 1
    %v5424 = vadd.f32 %v5422, %v5423
    %v5425 = vrot.slane %v3112, 4
    %v5426 = vadd.f32 %v3112, %v5425
    %v5427 = vrot.slane %v5426, 2
    %v5428 = vadd.f32 %v5426, %v5427
    %v5429 = vrot.slane %v5428, 1
    %v5430 = vadd.f32 %v5428, %v5429
    %v5431 = vrot.slane %v3113, 4
    %v5432 = vadd.f32 %v3113, %v5431
    %v5433 = vrot.slane %v5432, 2
    %v5434 = vadd.f32 %v5432, %v5433
    %v5435 = vrot.slane %v5434, 1
    %v5436 = vadd.f32 %v5434, %v5435
    %v5437 = vrot.slane %v3114, 4
    %v5438 = vadd.f32 %v3114, %v5437
    %v5439 = vrot.slane %v5438, 2
    %v5440 = vadd.f32 %v5438, %v5439
    %v5441 = vrot.slane %v5440, 1
    %v5442 = vadd.f32 %v5440, %v5441
    %v5443 = vrot.slane %v3115, 4
    %v5444 = vadd.f32 %v3115, %v5443
    %v5445 = vrot.slane %v5444, 2
    %v5446 = vadd.f32 %v5444, %v5445
    %v5447 = vrot.slane %v5446, 1
    %v5448 = vadd.f32 %v5446, %v5447
    %v5449 = vrot.slane %v3116, 4
    %v5450 = vadd.f32 %v3116, %v5449
    %v5451 = vrot.slane %v5450, 2
    %v5452 = vadd.f32 %v5450, %v5451
    %v5453 = vrot.slane %v5452, 1
    %v5454 = vadd.f32 %v5452, %v5453
    %v5455 = vrot.slane %v3117, 4
    %v5456 = vadd.f32 %v3117, %v5455
    %v5457 = vrot.slane %v5456, 2
    %v5458 = vadd.f32 %v5456, %v5457
    %v5459 = vrot.slane %v5458, 1
    %v5460 = vadd.f32 %v5458, %v5459
    %v5461 = vrot.slane %v3118, 4
    %v5462 = vadd.f32 %v3118, %v5461
    %v5463 = vrot.slane %v5462, 2
    %v5464 = vadd.f32 %v5462, %v5463
    %v5465 = vrot.slane %v5464, 1
    %v5466 = vadd.f32 %v5464, %v5465
    %v5467 = vrot.slane %v3119, 4
    %v5468 = vadd.f32 %v3119, %v5467
    %v5469 = vrot.slane %v5468, 2
    %v5470 = vadd.f32 %v5468, %v5469
    %v5471 = vrot.slane %v5470, 1
    %v5472 = vadd.f32 %v5470, %v5471
    %v5473 = vrot.slane %v3120, 4
    %v5474 = vadd.f32 %v3120, %v5473
    %v5475 = vrot.slane %v5474, 2
    %v5476 = vadd.f32 %v5474, %v5475
    %v5477 = vrot.slane %v5476, 1
    %v5478 = vadd.f32 %v5476, %v5477
    %v5479 = vrot.slane %v3121, 4
    %v5480 = vadd.f32 %v3121, %v5479
    %v5481 = vrot.slane %v5480, 2
    %v5482 = vadd.f32 %v5480, %v5481
    %v5483 = vrot.slane %v5482, 1
    %v5484 = vadd.f32 %v5482, %v5483
    %v5485 = vrot.slane %v3122, 4
    %v5486 = vadd.f32 %v3122, %v5485
    %v5487 = vrot.slane %v5486, 2
    %v5488 = vadd.f32 %v5486, %v5487
    %v5489 = vrot.slane %v5488, 1
    %v5490 = vadd.f32 %v5488, %v5489
    %v5491 = vrot.slane %v3123, 4
    %v5492 = vadd.f32 %v3123, %v5491
    %v5493 = vrot.slane %v5492, 2
    %v5494 = vadd.f32 %v5492, %v5493
    %v5495 = vrot.slane %v5494, 1
    %v5496 = vadd.f32 %v5494, %v5495
    %v5497 = vrot.slane %v3124, 4
    %v5498 = vadd.f32 %v3124, %v5497
    %v5499 = vrot.slane %v5498, 2
    %v5500 = vadd.f32 %v5498, %v5499
    %v5501 = vrot.slane %v5500, 1
    %v5502 = vadd.f32 %v5500, %v5501
    %v5503 = vrot.slane %v3125, 4
    %v5504 = vadd.f32 %v3125, %v5503
    %v5505 = vrot.slane %v5504, 2
    %v5506 = vadd.f32 %v5504, %v5505
    %v5507 = vrot.slane %v5506, 1
    %v5508 = vadd.f32 %v5506, %v5507
    %v5509 = vrot.slane %v3126, 4
    %v5510 = vadd.f32 %v3126, %v5509
    %v5511 = vrot.slane %v5510, 2
    %v5512 = vadd.f32 %v5510, %v5511
    %v5513 = vrot.slane %v5512, 1
    %v5514 = vadd.f32 %v5512, %v5513
    %v5515 = vrot.slane %v3127, 4
    %v5516 = vadd.f32 %v3127, %v5515
    %v5517 = vrot.slane %v5516, 2
    %v5518 = vadd.f32 %v5516, %v5517
    %v5519 = vrot.slane %v5518, 1
    %v5520 = vadd.f32 %v5518, %v5519
    %v5521 = vrot.slane %v3128, 4
    %v5522 = vadd.f32 %v3128, %v5521
    %v5523 = vrot.slane %v5522, 2
    %v5524 = vadd.f32 %v5522, %v5523
    %v5525 = vrot.slane %v5524, 1
    %v5526 = vadd.f32 %v5524, %v5525
    %v5527 = vrot.slane %v3129, 4
    %v5528 = vadd.f32 %v3129, %v5527
    %v5529 = vrot.slane %v5528, 2
    %v5530 = vadd.f32 %v5528, %v5529
    %v5531 = vrot.slane %v5530, 1
    %v5532 = vadd.f32 %v5530, %v5531
    %v5533 = vrot.slane %v3130, 4
    %v5534 = vadd.f32 %v3130, %v5533
    %v5535 = vrot.slane %v5534, 2
    %v5536 = vadd.f32 %v5534, %v5535
    %v5537 = vrot.slane %v5536, 1
    %v5538 = vadd.f32 %v5536, %v5537
    %v5539 = vrot.slane %v3131, 4
    %v5540 = vadd.f32 %v3131, %v5539
    %v5541 = vrot.slane %v5540, 2
    %v5542 = vadd.f32 %v5540, %v5541
    %v5543 = vrot.slane %v5542, 1
    %v5544 = vadd.f32 %v5542, %v5543
    %v5545 = vrot.slane %v3132, 4
    %v5546 = vadd.f32 %v3132, %v5545
    %v5547 = vrot.slane %v5546, 2
    %v5548 = vadd.f32 %v5546, %v5547
    %v5549 = vrot.slane %v5548, 1
    %v5550 = vadd.f32 %v5548, %v5549
    %v5551 = vrot.slane %v3133, 4
    %v5552 = vadd.f32 %v3133, %v5551
    %v5553 = vrot.slane %v5552, 2
    %v5554 = vadd.f32 %v5552, %v5553
    %v5555 = vrot.slane %v5554, 1
    %v5556 = vadd.f32 %v5554, %v5555
    %v5557 = vrot.slane %v3134, 4
    %v5558 = vadd.f32 %v3134, %v5557
    %v5559 = vrot.slane %v5558, 2
    %v5560 = vadd.f32 %v5558, %v5559
    %v5561 = vrot.slane %v5560, 1
    %v5562 = vadd.f32 %v5560, %v5561
    %v5563 = vrot.slane %v3135, 4
    %v5564 = vadd.f32 %v3135, %v5563
    %v5565 = vrot.slane %v5564, 2
    %v5566 = vadd.f32 %v5564, %v5565
    %v5567 = vrot.slane %v5566, 1
    %v5568 = vadd.f32 %v5566, %v5567
    %v5569 = vrot.slane %v3136, 4
    %v5570 = vadd.f32 %v3136, %v5569
    %v5571 = vrot.slane %v5570, 2
    %v5572 = vadd.f32 %v5570, %v5571
    %v5573 = vrot.slane %v5572, 1
    %v5574 = vadd.f32 %v5572, %v5573
    %v5575 = vrot.slane %v3137, 4
    %v5576 = vadd.f32 %v3137, %v5575
    %v5577 = vrot.slane %v5576, 2
    %v5578 = vadd.f32 %v5576, %v5577
    %v5579 = vrot.slane %v5578, 1
    %v5580 = vadd.f32 %v5578, %v5579
    %v5581 = vrot.slane %v3138, 4
    %v5582 = vadd.f32 %v3138, %v5581
    %v5583 = vrot.slane %v5582, 2
    %v5584 = vadd.f32 %v5582, %v5583
    %v5585 = vrot.slane %v5584, 1
    %v5586 = vadd.f32 %v5584, %v5585
    %v5587 = vrot.slane %v3139, 4
    %v5588 = vadd.f32 %v3139, %v5587
    %v5589 = vrot.slane %v5588, 2
    %v5590 = vadd.f32 %v5588, %v5589
    %v5591 = vrot.slane %v5590, 1
    %v5592 = vadd.f32 %v5590, %v5591
    %v5593 = vrot.slane %v3140, 4
    %v5594 = vadd.f32 %v3140, %v5593
    %v5595 = vrot.slane %v5594, 2
    %v5596 = vadd.f32 %v5594, %v5595
    %v5597 = vrot.slane %v5596, 1
    %v5598 = vadd.f32 %v5596, %v5597
    %v5599 = vrot.slane %v3141, 4
    %v5600 = vadd.f32 %v3141, %v5599
    %v5601 = vrot.slane %v5600, 2
    %v5602 = vadd.f32 %v5600, %v5601
    %v5603 = vrot.slane %v5602, 1
    %v5604 = vadd.f32 %v5602, %v5603
    %v5605 = vrot.slane %v3142, 4
    %v5606 = vadd.f32 %v3142, %v5605
    %v5607 = vrot.slane %v5606, 2
    %v5608 = vadd.f32 %v5606, %v5607
    %v5609 = vrot.slane %v5608, 1
    %v5610 = vadd.f32 %v5608, %v5609
    %v5611 = vrot.slane %v3143, 4
    %v5612 = vadd.f32 %v3143, %v5611
    %v5613 = vrot.slane %v5612, 2
    %v5614 = vadd.f32 %v5612, %v5613
    %v5615 = vrot.slane %v5614, 1
    %v5616 = vadd.f32 %v5614, %v5615
    %v5617 = vrot.slane %v3144, 4
    %v5618 = vadd.f32 %v3144, %v5617
    %v5619 = vrot.slane %v5618, 2
    %v5620 = vadd.f32 %v5618, %v5619
    %v5621 = vrot.slane %v5620, 1
    %v5622 = vadd.f32 %v5620, %v5621
    %v5623 = vrot.slane %v3145, 4
    %v5624 = vadd.f32 %v3145, %v5623
    %v5625 = vrot.slane %v5624, 2
    %v5626 = vadd.f32 %v5624, %v5625
    %v5627 = vrot.slane %v5626, 1
    %v5628 = vadd.f32 %v5626, %v5627
    %v5629 = vrot.slane %v3146, 4
    %v5630 = vadd.f32 %v3146, %v5629
    %v5631 = vrot.slane %v5630, 2
    %v5632 = vadd.f32 %v5630, %v5631
    %v5633 = vrot.slane %v5632, 1
    %v5634 = vadd.f32 %v5632, %v5633
    %v5635 = vrot.slane %v3147, 4
    %v5636 = vadd.f32 %v3147, %v5635
    %v5637 = vrot.slane %v5636, 2
    %v5638 = vadd.f32 %v5636, %v5637
    %v5639 = vrot.slane %v5638, 1
    %v5640 = vadd.f32 %v5638, %v5639
    %v5641 = vrot.slane %v3148, 4
    %v5642 = vadd.f32 %v3148, %v5641
    %v5643 = vrot.slane %v5642, 2
    %v5644 = vadd.f32 %v5642, %v5643
    %v5645 = vrot.slane %v5644, 1
    %v5646 = vadd.f32 %v5644, %v5645
    %v5647 = vrot.slane %v3149, 4
    %v5648 = vadd.f32 %v3149, %v5647
    %v5649 = vrot.slane %v5648, 2
    %v5650 = vadd.f32 %v5648, %v5649
    %v5651 = vrot.slane %v5650, 1
    %v5652 = vadd.f32 %v5650, %v5651
    %v5653 = vrot.slane %v3150, 4
    %v5654 = vadd.f32 %v3150, %v5653
    %v5655 = vrot.slane %v5654, 2
    %v5656 = vadd.f32 %v5654, %v5655
    %v5657 = vrot.slane %v5656, 1
    %v5658 = vadd.f32 %v5656, %v5657
    %v5659 = vrot.slane %v3151, 4
    %v5660 = vadd.f32 %v3151, %v5659
    %v5661 = vrot.slane %v5660, 2
    %v5662 = vadd.f32 %v5660, %v5661
    %v5663 = vrot.slane %v5662, 1
    %v5664 = vadd.f32 %v5662, %v5663
    %v5665 = vrot.slane %v3152, 4
    %v5666 = vadd.f32 %v3152, %v5665
    %v5667 = vrot.slane %v5666, 2
    %v5668 = vadd.f32 %v5666, %v5667
    %v5669 = vrot.slane %v5668, 1
    %v5670 = vadd.f32 %v5668, %v5669
    %v5671 = vrot.slane %v3153, 4
    %v5672 = vadd.f32 %v3153, %v5671
    %v5673 = vrot.slane %v5672, 2
    %v5674 = vadd.f32 %v5672, %v5673
    %v5675 = vrot.slane %v5674, 1
    %v5676 = vadd.f32 %v5674, %v5675
    %v5677 = vrot.slane %v3154, 4
    %v5678 = vadd.f32 %v3154, %v5677
    %v5679 = vrot.slane %v5678, 2
    %v5680 = vadd.f32 %v5678, %v5679
    %v5681 = vrot.slane %v5680, 1
    %v5682 = vadd.f32 %v5680, %v5681
    %v5683 = vrot.slane %v3155, 4
    %v5684 = vadd.f32 %v3155, %v5683
    %v5685 = vrot.slane %v5684, 2
    %v5686 = vadd.f32 %v5684, %v5685
    %v5687 = vrot.slane %v5686, 1
    %v5688 = vadd.f32 %v5686, %v5687
    %v5689 = vrot.slane %v3156, 4
    %v5690 = vadd.f32 %v3156, %v5689
    %v5691 = vrot.slane %v5690, 2
    %v5692 = vadd.f32 %v5690, %v5691
    %v5693 = vrot.slane %v5692, 1
    %v5694 = vadd.f32 %v5692, %v5693
    %v5695 = vrot.slane %v3157, 4
    %v5696 = vadd.f32 %v3157, %v5695
    %v5697 = vrot.slane %v5696, 2
    %v5698 = vadd.f32 %v5696, %v5697
    %v5699 = vrot.slane %v5698, 1
    %v5700 = vadd.f32 %v5698, %v5699
    %v5701 = vrot.slane %v3158, 4
    %v5702 = vadd.f32 %v3158, %v5701
    %v5703 = vrot.slane %v5702, 2
    %v5704 = vadd.f32 %v5702, %v5703
    %v5705 = vrot.slane %v5704, 1
    %v5706 = vadd.f32 %v5704, %v5705
    %v5707 = vrot.slane %v3159, 4
    %v5708 = vadd.f32 %v3159, %v5707
    %v5709 = vrot.slane %v5708, 2
    %v5710 = vadd.f32 %v5708, %v5709
    %v5711 = vrot.slane %v5710, 1
    %v5712 = vadd.f32 %v5710, %v5711
    %v5713 = vrot.slane %v3160, 4
    %v5714 = vadd.f32 %v3160, %v5713
    %v5715 = vrot.slane %v5714, 2
    %v5716 = vadd.f32 %v5714, %v5715
    %v5717 = vrot.slane %v5716, 1
    %v5718 = vadd.f32 %v5716, %v5717
    %v5719 = vrot.slane %v3161, 4
    %v5720 = vadd.f32 %v3161, %v5719
    %v5721 = vrot.slane %v5720, 2
    %v5722 = vadd.f32 %v5720, %v5721
    %v5723 = vrot.slane %v5722, 1
    %v5724 = vadd.f32 %v5722, %v5723
    %v5725 = vrot.slane %v3162, 4
    %v5726 = vadd.f32 %v3162, %v5725
    %v5727 = vrot.slane %v5726, 2
    %v5728 = vadd.f32 %v5726, %v5727
    %v5729 = vrot.slane %v5728, 1
    %v5730 = vadd.f32 %v5728, %v5729
    %v5731 = vrot.slane %v3163, 4
    %v5732 = vadd.f32 %v3163, %v5731
    %v5733 = vrot.slane %v5732, 2
    %v5734 = vadd.f32 %v5732, %v5733
    %v5735 = vrot.slane %v5734, 1
    %v5736 = vadd.f32 %v5734, %v5735
    %v5737 = vrot.slane %v3164, 4
    %v5738 = vadd.f32 %v3164, %v5737
    %v5739 = vrot.slane %v5738, 2
    %v5740 = vadd.f32 %v5738, %v5739
    %v5741 = vrot.slane %v5740, 1
    %v5742 = vadd.f32 %v5740, %v5741
    %v5743 = vrot.slane %v3165, 4
    %v5744 = vadd.f32 %v3165, %v5743
    %v5745 = vrot.slane %v5744, 2
    %v5746 = vadd.f32 %v5744, %v5745
    %v5747 = vrot.slane %v5746, 1
    %v5748 = vadd.f32 %v5746, %v5747
    %v5749 = vrot.slane %v3166, 4
    %v5750 = vadd.f32 %v3166, %v5749
    %v5751 = vrot.slane %v5750, 2
    %v5752 = vadd.f32 %v5750, %v5751
    %v5753 = vrot.slane %v5752, 1
    %v5754 = vadd.f32 %v5752, %v5753
    %v5755 = vrot.slane %v3167, 4
    %v5756 = vadd.f32 %v3167, %v5755
    %v5757 = vrot.slane %v5756, 2
    %v5758 = vadd.f32 %v5756, %v5757
    %v5759 = vrot.slane %v5758, 1
    %v5760 = vadd.f32 %v5758, %v5759
    %v5761 = vrot.slane %v3168, 4
    %v5762 = vadd.f32 %v3168, %v5761
    %v5763 = vrot.slane %v5762, 2
    %v5764 = vadd.f32 %v5762, %v5763
    %v5765 = vrot.slane %v5764, 1
    %v5766 = vadd.f32 %v5764, %v5765
    %v5767 = vrot.slane %v3169, 4
    %v5768 = vadd.f32 %v3169, %v5767
    %v5769 = vrot.slane %v5768, 2
    %v5770 = vadd.f32 %v5768, %v5769
    %v5771 = vrot.slane %v5770, 1
    %v5772 = vadd.f32 %v5770, %v5771
    %v5773 = vrot.slane %v3170, 4
    %v5774 = vadd.f32 %v3170, %v5773
    %v5775 = vrot.slane %v5774, 2
    %v5776 = vadd.f32 %v5774, %v5775
    %v5777 = vrot.slane %v5776, 1
    %v5778 = vadd.f32 %v5776, %v5777
    %v5779 = vrot.slane %v3171, 4
    %v5780 = vadd.f32 %v3171, %v5779
    %v5781 = vrot.slane %v5780, 2
    %v5782 = vadd.f32 %v5780, %v5781
    %v5783 = vrot.slane %v5782, 1
    %v5784 = vadd.f32 %v5782, %v5783
    %v5785 = vrot.slane %v3172, 4
    %v5786 = vadd.f32 %v3172, %v5785
    %v5787 = vrot.slane %v5786, 2
    %v5788 = vadd.f32 %v5786, %v5787
    %v5789 = vrot.slane %v5788, 1
    %v5790 = vadd.f32 %v5788, %v5789
    %v5791 = vrot.slane %v3173, 4
    %v5792 = vadd.f32 %v3173, %v5791
    %v5793 = vrot.slane %v5792, 2
    %v5794 = vadd.f32 %v5792, %v5793
    %v5795 = vrot.slane %v5794, 1
    %v5796 = vadd.f32 %v5794, %v5795
    %v5797 = vrot.slane %v3174, 4
    %v5798 = vadd.f32 %v3174, %v5797
    %v5799 = vrot.slane %v5798, 2
    %v5800 = vadd.f32 %v5798, %v5799
    %v5801 = vrot.slane %v5800, 1
    %v5802 = vadd.f32 %v5800, %v5801
    %v5803 = vrot.slane %v3175, 4
    %v5804 = vadd.f32 %v3175, %v5803
    %v5805 = vrot.slane %v5804, 2
    %v5806 = vadd.f32 %v5804, %v5805
    %v5807 = vrot.slane %v5806, 1
    %v5808 = vadd.f32 %v5806, %v5807
    %v5809 = vrot.slane %v3176, 4
    %v5810 = vadd.f32 %v3176, %v5809
    %v5811 = vrot.slane %v5810, 2
    %v5812 = vadd.f32 %v5810, %v5811
    %v5813 = vrot.slane %v5812, 1
    %v5814 = vadd.f32 %v5812, %v5813
    %v5815 = vrot.slane %v3177, 4
    %v5816 = vadd.f32 %v3177, %v5815
    %v5817 = vrot.slane %v5816, 2
    %v5818 = vadd.f32 %v5816, %v5817
    %v5819 = vrot.slane %v5818, 1
    %v5820 = vadd.f32 %v5818, %v5819
    %v5821 = vrot.slane %v3178, 4
    %v5822 = vadd.f32 %v3178, %v5821
    %v5823 = vrot.slane %v5822, 2
    %v5824 = vadd.f32 %v5822, %v5823
    %v5825 = vrot.slane %v5824, 1
    %v5826 = vadd.f32 %v5824, %v5825
    %v5827 = vrot.slane %v3179, 4
    %v5828 = vadd.f32 %v3179, %v5827
    %v5829 = vrot.slane %v5828, 2
    %v5830 = vadd.f32 %v5828, %v5829
    %v5831 = vrot.slane %v5830, 1
    %v5832 = vadd.f32 %v5830, %v5831
    %v5833 = vrot.slane %v3180, 4
    %v5834 = vadd.f32 %v3180, %v5833
    %v5835 = vrot.slane %v5834, 2
    %v5836 = vadd.f32 %v5834, %v5835
    %v5837 = vrot.slane %v5836, 1
    %v5838 = vadd.f32 %v5836, %v5837
    %v5839 = vrot.slane %v3181, 4
    %v5840 = vadd.f32 %v3181, %v5839
    %v5841 = vrot.slane %v5840, 2
    %v5842 = vadd.f32 %v5840, %v5841
    %v5843 = vrot.slane %v5842, 1
    %v5844 = vadd.f32 %v5842, %v5843
    %v5845 = vrot.slane %v3182, 4
    %v5846 = vadd.f32 %v3182, %v5845
    %v5847 = vrot.slane %v5846, 2
    %v5848 = vadd.f32 %v5846, %v5847
    %v5849 = vrot.slane %v5848, 1
    %v5850 = vadd.f32 %v5848, %v5849
    %v5851 = vrot.slane %v3183, 4
    %v5852 = vadd.f32 %v3183, %v5851
    %v5853 = vrot.slane %v5852, 2
    %v5854 = vadd.f32 %v5852, %v5853
    %v5855 = vrot.slane %v5854, 1
    %v5856 = vadd.f32 %v5854, %v5855
    %v5857 = vrot.slane %v3184, 4
    %v5858 = vadd.f32 %v3184, %v5857
    %v5859 = vrot.slane %v5858, 2
    %v5860 = vadd.f32 %v5858, %v5859
    %v5861 = vrot.slane %v5860, 1
    %v5862 = vadd.f32 %v5860, %v5861
    %v5863 = vrot.slane %v3185, 4
    %v5864 = vadd.f32 %v3185, %v5863
    %v5865 = vrot.slane %v5864, 2
    %v5866 = vadd.f32 %v5864, %v5865
    %v5867 = vrot.slane %v5866, 1
    %v5868 = vadd.f32 %v5866, %v5867
    %v5869 = vrot.slane %v3186, 4
    %v5870 = vadd.f32 %v3186, %v5869
    %v5871 = vrot.slane %v5870, 2
    %v5872 = vadd.f32 %v5870, %v5871
    %v5873 = vrot.slane %v5872, 1
    %v5874 = vadd.f32 %v5872, %v5873
    %v5875 = vrot.slane %v3187, 4
    %v5876 = vadd.f32 %v3187, %v5875
    %v5877 = vrot.slane %v5876, 2
    %v5878 = vadd.f32 %v5876, %v5877
    %v5879 = vrot.slane %v5878, 1
    %v5880 = vadd.f32 %v5878, %v5879
    %v5881 = vrot.slane %v3188, 4
    %v5882 = vadd.f32 %v3188, %v5881
    %v5883 = vrot.slane %v5882, 2
    %v5884 = vadd.f32 %v5882, %v5883
    %v5885 = vrot.slane %v5884, 1
    %v5886 = vadd.f32 %v5884, %v5885
    %v5887 = vrot.slane %v3189, 4
    %v5888 = vadd.f32 %v3189, %v5887
    %v5889 = vrot.slane %v5888, 2
    %v5890 = vadd.f32 %v5888, %v5889
    %v5891 = vrot.slane %v5890, 1
    %v5892 = vadd.f32 %v5890, %v5891
    %v5893 = vrot.slane %v3190, 4
    %v5894 = vadd.f32 %v3190, %v5893
    %v5895 = vrot.slane %v5894, 2
    %v5896 = vadd.f32 %v5894, %v5895
    %v5897 = vrot.slane %v5896, 1
    %v5898 = vadd.f32 %v5896, %v5897
    %v5899 = vrot.slane %v3191, 4
    %v5900 = vadd.f32 %v3191, %v5899
    %v5901 = vrot.slane %v5900, 2
    %v5902 = vadd.f32 %v5900, %v5901
    %v5903 = vrot.slane %v5902, 1
    %v5904 = vadd.f32 %v5902, %v5903
    %v5905 = vrot.slane %v3192, 4
    %v5906 = vadd.f32 %v3192, %v5905
    %v5907 = vrot.slane %v5906, 2
    %v5908 = vadd.f32 %v5906, %v5907
    %v5909 = vrot.slane %v5908, 1
    %v5910 = vadd.f32 %v5908, %v5909
    %v5911 = vrot.slane %v3193, 4
    %v5912 = vadd.f32 %v3193, %v5911
    %v5913 = vrot.slane %v5912, 2
    %v5914 = vadd.f32 %v5912, %v5913
    %v5915 = vrot.slane %v5914, 1
    %v5916 = vadd.f32 %v5914, %v5915
    %v5917 = vrot.slane %v3194, 4
    %v5918 = vadd.f32 %v3194, %v5917
    %v5919 = vrot.slane %v5918, 2
    %v5920 = vadd.f32 %v5918, %v5919
    %v5921 = vrot.slane %v5920, 1
    %v5922 = vadd.f32 %v5920, %v5921
    %v5923 = vrot.slane %v3195, 4
    %v5924 = vadd.f32 %v3195, %v5923
    %v5925 = vrot.slane %v5924, 2
    %v5926 = vadd.f32 %v5924, %v5925
    %v5927 = vrot.slane %v5926, 1
    %v5928 = vadd.f32 %v5926, %v5927
    %v5929 = vrot.slane %v3196, 4
    %v5930 = vadd.f32 %v3196, %v5929
    %v5931 = vrot.slane %v5930, 2
    %v5932 = vadd.f32 %v5930, %v5931
    %v5933 = vrot.slane %v5932, 1
    %v5934 = vadd.f32 %v5932, %v5933
    %v5935 = vrot.slane %v3197, 4
    %v5936 = vadd.f32 %v3197, %v5935
    %v5937 = vrot.slane %v5936, 2
    %v5938 = vadd.f32 %v5936, %v5937
    %v5939 = vrot.slane %v5938, 1
    %v5940 = vadd.f32 %v5938, %v5939
    %v5941 = vrot.slane %v3198, 4
    %v5942 = vadd.f32 %v3198, %v5941
    %v5943 = vrot.slane %v5942, 2
    %v5944 = vadd.f32 %v5942, %v5943
    %v5945 = vrot.slane %v5944, 1
    %v5946 = vadd.f32 %v5944, %v5945
    %v5947 = vrot.slane %v3199, 4
    %v5948 = vadd.f32 %v3199, %v5947
    %v5949 = vrot.slane %v5948, 2
    %v5950 = vadd.f32 %v5948, %v5949
    %v5951 = vrot.slane %v5950, 1
    %v5952 = vadd.f32 %v5950, %v5951
    %v5953 = vrot.slane %v3200, 4
    %v5954 = vadd.f32 %v3200, %v5953
    %v5955 = vrot.slane %v5954, 2
    %v5956 = vadd.f32 %v5954, %v5955
    %v5957 = vrot.slane %v5956, 1
    %v5958 = vadd.f32 %v5956, %v5957
    %v5959 = vrot.slane %v3201, 4
    %v5960 = vadd.f32 %v3201, %v5959
    %v5961 = vrot.slane %v5960, 2
    %v5962 = vadd.f32 %v5960, %v5961
    %v5963 = vrot.slane %v5962, 1
    %v5964 = vadd.f32 %v5962, %v5963
    %v5965 = vrot.slane %v3202, 4
    %v5966 = vadd.f32 %v3202, %v5965
    %v5967 = vrot.slane %v5966, 2
    %v5968 = vadd.f32 %v5966, %v5967
    %v5969 = vrot.slane %v5968, 1
    %v5970 = vadd.f32 %v5968, %v5969
    %v5971 = vrot.slane %v3203, 4
    %v5972 = vadd.f32 %v3203, %v5971
    %v5973 = vrot.slane %v5972, 2
    %v5974 = vadd.f32 %v5972, %v5973
    %v5975 = vrot.slane %v5974, 1
    %v5976 = vadd.f32 %v5974, %v5975
    %v5977 = vrot.slane %v3204, 4
    %v5978 = vadd.f32 %v3204, %v5977
    %v5979 = vrot.slane %v5978, 2
    %v5980 = vadd.f32 %v5978, %v5979
    %v5981 = vrot.slane %v5980, 1
    %v5982 = vadd.f32 %v5980, %v5981
    %v5983 = vrot.slane %v3205, 4
    %v5984 = vadd.f32 %v3205, %v5983
    %v5985 = vrot.slane %v5984, 2
    %v5986 = vadd.f32 %v5984, %v5985
    %v5987 = vrot.slane %v5986, 1
    %v5988 = vadd.f32 %v5986, %v5987
    %v5989 = vrot.slane %v3206, 4
    %v5990 = vadd.f32 %v3206, %v5989
    %v5991 = vrot.slane %v5990, 2
    %v5992 = vadd.f32 %v5990, %v5991
    %v5993 = vrot.slane %v5992, 1
    %v5994 = vadd.f32 %v5992, %v5993
    %v5995 = vrot.slane %v3207, 4
    %v5996 = vadd.f32 %v3207, %v5995
    %v5997 = vrot.slane %v5996, 2
    %v5998 = vadd.f32 %v5996, %v5997
    %v5999 = vrot.slane %v5998, 1
    %v6000 = vadd.f32 %v5998, %v5999
    %v6001 = vrot.slane %v3208, 4
    %v6002 = vadd.f32 %v3208, %v6001
    %v6003 = vrot.slane %v6002, 2
    %v6004 = vadd.f32 %v6002, %v6003
    %v6005 = vrot.slane %v6004, 1
    %v6006 = vadd.f32 %v6004, %v6005
    %v6007 = vrot.slane %v3209, 4
    %v6008 = vadd.f32 %v3209, %v6007
    %v6009 = vrot.slane %v6008, 2
    %v6010 = vadd.f32 %v6008, %v6009
    %v6011 = vrot.slane %v6010, 1
    %v6012 = vadd.f32 %v6010, %v6011
    %v6013 = vrot.slane %v3210, 4
    %v6014 = vadd.f32 %v3210, %v6013
    %v6015 = vrot.slane %v6014, 2
    %v6016 = vadd.f32 %v6014, %v6015
    %v6017 = vrot.slane %v6016, 1
    %v6018 = vadd.f32 %v6016, %v6017
    %v6019 = vrot.slane %v3211, 4
    %v6020 = vadd.f32 %v3211, %v6019
    %v6021 = vrot.slane %v6020, 2
    %v6022 = vadd.f32 %v6020, %v6021
    %v6023 = vrot.slane %v6022, 1
    %v6024 = vadd.f32 %v6022, %v6023
    %v6025 = vrot.slane %v3212, 4
    %v6026 = vadd.f32 %v3212, %v6025
    %v6027 = vrot.slane %v6026, 2
    %v6028 = vadd.f32 %v6026, %v6027
    %v6029 = vrot.slane %v6028, 1
    %v6030 = vadd.f32 %v6028, %v6029
    %v6031 = vrot.slane %v3213, 4
    %v6032 = vadd.f32 %v3213, %v6031
    %v6033 = vrot.slane %v6032, 2
    %v6034 = vadd.f32 %v6032, %v6033
    %v6035 = vrot.slane %v6034, 1
    %v6036 = vadd.f32 %v6034, %v6035
    %v6037 = vrot.slane %v3214, 4
    %v6038 = vadd.f32 %v3214, %v6037
    %v6039 = vrot.slane %v6038, 2
    %v6040 = vadd.f32 %v6038, %v6039
    %v6041 = vrot.slane %v6040, 1
    %v6042 = vadd.f32 %v6040, %v6041
    %v6043 = vrot.slane %v3215, 4
    %v6044 = vadd.f32 %v3215, %v6043
    %v6045 = vrot.slane %v6044, 2
    %v6046 = vadd.f32 %v6044, %v6045
    %v6047 = vrot.slane %v6046, 1
    %v6048 = vadd.f32 %v6046, %v6047
    %v6049 = vrot.slane %v3216, 4
    %v6050 = vadd.f32 %v3216, %v6049
    %v6051 = vrot.slane %v6050, 2
    %v6052 = vadd.f32 %v6050, %v6051
    %v6053 = vrot.slane %v6052, 1
    %v6054 = vadd.f32 %v6052, %v6053
    %v6055 = vrot.slane %v3217, 4
    %v6056 = vadd.f32 %v3217, %v6055
    %v6057 = vrot.slane %v6056, 2
    %v6058 = vadd.f32 %v6056, %v6057
    %v6059 = vrot.slane %v6058, 1
    %v6060 = vadd.f32 %v6058, %v6059
    %v6061 = vrot.slane %v3218, 4
    %v6062 = vadd.f32 %v3218, %v6061
    %v6063 = vrot.slane %v6062, 2
    %v6064 = vadd.f32 %v6062, %v6063
    %v6065 = vrot.slane %v6064, 1
    %v6066 = vadd.f32 %v6064, %v6065
    %v6067 = vrot.slane %v3219, 4
    %v6068 = vadd.f32 %v3219, %v6067
    %v6069 = vrot.slane %v6068, 2
    %v6070 = vadd.f32 %v6068, %v6069
    %v6071 = vrot.slane %v6070, 1
    %v6072 = vadd.f32 %v6070, %v6071
    %v6073 = vrot.slane %v3220, 4
    %v6074 = vadd.f32 %v3220, %v6073
    %v6075 = vrot.slane %v6074, 2
    %v6076 = vadd.f32 %v6074, %v6075
    %v6077 = vrot.slane %v6076, 1
    %v6078 = vadd.f32 %v6076, %v6077
    %v6079 = vrot.slane %v3221, 4
    %v6080 = vadd.f32 %v3221, %v6079
    %v6081 = vrot.slane %v6080, 2
    %v6082 = vadd.f32 %v6080, %v6081
    %v6083 = vrot.slane %v6082, 1
    %v6084 = vadd.f32 %v6082, %v6083
    %v6085 = vrot.slane %v3222, 4
    %v6086 = vadd.f32 %v3222, %v6085
    %v6087 = vrot.slane %v6086, 2
    %v6088 = vadd.f32 %v6086, %v6087
    %v6089 = vrot.slane %v6088, 1
    %v6090 = vadd.f32 %v6088, %v6089
    %v6091 = vrot.slane %v3223, 4
    %v6092 = vadd.f32 %v3223, %v6091
    %v6093 = vrot.slane %v6092, 2
    %v6094 = vadd.f32 %v6092, %v6093
    %v6095 = vrot.slane %v6094, 1
    %v6096 = vadd.f32 %v6094, %v6095
    %v6097 = vrot.slane %v3224, 4
    %v6098 = vadd.f32 %v3224, %v6097
    %v6099 = vrot.slane %v6098, 2
    %v6100 = vadd.f32 %v6098, %v6099
    %v6101 = vrot.slane %v6100, 1
    %v6102 = vadd.f32 %v6100, %v6101
    %v6103 = vrot.slane %v3225, 4
    %v6104 = vadd.f32 %v3225, %v6103
    %v6105 = vrot.slane %v6104, 2
    %v6106 = vadd.f32 %v6104, %v6105
    %v6107 = vrot.slane %v6106, 1
    %v6108 = vadd.f32 %v6106, %v6107
    %v6109 = vrot.slane %v3226, 4
    %v6110 = vadd.f32 %v3226, %v6109
    %v6111 = vrot.slane %v6110, 2
    %v6112 = vadd.f32 %v6110, %v6111
    %v6113 = vrot.slane %v6112, 1
    %v6114 = vadd.f32 %v6112, %v6113
    %v6115 = vrot.slane %v3227, 4
    %v6116 = vadd.f32 %v3227, %v6115
    %v6117 = vrot.slane %v6116, 2
    %v6118 = vadd.f32 %v6116, %v6117
    %v6119 = vrot.slane %v6118, 1
    %v6120 = vadd.f32 %v6118, %v6119
    %v6121 = vrot.slane %v3228, 4
    %v6122 = vadd.f32 %v3228, %v6121
    %v6123 = vrot.slane %v6122, 2
    %v6124 = vadd.f32 %v6122, %v6123
    %v6125 = vrot.slane %v6124, 1
    %v6126 = vadd.f32 %v6124, %v6125
    %v6127 = vrot.slane %v3229, 4
    %v6128 = vadd.f32 %v3229, %v6127
    %v6129 = vrot.slane %v6128, 2
    %v6130 = vadd.f32 %v6128, %v6129
    %v6131 = vrot.slane %v6130, 1
    %v6132 = vadd.f32 %v6130, %v6131
    %v6133 = vrot.slane %v3230, 4
    %v6134 = vadd.f32 %v3230, %v6133
    %v6135 = vrot.slane %v6134, 2
    %v6136 = vadd.f32 %v6134, %v6135
    %v6137 = vrot.slane %v6136, 1
    %v6138 = vadd.f32 %v6136, %v6137
    %v6139 = vrot.slane %v3231, 4
    %v6140 = vadd.f32 %v3231, %v6139
    %v6141 = vrot.slane %v6140, 2
    %v6142 = vadd.f32 %v6140, %v6141
    %v6143 = vrot.slane %v6142, 1
    %v6144 = vadd.f32 %v6142, %v6143
    %v6145 = vrot.slane %v3232, 4
    %v6146 = vadd.f32 %v3232, %v6145
    %v6147 = vrot.slane %v6146, 2
    %v6148 = vadd.f32 %v6146, %v6147
    %v6149 = vrot.slane %v6148, 1
    %v6150 = vadd.f32 %v6148, %v6149
    %v6151 = vrot.slane %v3233, 4
    %v6152 = vadd.f32 %v3233, %v6151
    %v6153 = vrot.slane %v6152, 2
    %v6154 = vadd.f32 %v6152, %v6153
    %v6155 = vrot.slane %v6154, 1
    %v6156 = vadd.f32 %v6154, %v6155
    %v6157 = vrot.slane %v3234, 4
    %v6158 = vadd.f32 %v3234, %v6157
    %v6159 = vrot.slane %v6158, 2
    %v6160 = vadd.f32 %v6158, %v6159
    %v6161 = vrot.slane %v6160, 1
    %v6162 = vadd.f32 %v6160, %v6161
    %v6163 = vrot.slane %v3235, 4
    %v6164 = vadd.f32 %v3235, %v6163
    %v6165 = vrot.slane %v6164, 2
    %v6166 = vadd.f32 %v6164, %v6165
    %v6167 = vrot.slane %v6166, 1
    %v6168 = vadd.f32 %v6166, %v6167
    %v6169 = vrot.slane %v3236, 4
    %v6170 = vadd.f32 %v3236, %v6169
    %v6171 = vrot.slane %v6170, 2
    %v6172 = vadd.f32 %v6170, %v6171
    %v6173 = vrot.slane %v6172, 1
    %v6174 = vadd.f32 %v6172, %v6173
    %v6175 = vrot.slane %v3237, 4
    %v6176 = vadd.f32 %v3237, %v6175
    %v6177 = vrot.slane %v6176, 2
    %v6178 = vadd.f32 %v6176, %v6177
    %v6179 = vrot.slane %v6178, 1
    %v6180 = vadd.f32 %v6178, %v6179
    %v6181 = vrot.slane %v3238, 4
    %v6182 = vadd.f32 %v3238, %v6181
    %v6183 = vrot.slane %v6182, 2
    %v6184 = vadd.f32 %v6182, %v6183
    %v6185 = vrot.slane %v6184, 1
    %v6186 = vadd.f32 %v6184, %v6185
    %v6187 = vrot.slane %v3239, 4
    %v6188 = vadd.f32 %v3239, %v6187
    %v6189 = vrot.slane %v6188, 2
    %v6190 = vadd.f32 %v6188, %v6189
    %v6191 = vrot.slane %v6190, 1
    %v6192 = vadd.f32 %v6190, %v6191
    %v6193 = vrot.slane %v3240, 4
    %v6194 = vadd.f32 %v3240, %v6193
    %v6195 = vrot.slane %v6194, 2
    %v6196 = vadd.f32 %v6194, %v6195
    %v6197 = vrot.slane %v6196, 1
    %v6198 = vadd.f32 %v6196, %v6197
    %v6199 = vrot.slane %v3241, 4
    %v6200 = vadd.f32 %v3241, %v6199
    %v6201 = vrot.slane %v6200, 2
    %v6202 = vadd.f32 %v6200, %v6201
    %v6203 = vrot.slane %v6202, 1
    %v6204 = vadd.f32 %v6202, %v6203
    %v6205 = vrot.slane %v3242, 4
    %v6206 = vadd.f32 %v3242, %v6205
    %v6207 = vrot.slane %v6206, 2
    %v6208 = vadd.f32 %v6206, %v6207
    %v6209 = vrot.slane %v6208, 1
    %v6210 = vadd.f32 %v6208, %v6209
    %v6211 = vrot.slane %v3243, 4
    %v6212 = vadd.f32 %v3243, %v6211
    %v6213 = vrot.slane %v6212, 2
    %v6214 = vadd.f32 %v6212, %v6213
    %v6215 = vrot.slane %v6214, 1
    %v6216 = vadd.f32 %v6214, %v6215
    %v6217 = vrot.slane %v3244, 4
    %v6218 = vadd.f32 %v3244, %v6217
    %v6219 = vrot.slane %v6218, 2
    %v6220 = vadd.f32 %v6218, %v6219
    %v6221 = vrot.slane %v6220, 1
    %v6222 = vadd.f32 %v6220, %v6221
    %v6223 = vrot.slane %v3245, 4
    %v6224 = vadd.f32 %v3245, %v6223
    %v6225 = vrot.slane %v6224, 2
    %v6226 = vadd.f32 %v6224, %v6225
    %v6227 = vrot.slane %v6226, 1
    %v6228 = vadd.f32 %v6226, %v6227
    %v6229 = vrot.slane %v3246, 4
    %v6230 = vadd.f32 %v3246, %v6229
    %v6231 = vrot.slane %v6230, 2
    %v6232 = vadd.f32 %v6230, %v6231
    %v6233 = vrot.slane %v6232, 1
    %v6234 = vadd.f32 %v6232, %v6233
    %v6235 = vrot.slane %v3247, 4
    %v6236 = vadd.f32 %v3247, %v6235
    %v6237 = vrot.slane %v6236, 2
    %v6238 = vadd.f32 %v6236, %v6237
    %v6239 = vrot.slane %v6238, 1
    %v6240 = vadd.f32 %v6238, %v6239
    %v6241 = vrot.slane %v3248, 4
    %v6242 = vadd.f32 %v3248, %v6241
    %v6243 = vrot.slane %v6242, 2
    %v6244 = vadd.f32 %v6242, %v6243
    %v6245 = vrot.slane %v6244, 1
    %v6246 = vadd.f32 %v6244, %v6245
    %v6247 = vrot.slane %v3249, 4
    %v6248 = vadd.f32 %v3249, %v6247
    %v6249 = vrot.slane %v6248, 2
    %v6250 = vadd.f32 %v6248, %v6249
    %v6251 = vrot.slane %v6250, 1
    %v6252 = vadd.f32 %v6250, %v6251
    %v6253 = vrot.slane %v3250, 4
    %v6254 = vadd.f32 %v3250, %v6253
    %v6255 = vrot.slane %v6254, 2
    %v6256 = vadd.f32 %v6254, %v6255
    %v6257 = vrot.slane %v6256, 1
    %v6258 = vadd.f32 %v6256, %v6257
    %v6259 = vrot.slane %v3251, 4
    %v6260 = vadd.f32 %v3251, %v6259
    %v6261 = vrot.slane %v6260, 2
    %v6262 = vadd.f32 %v6260, %v6261
    %v6263 = vrot.slane %v6262, 1
    %v6264 = vadd.f32 %v6262, %v6263
    %v6265 = vrot.slane %v3252, 4
    %v6266 = vadd.f32 %v3252, %v6265
    %v6267 = vrot.slane %v6266, 2
    %v6268 = vadd.f32 %v6266, %v6267
    %v6269 = vrot.slane %v6268, 1
    %v6270 = vadd.f32 %v6268, %v6269
    %v6271 = vrot.slane %v3253, 4
    %v6272 = vadd.f32 %v3253, %v6271
    %v6273 = vrot.slane %v6272, 2
    %v6274 = vadd.f32 %v6272, %v6273
    %v6275 = vrot.slane %v6274, 1
    %v6276 = vadd.f32 %v6274, %v6275
    %v6277 = vrot.slane %v3254, 4
    %v6278 = vadd.f32 %v3254, %v6277
    %v6279 = vrot.slane %v6278, 2
    %v6280 = vadd.f32 %v6278, %v6279
    %v6281 = vrot.slane %v6280, 1
    %v6282 = vadd.f32 %v6280, %v6281
    %v6283 = vrot.slane %v3255, 4
    %v6284 = vadd.f32 %v3255, %v6283
    %v6285 = vrot.slane %v6284, 2
    %v6286 = vadd.f32 %v6284, %v6285
    %v6287 = vrot.slane %v6286, 1
    %v6288 = vadd.f32 %v6286, %v6287
    %v6289 = vrot.slane %v3256, 4
    %v6290 = vadd.f32 %v3256, %v6289
    %v6291 = vrot.slane %v6290, 2
    %v6292 = vadd.f32 %v6290, %v6291
    %v6293 = vrot.slane %v6292, 1
    %v6294 = vadd.f32 %v6292, %v6293
    %v6295 = vrot.slane %v3257, 4
    %v6296 = vadd.f32 %v3257, %v6295
    %v6297 = vrot.slane %v6296, 2
    %v6298 = vadd.f32 %v6296, %v6297
    %v6299 = vrot.slane %v6298, 1
    %v6300 = vadd.f32 %v6298, %v6299
    %v6301 = vrot.slane %v3258, 4
    %v6302 = vadd.f32 %v3258, %v6301
    %v6303 = vrot.slane %v6302, 2
    %v6304 = vadd.f32 %v6302, %v6303
    %v6305 = vrot.slane %v6304, 1
    %v6306 = vadd.f32 %v6304, %v6305
    %v6307 = vrot.slane %v3259, 4
    %v6308 = vadd.f32 %v3259, %v6307
    %v6309 = vrot.slane %v6308, 2
    %v6310 = vadd.f32 %v6308, %v6309
    %v6311 = vrot.slane %v6310, 1
    %v6312 = vadd.f32 %v6310, %v6311
    %v6313 = vrot.slane %v3260, 4
    %v6314 = vadd.f32 %v3260, %v6313
    %v6315 = vrot.slane %v6314, 2
    %v6316 = vadd.f32 %v6314, %v6315
    %v6317 = vrot.slane %v6316, 1
    %v6318 = vadd.f32 %v6316, %v6317
    %v6319 = vrot.slane %v3261, 4
    %v6320 = vadd.f32 %v3261, %v6319
    %v6321 = vrot.slane %v6320, 2
    %v6322 = vadd.f32 %v6320, %v6321
    %v6323 = vrot.slane %v6322, 1
    %v6324 = vadd.f32 %v6322, %v6323
    %v6325 = vrot.slane %v3262, 4
    %v6326 = vadd.f32 %v3262, %v6325
    %v6327 = vrot.slane %v6326, 2
    %v6328 = vadd.f32 %v6326, %v6327
    %v6329 = vrot.slane %v6328, 1
    %v6330 = vadd.f32 %v6328, %v6329
    %v6331 = vrot.slane %v3263, 4
    %v6332 = vadd.f32 %v3263, %v6331
    %v6333 = vrot.slane %v6332, 2
    %v6334 = vadd.f32 %v6332, %v6333
    %v6335 = vrot.slane %v6334, 1
    %v6336 = vadd.f32 %v6334, %v6335
    %v6337 = vrot.slane %v3264, 4
    %v6338 = vadd.f32 %v3264, %v6337
    %v6339 = vrot.slane %v6338, 2
    %v6340 = vadd.f32 %v6338, %v6339
    %v6341 = vrot.slane %v6340, 1
    %v6342 = vadd.f32 %v6340, %v6341
    %v6343 = vrot.slane %v3265, 4
    %v6344 = vadd.f32 %v3265, %v6343
    %v6345 = vrot.slane %v6344, 2
    %v6346 = vadd.f32 %v6344, %v6345
    %v6347 = vrot.slane %v6346, 1
    %v6348 = vadd.f32 %v6346, %v6347
    %v6349 = vrot.slane %v3266, 4
    %v6350 = vadd.f32 %v3266, %v6349
    %v6351 = vrot.slane %v6350, 2
    %v6352 = vadd.f32 %v6350, %v6351
    %v6353 = vrot.slane %v6352, 1
    %v6354 = vadd.f32 %v6352, %v6353
    %v6355 = vrot.slane %v3267, 4
    %v6356 = vadd.f32 %v3267, %v6355
    %v6357 = vrot.slane %v6356, 2
    %v6358 = vadd.f32 %v6356, %v6357
    %v6359 = vrot.slane %v6358, 1
    %v6360 = vadd.f32 %v6358, %v6359
    %v6361 = vrot.slane %v3268, 4
    %v6362 = vadd.f32 %v3268, %v6361
    %v6363 = vrot.slane %v6362, 2
    %v6364 = vadd.f32 %v6362, %v6363
    %v6365 = vrot.slane %v6364, 1
    %v6366 = vadd.f32 %v6364, %v6365
    %v6367 = vrot.slane %v3269, 4
    %v6368 = vadd.f32 %v3269, %v6367
    %v6369 = vrot.slane %v6368, 2
    %v6370 = vadd.f32 %v6368, %v6369
    %v6371 = vrot.slane %v6370, 1
    %v6372 = vadd.f32 %v6370, %v6371
    %v6373 = vrot.slane %v3270, 4
    %v6374 = vadd.f32 %v3270, %v6373
    %v6375 = vrot.slane %v6374, 2
    %v6376 = vadd.f32 %v6374, %v6375
    %v6377 = vrot.slane %v6376, 1
    %v6378 = vadd.f32 %v6376, %v6377
    %v6379 = vrot.slane %v3271, 4
    %v6380 = vadd.f32 %v3271, %v6379
    %v6381 = vrot.slane %v6380, 2
    %v6382 = vadd.f32 %v6380, %v6381
    %v6383 = vrot.slane %v6382, 1
    %v6384 = vadd.f32 %v6382, %v6383
    %v6385 = vrot.slane %v3272, 4
    %v6386 = vadd.f32 %v3272, %v6385
    %v6387 = vrot.slane %v6386, 2
    %v6388 = vadd.f32 %v6386, %v6387
    %v6389 = vrot.slane %v6388, 1
    %v6390 = vadd.f32 %v6388, %v6389
    %v6391 = vrot.slane %v3273, 4
    %v6392 = vadd.f32 %v3273, %v6391
    %v6393 = vrot.slane %v6392, 2
    %v6394 = vadd.f32 %v6392, %v6393
    %v6395 = vrot.slane %v6394, 1
    %v6396 = vadd.f32 %v6394, %v6395
    %v6397 = vrot.slane %v3274, 4
    %v6398 = vadd.f32 %v3274, %v6397
    %v6399 = vrot.slane %v6398, 2
    %v6400 = vadd.f32 %v6398, %v6399
    %v6401 = vrot.slane %v6400, 1
    %v6402 = vadd.f32 %v6400, %v6401
    %v6403 = vrot.slane %v3275, 4
    %v6404 = vadd.f32 %v3275, %v6403
    %v6405 = vrot.slane %v6404, 2
    %v6406 = vadd.f32 %v6404, %v6405
    %v6407 = vrot.slane %v6406, 1
    %v6408 = vadd.f32 %v6406, %v6407
    %v6409 = vrot.slane %v3276, 4
    %v6410 = vadd.f32 %v3276, %v6409
    %v6411 = vrot.slane %v6410, 2
    %v6412 = vadd.f32 %v6410, %v6411
    %v6413 = vrot.slane %v6412, 1
    %v6414 = vadd.f32 %v6412, %v6413
    %v6415 = vrot.slane %v3277, 4
    %v6416 = vadd.f32 %v3277, %v6415
    %v6417 = vrot.slane %v6416, 2
    %v6418 = vadd.f32 %v6416, %v6417
    %v6419 = vrot.slane %v6418, 1
    %v6420 = vadd.f32 %v6418, %v6419
    %v6421 = vrot.slane %v3278, 4
    %v6422 = vadd.f32 %v3278, %v6421
    %v6423 = vrot.slane %v6422, 2
    %v6424 = vadd.f32 %v6422, %v6423
    %v6425 = vrot.slane %v6424, 1
    %v6426 = vadd.f32 %v6424, %v6425
    %v6427 = vrot.slane %v3279, 4
    %v6428 = vadd.f32 %v3279, %v6427
    %v6429 = vrot.slane %v6428, 2
    %v6430 = vadd.f32 %v6428, %v6429
    %v6431 = vrot.slane %v6430, 1
    %v6432 = vadd.f32 %v6430, %v6431
    %v6433 = vrot.slane %v3280, 4
    %v6434 = vadd.f32 %v3280, %v6433
    %v6435 = vrot.slane %v6434, 2
    %v6436 = vadd.f32 %v6434, %v6435
    %v6437 = vrot.slane %v6436, 1
    %v6438 = vadd.f32 %v6436, %v6437
    %v6439 = vrot.slane %v3281, 4
    %v6440 = vadd.f32 %v3281, %v6439
    %v6441 = vrot.slane %v6440, 2
    %v6442 = vadd.f32 %v6440, %v6441
    %v6443 = vrot.slane %v6442, 1
    %v6444 = vadd.f32 %v6442, %v6443
    %v6445 = vrot.slane %v3282, 4
    %v6446 = vadd.f32 %v3282, %v6445
    %v6447 = vrot.slane %v6446, 2
    %v6448 = vadd.f32 %v6446, %v6447
    %v6449 = vrot.slane %v6448, 1
    %v6450 = vadd.f32 %v6448, %v6449
    %v6451 = vmul.f32 %v3288, %v3480
    %v6452 = vmul.f32 %v3312, %v3480
    %v6453 = vmul.f32 %v3336, %v3480
    %v6454 = vmul.f32 %v3360, %v3480
    %v6455 = vmul.f32 %v3384, %v3480
    %v6456 = vmul.f32 %v3408, %v3480
    %v6457 = vmul.f32 %v3432, %v3480
    %v6458 = vmul.f32 %v3456, %v3480
    %v6459 = vmul.f32 %v3486, %v3678
    %v6460 = vmul.f32 %v3510, %v3678
    %v6461 = vmul.f32 %v3534, %v3678
    %v6462 = vmul.f32 %v3558, %v3678
    %v6463 = vmul.f32 %v3582, %v3678
    %v6464 = vmul.f32 %v3606, %v3678
    %v6465 = vmul.f32 %v3630, %v3678
    %v6466 = vmul.f32 %v3654, %v3678
    %v6467 = vmul.f32 %v3684, %v3876
    %v6468 = vmul.f32 %v3708, %v3876
    %v6469 = vmul.f32 %v3732, %v3876
    %v6470 = vmul.f32 %v3756, %v3876
    %v6471 = vmul.f32 %v3780, %v3876
    %v6472 = vmul.f32 %v3804, %v3876
    %v6473 = vmul.f32 %v3828, %v3876
    %v6474 = vmul.f32 %v3852, %v3876
    %v6475 = vmul.f32 %v3882, %v4074
    %v6476 = vmul.f32 %v3906, %v4074
    %v6477 = vmul.f32 %v3930, %v4074
    %v6478 = vmul.f32 %v3954, %v4074
    %v6479 = vmul.f32 %v3978, %v4074
    %v6480 = vmul.f32 %v4002, %v4074
    %v6481 = vmul.f32 %v4026, %v4074
    %v6482 = vmul.f32 %v4050, %v4074
    %v6483 = vmul.f32 %v4080, %v4272
    %v6484 = vmul.f32 %v4104, %v4272
    %v6485 = vmul.f32 %v4128, %v4272
    %v6486 = vmul.f32 %v4152, %v4272
    %v6487 = vmul.f32 %v4176, %v4272
    %v6488 = vmul.f32 %v4200, %v4272
    %v6489 = vmul.f32 %v4224, %v4272
    %v6490 = vmul.f32 %v4248, %v4272
    %v6491 = vmul.f32 %v4278, %v4470
    %v6492 = vmul.f32 %v4302, %v4470
    %v6493 = vmul.f32 %v4326, %v4470
    %v6494 = vmul.f32 %v4350, %v4470
    %v6495 = vmul.f32 %v4374, %v4470
    %v6496 = vmul.f32 %v4398, %v4470
    %v6497 = vmul.f32 %v4422, %v4470
    %v6498 = vmul.f32 %v4446, %v4470
    %v6499 = vmul.f32 %v4476, %v4668
    %v6500 = vmul.f32 %v4500, %v4668
    %v6501 = vmul.f32 %v4524, %v4668
    %v6502 = vmul.f32 %v4548, %v4668
    %v6503 = vmul.f32 %v4572, %v4668
    %v6504 = vmul.f32 %v4596, %v4668
    %v6505 = vmul.f32 %v4620, %v4668
    %v6506 = vmul.f32 %v4644, %v4668
    %v6507 = vmul.f32 %v4674, %v4866
    %v6508 = vmul.f32 %v4698, %v4866
    %v6509 = vmul.f32 %v4722, %v4866
    %v6510 = vmul.f32 %v4746, %v4866
    %v6511 = vmul.f32 %v4770, %v4866
    %v6512 = vmul.f32 %v4794, %v4866
    %v6513 = vmul.f32 %v4818, %v4866
    %v6514 = vmul.f32 %v4842, %v4866
    %v6515 = vmul.f32 %v4872, %v5064
    %v6516 = vmul.f32 %v4896, %v5064
    %v6517 = vmul.f32 %v4920, %v5064
    %v6518 = vmul.f32 %v4944, %v5064
    %v6519 = vmul.f32 %v4968, %v5064
    %v6520 = vmul.f32 %v4992, %v5064
    %v6521 = vmul.f32 %v5016, %v5064
    %v6522 = vmul.f32 %v5040, %v5064
    %v6523 = vmul.f32 %v5070, %v5262
    %v6524 = vmul.f32 %v5094, %v5262
    %v6525 = vmul.f32 %v5118, %v5262
    %v6526 = vmul.f32 %v5142, %v5262
    %v6527 = vmul.f32 %v5166, %v5262
    %v6528 = vmul.f32 %v5190, %v5262
    %v6529 = vmul.f32 %v5214, %v5262
    %v6530 = vmul.f32 %v5238, %v5262
    %v6531 = vmul.f32 %v5268, %v5460
    %v6532 = vmul.f32 %v5292, %v5460
    %v6533 = vmul.f32 %v5316, %v5460
    %v6534 = vmul.f32 %v5340, %v5460
    %v6535 = vmul.f32 %v5364, %v5460
    %v6536 = vmul.f32 %v5388, %v5460
    %v6537 = vmul.f32 %v5412, %v5460
    %v6538 = vmul.f32 %v5436, %v5460
    %v6539 = vmul.f32 %v5466, %v5658
    %v6540 = vmul.f32 %v5490, %v5658
    %v6541 = vmul.f32 %v5514, %v5658
    %v6542 = vmul.f32 %v5538, %v5658
    %v6543 = vmul.f32 %v5562, %v5658
    %v6544 = vmul.f32 %v5586, %v5658
    %v6545 = vmul.f32 %v5610, %v5658
    %v6546 = vmul.f32 %v5634, %v5658
    %v6547 = vmul.f32 %v5664, %v5856
    %v6548 = vmul.f32 %v5688, %v5856
    %v6549 = vmul.f32 %v5712, %v5856
    %v6550 = vmul.f32 %v5736, %v5856
    %v6551 = vmul.f32 %v5760, %v5856
    %v6552 = vmul.f32 %v5784, %v5856
    %v6553 = vmul.f32 %v5808, %v5856
    %v6554 = vmul.f32 %v5832, %v5856
    %v6555 = vmul.f32 %v5862, %v6054
    %v6556 = vmul.f32 %v5886, %v6054
    %v6557 = vmul.f32 %v5910, %v6054
    %v6558 = vmul.f32 %v5934, %v6054
    %v6559 = vmul.f32 %v5958, %v6054
    %v6560 = vmul.f32 %v5982, %v6054
    %v6561 = vmul.f32 %v6006, %v6054
    %v6562 = vmul.f32 %v6030, %v6054
    %v6563 = vmul.f32 %v6060, %v6252
    %v6564 = vmul.f32 %v6084, %v6252
    %v6565 = vmul.f32 %v6108, %v6252
    %v6566 = vmul.f32 %v6132, %v6252
    %v6567 = vmul.f32 %v6156, %v6252
    %v6568 = vmul.f32 %v6180, %v6252
    %v6569 = vmul.f32 %v6204, %v6252
    %v6570 = vmul.f32 %v6228, %v6252
    %v6571 = vmul.f32 %v6258, %v6450
    %v6572 = vmul.f32 %v6282, %v6450
    %v6573 = vmul.f32 %v6306, %v6450
    %v6574 = vmul.f32 %v6330, %v6450
    %v6575 = vmul.f32 %v6354, %v6450
    %v6576 = vmul.f32 %v6378, %v6450
    %v6577 = vmul.f32 %v6402, %v6450
    %v6578 = vmul.f32 %v6426, %v6450
    %v6707 = vrot.slane %v6452, 7
    %vm6708 = vcmask 1041409
    %v6709 = vsel %vm6708, %v6707, %v6451
    %v6710 = vrot.slane %v6453, 6
    %vm6711 = vcmask 1042434
    %v6712 = vsel %vm6711, %v6710, %v6709
    %v6713 = vrot.slane %v6454, 5
    %vm6714 = vcmask 1043459
    %v6715 = vsel %vm6714, %v6713, %v6712
    %v6716 = vrot.slane %v6455, 4
    %vm6717 = vcmask 1044484
    %v6718 = vsel %vm6717, %v6716, %v6715
    %v6719 = vrot.slane %v6456, 3
    %vm6720 = vcmask 1045509
    %v6721 = vsel %vm6720, %v6719, %v6718
    %v6722 = vrot.slane %v6457, 2
    %vm6723 = vcmask 1046534
    %v6724 = vsel %vm6723, %v6722, %v6721
    %v6725 = vrot.slane %v6458, 1
    %vm6726 = vcmask 1047559
    %v6727 = vsel %vm6726, %v6725, %v6724
    %v6728 = vrot.slane %v6460, 7
    %v6729 = vsel %vm6708, %v6728, %v6459
    %v6730 = vrot.slane %v6461, 6
    %v6731 = vsel %vm6711, %v6730, %v6729
    %v6732 = vrot.slane %v6462, 5
    %v6733 = vsel %vm6714, %v6732, %v6731
    %v6734 = vrot.slane %v6463, 4
    %v6735 = vsel %vm6717, %v6734, %v6733
    %v6736 = vrot.slane %v6464, 3
    %v6737 = vsel %vm6720, %v6736, %v6735
    %v6738 = vrot.slane %v6465, 2
    %v6739 = vsel %vm6723, %v6738, %v6737
    %v6740 = vrot.slane %v6466, 1
    %v6741 = vsel %vm6726, %v6740, %v6739
    %v6742 = vrot.slane %v6468, 7
    %v6743 = vsel %vm6708, %v6742, %v6467
    %v6744 = vrot.slane %v6469, 6
    %v6745 = vsel %vm6711, %v6744, %v6743
    %v6746 = vrot.slane %v6470, 5
    %v6747 = vsel %vm6714, %v6746, %v6745
    %v6748 = vrot.slane %v6471, 4
    %v6749 = vsel %vm6717, %v6748, %v6747
    %v6750 = vrot.slane %v6472, 3
    %v6751 = vsel %vm6720, %v6750, %v6749
    %v6752 = vrot.slane %v6473, 2
    %v6753 = vsel %vm6723, %v6752, %v6751
    %v6754 = vrot.slane %v6474, 1
    %v6755 = vsel %vm6726, %v6754, %v6753
    %v6756 = vrot.slane %v6476, 7
    %v6757 = vsel %vm6708, %v6756, %v6475
    %v6758 = vrot.slane %v6477, 6
    %v6759 = vsel %vm6711, %v6758, %v6757
    %v6760 = vrot.slane %v6478, 5
    %v6761 = vsel %vm6714, %v6760, %v6759
    %v6762 = vrot.slane %v6479, 4
    %v6763 = vsel %vm6717, %v6762, %v6761
    %v6764 = vrot.slane %v6480, 3
    %v6765 = vsel %vm6720, %v6764, %v6763
    %v6766 = vrot.slane %v6481, 2
    %v6767 = vsel %vm6723, %v6766, %v6765
    %v6768 = vrot.slane %v6482, 1
    %v6769 = vsel %vm6726, %v6768, %v6767
    %v6770 = vrot.slane %v6484, 7
    %v6771 = vsel %vm6708, %v6770, %v6483
    %v6772 = vrot.slane %v6485, 6
    %v6773 = vsel %vm6711, %v6772, %v6771
    %v6774 = vrot.slane %v6486, 5
    %v6775 = vsel %vm6714, %v6774, %v6773
    %v6776 = vrot.slane %v6487, 4
    %v6777 = vsel %vm6717, %v6776, %v6775
    %v6778 = vrot.slane %v6488, 3
    %v6779 = vsel %vm6720, %v6778, %v6777
    %v6780 = vrot.slane %v6489, 2
    %v6781 = vsel %vm6723, %v6780, %v6779
    %v6782 = vrot.slane %v6490, 1
    %v6783 = vsel %vm6726, %v6782, %v6781
    %v6784 = vrot.slane %v6492, 7
    %v6785 = vsel %vm6708, %v6784, %v6491
    %v6786 = vrot.slane %v6493, 6
    %v6787 = vsel %vm6711, %v6786, %v6785
    %v6788 = vrot.slane %v6494, 5
    %v6789 = vsel %vm6714, %v6788, %v6787
    %v6790 = vrot.slane %v6495, 4
    %v6791 = vsel %vm6717, %v6790, %v6789
    %v6792 = vrot.slane %v6496, 3
    %v6793 = vsel %vm6720, %v6792, %v6791
    %v6794 = vrot.slane %v6497, 2
    %v6795 = vsel %vm6723, %v6794, %v6793
    %v6796 = vrot.slane %v6498, 1
    %v6797 = vsel %vm6726, %v6796, %v6795
    %v6798 = vrot.slane %v6500, 7
    %v6799 = vsel %vm6708, %v6798, %v6499
    %v6800 = vrot.slane %v6501, 6
    %v6801 = vsel %vm6711, %v6800, %v6799
    %v6802 = vrot.slane %v6502, 5
    %v6803 = vsel %vm6714, %v6802, %v6801
    %v6804 = vrot.slane %v6503, 4
    %v6805 = vsel %vm6717, %v6804, %v6803
    %v6806 = vrot.slane %v6504, 3
    %v6807 = vsel %vm6720, %v6806, %v6805
    %v6808 = vrot.slane %v6505, 2
    %v6809 = vsel %vm6723, %v6808, %v6807
    %v6810 = vrot.slane %v6506, 1
    %v6811 = vsel %vm6726, %v6810, %v6809
    %v6812 = vrot.slane %v6508, 7
    %v6813 = vsel %vm6708, %v6812, %v6507
    %v6814 = vrot.slane %v6509, 6
    %v6815 = vsel %vm6711, %v6814, %v6813
    %v6816 = vrot.slane %v6510, 5
    %v6817 = vsel %vm6714, %v6816, %v6815
    %v6818 = vrot.slane %v6511, 4
    %v6819 = vsel %vm6717, %v6818, %v6817
    %v6820 = vrot.slane %v6512, 3
    %v6821 = vsel %vm6720, %v6820, %v6819
    %v6822 = vrot.slane %v6513, 2
    %v6823 = vsel %vm6723, %v6822, %v6821
    %v6824 = vrot.slane %v6514, 1
    %v6825 = vsel %vm6726, %v6824, %v6823
    %v6826 = vrot.slane %v6516, 7
    %v6827 = vsel %vm6708, %v6826, %v6515
    %v6828 = vrot.slane %v6517, 6
    %v6829 = vsel %vm6711, %v6828, %v6827
    %v6830 = vrot.slane %v6518, 5
    %v6831 = vsel %vm6714, %v6830, %v6829
    %v6832 = vrot.slane %v6519, 4
    %v6833 = vsel %vm6717, %v6832, %v6831
    %v6834 = vrot.slane %v6520, 3
    %v6835 = vsel %vm6720, %v6834, %v6833
    %v6836 = vrot.slane %v6521, 2
    %v6837 = vsel %vm6723, %v6836, %v6835
    %v6838 = vrot.slane %v6522, 1
    %v6839 = vsel %vm6726, %v6838, %v6837
    %v6840 = vrot.slane %v6524, 7
    %v6841 = vsel %vm6708, %v6840, %v6523
    %v6842 = vrot.slane %v6525, 6
    %v6843 = vsel %vm6711, %v6842, %v6841
    %v6844 = vrot.slane %v6526, 5
    %v6845 = vsel %vm6714, %v6844, %v6843
    %v6846 = vrot.slane %v6527, 4
    %v6847 = vsel %vm6717, %v6846, %v6845
    %v6848 = vrot.slane %v6528, 3
    %v6849 = vsel %vm6720, %v6848, %v6847
    %v6850 = vrot.slane %v6529, 2
    %v6851 = vsel %vm6723, %v6850, %v6849
    %v6852 = vrot.slane %v6530, 1
    %v6853 = vsel %vm6726, %v6852, %v6851
    %v6854 = vrot.slane %v6532, 7
    %v6855 = vsel %vm6708, %v6854, %v6531
    %v6856 = vrot.slane %v6533, 6
    %v6857 = vsel %vm6711, %v6856, %v6855
    %v6858 = vrot.slane %v6534, 5
    %v6859 = vsel %vm6714, %v6858, %v6857
    %v6860 = vrot.slane %v6535, 4
    %v6861 = vsel %vm6717, %v6860, %v6859
    %v6862 = vrot.slane %v6536, 3
    %v6863 = vsel %vm6720, %v6862, %v6861
    %v6864 = vrot.slane %v6537, 2
    %v6865 = vsel %vm6723, %v6864, %v6863
    %v6866 = vrot.slane %v6538, 1
    %v6867 = vsel %vm6726, %v6866, %v6865
    %v6868 = vrot.slane %v6540, 7
    %v6869 = vsel %vm6708, %v6868, %v6539
    %v6870 = vrot.slane %v6541, 6
    %v6871 = vsel %vm6711, %v6870, %v6869
    %v6872 = vrot.slane %v6542, 5
    %v6873 = vsel %vm6714, %v6872, %v6871
    %v6874 = vrot.slane %v6543, 4
    %v6875 = vsel %vm6717, %v6874, %v6873
    %v6876 = vrot.slane %v6544, 3
    %v6877 = vsel %vm6720, %v6876, %v6875
    %v6878 = vrot.slane %v6545, 2
    %v6879 = vsel %vm6723, %v6878, %v6877
    %v6880 = vrot.slane %v6546, 1
    %v6881 = vsel %vm6726, %v6880, %v6879
    %v6882 = vrot.slane %v6548, 7
    %v6883 = vsel %vm6708, %v6882, %v6547
    %v6884 = vrot.slane %v6549, 6
    %v6885 = vsel %vm6711, %v6884, %v6883
    %v6886 = vrot.slane %v6550, 5
    %v6887 = vsel %vm6714, %v6886, %v6885
    %v6888 = vrot.slane %v6551, 4
    %v6889 = vsel %vm6717, %v6888, %v6887
    %v6890 = vrot.slane %v6552, 3
    %v6891 = vsel %vm6720, %v6890, %v6889
    %v6892 = vrot.slane %v6553, 2
    %v6893 = vsel %vm6723, %v6892, %v6891
    %v6894 = vrot.slane %v6554, 1
    %v6895 = vsel %vm6726, %v6894, %v6893
    %v6896 = vrot.slane %v6556, 7
    %v6897 = vsel %vm6708, %v6896, %v6555
    %v6898 = vrot.slane %v6557, 6
    %v6899 = vsel %vm6711, %v6898, %v6897
    %v6900 = vrot.slane %v6558, 5
    %v6901 = vsel %vm6714, %v6900, %v6899
    %v6902 = vrot.slane %v6559, 4
    %v6903 = vsel %vm6717, %v6902, %v6901
    %v6904 = vrot.slane %v6560, 3
    %v6905 = vsel %vm6720, %v6904, %v6903
    %v6906 = vrot.slane %v6561, 2
    %v6907 = vsel %vm6723, %v6906, %v6905
    %v6908 = vrot.slane %v6562, 1
    %v6909 = vsel %vm6726, %v6908, %v6907
    %v6910 = vrot.slane %v6564, 7
    %v6911 = vsel %vm6708, %v6910, %v6563
    %v6912 = vrot.slane %v6565, 6
    %v6913 = vsel %vm6711, %v6912, %v6911
    %v6914 = vrot.slane %v6566, 5
    %v6915 = vsel %vm6714, %v6914, %v6913
    %v6916 = vrot.slane %v6567, 4
    %v6917 = vsel %vm6717, %v6916, %v6915
    %v6918 = vrot.slane %v6568, 3
    %v6919 = vsel %vm6720, %v6918, %v6917
    %v6920 = vrot.slane %v6569, 2
    %v6921 = vsel %vm6723, %v6920, %v6919
    %v6922 = vrot.slane %v6570, 1
    %v6923 = vsel %vm6726, %v6922, %v6921
    %v6924 = vrot.slane %v6572, 7
    %v6925 = vsel %vm6708, %v6924, %v6571
    %v6926 = vrot.slane %v6573, 6
    %v6927 = vsel %vm6711, %v6926, %v6925
    %v6928 = vrot.slane %v6574, 5
    %v6929 = vsel %vm6714, %v6928, %v6927
    %v6930 = vrot.slane %v6575, 4
    %v6931 = vsel %vm6717, %v6930, %v6929
    %v6932 = vrot.slane %v6576, 3
    %v6933 = vsel %vm6720, %v6932, %v6931
    %v6934 = vrot.slane %v6577, 2
    %v6935 = vsel %vm6723, %v6934, %v6933
    %v6936 = vrot.slane %v6578, 1
    %v6937 = vsel %vm6726, %v6936, %v6935
    %6954 = vadd.xlane.f32.xlu0 %v6727
    %v6955 = vpop.xlane.xlu0 %6954
    %6956 = vadd.xlane.f32.xlu0 %v6741
    %v6957 = vpop.xlane.xlu0 %6956
    %6958 = vadd.xlane.f32.xlu0 %v6755
    %v6959 = vpop.xlane.xlu0 %6958
    %6960 = vadd.xlane.f32.xlu0 %v6769
    %v6961 = vpop.xlane.xlu0 %6960
    %6962 = vadd.xlane.f32.xlu0 %v6783
    %v6963 = vpop.xlane.xlu0 %6962
    %6964 = vadd.xlane.f32.xlu0 %v6797
    %v6965 = vpop.xlane.xlu0 %6964
    %6966 = vadd.xlane.f32.xlu0 %v6811
    %v6967 = vpop.xlane.xlu0 %6966
    %6968 = vadd.xlane.f32.xlu0 %v6825
    %v6969 = vpop.xlane.xlu0 %6968
    %6970 = vadd.xlane.f32.xlu0 %v6839
    %v6971 = vpop.xlane.xlu0 %6970
    %6972 = vadd.xlane.f32.xlu0 %v6853
    %v6973 = vpop.xlane.xlu0 %6972
    %6974 = vadd.xlane.f32.xlu0 %v6867
    %v6975 = vpop.xlane.xlu0 %6974
    %6976 = vadd.xlane.f32.xlu0 %v6881
    %v6977 = vpop.xlane.xlu0 %6976
    %6978 = vadd.xlane.f32.xlu0 %v6895
    %v6979 = vpop.xlane.xlu0 %6978
    %6980 = vadd.xlane.f32.xlu0 %v6909
    %v6981 = vpop.xlane.xlu0 %6980
    %6982 = vadd.xlane.f32.xlu0 %v6923
    %v6983 = vpop.xlane.xlu0 %6982
    %6984 = vadd.xlane.f32.xlu0 %v6937
    %v6985 = vpop.xlane.xlu0 %6984
    %v6986 = vrot.slane %v6955, 4
    %v6987 = vmax.f32 %v6955, %v6986
    %v6988 = vrot.slane %v6987, 2
    %v6989 = vmax.f32 %v6987, %v6988
    %v6990 = vrot.slane %v6989, 1
    %v6991 = vmax.f32 %v6989, %v6990
    %v6992 = vrot.slane %v6957, 4
    %v6993 = vmax.f32 %v6957, %v6992
    %v6994 = vrot.slane %v6993, 2
    %v6995 = vmax.f32 %v6993, %v6994
    %v6996 = vrot.slane %v6995, 1
    %v6997 = vmax.f32 %v6995, %v6996
    %v6998 = vrot.slane %v6959, 4
    %v6999 = vmax.f32 %v6959, %v6998
    %v7000 = vrot.slane %v6999, 2
    %v7001 = vmax.f32 %v6999, %v7000
    %v7002 = vrot.slane %v7001, 1
    %v7003 = vmax.f32 %v7001, %v7002
    %v7004 = vrot.slane %v6961, 4
    %v7005 = vmax.f32 %v6961, %v7004
    %v7006 = vrot.slane %v7005, 2
    %v7007 = vmax.f32 %v7005, %v7006
    %v7008 = vrot.slane %v7007, 1
    %v7009 = vmax.f32 %v7007, %v7008
    %v7010 = vrot.slane %v6963, 4
    %v7011 = vmax.f32 %v6963, %v7010
    %v7012 = vrot.slane %v7011, 2
    %v7013 = vmax.f32 %v7011, %v7012
    %v7014 = vrot.slane %v7013, 1
    %v7015 = vmax.f32 %v7013, %v7014
    %v7016 = vrot.slane %v6965, 4
    %v7017 = vmax.f32 %v6965, %v7016
    %v7018 = vrot.slane %v7017, 2
    %v7019 = vmax.f32 %v7017, %v7018
    %v7020 = vrot.slane %v7019, 1
    %v7021 = vmax.f32 %v7019, %v7020
    %v7022 = vrot.slane %v6967, 4
    %v7023 = vmax.f32 %v6967, %v7022
    %v7024 = vrot.slane %v7023, 2
    %v7025 = vmax.f32 %v7023, %v7024
    %v7026 = vrot.slane %v7025, 1
    %v7027 = vmax.f32 %v7025, %v7026
    %v7028 = vrot.slane %v6969, 4
    %v7029 = vmax.f32 %v6969, %v7028
    %v7030 = vrot.slane %v7029, 2
    %v7031 = vmax.f32 %v7029, %v7030
    %v7032 = vrot.slane %v7031, 1
    %v7033 = vmax.f32 %v7031, %v7032
    %v7034 = vrot.slane %v6971, 4
    %v7035 = vmax.f32 %v6971, %v7034
    %v7036 = vrot.slane %v7035, 2
    %v7037 = vmax.f32 %v7035, %v7036
    %v7038 = vrot.slane %v7037, 1
    %v7039 = vmax.f32 %v7037, %v7038
    %v7040 = vrot.slane %v6973, 4
    %v7041 = vmax.f32 %v6973, %v7040
    %v7042 = vrot.slane %v7041, 2
    %v7043 = vmax.f32 %v7041, %v7042
    %v7044 = vrot.slane %v7043, 1
    %v7045 = vmax.f32 %v7043, %v7044
    %v7046 = vrot.slane %v6975, 4
    %v7047 = vmax.f32 %v6975, %v7046
    %v7048 = vrot.slane %v7047, 2
    %v7049 = vmax.f32 %v7047, %v7048
    %v7050 = vrot.slane %v7049, 1
    %v7051 = vmax.f32 %v7049, %v7050
    %v7052 = vrot.slane %v6977, 4
    %v7053 = vmax.f32 %v6977, %v7052
    %v7054 = vrot.slane %v7053, 2
    %v7055 = vmax.f32 %v7053, %v7054
    %v7056 = vrot.slane %v7055, 1
    %v7057 = vmax.f32 %v7055, %v7056
    %v7058 = vrot.slane %v6979, 4
    %v7059 = vmax.f32 %v6979, %v7058
    %v7060 = vrot.slane %v7059, 2
    %v7061 = vmax.f32 %v7059, %v7060
    %v7062 = vrot.slane %v7061, 1
    %v7063 = vmax.f32 %v7061, %v7062
    %v7064 = vrot.slane %v6981, 4
    %v7065 = vmax.f32 %v6981, %v7064
    %v7066 = vrot.slane %v7065, 2
    %v7067 = vmax.f32 %v7065, %v7066
    %v7068 = vrot.slane %v7067, 1
    %v7069 = vmax.f32 %v7067, %v7068
    %v7070 = vrot.slane %v6983, 4
    %v7071 = vmax.f32 %v6983, %v7070
    %v7072 = vrot.slane %v7071, 2
    %v7073 = vmax.f32 %v7071, %v7072
    %v7074 = vrot.slane %v7073, 1
    %v7075 = vmax.f32 %v7073, %v7074
    %v7076 = vrot.slane %v6985, 4
    %v7077 = vmax.f32 %v6985, %v7076
    %v7078 = vrot.slane %v7077, 2
    %v7079 = vmax.f32 %v7077, %v7078
    %v7080 = vrot.slane %v7079, 1
    %v7081 = vmax.f32 %v7079, %v7080
    %v7082 = vsub.f32 %v6955, %v6991
    %v7083 = vsub.f32 %v6957, %v6997
    %v7084 = vsub.f32 %v6959, %v7003
    %v7085 = vsub.f32 %v6961, %v7009
    %v7086 = vsub.f32 %v6963, %v7015
    %v7087 = vsub.f32 %v6965, %v7021
    %v7088 = vsub.f32 %v6967, %v7027
    %v7089 = vsub.f32 %v6969, %v7033
    %v7090 = vsub.f32 %v6971, %v7039
    %v7091 = vsub.f32 %v6973, %v7045
    %v7092 = vsub.f32 %v6975, %v7051
    %v7093 = vsub.f32 %v6977, %v7057
    %v7094 = vsub.f32 %v6979, %v7063
    %v7095 = vsub.f32 %v6981, %v7069
    %v7096 = vsub.f32 %v6983, %v7075
    %v7097 = vsub.f32 %v6985, %v7081
    %v7098 = vmul.f32 %v7082, 1.442695
    %v7099 = vpow.pop %v7098
    %v7100 = vmul.f32 %v7083, 1.442695
    %v7101 = vpow.pop %v7100
    %v7102 = vmul.f32 %v7084, 1.442695
    %v7103 = vpow.pop %v7102
    %v7104 = vmul.f32 %v7085, 1.442695
    %v7105 = vpow.pop %v7104
    %v7106 = vmul.f32 %v7086, 1.442695
    %v7107 = vpow.pop %v7106
    %v7108 = vmul.f32 %v7087, 1.442695
    %v7109 = vpow.pop %v7108
    %v7110 = vmul.f32 %v7088, 1.442695
    %v7111 = vpow.pop %v7110
    %v7112 = vmul.f32 %v7089, 1.442695
    %v7113 = vpow.pop %v7112
    %v7114 = vmul.f32 %v7090, 1.442695
    %v7115 = vpow.pop %v7114
    %v7116 = vmul.f32 %v7091, 1.442695
    %v7117 = vpow.pop %v7116
    %v7118 = vmul.f32 %v7092, 1.442695
    %v7119 = vpow.pop %v7118
    %v7120 = vmul.f32 %v7093, 1.442695
    %v7121 = vpow.pop %v7120
    %v7122 = vmul.f32 %v7094, 1.442695
    %v7123 = vpow.pop %v7122
    %v7124 = vmul.f32 %v7095, 1.442695
    %v7125 = vpow.pop %v7124
    %v7126 = vmul.f32 %v7096, 1.442695
    %v7127 = vpow.pop %v7126
    %v7128 = vmul.f32 %v7097, 1.442695
    %v7129 = vpow.pop %v7128
    %v7130 = vrot.slane %v7099, 4
    %v7131 = vadd.f32 %v7099, %v7130
    %v7132 = vrot.slane %v7131, 2
    %v7133 = vadd.f32 %v7131, %v7132
    %v7134 = vrot.slane %v7133, 1
    %v7135 = vadd.f32 %v7133, %v7134
    %v7136 = vrot.slane %v7101, 4
    %v7137 = vadd.f32 %v7101, %v7136
    %v7138 = vrot.slane %v7137, 2
    %v7139 = vadd.f32 %v7137, %v7138
    %v7140 = vrot.slane %v7139, 1
    %v7141 = vadd.f32 %v7139, %v7140
    %v7142 = vrot.slane %v7103, 4
    %v7143 = vadd.f32 %v7103, %v7142
    %v7144 = vrot.slane %v7143, 2
    %v7145 = vadd.f32 %v7143, %v7144
    %v7146 = vrot.slane %v7145, 1
    %v7147 = vadd.f32 %v7145, %v7146
    %v7148 = vrot.slane %v7105, 4
    %v7149 = vadd.f32 %v7105, %v7148
    %v7150 = vrot.slane %v7149, 2
    %v7151 = vadd.f32 %v7149, %v7150
    %v7152 = vrot.slane %v7151, 1
    %v7153 = vadd.f32 %v7151, %v7152
    %v7154 = vrot.slane %v7107, 4
    %v7155 = vadd.f32 %v7107, %v7154
    %v7156 = vrot.slane %v7155, 2
    %v7157 = vadd.f32 %v7155, %v7156
    %v7158 = vrot.slane %v7157, 1
    %v7159 = vadd.f32 %v7157, %v7158
    %v7160 = vrot.slane %v7109, 4
    %v7161 = vadd.f32 %v7109, %v7160
    %v7162 = vrot.slane %v7161, 2
    %v7163 = vadd.f32 %v7161, %v7162
    %v7164 = vrot.slane %v7163, 1
    %v7165 = vadd.f32 %v7163, %v7164
    %v7166 = vrot.slane %v7111, 4
    %v7167 = vadd.f32 %v7111, %v7166
    %v7168 = vrot.slane %v7167, 2
    %v7169 = vadd.f32 %v7167, %v7168
    %v7170 = vrot.slane %v7169, 1
    %v7171 = vadd.f32 %v7169, %v7170
    %v7172 = vrot.slane %v7113, 4
    %v7173 = vadd.f32 %v7113, %v7172
    %v7174 = vrot.slane %v7173, 2
    %v7175 = vadd.f32 %v7173, %v7174
    %v7176 = vrot.slane %v7175, 1
    %v7177 = vadd.f32 %v7175, %v7176
    %v7178 = vrot.slane %v7115, 4
    %v7179 = vadd.f32 %v7115, %v7178
    %v7180 = vrot.slane %v7179, 2
    %v7181 = vadd.f32 %v7179, %v7180
    %v7182 = vrot.slane %v7181, 1
    %v7183 = vadd.f32 %v7181, %v7182
    %v7184 = vrot.slane %v7117, 4
    %v7185 = vadd.f32 %v7117, %v7184
    %v7186 = vrot.slane %v7185, 2
    %v7187 = vadd.f32 %v7185, %v7186
    %v7188 = vrot.slane %v7187, 1
    %v7189 = vadd.f32 %v7187, %v7188
    %v7190 = vrot.slane %v7119, 4
    %v7191 = vadd.f32 %v7119, %v7190
    %v7192 = vrot.slane %v7191, 2
    %v7193 = vadd.f32 %v7191, %v7192
    %v7194 = vrot.slane %v7193, 1
    %v7195 = vadd.f32 %v7193, %v7194
    %v7196 = vrot.slane %v7121, 4
    %v7197 = vadd.f32 %v7121, %v7196
    %v7198 = vrot.slane %v7197, 2
    %v7199 = vadd.f32 %v7197, %v7198
    %v7200 = vrot.slane %v7199, 1
    %v7201 = vadd.f32 %v7199, %v7200
    %v7202 = vrot.slane %v7123, 4
    %v7203 = vadd.f32 %v7123, %v7202
    %v7204 = vrot.slane %v7203, 2
    %v7205 = vadd.f32 %v7203, %v7204
    %v7206 = vrot.slane %v7205, 1
    %v7207 = vadd.f32 %v7205, %v7206
    %v7208 = vrot.slane %v7125, 4
    %v7209 = vadd.f32 %v7125, %v7208
    %v7210 = vrot.slane %v7209, 2
    %v7211 = vadd.f32 %v7209, %v7210
    %v7212 = vrot.slane %v7211, 1
    %v7213 = vadd.f32 %v7211, %v7212
    %v7214 = vrot.slane %v7127, 4
    %v7215 = vadd.f32 %v7127, %v7214
    %v7216 = vrot.slane %v7215, 2
    %v7217 = vadd.f32 %v7215, %v7216
    %v7218 = vrot.slane %v7217, 1
    %v7219 = vadd.f32 %v7217, %v7218
    %v7220 = vrot.slane %v7129, 4
    %v7221 = vadd.f32 %v7129, %v7220
    %v7222 = vrot.slane %v7221, 2
    %v7223 = vadd.f32 %v7221, %v7222
    %v7224 = vrot.slane %v7223, 1
    %v7225 = vadd.f32 %v7223, %v7224
    %v7226 = vrcp.pop %v7135
    %v7227 = vrcp.pop %v7141
    %v7228 = vrcp.pop %v7147
    %v7229 = vrcp.pop %v7153
    %v7230 = vrcp.pop %v7159
    %v7231 = vrcp.pop %v7165
    %v7232 = vrcp.pop %v7171
    %v7233 = vrcp.pop %v7177
    %v7234 = vrcp.pop %v7183
    %v7235 = vrcp.pop %v7189
    %v7236 = vrcp.pop %v7195
    %v7237 = vrcp.pop %v7201
    %v7238 = vrcp.pop %v7207
    %v7239 = vrcp.pop %v7213
    %v7240 = vrcp.pop %v7219
    %v7241 = vrcp.pop %v7225
    %v7242 = vmul.f32 %v7099, %v7226
    %v7243 = vmul.f32 %v7101, %v7227
    %v7244 = vmul.f32 %v7103, %v7228
    %v7245 = vmul.f32 %v7105, %v7229
    %v7246 = vmul.f32 %v7107, %v7230
    %v7247 = vmul.f32 %v7109, %v7231
    %v7248 = vmul.f32 %v7111, %v7232
    %v7249 = vmul.f32 %v7113, %v7233
    %v7250 = vmul.f32 %v7115, %v7234
    %v7251 = vmul.f32 %v7117, %v7235
    %v7252 = vmul.f32 %v7119, %v7236
    %v7253 = vmul.f32 %v7121, %v7237
    %v7254 = vmul.f32 %v7123, %v7238
    %v7255 = vmul.f32 %v7125, %v7239
    %v7256 = vmul.f32 %v7127, %v7240
    %v7257 = vmul.f32 %v7129, %v7241
    %v7274 = vrot.slane %v7242, 1
    %v7275 = vrot.slane %v7242, 2
    %v7276 = vrot.slane %v7242, 3
    %v7277 = vrot.slane %v7242, 4
    %v7278 = vrot.slane %v7242, 5
    %v7279 = vrot.slane %v7242, 6
    %v7280 = vrot.slane %v7242, 7
    %v7281 = vrot.slane %v7243, 1
    %v7282 = vrot.slane %v7243, 2
    %v7283 = vrot.slane %v7243, 3
    %v7284 = vrot.slane %v7243, 4
    %v7285 = vrot.slane %v7243, 5
    %v7286 = vrot.slane %v7243, 6
    %v7287 = vrot.slane %v7243, 7
    %v7288 = vrot.slane %v7244, 1
    %v7289 = vrot.slane %v7244, 2
    %v7290 = vrot.slane %v7244, 3
    %v7291 = vrot.slane %v7244, 4
    %v7292 = vrot.slane %v7244, 5
    %v7293 = vrot.slane %v7244, 6
    %v7294 = vrot.slane %v7244, 7
    %v7295 = vrot.slane %v7245, 1
    %v7296 = vrot.slane %v7245, 2
    %v7297 = vrot.slane %v7245, 3
    %v7298 = vrot.slane %v7245, 4
    %v7299 = vrot.slane %v7245, 5
    %v7300 = vrot.slane %v7245, 6
    %v7301 = vrot.slane %v7245, 7
    %v7302 = vrot.slane %v7246, 1
    %v7303 = vrot.slane %v7246, 2
    %v7304 = vrot.slane %v7246, 3
    %v7305 = vrot.slane %v7246, 4
    %v7306 = vrot.slane %v7246, 5
    %v7307 = vrot.slane %v7246, 6
    %v7308 = vrot.slane %v7246, 7
    %v7309 = vrot.slane %v7247, 1
    %v7310 = vrot.slane %v7247, 2
    %v7311 = vrot.slane %v7247, 3
    %v7312 = vrot.slane %v7247, 4
    %v7313 = vrot.slane %v7247, 5
    %v7314 = vrot.slane %v7247, 6
    %v7315 = vrot.slane %v7247, 7
    %v7316 = vrot.slane %v7248, 1
    %v7317 = vrot.slane %v7248, 2
    %v7318 = vrot.slane %v7248, 3
    %v7319 = vrot.slane %v7248, 4
    %v7320 = vrot.slane %v7248, 5
    %v7321 = vrot.slane %v7248, 6
    %v7322 = vrot.slane %v7248, 7
    %v7323 = vrot.slane %v7249, 1
    %v7324 = vrot.slane %v7249, 2
    %v7325 = vrot.slane %v7249, 3
    %v7326 = vrot.slane %v7249, 4
    %v7327 = vrot.slane %v7249, 5
    %v7328 = vrot.slane %v7249, 6
    %v7329 = vrot.slane %v7249, 7
    %v7330 = vrot.slane %v7250, 1
    %v7331 = vrot.slane %v7250, 2
    %v7332 = vrot.slane %v7250, 3
    %v7333 = vrot.slane %v7250, 4
    %v7334 = vrot.slane %v7250, 5
    %v7335 = vrot.slane %v7250, 6
    %v7336 = vrot.slane %v7250, 7
    %v7337 = vrot.slane %v7251, 1
    %v7338 = vrot.slane %v7251, 2
    %v7339 = vrot.slane %v7251, 3
    %v7340 = vrot.slane %v7251, 4
    %v7341 = vrot.slane %v7251, 5
    %v7342 = vrot.slane %v7251, 6
    %v7343 = vrot.slane %v7251, 7
    %v7344 = vrot.slane %v7252, 1
    %v7345 = vrot.slane %v7252, 2
    %v7346 = vrot.slane %v7252, 3
    %v7347 = vrot.slane %v7252, 4
    %v7348 = vrot.slane %v7252, 5
    %v7349 = vrot.slane %v7252, 6
    %v7350 = vrot.slane %v7252, 7
    %v7351 = vrot.slane %v7253, 1
    %v7352 = vrot.slane %v7253, 2
    %v7353 = vrot.slane %v7253, 3
    %v7354 = vrot.slane %v7253, 4
    %v7355 = vrot.slane %v7253, 5
    %v7356 = vrot.slane %v7253, 6
    %v7357 = vrot.slane %v7253, 7
    %v7358 = vrot.slane %v7254, 1
    %v7359 = vrot.slane %v7254, 2
    %v7360 = vrot.slane %v7254, 3
    %v7361 = vrot.slane %v7254, 4
    %v7362 = vrot.slane %v7254, 5
    %v7363 = vrot.slane %v7254, 6
    %v7364 = vrot.slane %v7254, 7
    %v7365 = vrot.slane %v7255, 1
    %v7366 = vrot.slane %v7255, 2
    %v7367 = vrot.slane %v7255, 3
    %v7368 = vrot.slane %v7255, 4
    %v7369 = vrot.slane %v7255, 5
    %v7370 = vrot.slane %v7255, 6
    %v7371 = vrot.slane %v7255, 7
    %v7372 = vrot.slane %v7256, 1
    %v7373 = vrot.slane %v7256, 2
    %v7374 = vrot.slane %v7256, 3
    %v7375 = vrot.slane %v7256, 4
    %v7376 = vrot.slane %v7256, 5
    %v7377 = vrot.slane %v7256, 6
    %v7378 = vrot.slane %v7256, 7
    %v7379 = vrot.slane %v7257, 1
    %v7380 = vrot.slane %v7257, 2
    %v7381 = vrot.slane %v7257, 3
    %v7382 = vrot.slane %v7257, 4
    %v7383 = vrot.slane %v7257, 5
    %v7384 = vrot.slane %v7257, 6
    %v7385 = vrot.slane %v7257, 7
    %v7514 = vmul.f32 %v3294, %v7242
    %v7515 = vmul.f32 %v3318, %v7274
    %v7516 = vmul.f32 %v3342, %v7275
    %v7517 = vmul.f32 %v3366, %v7276
    %v7518 = vmul.f32 %v3390, %v7277
    %v7519 = vmul.f32 %v3414, %v7278
    %v7520 = vmul.f32 %v3438, %v7279
    %v7521 = vmul.f32 %v3462, %v7280
    %v7522 = vmul.f32 %v3492, %v7243
    %v7523 = vmul.f32 %v3516, %v7281
    %v7524 = vmul.f32 %v3540, %v7282
    %v7525 = vmul.f32 %v3564, %v7283
    %v7526 = vmul.f32 %v3588, %v7284
    %v7527 = vmul.f32 %v3612, %v7285
    %v7528 = vmul.f32 %v3636, %v7286
    %v7529 = vmul.f32 %v3660, %v7287
    %v7530 = vmul.f32 %v3690, %v7244
    %v7531 = vmul.f32 %v3714, %v7288
    %v7532 = vmul.f32 %v3738, %v7289
    %v7533 = vmul.f32 %v3762, %v7290
    %v7534 = vmul.f32 %v3786, %v7291
    %v7535 = vmul.f32 %v3810, %v7292
    %v7536 = vmul.f32 %v3834, %v7293
    %v7537 = vmul.f32 %v3858, %v7294
    %v7538 = vmul.f32 %v3888, %v7245
    %v7539 = vmul.f32 %v3912, %v7295
    %v7540 = vmul.f32 %v3936, %v7296
    %v7541 = vmul.f32 %v3960, %v7297
    %v7542 = vmul.f32 %v3984, %v7298
    %v7543 = vmul.f32 %v4008, %v7299
    %v7544 = vmul.f32 %v4032, %v7300
    %v7545 = vmul.f32 %v4056, %v7301
    %v7546 = vmul.f32 %v4086, %v7246
    %v7547 = vmul.f32 %v4110, %v7302
    %v7548 = vmul.f32 %v4134, %v7303
    %v7549 = vmul.f32 %v4158, %v7304
    %v7550 = vmul.f32 %v4182, %v7305
    %v7551 = vmul.f32 %v4206, %v7306
    %v7552 = vmul.f32 %v4230, %v7307
    %v7553 = vmul.f32 %v4254, %v7308
    %v7554 = vmul.f32 %v4284, %v7247
    %v7555 = vmul.f32 %v4308, %v7309
    %v7556 = vmul.f32 %v4332, %v7310
    %v7557 = vmul.f32 %v4356, %v7311
    %v7558 = vmul.f32 %v4380, %v7312
    %v7559 = vmul.f32 %v4404, %v7313
    %v7560 = vmul.f32 %v4428, %v7314
    %v7561 = vmul.f32 %v4452, %v7315
    %v7562 = vmul.f32 %v4482, %v7248
    %v7563 = vmul.f32 %v4506, %v7316
    %v7564 = vmul.f32 %v4530, %v7317
    %v7565 = vmul.f32 %v4554, %v7318
    %v7566 = vmul.f32 %v4578, %v7319
    %v7567 = vmul.f32 %v4602, %v7320
    %v7568 = vmul.f32 %v4626, %v7321
    %v7569 = vmul.f32 %v4650, %v7322
    %v7570 = vmul.f32 %v4680, %v7249
    %v7571 = vmul.f32 %v4704, %v7323
    %v7572 = vmul.f32 %v4728, %v7324
    %v7573 = vmul.f32 %v4752, %v7325
    %v7574 = vmul.f32 %v4776, %v7326
    %v7575 = vmul.f32 %v4800, %v7327
    %v7576 = vmul.f32 %v4824, %v7328
    %v7577 = vmul.f32 %v4848, %v7329
    %v7578 = vmul.f32 %v4878, %v7250
    %v7579 = vmul.f32 %v4902, %v7330
    %v7580 = vmul.f32 %v4926, %v7331
    %v7581 = vmul.f32 %v4950, %v7332
    %v7582 = vmul.f32 %v4974, %v7333
    %v7583 = vmul.f32 %v4998, %v7334
    %v7584 = vmul.f32 %v5022, %v7335
    %v7585 = vmul.f32 %v5046, %v7336
    %v7586 = vmul.f32 %v5076, %v7251
    %v7587 = vmul.f32 %v5100, %v7337
    %v7588 = vmul.f32 %v5124, %v7338
    %v7589 = vmul.f32 %v5148, %v7339
    %v7590 = vmul.f32 %v5172, %v7340
    %v7591 = vmul.f32 %v5196, %v7341
    %v7592 = vmul.f32 %v5220, %v7342
    %v7593 = vmul.f32 %v5244, %v7343
    %v7594 = vmul.f32 %v5274, %v7252
    %v7595 = vmul.f32 %v5298, %v7344
    %v7596 = vmul.f32 %v5322, %v7345
    %v7597 = vmul.f32 %v5346, %v7346
    %v7598 = vmul.f32 %v5370, %v7347
    %v7599 = vmul.f32 %v5394, %v7348
    %v7600 = vmul.f32 %v5418, %v7349
    %v7601 = vmul.f32 %v5442, %v7350
    %v7602 = vmul.f32 %v5472, %v7253
    %v7603 = vmul.f32 %v5496, %v7351
    %v7604 = vmul.f32 %v5520, %v7352
    %v7605 = vmul.f32 %v5544, %v7353
    %v7606 = vmul.f32 %v5568, %v7354
    %v7607 = vmul.f32 %v5592, %v7355
    %v7608 = vmul.f32 %v5616, %v7356
    %v7609 = vmul.f32 %v5640, %v7357
    %v7610 = vmul.f32 %v5670, %v7254
    %v7611 = vmul.f32 %v5694, %v7358
    %v7612 = vmul.f32 %v5718, %v7359
    %v7613 = vmul.f32 %v5742, %v7360
    %v7614 = vmul.f32 %v5766, %v7361
    %v7615 = vmul.f32 %v5790, %v7362
    %v7616 = vmul.f32 %v5814, %v7363
    %v7617 = vmul.f32 %v5838, %v7364
    %v7618 = vmul.f32 %v5868, %v7255
    %v7619 = vmul.f32 %v5892, %v7365
    %v7620 = vmul.f32 %v5916, %v7366
    %v7621 = vmul.f32 %v5940, %v7367
    %v7622 = vmul.f32 %v5964, %v7368
    %v7623 = vmul.f32 %v5988, %v7369
    %v7624 = vmul.f32 %v6012, %v7370
    %v7625 = vmul.f32 %v6036, %v7371
    %v7626 = vmul.f32 %v6066, %v7256
    %v7627 = vmul.f32 %v6090, %v7372
    %v7628 = vmul.f32 %v6114, %v7373
    %v7629 = vmul.f32 %v6138, %v7374
    %v7630 = vmul.f32 %v6162, %v7375
    %v7631 = vmul.f32 %v6186, %v7376
    %v7632 = vmul.f32 %v6210, %v7377
    %v7633 = vmul.f32 %v6234, %v7378
    %v7634 = vmul.f32 %v6264, %v7257
    %v7635 = vmul.f32 %v6288, %v7379
    %v7636 = vmul.f32 %v6312, %v7380
    %v7637 = vmul.f32 %v6336, %v7381
    %v7638 = vmul.f32 %v6360, %v7382
    %v7639 = vmul.f32 %v6384, %v7383
    %v7640 = vmul.f32 %v6408, %v7384
    %v7641 = vmul.f32 %v6432, %v7385
    %v7770 = vrot.slane %v7515, 7
    %v7771 = vsel %vm6708, %v7770, %v7514
    %v7772 = vrot.slane %v7516, 6
    %v7773 = vsel %vm6711, %v7772, %v7771
    %v7774 = vrot.slane %v7517, 5
    %v7775 = vsel %vm6714, %v7774, %v7773
    %v7776 = vrot.slane %v7518, 4
    %v7777 = vsel %vm6717, %v7776, %v7775
    %v7778 = vrot.slane %v7519, 3
    %v7779 = vsel %vm6720, %v7778, %v7777
    %v7780 = vrot.slane %v7520, 2
    %v7781 = vsel %vm6723, %v7780, %v7779
    %v7782 = vrot.slane %v7521, 1
    %v7783 = vsel %vm6726, %v7782, %v7781
    %v7784 = vrot.slane %v7523, 7
    %v7785 = vsel %vm6708, %v7784, %v7522
    %v7786 = vrot.slane %v7524, 6
    %v7787 = vsel %vm6711, %v7786, %v7785
    %v7788 = vrot.slane %v7525, 5
    %v7789 = vsel %vm6714, %v7788, %v7787
    %v7790 = vrot.slane %v7526, 4
    %v7791 = vsel %vm6717, %v7790, %v7789
    %v7792 = vrot.slane %v7527, 3
    %v7793 = vsel %vm6720, %v7792, %v7791
    %v7794 = vrot.slane %v7528, 2
    %v7795 = vsel %vm6723, %v7794, %v7793
    %v7796 = vrot.slane %v7529, 1
    %v7797 = vsel %vm6726, %v7796, %v7795
    %v7798 = vrot.slane %v7531, 7
    %v7799 = vsel %vm6708, %v7798, %v7530
    %v7800 = vrot.slane %v7532, 6
    %v7801 = vsel %vm6711, %v7800, %v7799
    %v7802 = vrot.slane %v7533, 5
    %v7803 = vsel %vm6714, %v7802, %v7801
    %v7804 = vrot.slane %v7534, 4
    %v7805 = vsel %vm6717, %v7804, %v7803
    %v7806 = vrot.slane %v7535, 3
    %v7807 = vsel %vm6720, %v7806, %v7805
    %v7808 = vrot.slane %v7536, 2
    %v7809 = vsel %vm6723, %v7808, %v7807
    %v7810 = vrot.slane %v7537, 1
    %v7811 = vsel %vm6726, %v7810, %v7809
    %v7812 = vrot.slane %v7539, 7
    %v7813 = vsel %vm6708, %v7812, %v7538
    %v7814 = vrot.slane %v7540, 6
    %v7815 = vsel %vm6711, %v7814, %v7813
    %v7816 = vrot.slane %v7541, 5
    %v7817 = vsel %vm6714, %v7816, %v7815
    %v7818 = vrot.slane %v7542, 4
    %v7819 = vsel %vm6717, %v7818, %v7817
    %v7820 = vrot.slane %v7543, 3
    %v7821 = vsel %vm6720, %v7820, %v7819
    %v7822 = vrot.slane %v7544, 2
    %v7823 = vsel %vm6723, %v7822, %v7821
    %v7824 = vrot.slane %v7545, 1
    %v7825 = vsel %vm6726, %v7824, %v7823
    %v7826 = vrot.slane %v7547, 7
    %v7827 = vsel %vm6708, %v7826, %v7546
    %v7828 = vrot.slane %v7548, 6
    %v7829 = vsel %vm6711, %v7828, %v7827
    %v7830 = vrot.slane %v7549, 5
    %v7831 = vsel %vm6714, %v7830, %v7829
    %v7832 = vrot.slane %v7550, 4
    %v7833 = vsel %vm6717, %v7832, %v7831
    %v7834 = vrot.slane %v7551, 3
    %v7835 = vsel %vm6720, %v7834, %v7833
    %v7836 = vrot.slane %v7552, 2
    %v7837 = vsel %vm6723, %v7836, %v7835
    %v7838 = vrot.slane %v7553, 1
    %v7839 = vsel %vm6726, %v7838, %v7837
    %v7840 = vrot.slane %v7555, 7
    %v7841 = vsel %vm6708, %v7840, %v7554
    %v7842 = vrot.slane %v7556, 6
    %v7843 = vsel %vm6711, %v7842, %v7841
    %v7844 = vrot.slane %v7557, 5
    %v7845 = vsel %vm6714, %v7844, %v7843
    %v7846 = vrot.slane %v7558, 4
    %v7847 = vsel %vm6717, %v7846, %v7845
    %v7848 = vrot.slane %v7559, 3
    %v7849 = vsel %vm6720, %v7848, %v7847
    %v7850 = vrot.slane %v7560, 2
    %v7851 = vsel %vm6723, %v7850, %v7849
    %v7852 = vrot.slane %v7561, 1
    %v7853 = vsel %vm6726, %v7852, %v7851
    %v7854 = vrot.slane %v7563, 7
    %v7855 = vsel %vm6708, %v7854, %v7562
    %v7856 = vrot.slane %v7564, 6
    %v7857 = vsel %vm6711, %v7856, %v7855
    %v7858 = vrot.slane %v7565, 5
    %v7859 = vsel %vm6714, %v7858, %v7857
    %v7860 = vrot.slane %v7566, 4
    %v7861 = vsel %vm6717, %v7860, %v7859
    %v7862 = vrot.slane %v7567, 3
    %v7863 = vsel %vm6720, %v7862, %v7861
    %v7864 = vrot.slane %v7568, 2
    %v7865 = vsel %vm6723, %v7864, %v7863
    %v7866 = vrot.slane %v7569, 1
    %v7867 = vsel %vm6726, %v7866, %v7865
    %v7868 = vrot.slane %v7571, 7
    %v7869 = vsel %vm6708, %v7868, %v7570
    %v7870 = vrot.slane %v7572, 6
    %v7871 = vsel %vm6711, %v7870, %v7869
    %v7872 = vrot.slane %v7573, 5
    %v7873 = vsel %vm6714, %v7872, %v7871
    %v7874 = vrot.slane %v7574, 4
    %v7875 = vsel %vm6717, %v7874, %v7873
    %v7876 = vrot.slane %v7575, 3
    %v7877 = vsel %vm6720, %v7876, %v7875
    %v7878 = vrot.slane %v7576, 2
    %v7879 = vsel %vm6723, %v7878, %v7877
    %v7880 = vrot.slane %v7577, 1
    %v7881 = vsel %vm6726, %v7880, %v7879
    %v7882 = vrot.slane %v7579, 7
    %v7883 = vsel %vm6708, %v7882, %v7578
    %v7884 = vrot.slane %v7580, 6
    %v7885 = vsel %vm6711, %v7884, %v7883
    %v7886 = vrot.slane %v7581, 5
    %v7887 = vsel %vm6714, %v7886, %v7885
    %v7888 = vrot.slane %v7582, 4
    %v7889 = vsel %vm6717, %v7888, %v7887
    %v7890 = vrot.slane %v7583, 3
    %v7891 = vsel %vm6720, %v7890, %v7889
    %v7892 = vrot.slane %v7584, 2
    %v7893 = vsel %vm6723, %v7892, %v7891
    %v7894 = vrot.slane %v7585, 1
    %v7895 = vsel %vm6726, %v7894, %v7893
    %v7896 = vrot.slane %v7587, 7
    %v7897 = vsel %vm6708, %v7896, %v7586
    %v7898 = vrot.slane %v7588, 6
    %v7899 = vsel %vm6711, %v7898, %v7897
    %v7900 = vrot.slane %v7589, 5
    %v7901 = vsel %vm6714, %v7900, %v7899
    %v7902 = vrot.slane %v7590, 4
    %v7903 = vsel %vm6717, %v7902, %v7901
    %v7904 = vrot.slane %v7591, 3
    %v7905 = vsel %vm6720, %v7904, %v7903
    %v7906 = vrot.slane %v7592, 2
    %v7907 = vsel %vm6723, %v7906, %v7905
    %v7908 = vrot.slane %v7593, 1
    %v7909 = vsel %vm6726, %v7908, %v7907
    %v7910 = vrot.slane %v7595, 7
    %v7911 = vsel %vm6708, %v7910, %v7594
    %v7912 = vrot.slane %v7596, 6
    %v7913 = vsel %vm6711, %v7912, %v7911
    %v7914 = vrot.slane %v7597, 5
    %v7915 = vsel %vm6714, %v7914, %v7913
    %v7916 = vrot.slane %v7598, 4
    %v7917 = vsel %vm6717, %v7916, %v7915
    %v7918 = vrot.slane %v7599, 3
    %v7919 = vsel %vm6720, %v7918, %v7917
    %v7920 = vrot.slane %v7600, 2
    %v7921 = vsel %vm6723, %v7920, %v7919
    %v7922 = vrot.slane %v7601, 1
    %v7923 = vsel %vm6726, %v7922, %v7921
    %v7924 = vrot.slane %v7603, 7
    %v7925 = vsel %vm6708, %v7924, %v7602
    %v7926 = vrot.slane %v7604, 6
    %v7927 = vsel %vm6711, %v7926, %v7925
    %v7928 = vrot.slane %v7605, 5
    %v7929 = vsel %vm6714, %v7928, %v7927
    %v7930 = vrot.slane %v7606, 4
    %v7931 = vsel %vm6717, %v7930, %v7929
    %v7932 = vrot.slane %v7607, 3
    %v7933 = vsel %vm6720, %v7932, %v7931
    %v7934 = vrot.slane %v7608, 2
    %v7935 = vsel %vm6723, %v7934, %v7933
    %v7936 = vrot.slane %v7609, 1
    %v7937 = vsel %vm6726, %v7936, %v7935
    %v7938 = vrot.slane %v7611, 7
    %v7939 = vsel %vm6708, %v7938, %v7610
    %v7940 = vrot.slane %v7612, 6
    %v7941 = vsel %vm6711, %v7940, %v7939
    %v7942 = vrot.slane %v7613, 5
    %v7943 = vsel %vm6714, %v7942, %v7941
    %v7944 = vrot.slane %v7614, 4
    %v7945 = vsel %vm6717, %v7944, %v7943
    %v7946 = vrot.slane %v7615, 3
    %v7947 = vsel %vm6720, %v7946, %v7945
    %v7948 = vrot.slane %v7616, 2
    %v7949 = vsel %vm6723, %v7948, %v7947
    %v7950 = vrot.slane %v7617, 1
    %v7951 = vsel %vm6726, %v7950, %v7949
    %v7952 = vrot.slane %v7619, 7
    %v7953 = vsel %vm6708, %v7952, %v7618
    %v7954 = vrot.slane %v7620, 6
    %v7955 = vsel %vm6711, %v7954, %v7953
    %v7956 = vrot.slane %v7621, 5
    %v7957 = vsel %vm6714, %v7956, %v7955
    %v7958 = vrot.slane %v7622, 4
    %v7959 = vsel %vm6717, %v7958, %v7957
    %v7960 = vrot.slane %v7623, 3
    %v7961 = vsel %vm6720, %v7960, %v7959
    %v7962 = vrot.slane %v7624, 2
    %v7963 = vsel %vm6723, %v7962, %v7961
    %v7964 = vrot.slane %v7625, 1
    %v7965 = vsel %vm6726, %v7964, %v7963
    %v7966 = vrot.slane %v7627, 7
    %v7967 = vsel %vm6708, %v7966, %v7626
    %v7968 = vrot.slane %v7628, 6
    %v7969 = vsel %vm6711, %v7968, %v7967
    %v7970 = vrot.slane %v7629, 5
    %v7971 = vsel %vm6714, %v7970, %v7969
    %v7972 = vrot.slane %v7630, 4
    %v7973 = vsel %vm6717, %v7972, %v7971
    %v7974 = vrot.slane %v7631, 3
    %v7975 = vsel %vm6720, %v7974, %v7973
    %v7976 = vrot.slane %v7632, 2
    %v7977 = vsel %vm6723, %v7976, %v7975
    %v7978 = vrot.slane %v7633, 1
    %v7979 = vsel %vm6726, %v7978, %v7977
    %v7980 = vrot.slane %v7635, 7
    %v7981 = vsel %vm6708, %v7980, %v7634
    %v7982 = vrot.slane %v7636, 6
    %v7983 = vsel %vm6711, %v7982, %v7981
    %v7984 = vrot.slane %v7637, 5
    %v7985 = vsel %vm6714, %v7984, %v7983
    %v7986 = vrot.slane %v7638, 4
    %v7987 = vsel %vm6717, %v7986, %v7985
    %v7988 = vrot.slane %v7639, 3
    %v7989 = vsel %vm6720, %v7988, %v7987
    %v7990 = vrot.slane %v7640, 2
    %v7991 = vsel %vm6723, %v7990, %v7989
    %v7992 = vrot.slane %v7641, 1
    %v7993 = vsel %vm6726, %v7992, %v7991
    %v8010 = vrot.slane %v7783, 4
    %v8011 = vadd.f32 %v7783, %v8010
    %v8012 = vrot.slane %v8011, 2
    %v8013 = vadd.f32 %v8011, %v8012
    %v8014 = vrot.slane %v8013, 1
    %v8015 = vadd.f32 %v8013, %v8014
    %v8016 = vrot.slane %v7797, 4
    %v8017 = vadd.f32 %v7797, %v8016
    %v8018 = vrot.slane %v8017, 2
    %v8019 = vadd.f32 %v8017, %v8018
    %v8020 = vrot.slane %v8019, 1
    %v8021 = vadd.f32 %v8019, %v8020
    %v8022 = vrot.slane %v7811, 4
    %v8023 = vadd.f32 %v7811, %v8022
    %v8024 = vrot.slane %v8023, 2
    %v8025 = vadd.f32 %v8023, %v8024
    %v8026 = vrot.slane %v8025, 1
    %v8027 = vadd.f32 %v8025, %v8026
    %v8028 = vrot.slane %v7825, 4
    %v8029 = vadd.f32 %v7825, %v8028
    %v8030 = vrot.slane %v8029, 2
    %v8031 = vadd.f32 %v8029, %v8030
    %v8032 = vrot.slane %v8031, 1
    %v8033 = vadd.f32 %v8031, %v8032
    %v8034 = vrot.slane %v7839, 4
    %v8035 = vadd.f32 %v7839, %v8034
    %v8036 = vrot.slane %v8035, 2
    %v8037 = vadd.f32 %v8035, %v8036
    %v8038 = vrot.slane %v8037, 1
    %v8039 = vadd.f32 %v8037, %v8038
    %v8040 = vrot.slane %v7853, 4
    %v8041 = vadd.f32 %v7853, %v8040
    %v8042 = vrot.slane %v8041, 2
    %v8043 = vadd.f32 %v8041, %v8042
    %v8044 = vrot.slane %v8043, 1
    %v8045 = vadd.f32 %v8043, %v8044
    %v8046 = vrot.slane %v7867, 4
    %v8047 = vadd.f32 %v7867, %v8046
    %v8048 = vrot.slane %v8047, 2
    %v8049 = vadd.f32 %v8047, %v8048
    %v8050 = vrot.slane %v8049, 1
    %v8051 = vadd.f32 %v8049, %v8050
    %v8052 = vrot.slane %v7881, 4
    %v8053 = vadd.f32 %v7881, %v8052
    %v8054 = vrot.slane %v8053, 2
    %v8055 = vadd.f32 %v8053, %v8054
    %v8056 = vrot.slane %v8055, 1
    %v8057 = vadd.f32 %v8055, %v8056
    %v8058 = vrot.slane %v7895, 4
    %v8059 = vadd.f32 %v7895, %v8058
    %v8060 = vrot.slane %v8059, 2
    %v8061 = vadd.f32 %v8059, %v8060
    %v8062 = vrot.slane %v8061, 1
    %v8063 = vadd.f32 %v8061, %v8062
    %v8064 = vrot.slane %v7909, 4
    %v8065 = vadd.f32 %v7909, %v8064
    %v8066 = vrot.slane %v8065, 2
    %v8067 = vadd.f32 %v8065, %v8066
    %v8068 = vrot.slane %v8067, 1
    %v8069 = vadd.f32 %v8067, %v8068
    %v8070 = vrot.slane %v7923, 4
    %v8071 = vadd.f32 %v7923, %v8070
    %v8072 = vrot.slane %v8071, 2
    %v8073 = vadd.f32 %v8071, %v8072
    %v8074 = vrot.slane %v8073, 1
    %v8075 = vadd.f32 %v8073, %v8074
    %v8076 = vrot.slane %v7937, 4
    %v8077 = vadd.f32 %v7937, %v8076
    %v8078 = vrot.slane %v8077, 2
    %v8079 = vadd.f32 %v8077, %v8078
    %v8080 = vrot.slane %v8079, 1
    %v8081 = vadd.f32 %v8079, %v8080
    %v8082 = vrot.slane %v7951, 4
    %v8083 = vadd.f32 %v7951, %v8082
    %v8084 = vrot.slane %v8083, 2
    %v8085 = vadd.f32 %v8083, %v8084
    %v8086 = vrot.slane %v8085, 1
    %v8087 = vadd.f32 %v8085, %v8086
    %v8088 = vrot.slane %v7965, 4
    %v8089 = vadd.f32 %v7965, %v8088
    %v8090 = vrot.slane %v8089, 2
    %v8091 = vadd.f32 %v8089, %v8090
    %v8092 = vrot.slane %v8091, 1
    %v8093 = vadd.f32 %v8091, %v8092
    %v8094 = vrot.slane %v7979, 4
    %v8095 = vadd.f32 %v7979, %v8094
    %v8096 = vrot.slane %v8095, 2
    %v8097 = vadd.f32 %v8095, %v8096
    %v8098 = vrot.slane %v8097, 1
    %v8099 = vadd.f32 %v8097, %v8098
    %v8100 = vrot.slane %v7993, 4
    %v8101 = vadd.f32 %v7993, %v8100
    %v8102 = vrot.slane %v8101, 2
    %v8103 = vadd.f32 %v8101, %v8102
    %v8104 = vrot.slane %v8103, 1
    %v8105 = vadd.f32 %v8103, %v8104
    %v8106 = vadd.f32 %v3480, %v8015
    %v8107 = vadd.f32 %v3678, %v8021
    %v8108 = vadd.f32 %v3876, %v8027
    %v8109 = vadd.f32 %v4074, %v8033
    %v8110 = vadd.f32 %v4272, %v8039
    %v8111 = vadd.f32 %v4470, %v8045
    %v8112 = vadd.f32 %v4668, %v8051
    %v8113 = vadd.f32 %v4866, %v8057
    %v8114 = vadd.f32 %v5064, %v8063
    %v8115 = vadd.f32 %v5262, %v8069
    %v8116 = vadd.f32 %v5460, %v8075
    %v8117 = vadd.f32 %v5658, %v8081
    %v8118 = vadd.f32 %v5856, %v8087
    %v8119 = vadd.f32 %v6054, %v8093
    %v8120 = vadd.f32 %v6252, %v8099
    %v8121 = vadd.f32 %v6450, %v8105
    %v8122 = vlaneseq
    %v8123 = vshrl.u32 %v8122, 7
    %v8124 = vsub.s32 0, %v8123
    %v8125 = vrot.slane %v8106, %v8124
    %v8126 = vlaneseq
    %v8127 = vshrl.u32 %v8126, 7
    %v8128 = vsub.s32 0, %v8127
    %v8129 = vrot.slane %v8107, %v8128
    %v8130 = vlaneseq
    %v8131 = vshrl.u32 %v8130, 7
    %v8132 = vsub.s32 0, %v8131
    %v8133 = vrot.slane %v8108, %v8132
    %v8134 = vlaneseq
    %v8135 = vshrl.u32 %v8134, 7
    %v8136 = vsub.s32 0, %v8135
    %v8137 = vrot.slane %v8109, %v8136
    %v8138 = vlaneseq
    %v8139 = vshrl.u32 %v8138, 7
    %v8140 = vsub.s32 0, %v8139
    %v8141 = vrot.slane %v8110, %v8140
    %v8142 = vlaneseq
    %v8143 = vshrl.u32 %v8142, 7
    %v8144 = vsub.s32 0, %v8143
    %v8145 = vrot.slane %v8111, %v8144
    %v8146 = vlaneseq
    %v8147 = vshrl.u32 %v8146, 7
    %v8148 = vsub.s32 0, %v8147
    %v8149 = vrot.slane %v8112, %v8148
    %v8150 = vlaneseq
    %v8151 = vshrl.u32 %v8150, 7
    %v8152 = vsub.s32 0, %v8151
    %v8153 = vrot.slane %v8113, %v8152
    %v8154 = vlaneseq
    %v8155 = vshrl.u32 %v8154, 7
    %v8156 = vsub.s32 0, %v8155
    %v8157 = vrot.slane %v8114, %v8156
    %v8158 = vlaneseq
    %v8159 = vshrl.u32 %v8158, 7
    %v8160 = vsub.s32 0, %v8159
    %v8161 = vrot.slane %v8115, %v8160
    %v8162 = vlaneseq
    %v8163 = vshrl.u32 %v8162, 7
    %v8164 = vsub.s32 0, %v8163
    %v8165 = vrot.slane %v8116, %v8164
    %v8166 = vlaneseq
    %v8167 = vshrl.u32 %v8166, 7
    %v8168 = vsub.s32 0, %v8167
    %v8169 = vrot.slane %v8117, %v8168
    %v8170 = vlaneseq
    %v8171 = vshrl.u32 %v8170, 7
    %v8172 = vsub.s32 0, %v8171
    %v8173 = vrot.slane %v8118, %v8172
    %v8174 = vlaneseq
    %v8175 = vshrl.u32 %v8174, 7
    %v8176 = vsub.s32 0, %v8175
    %v8177 = vrot.slane %v8119, %v8176
    %v8178 = vlaneseq
    %v8179 = vshrl.u32 %v8178, 7
    %v8180 = vsub.s32 0, %v8179
    %v8181 = vrot.slane %v8120, %v8180
    %v8182 = vlaneseq
    %v8183 = vshrl.u32 %v8182, 7
    %v8184 = vsub.s32 0, %v8183
    %v8185 = vrot.slane %v8121, %v8184
    %v8186 = vmul.f32 %v3294, %v8125
    %v8187 = vmul.f32 %v3318, %v8125
    %v8188 = vmul.f32 %v3342, %v8125
    %v8189 = vmul.f32 %v3366, %v8125
    %v8190 = vmul.f32 %v3390, %v8125
    %v8191 = vmul.f32 %v3414, %v8125
    %v8192 = vmul.f32 %v3438, %v8125
    %v8193 = vmul.f32 %v3462, %v8125
    %v8194 = vmul.f32 %v3492, %v8129
    %v8195 = vmul.f32 %v3516, %v8129
    %v8196 = vmul.f32 %v3540, %v8129
    %v8197 = vmul.f32 %v3564, %v8129
    %v8198 = vmul.f32 %v3588, %v8129
    %v8199 = vmul.f32 %v3612, %v8129
    %v8200 = vmul.f32 %v3636, %v8129
    %v8201 = vmul.f32 %v3660, %v8129
    %v8202 = vmul.f32 %v3690, %v8133
    %v8203 = vmul.f32 %v3714, %v8133
    %v8204 = vmul.f32 %v3738, %v8133
    %v8205 = vmul.f32 %v3762, %v8133
    %v8206 = vmul.f32 %v3786, %v8133
    %v8207 = vmul.f32 %v3810, %v8133
    %v8208 = vmul.f32 %v3834, %v8133
    %v8209 = vmul.f32 %v3858, %v8133
    %v8210 = vmul.f32 %v3888, %v8137
    %v8211 = vmul.f32 %v3912, %v8137
    %v8212 = vmul.f32 %v3936, %v8137
    %v8213 = vmul.f32 %v3960, %v8137
    %v8214 = vmul.f32 %v3984, %v8137
    %v8215 = vmul.f32 %v4008, %v8137
    %v8216 = vmul.f32 %v4032, %v8137
    %v8217 = vmul.f32 %v4056, %v8137
    %v8218 = vmul.f32 %v4086, %v8141
    %v8219 = vmul.f32 %v4110, %v8141
    %v8220 = vmul.f32 %v4134, %v8141
    %v8221 = vmul.f32 %v4158, %v8141
    %v8222 = vmul.f32 %v4182, %v8141
    %v8223 = vmul.f32 %v4206, %v8141
    %v8224 = vmul.f32 %v4230, %v8141
    %v8225 = vmul.f32 %v4254, %v8141
    %v8226 = vmul.f32 %v4284, %v8145
    %v8227 = vmul.f32 %v4308, %v8145
    %v8228 = vmul.f32 %v4332, %v8145
    %v8229 = vmul.f32 %v4356, %v8145
    %v8230 = vmul.f32 %v4380, %v8145
    %v8231 = vmul.f32 %v4404, %v8145
    %v8232 = vmul.f32 %v4428, %v8145
    %v8233 = vmul.f32 %v4452, %v8145
    %v8234 = vmul.f32 %v4482, %v8149
    %v8235 = vmul.f32 %v4506, %v8149
    %v8236 = vmul.f32 %v4530, %v8149
    %v8237 = vmul.f32 %v4554, %v8149
    %v8238 = vmul.f32 %v4578, %v8149
    %v8239 = vmul.f32 %v4602, %v8149
    %v8240 = vmul.f32 %v4626, %v8149
    %v8241 = vmul.f32 %v4650, %v8149
    %v8242 = vmul.f32 %v4680, %v8153
    %v8243 = vmul.f32 %v4704, %v8153
    %v8244 = vmul.f32 %v4728, %v8153
    %v8245 = vmul.f32 %v4752, %v8153
    %v8246 = vmul.f32 %v4776, %v8153
    %v8247 = vmul.f32 %v4800, %v8153
    %v8248 = vmul.f32 %v4824, %v8153
    %v8249 = vmul.f32 %v4848, %v8153
    %v8250 = vmul.f32 %v4878, %v8157
    %v8251 = vmul.f32 %v4902, %v8157
    %v8252 = vmul.f32 %v4926, %v8157
    %v8253 = vmul.f32 %v4950, %v8157
    %v8254 = vmul.f32 %v4974, %v8157
    %v8255 = vmul.f32 %v4998, %v8157
    %v8256 = vmul.f32 %v5022, %v8157
    %v8257 = vmul.f32 %v5046, %v8157
    %v8258 = vmul.f32 %v5076, %v8161
    %v8259 = vmul.f32 %v5100, %v8161
    %v8260 = vmul.f32 %v5124, %v8161
    %v8261 = vmul.f32 %v5148, %v8161
    %v8262 = vmul.f32 %v5172, %v8161
    %v8263 = vmul.f32 %v5196, %v8161
    %v8264 = vmul.f32 %v5220, %v8161
    %v8265 = vmul.f32 %v5244, %v8161
    %v8266 = vmul.f32 %v5274, %v8165
    %v8267 = vmul.f32 %v5298, %v8165
    %v8268 = vmul.f32 %v5322, %v8165
    %v8269 = vmul.f32 %v5346, %v8165
    %v8270 = vmul.f32 %v5370, %v8165
    %v8271 = vmul.f32 %v5394, %v8165
    %v8272 = vmul.f32 %v5418, %v8165
    %v8273 = vmul.f32 %v5442, %v8165
    %v8274 = vmul.f32 %v5472, %v8169
    %v8275 = vmul.f32 %v5496, %v8169
    %v8276 = vmul.f32 %v5520, %v8169
    %v8277 = vmul.f32 %v5544, %v8169
    %v8278 = vmul.f32 %v5568, %v8169
    %v8279 = vmul.f32 %v5592, %v8169
    %v8280 = vmul.f32 %v5616, %v8169
    %v8281 = vmul.f32 %v5640, %v8169
    %v8282 = vmul.f32 %v5670, %v8173
    %v8283 = vmul.f32 %v5694, %v8173
    %v8284 = vmul.f32 %v5718, %v8173
    %v8285 = vmul.f32 %v5742, %v8173
    %v8286 = vmul.f32 %v5766, %v8173
    %v8287 = vmul.f32 %v5790, %v8173
    %v8288 = vmul.f32 %v5814, %v8173
    %v8289 = vmul.f32 %v5838, %v8173
    %v8290 = vmul.f32 %v5868, %v8177
    %v8291 = vmul.f32 %v5892, %v8177
    %v8292 = vmul.f32 %v5916, %v8177
    %v8293 = vmul.f32 %v5940, %v8177
    %v8294 = vmul.f32 %v5964, %v8177
    %v8295 = vmul.f32 %v5988, %v8177
    %v8296 = vmul.f32 %v6012, %v8177
    %v8297 = vmul.f32 %v6036, %v8177
    %v8298 = vmul.f32 %v6066, %v8181
    %v8299 = vmul.f32 %v6090, %v8181
    %v8300 = vmul.f32 %v6114, %v8181
    %v8301 = vmul.f32 %v6138, %v8181
    %v8302 = vmul.f32 %v6162, %v8181
    %v8303 = vmul.f32 %v6186, %v8181
    %v8304 = vmul.f32 %v6210, %v8181
    %v8305 = vmul.f32 %v6234, %v8181
    %v8306 = vmul.f32 %v6264, %v8185
    %v8307 = vmul.f32 %v6288, %v8185
    %v8308 = vmul.f32 %v6312, %v8185
    %v8309 = vmul.f32 %v6336, %v8185
    %v8310 = vmul.f32 %v6360, %v8185
    %v8311 = vmul.f32 %v6384, %v8185
    %v8312 = vmul.f32 %v6408, %v8185
    %v8313 = vmul.f32 %v6432, %v8185
    %v8442 = vrot.slane %v8187, 7
    %v8443 = vsel %vm6708, %v8442, %v8186
    %v8444 = vrot.slane %v8188, 6
    %v8445 = vsel %vm6711, %v8444, %v8443
    %v8446 = vrot.slane %v8189, 5
    %v8447 = vsel %vm6714, %v8446, %v8445
    %v8448 = vrot.slane %v8190, 4
    %v8449 = vsel %vm6717, %v8448, %v8447
    %v8450 = vrot.slane %v8191, 3
    %v8451 = vsel %vm6720, %v8450, %v8449
    %v8452 = vrot.slane %v8192, 2
    %v8453 = vsel %vm6723, %v8452, %v8451
    %v8454 = vrot.slane %v8193, 1
    %v8455 = vsel %vm6726, %v8454, %v8453
    %v8456 = vrot.slane %v8195, 7
    %v8457 = vsel %vm6708, %v8456, %v8194
    %v8458 = vrot.slane %v8196, 6
    %v8459 = vsel %vm6711, %v8458, %v8457
    %v8460 = vrot.slane %v8197, 5
    %v8461 = vsel %vm6714, %v8460, %v8459
    %v8462 = vrot.slane %v8198, 4
    %v8463 = vsel %vm6717, %v8462, %v8461
    %v8464 = vrot.slane %v8199, 3
    %v8465 = vsel %vm6720, %v8464, %v8463
    %v8466 = vrot.slane %v8200, 2
    %v8467 = vsel %vm6723, %v8466, %v8465
    %v8468 = vrot.slane %v8201, 1
    %v8469 = vsel %vm6726, %v8468, %v8467
    %v8470 = vrot.slane %v8203, 7
    %v8471 = vsel %vm6708, %v8470, %v8202
    %v8472 = vrot.slane %v8204, 6
    %v8473 = vsel %vm6711, %v8472, %v8471
    %v8474 = vrot.slane %v8205, 5
    %v8475 = vsel %vm6714, %v8474, %v8473
    %v8476 = vrot.slane %v8206, 4
    %v8477 = vsel %vm6717, %v8476, %v8475
    %v8478 = vrot.slane %v8207, 3
    %v8479 = vsel %vm6720, %v8478, %v8477
    %v8480 = vrot.slane %v8208, 2
    %v8481 = vsel %vm6723, %v8480, %v8479
    %v8482 = vrot.slane %v8209, 1
    %v8483 = vsel %vm6726, %v8482, %v8481
    %v8484 = vrot.slane %v8211, 7
    %v8485 = vsel %vm6708, %v8484, %v8210
    %v8486 = vrot.slane %v8212, 6
    %v8487 = vsel %vm6711, %v8486, %v8485
    %v8488 = vrot.slane %v8213, 5
    %v8489 = vsel %vm6714, %v8488, %v8487
    %v8490 = vrot.slane %v8214, 4
    %v8491 = vsel %vm6717, %v8490, %v8489
    %v8492 = vrot.slane %v8215, 3
    %v8493 = vsel %vm6720, %v8492, %v8491
    %v8494 = vrot.slane %v8216, 2
    %v8495 = vsel %vm6723, %v8494, %v8493
    %v8496 = vrot.slane %v8217, 1
    %v8497 = vsel %vm6726, %v8496, %v8495
    %v8498 = vrot.slane %v8219, 7
    %v8499 = vsel %vm6708, %v8498, %v8218
    %v8500 = vrot.slane %v8220, 6
    %v8501 = vsel %vm6711, %v8500, %v8499
    %v8502 = vrot.slane %v8221, 5
    %v8503 = vsel %vm6714, %v8502, %v8501
    %v8504 = vrot.slane %v8222, 4
    %v8505 = vsel %vm6717, %v8504, %v8503
    %v8506 = vrot.slane %v8223, 3
    %v8507 = vsel %vm6720, %v8506, %v8505
    %v8508 = vrot.slane %v8224, 2
    %v8509 = vsel %vm6723, %v8508, %v8507
    %v8510 = vrot.slane %v8225, 1
    %v8511 = vsel %vm6726, %v8510, %v8509
    %v8512 = vrot.slane %v8227, 7
    %v8513 = vsel %vm6708, %v8512, %v8226
    %v8514 = vrot.slane %v8228, 6
    %v8515 = vsel %vm6711, %v8514, %v8513
    %v8516 = vrot.slane %v8229, 5
    %v8517 = vsel %vm6714, %v8516, %v8515
    %v8518 = vrot.slane %v8230, 4
    %v8519 = vsel %vm6717, %v8518, %v8517
    %v8520 = vrot.slane %v8231, 3
    %v8521 = vsel %vm6720, %v8520, %v8519
    %v8522 = vrot.slane %v8232, 2
    %v8523 = vsel %vm6723, %v8522, %v8521
    %v8524 = vrot.slane %v8233, 1
    %v8525 = vsel %vm6726, %v8524, %v8523
    %v8526 = vrot.slane %v8235, 7
    %v8527 = vsel %vm6708, %v8526, %v8234
    %v8528 = vrot.slane %v8236, 6
    %v8529 = vsel %vm6711, %v8528, %v8527
    %v8530 = vrot.slane %v8237, 5
    %v8531 = vsel %vm6714, %v8530, %v8529
    %v8532 = vrot.slane %v8238, 4
    %v8533 = vsel %vm6717, %v8532, %v8531
    %v8534 = vrot.slane %v8239, 3
    %v8535 = vsel %vm6720, %v8534, %v8533
    %v8536 = vrot.slane %v8240, 2
    %v8537 = vsel %vm6723, %v8536, %v8535
    %v8538 = vrot.slane %v8241, 1
    %v8539 = vsel %vm6726, %v8538, %v8537
    %v8540 = vrot.slane %v8243, 7
    %v8541 = vsel %vm6708, %v8540, %v8242
    %v8542 = vrot.slane %v8244, 6
    %v8543 = vsel %vm6711, %v8542, %v8541
    %v8544 = vrot.slane %v8245, 5
    %v8545 = vsel %vm6714, %v8544, %v8543
    %v8546 = vrot.slane %v8246, 4
    %v8547 = vsel %vm6717, %v8546, %v8545
    %v8548 = vrot.slane %v8247, 3
    %v8549 = vsel %vm6720, %v8548, %v8547
    %v8550 = vrot.slane %v8248, 2
    %v8551 = vsel %vm6723, %v8550, %v8549
    %v8552 = vrot.slane %v8249, 1
    %v8553 = vsel %vm6726, %v8552, %v8551
    %v8554 = vrot.slane %v8251, 7
    %v8555 = vsel %vm6708, %v8554, %v8250
    %v8556 = vrot.slane %v8252, 6
    %v8557 = vsel %vm6711, %v8556, %v8555
    %v8558 = vrot.slane %v8253, 5
    %v8559 = vsel %vm6714, %v8558, %v8557
    %v8560 = vrot.slane %v8254, 4
    %v8561 = vsel %vm6717, %v8560, %v8559
    %v8562 = vrot.slane %v8255, 3
    %v8563 = vsel %vm6720, %v8562, %v8561
    %v8564 = vrot.slane %v8256, 2
    %v8565 = vsel %vm6723, %v8564, %v8563
    %v8566 = vrot.slane %v8257, 1
    %v8567 = vsel %vm6726, %v8566, %v8565
    %v8568 = vrot.slane %v8259, 7
    %v8569 = vsel %vm6708, %v8568, %v8258
    %v8570 = vrot.slane %v8260, 6
    %v8571 = vsel %vm6711, %v8570, %v8569
    %v8572 = vrot.slane %v8261, 5
    %v8573 = vsel %vm6714, %v8572, %v8571
    %v8574 = vrot.slane %v8262, 4
    %v8575 = vsel %vm6717, %v8574, %v8573
    %v8576 = vrot.slane %v8263, 3
    %v8577 = vsel %vm6720, %v8576, %v8575
    %v8578 = vrot.slane %v8264, 2
    %v8579 = vsel %vm6723, %v8578, %v8577
    %v8580 = vrot.slane %v8265, 1
    %v8581 = vsel %vm6726, %v8580, %v8579
    %v8582 = vrot.slane %v8267, 7
    %v8583 = vsel %vm6708, %v8582, %v8266
    %v8584 = vrot.slane %v8268, 6
    %v8585 = vsel %vm6711, %v8584, %v8583
    %v8586 = vrot.slane %v8269, 5
    %v8587 = vsel %vm6714, %v8586, %v8585
    %v8588 = vrot.slane %v8270, 4
    %v8589 = vsel %vm6717, %v8588, %v8587
    %v8590 = vrot.slane %v8271, 3
    %v8591 = vsel %vm6720, %v8590, %v8589
    %v8592 = vrot.slane %v8272, 2
    %v8593 = vsel %vm6723, %v8592, %v8591
    %v8594 = vrot.slane %v8273, 1
    %v8595 = vsel %vm6726, %v8594, %v8593
    %v8596 = vrot.slane %v8275, 7
    %v8597 = vsel %vm6708, %v8596, %v8274
    %v8598 = vrot.slane %v8276, 6
    %v8599 = vsel %vm6711, %v8598, %v8597
    %v8600 = vrot.slane %v8277, 5
    %v8601 = vsel %vm6714, %v8600, %v8599
    %v8602 = vrot.slane %v8278, 4
    %v8603 = vsel %vm6717, %v8602, %v8601
    %v8604 = vrot.slane %v8279, 3
    %v8605 = vsel %vm6720, %v8604, %v8603
    %v8606 = vrot.slane %v8280, 2
    %v8607 = vsel %vm6723, %v8606, %v8605
    %v8608 = vrot.slane %v8281, 1
    %v8609 = vsel %vm6726, %v8608, %v8607
    %v8610 = vrot.slane %v8283, 7
    %v8611 = vsel %vm6708, %v8610, %v8282
    %v8612 = vrot.slane %v8284, 6
    %v8613 = vsel %vm6711, %v8612, %v8611
    %v8614 = vrot.slane %v8285, 5
    %v8615 = vsel %vm6714, %v8614, %v8613
    %v8616 = vrot.slane %v8286, 4
    %v8617 = vsel %vm6717, %v8616, %v8615
    %v8618 = vrot.slane %v8287, 3
    %v8619 = vsel %vm6720, %v8618, %v8617
    %v8620 = vrot.slane %v8288, 2
    %v8621 = vsel %vm6723, %v8620, %v8619
    %v8622 = vrot.slane %v8289, 1
    %v8623 = vsel %vm6726, %v8622, %v8621
    %v8624 = vrot.slane %v8291, 7
    %v8625 = vsel %vm6708, %v8624, %v8290
    %v8626 = vrot.slane %v8292, 6
    %v8627 = vsel %vm6711, %v8626, %v8625
    %v8628 = vrot.slane %v8293, 5
    %v8629 = vsel %vm6714, %v8628, %v8627
    %v8630 = vrot.slane %v8294, 4
    %v8631 = vsel %vm6717, %v8630, %v8629
    %v8632 = vrot.slane %v8295, 3
    %v8633 = vsel %vm6720, %v8632, %v8631
    %v8634 = vrot.slane %v8296, 2
    %v8635 = vsel %vm6723, %v8634, %v8633
    %v8636 = vrot.slane %v8297, 1
    %v8637 = vsel %vm6726, %v8636, %v8635
    %v8638 = vrot.slane %v8299, 7
    %v8639 = vsel %vm6708, %v8638, %v8298
    %v8640 = vrot.slane %v8300, 6
    %v8641 = vsel %vm6711, %v8640, %v8639
    %v8642 = vrot.slane %v8301, 5
    %v8643 = vsel %vm6714, %v8642, %v8641
    %v8644 = vrot.slane %v8302, 4
    %v8645 = vsel %vm6717, %v8644, %v8643
    %v8646 = vrot.slane %v8303, 3
    %v8647 = vsel %vm6720, %v8646, %v8645
    %v8648 = vrot.slane %v8304, 2
    %v8649 = vsel %vm6723, %v8648, %v8647
    %v8650 = vrot.slane %v8305, 1
    %v8651 = vsel %vm6726, %v8650, %v8649
    %v8652 = vrot.slane %v8307, 7
    %v8653 = vsel %vm6708, %v8652, %v8306
    %v8654 = vrot.slane %v8308, 6
    %v8655 = vsel %vm6711, %v8654, %v8653
    %v8656 = vrot.slane %v8309, 5
    %v8657 = vsel %vm6714, %v8656, %v8655
    %v8658 = vrot.slane %v8310, 4
    %v8659 = vsel %vm6717, %v8658, %v8657
    %v8660 = vrot.slane %v8311, 3
    %v8661 = vsel %vm6720, %v8660, %v8659
    %v8662 = vrot.slane %v8312, 2
    %v8663 = vsel %vm6723, %v8662, %v8661
    %v8664 = vrot.slane %v8313, 1
    %v8665 = vsel %vm6726, %v8664, %v8663
    %8682 = vadd.xlane.f32.xlu0 %v8455
    %v8683 = vpop.xlane.xlu0 %8682
    %8684 = vadd.xlane.f32.xlu0 %v8469
    %v8685 = vpop.xlane.xlu0 %8684
    %8686 = vadd.xlane.f32.xlu0 %v8483
    %v8687 = vpop.xlane.xlu0 %8686
    %8688 = vadd.xlane.f32.xlu0 %v8497
    %v8689 = vpop.xlane.xlu0 %8688
    %8690 = vadd.xlane.f32.xlu0 %v8511
    %v8691 = vpop.xlane.xlu0 %8690
    %8692 = vadd.xlane.f32.xlu0 %v8525
    %v8693 = vpop.xlane.xlu0 %8692
    %8694 = vadd.xlane.f32.xlu0 %v8539
    %v8695 = vpop.xlane.xlu0 %8694
    %8696 = vadd.xlane.f32.xlu0 %v8553
    %v8697 = vpop.xlane.xlu0 %8696
    %8698 = vadd.xlane.f32.xlu0 %v8567
    %v8699 = vpop.xlane.xlu0 %8698
    %8700 = vadd.xlane.f32.xlu0 %v8581
    %v8701 = vpop.xlane.xlu0 %8700
    %8702 = vadd.xlane.f32.xlu0 %v8595
    %v8703 = vpop.xlane.xlu0 %8702
    %8704 = vadd.xlane.f32.xlu0 %v8609
    %v8705 = vpop.xlane.xlu0 %8704
    %8706 = vadd.xlane.f32.xlu0 %v8623
    %v8707 = vpop.xlane.xlu0 %8706
    %8708 = vadd.xlane.f32.xlu0 %v8637
    %v8709 = vpop.xlane.xlu0 %8708
    %8710 = vadd.xlane.f32.xlu0 %v8651
    %v8711 = vpop.xlane.xlu0 %8710
    %8712 = vadd.xlane.f32.xlu0 %v8665
    %v8713 = vpop.xlane.xlu0 %8712
    %v8714 = vrot.slane %v8683, 4
    %v8715 = vmax.f32 %v8683, %v8714
    %v8716 = vrot.slane %v8715, 2
    %v8717 = vmax.f32 %v8715, %v8716
    %v8718 = vrot.slane %v8717, 1
    %v8719 = vmax.f32 %v8717, %v8718
    %v8720 = vrot.slane %v8685, 4
    %v8721 = vmax.f32 %v8685, %v8720
    %v8722 = vrot.slane %v8721, 2
    %v8723 = vmax.f32 %v8721, %v8722
    %v8724 = vrot.slane %v8723, 1
    %v8725 = vmax.f32 %v8723, %v8724
    %v8726 = vrot.slane %v8687, 4
    %v8727 = vmax.f32 %v8687, %v8726
    %v8728 = vrot.slane %v8727, 2
    %v8729 = vmax.f32 %v8727, %v8728
    %v8730 = vrot.slane %v8729, 1
    %v8731 = vmax.f32 %v8729, %v8730
    %v8732 = vrot.slane %v8689, 4
    %v8733 = vmax.f32 %v8689, %v8732
    %v8734 = vrot.slane %v8733, 2
    %v8735 = vmax.f32 %v8733, %v8734
    %v8736 = vrot.slane %v8735, 1
    %v8737 = vmax.f32 %v8735, %v8736
    %v8738 = vrot.slane %v8691, 4
    %v8739 = vmax.f32 %v8691, %v8738
    %v8740 = vrot.slane %v8739, 2
    %v8741 = vmax.f32 %v8739, %v8740
    %v8742 = vrot.slane %v8741, 1
    %v8743 = vmax.f32 %v8741, %v8742
    %v8744 = vrot.slane %v8693, 4
    %v8745 = vmax.f32 %v8693, %v8744
    %v8746 = vrot.slane %v8745, 2
    %v8747 = vmax.f32 %v8745, %v8746
    %v8748 = vrot.slane %v8747, 1
    %v8749 = vmax.f32 %v8747, %v8748
    %v8750 = vrot.slane %v8695, 4
    %v8751 = vmax.f32 %v8695, %v8750
    %v8752 = vrot.slane %v8751, 2
    %v8753 = vmax.f32 %v8751, %v8752
    %v8754 = vrot.slane %v8753, 1
    %v8755 = vmax.f32 %v8753, %v8754
    %v8756 = vrot.slane %v8697, 4
    %v8757 = vmax.f32 %v8697, %v8756
    %v8758 = vrot.slane %v8757, 2
    %v8759 = vmax.f32 %v8757, %v8758
    %v8760 = vrot.slane %v8759, 1
    %v8761 = vmax.f32 %v8759, %v8760
    %v8762 = vrot.slane %v8699, 4
    %v8763 = vmax.f32 %v8699, %v8762
    %v8764 = vrot.slane %v8763, 2
    %v8765 = vmax.f32 %v8763, %v8764
    %v8766 = vrot.slane %v8765, 1
    %v8767 = vmax.f32 %v8765, %v8766
    %v8768 = vrot.slane %v8701, 4
    %v8769 = vmax.f32 %v8701, %v8768
    %v8770 = vrot.slane %v8769, 2
    %v8771 = vmax.f32 %v8769, %v8770
    %v8772 = vrot.slane %v8771, 1
    %v8773 = vmax.f32 %v8771, %v8772
    %v8774 = vrot.slane %v8703, 4
    %v8775 = vmax.f32 %v8703, %v8774
    %v8776 = vrot.slane %v8775, 2
    %v8777 = vmax.f32 %v8775, %v8776
    %v8778 = vrot.slane %v8777, 1
    %v8779 = vmax.f32 %v8777, %v8778
    %v8780 = vrot.slane %v8705, 4
    %v8781 = vmax.f32 %v8705, %v8780
    %v8782 = vrot.slane %v8781, 2
    %v8783 = vmax.f32 %v8781, %v8782
    %v8784 = vrot.slane %v8783, 1
    %v8785 = vmax.f32 %v8783, %v8784
    %v8786 = vrot.slane %v8707, 4
    %v8787 = vmax.f32 %v8707, %v8786
    %v8788 = vrot.slane %v8787, 2
    %v8789 = vmax.f32 %v8787, %v8788
    %v8790 = vrot.slane %v8789, 1
    %v8791 = vmax.f32 %v8789, %v8790
    %v8792 = vrot.slane %v8709, 4
    %v8793 = vmax.f32 %v8709, %v8792
    %v8794 = vrot.slane %v8793, 2
    %v8795 = vmax.f32 %v8793, %v8794
    %v8796 = vrot.slane %v8795, 1
    %v8797 = vmax.f32 %v8795, %v8796
    %v8798 = vrot.slane %v8711, 4
    %v8799 = vmax.f32 %v8711, %v8798
    %v8800 = vrot.slane %v8799, 2
    %v8801 = vmax.f32 %v8799, %v8800
    %v8802 = vrot.slane %v8801, 1
    %v8803 = vmax.f32 %v8801, %v8802
    %v8804 = vrot.slane %v8713, 4
    %v8805 = vmax.f32 %v8713, %v8804
    %v8806 = vrot.slane %v8805, 2
    %v8807 = vmax.f32 %v8805, %v8806
    %v8808 = vrot.slane %v8807, 1
    %v8809 = vmax.f32 %v8807, %v8808
    %v8810 = vsub.f32 %v8683, %v8719
    %v8811 = vsub.f32 %v8685, %v8725
    %v8812 = vsub.f32 %v8687, %v8731
    %v8813 = vsub.f32 %v8689, %v8737
    %v8814 = vsub.f32 %v8691, %v8743
    %v8815 = vsub.f32 %v8693, %v8749
    %v8816 = vsub.f32 %v8695, %v8755
    %v8817 = vsub.f32 %v8697, %v8761
    %v8818 = vsub.f32 %v8699, %v8767
    %v8819 = vsub.f32 %v8701, %v8773
    %v8820 = vsub.f32 %v8703, %v8779
    %v8821 = vsub.f32 %v8705, %v8785
    %v8822 = vsub.f32 %v8707, %v8791
    %v8823 = vsub.f32 %v8709, %v8797
    %v8824 = vsub.f32 %v8711, %v8803
    %v8825 = vsub.f32 %v8713, %v8809
    %v8826 = vmul.f32 %v8810, 1.442695
    %v8827 = vpow.pop %v8826
    %v8828 = vmul.f32 %v8811, 1.442695
    %v8829 = vpow.pop %v8828
    %v8830 = vmul.f32 %v8812, 1.442695
    %v8831 = vpow.pop %v8830
    %v8832 = vmul.f32 %v8813, 1.442695
    %v8833 = vpow.pop %v8832
    %v8834 = vmul.f32 %v8814, 1.442695
    %v8835 = vpow.pop %v8834
    %v8836 = vmul.f32 %v8815, 1.442695
    %v8837 = vpow.pop %v8836
    %v8838 = vmul.f32 %v8816, 1.442695
    %v8839 = vpow.pop %v8838
    %v8840 = vmul.f32 %v8817, 1.442695
    %v8841 = vpow.pop %v8840
    %v8842 = vmul.f32 %v8818, 1.442695
    %v8843 = vpow.pop %v8842
    %v8844 = vmul.f32 %v8819, 1.442695
    %v8845 = vpow.pop %v8844
    %v8846 = vmul.f32 %v8820, 1.442695
    %v8847 = vpow.pop %v8846
    %v8848 = vmul.f32 %v8821, 1.442695
    %v8849 = vpow.pop %v8848
    %v8850 = vmul.f32 %v8822, 1.442695
    %v8851 = vpow.pop %v8850
    %v8852 = vmul.f32 %v8823, 1.442695
    %v8853 = vpow.pop %v8852
    %v8854 = vmul.f32 %v8824, 1.442695
    %v8855 = vpow.pop %v8854
    %v8856 = vmul.f32 %v8825, 1.442695
    %v8857 = vpow.pop %v8856
    %v8858 = vrot.slane %v8827, 4
    %v8859 = vadd.f32 %v8827, %v8858
    %v8860 = vrot.slane %v8859, 2
    %v8861 = vadd.f32 %v8859, %v8860
    %v8862 = vrot.slane %v8861, 1
    %v8863 = vadd.f32 %v8861, %v8862
    %v8864 = vrot.slane %v8829, 4
    %v8865 = vadd.f32 %v8829, %v8864
    %v8866 = vrot.slane %v8865, 2
    %v8867 = vadd.f32 %v8865, %v8866
    %v8868 = vrot.slane %v8867, 1
    %v8869 = vadd.f32 %v8867, %v8868
    %v8870 = vrot.slane %v8831, 4
    %v8871 = vadd.f32 %v8831, %v8870
    %v8872 = vrot.slane %v8871, 2
    %v8873 = vadd.f32 %v8871, %v8872
    %v8874 = vrot.slane %v8873, 1
    %v8875 = vadd.f32 %v8873, %v8874
    %v8876 = vrot.slane %v8833, 4
    %v8877 = vadd.f32 %v8833, %v8876
    %v8878 = vrot.slane %v8877, 2
    %v8879 = vadd.f32 %v8877, %v8878
    %v8880 = vrot.slane %v8879, 1
    %v8881 = vadd.f32 %v8879, %v8880
    %v8882 = vrot.slane %v8835, 4
    %v8883 = vadd.f32 %v8835, %v8882
    %v8884 = vrot.slane %v8883, 2
    %v8885 = vadd.f32 %v8883, %v8884
    %v8886 = vrot.slane %v8885, 1
    %v8887 = vadd.f32 %v8885, %v8886
    %v8888 = vrot.slane %v8837, 4
    %v8889 = vadd.f32 %v8837, %v8888
    %v8890 = vrot.slane %v8889, 2
    %v8891 = vadd.f32 %v8889, %v8890
    %v8892 = vrot.slane %v8891, 1
    %v8893 = vadd.f32 %v8891, %v8892
    %v8894 = vrot.slane %v8839, 4
    %v8895 = vadd.f32 %v8839, %v8894
    %v8896 = vrot.slane %v8895, 2
    %v8897 = vadd.f32 %v8895, %v8896
    %v8898 = vrot.slane %v8897, 1
    %v8899 = vadd.f32 %v8897, %v8898
    %v8900 = vrot.slane %v8841, 4
    %v8901 = vadd.f32 %v8841, %v8900
    %v8902 = vrot.slane %v8901, 2
    %v8903 = vadd.f32 %v8901, %v8902
    %v8904 = vrot.slane %v8903, 1
    %v8905 = vadd.f32 %v8903, %v8904
    %v8906 = vrot.slane %v8843, 4
    %v8907 = vadd.f32 %v8843, %v8906
    %v8908 = vrot.slane %v8907, 2
    %v8909 = vadd.f32 %v8907, %v8908
    %v8910 = vrot.slane %v8909, 1
    %v8911 = vadd.f32 %v8909, %v8910
    %v8912 = vrot.slane %v8845, 4
    %v8913 = vadd.f32 %v8845, %v8912
    %v8914 = vrot.slane %v8913, 2
    %v8915 = vadd.f32 %v8913, %v8914
    %v8916 = vrot.slane %v8915, 1
    %v8917 = vadd.f32 %v8915, %v8916
    %v8918 = vrot.slane %v8847, 4
    %v8919 = vadd.f32 %v8847, %v8918
    %v8920 = vrot.slane %v8919, 2
    %v8921 = vadd.f32 %v8919, %v8920
    %v8922 = vrot.slane %v8921, 1
    %v8923 = vadd.f32 %v8921, %v8922
    %v8924 = vrot.slane %v8849, 4
    %v8925 = vadd.f32 %v8849, %v8924
    %v8926 = vrot.slane %v8925, 2
    %v8927 = vadd.f32 %v8925, %v8926
    %v8928 = vrot.slane %v8927, 1
    %v8929 = vadd.f32 %v8927, %v8928
    %v8930 = vrot.slane %v8851, 4
    %v8931 = vadd.f32 %v8851, %v8930
    %v8932 = vrot.slane %v8931, 2
    %v8933 = vadd.f32 %v8931, %v8932
    %v8934 = vrot.slane %v8933, 1
    %v8935 = vadd.f32 %v8933, %v8934
    %v8936 = vrot.slane %v8853, 4
    %v8937 = vadd.f32 %v8853, %v8936
    %v8938 = vrot.slane %v8937, 2
    %v8939 = vadd.f32 %v8937, %v8938
    %v8940 = vrot.slane %v8939, 1
    %v8941 = vadd.f32 %v8939, %v8940
    %v8942 = vrot.slane %v8855, 4
    %v8943 = vadd.f32 %v8855, %v8942
    %v8944 = vrot.slane %v8943, 2
    %v8945 = vadd.f32 %v8943, %v8944
    %v8946 = vrot.slane %v8945, 1
    %v8947 = vadd.f32 %v8945, %v8946
    %v8948 = vrot.slane %v8857, 4
    %v8949 = vadd.f32 %v8857, %v8948
    %v8950 = vrot.slane %v8949, 2
    %v8951 = vadd.f32 %v8949, %v8950
    %v8952 = vrot.slane %v8951, 1
    %v8953 = vadd.f32 %v8951, %v8952
    %v8954 = vrcp.pop %v8863
    %v8955 = vrcp.pop %v8869
    %v8956 = vrcp.pop %v8875
    %v8957 = vrcp.pop %v8881
    %v8958 = vrcp.pop %v8887
    %v8959 = vrcp.pop %v8893
    %v8960 = vrcp.pop %v8899
    %v8961 = vrcp.pop %v8905
    %v8962 = vrcp.pop %v8911
    %v8963 = vrcp.pop %v8917
    %v8964 = vrcp.pop %v8923
    %v8965 = vrcp.pop %v8929
    %v8966 = vrcp.pop %v8935
    %v8967 = vrcp.pop %v8941
    %v8968 = vrcp.pop %v8947
    %v8969 = vrcp.pop %v8953
    %v8970 = vmul.f32 %v8827, %v8954
    %v8971 = vmul.f32 %v8829, %v8955
    %v8972 = vmul.f32 %v8831, %v8956
    %v8973 = vmul.f32 %v8833, %v8957
    %v8974 = vmul.f32 %v8835, %v8958
    %v8975 = vmul.f32 %v8837, %v8959
    %v8976 = vmul.f32 %v8839, %v8960
    %v8977 = vmul.f32 %v8841, %v8961
    %v8978 = vmul.f32 %v8843, %v8962
    %v8979 = vmul.f32 %v8845, %v8963
    %v8980 = vmul.f32 %v8847, %v8964
    %v8981 = vmul.f32 %v8849, %v8965
    %v8982 = vmul.f32 %v8851, %v8966
    %v8983 = vmul.f32 %v8853, %v8967
    %v8984 = vmul.f32 %v8855, %v8968
    %v8985 = vmul.f32 %v8857, %v8969
    %v9002 = vrot.slane %v8970, 1
    %v9003 = vrot.slane %v8970, 2
    %v9004 = vrot.slane %v8970, 3
    %v9005 = vrot.slane %v8970, 4
    %v9006 = vrot.slane %v8970, 5
    %v9007 = vrot.slane %v8970, 6
    %v9008 = vrot.slane %v8970, 7
    %v9009 = vrot.slane %v8971, 1
    %v9010 = vrot.slane %v8971, 2
    %v9011 = vrot.slane %v8971, 3
    %v9012 = vrot.slane %v8971, 4
    %v9013 = vrot.slane %v8971, 5
    %v9014 = vrot.slane %v8971, 6
    %v9015 = vrot.slane %v8971, 7
    %v9016 = vrot.slane %v8972, 1
    %v9017 = vrot.slane %v8972, 2
    %v9018 = vrot.slane %v8972, 3
    %v9019 = vrot.slane %v8972, 4
    %v9020 = vrot.slane %v8972, 5
    %v9021 = vrot.slane %v8972, 6
    %v9022 = vrot.slane %v8972, 7
    %v9023 = vrot.slane %v8973, 1
    %v9024 = vrot.slane %v8973, 2
    %v9025 = vrot.slane %v8973, 3
    %v9026 = vrot.slane %v8973, 4
    %v9027 = vrot.slane %v8973, 5
    %v9028 = vrot.slane %v8973, 6
    %v9029 = vrot.slane %v8973, 7
    %v9030 = vrot.slane %v8974, 1
    %v9031 = vrot.slane %v8974, 2
    %v9032 = vrot.slane %v8974, 3
    %v9033 = vrot.slane %v8974, 4
    %v9034 = vrot.slane %v8974, 5
    %v9035 = vrot.slane %v8974, 6
    %v9036 = vrot.slane %v8974, 7
    %v9037 = vrot.slane %v8975, 1
    %v9038 = vrot.slane %v8975, 2
    %v9039 = vrot.slane %v8975, 3
    %v9040 = vrot.slane %v8975, 4
    %v9041 = vrot.slane %v8975, 5
    %v9042 = vrot.slane %v8975, 6
    %v9043 = vrot.slane %v8975, 7
    %v9044 = vrot.slane %v8976, 1
    %v9045 = vrot.slane %v8976, 2
    %v9046 = vrot.slane %v8976, 3
    %v9047 = vrot.slane %v8976, 4
    %v9048 = vrot.slane %v8976, 5
    %v9049 = vrot.slane %v8976, 6
    %v9050 = vrot.slane %v8976, 7
    %v9051 = vrot.slane %v8977, 1
    %v9052 = vrot.slane %v8977, 2
    %v9053 = vrot.slane %v8977, 3
    %v9054 = vrot.slane %v8977, 4
    %v9055 = vrot.slane %v8977, 5
    %v9056 = vrot.slane %v8977, 6
    %v9057 = vrot.slane %v8977, 7
    %v9058 = vrot.slane %v8978, 1
    %v9059 = vrot.slane %v8978, 2
    %v9060 = vrot.slane %v8978, 3
    %v9061 = vrot.slane %v8978, 4
    %v9062 = vrot.slane %v8978, 5
    %v9063 = vrot.slane %v8978, 6
    %v9064 = vrot.slane %v8978, 7
    %v9065 = vrot.slane %v8979, 1
    %v9066 = vrot.slane %v8979, 2
    %v9067 = vrot.slane %v8979, 3
    %v9068 = vrot.slane %v8979, 4
    %v9069 = vrot.slane %v8979, 5
    %v9070 = vrot.slane %v8979, 6
    %v9071 = vrot.slane %v8979, 7
    %v9072 = vrot.slane %v8980, 1
    %v9073 = vrot.slane %v8980, 2
    %v9074 = vrot.slane %v8980, 3
    %v9075 = vrot.slane %v8980, 4
    %v9076 = vrot.slane %v8980, 5
    %v9077 = vrot.slane %v8980, 6
    %v9078 = vrot.slane %v8980, 7
    %v9079 = vrot.slane %v8981, 1
    %v9080 = vrot.slane %v8981, 2
    %v9081 = vrot.slane %v8981, 3
    %v9082 = vrot.slane %v8981, 4
    %v9083 = vrot.slane %v8981, 5
    %v9084 = vrot.slane %v8981, 6
    %v9085 = vrot.slane %v8981, 7
    %v9086 = vrot.slane %v8982, 1
    %v9087 = vrot.slane %v8982, 2
    %v9088 = vrot.slane %v8982, 3
    %v9089 = vrot.slane %v8982, 4
    %v9090 = vrot.slane %v8982, 5
    %v9091 = vrot.slane %v8982, 6
    %v9092 = vrot.slane %v8982, 7
    %v9093 = vrot.slane %v8983, 1
    %v9094 = vrot.slane %v8983, 2
    %v9095 = vrot.slane %v8983, 3
    %v9096 = vrot.slane %v8983, 4
    %v9097 = vrot.slane %v8983, 5
    %v9098 = vrot.slane %v8983, 6
    %v9099 = vrot.slane %v8983, 7
    %v9100 = vrot.slane %v8984, 1
    %v9101 = vrot.slane %v8984, 2
    %v9102 = vrot.slane %v8984, 3
    %v9103 = vrot.slane %v8984, 4
    %v9104 = vrot.slane %v8984, 5
    %v9105 = vrot.slane %v8984, 6
    %v9106 = vrot.slane %v8984, 7
    %v9107 = vrot.slane %v8985, 1
    %v9108 = vrot.slane %v8985, 2
    %v9109 = vrot.slane %v8985, 3
    %v9110 = vrot.slane %v8985, 4
    %v9111 = vrot.slane %v8985, 5
    %v9112 = vrot.slane %v8985, 6
    %v9113 = vrot.slane %v8985, 7
    %v9242 = vmul.f32 %v3300, %v8970
    %v9243 = vmul.f32 %v3324, %v9002
    %v9244 = vmul.f32 %v3348, %v9003
    %v9245 = vmul.f32 %v3372, %v9004
    %v9246 = vmul.f32 %v3396, %v9005
    %v9247 = vmul.f32 %v3420, %v9006
    %v9248 = vmul.f32 %v3444, %v9007
    %v9249 = vmul.f32 %v3468, %v9008
    %v9250 = vmul.f32 %v3498, %v8971
    %v9251 = vmul.f32 %v3522, %v9009
    %v9252 = vmul.f32 %v3546, %v9010
    %v9253 = vmul.f32 %v3570, %v9011
    %v9254 = vmul.f32 %v3594, %v9012
    %v9255 = vmul.f32 %v3618, %v9013
    %v9256 = vmul.f32 %v3642, %v9014
    %v9257 = vmul.f32 %v3666, %v9015
    %v9258 = vmul.f32 %v3696, %v8972
    %v9259 = vmul.f32 %v3720, %v9016
    %v9260 = vmul.f32 %v3744, %v9017
    %v9261 = vmul.f32 %v3768, %v9018
    %v9262 = vmul.f32 %v3792, %v9019
    %v9263 = vmul.f32 %v3816, %v9020
    %v9264 = vmul.f32 %v3840, %v9021
    %v9265 = vmul.f32 %v3864, %v9022
    %v9266 = vmul.f32 %v3894, %v8973
    %v9267 = vmul.f32 %v3918, %v9023
    %v9268 = vmul.f32 %v3942, %v9024
    %v9269 = vmul.f32 %v3966, %v9025
    %v9270 = vmul.f32 %v3990, %v9026
    %v9271 = vmul.f32 %v4014, %v9027
    %v9272 = vmul.f32 %v4038, %v9028
    %v9273 = vmul.f32 %v4062, %v9029
    %v9274 = vmul.f32 %v4092, %v8974
    %v9275 = vmul.f32 %v4116, %v9030
    %v9276 = vmul.f32 %v4140, %v9031
    %v9277 = vmul.f32 %v4164, %v9032
    %v9278 = vmul.f32 %v4188, %v9033
    %v9279 = vmul.f32 %v4212, %v9034
    %v9280 = vmul.f32 %v4236, %v9035
    %v9281 = vmul.f32 %v4260, %v9036
    %v9282 = vmul.f32 %v4290, %v8975
    %v9283 = vmul.f32 %v4314, %v9037
    %v9284 = vmul.f32 %v4338, %v9038
    %v9285 = vmul.f32 %v4362, %v9039
    %v9286 = vmul.f32 %v4386, %v9040
    %v9287 = vmul.f32 %v4410, %v9041
    %v9288 = vmul.f32 %v4434, %v9042
    %v9289 = vmul.f32 %v4458, %v9043
    %v9290 = vmul.f32 %v4488, %v8976
    %v9291 = vmul.f32 %v4512, %v9044
    %v9292 = vmul.f32 %v4536, %v9045
    %v9293 = vmul.f32 %v4560, %v9046
    %v9294 = vmul.f32 %v4584, %v9047
    %v9295 = vmul.f32 %v4608, %v9048
    %v9296 = vmul.f32 %v4632, %v9049
    %v9297 = vmul.f32 %v4656, %v9050
    %v9298 = vmul.f32 %v4686, %v8977
    %v9299 = vmul.f32 %v4710, %v9051
    %v9300 = vmul.f32 %v4734, %v9052
    %v9301 = vmul.f32 %v4758, %v9053
    %v9302 = vmul.f32 %v4782, %v9054
    %v9303 = vmul.f32 %v4806, %v9055
    %v9304 = vmul.f32 %v4830, %v9056
    %v9305 = vmul.f32 %v4854, %v9057
    %v9306 = vmul.f32 %v4884, %v8978
    %v9307 = vmul.f32 %v4908, %v9058
    %v9308 = vmul.f32 %v4932, %v9059
    %v9309 = vmul.f32 %v4956, %v9060
    %v9310 = vmul.f32 %v4980, %v9061
    %v9311 = vmul.f32 %v5004, %v9062
    %v9312 = vmul.f32 %v5028, %v9063
    %v9313 = vmul.f32 %v5052, %v9064
    %v9314 = vmul.f32 %v5082, %v8979
    %v9315 = vmul.f32 %v5106, %v9065
    %v9316 = vmul.f32 %v5130, %v9066
    %v9317 = vmul.f32 %v5154, %v9067
    %v9318 = vmul.f32 %v5178, %v9068
    %v9319 = vmul.f32 %v5202, %v9069
    %v9320 = vmul.f32 %v5226, %v9070
    %v9321 = vmul.f32 %v5250, %v9071
    %v9322 = vmul.f32 %v5280, %v8980
    %v9323 = vmul.f32 %v5304, %v9072
    %v9324 = vmul.f32 %v5328, %v9073
    %v9325 = vmul.f32 %v5352, %v9074
    %v9326 = vmul.f32 %v5376, %v9075
    %v9327 = vmul.f32 %v5400, %v9076
    %v9328 = vmul.f32 %v5424, %v9077
    %v9329 = vmul.f32 %v5448, %v9078
    %v9330 = vmul.f32 %v5478, %v8981
    %v9331 = vmul.f32 %v5502, %v9079
    %v9332 = vmul.f32 %v5526, %v9080
    %v9333 = vmul.f32 %v5550, %v9081
    %v9334 = vmul.f32 %v5574, %v9082
    %v9335 = vmul.f32 %v5598, %v9083
    %v9336 = vmul.f32 %v5622, %v9084
    %v9337 = vmul.f32 %v5646, %v9085
    %v9338 = vmul.f32 %v5676, %v8982
    %v9339 = vmul.f32 %v5700, %v9086
    %v9340 = vmul.f32 %v5724, %v9087
    %v9341 = vmul.f32 %v5748, %v9088
    %v9342 = vmul.f32 %v5772, %v9089
    %v9343 = vmul.f32 %v5796, %v9090
    %v9344 = vmul.f32 %v5820, %v9091
    %v9345 = vmul.f32 %v5844, %v9092
    %v9346 = vmul.f32 %v5874, %v8983
    %v9347 = vmul.f32 %v5898, %v9093
    %v9348 = vmul.f32 %v5922, %v9094
    %v9349 = vmul.f32 %v5946, %v9095
    %v9350 = vmul.f32 %v5970, %v9096
    %v9351 = vmul.f32 %v5994, %v9097
    %v9352 = vmul.f32 %v6018, %v9098
    %v9353 = vmul.f32 %v6042, %v9099
    %v9354 = vmul.f32 %v6072, %v8984
    %v9355 = vmul.f32 %v6096, %v9100
    %v9356 = vmul.f32 %v6120, %v9101
    %v9357 = vmul.f32 %v6144, %v9102
    %v9358 = vmul.f32 %v6168, %v9103
    %v9359 = vmul.f32 %v6192, %v9104
    %v9360 = vmul.f32 %v6216, %v9105
    %v9361 = vmul.f32 %v6240, %v9106
    %v9362 = vmul.f32 %v6270, %v8985
    %v9363 = vmul.f32 %v6294, %v9107
    %v9364 = vmul.f32 %v6318, %v9108
    %v9365 = vmul.f32 %v6342, %v9109
    %v9366 = vmul.f32 %v6366, %v9110
    %v9367 = vmul.f32 %v6390, %v9111
    %v9368 = vmul.f32 %v6414, %v9112
    %v9369 = vmul.f32 %v6438, %v9113
    %v9498 = vrot.slane %v9243, 7
    %v9499 = vsel %vm6708, %v9498, %v9242
    %v9500 = vrot.slane %v9244, 6
    %v9501 = vsel %vm6711, %v9500, %v9499
    %v9502 = vrot.slane %v9245, 5
    %v9503 = vsel %vm6714, %v9502, %v9501
    %v9504 = vrot.slane %v9246, 4
    %v9505 = vsel %vm6717, %v9504, %v9503
    %v9506 = vrot.slane %v9247, 3
    %v9507 = vsel %vm6720, %v9506, %v9505
    %v9508 = vrot.slane %v9248, 2
    %v9509 = vsel %vm6723, %v9508, %v9507
    %v9510 = vrot.slane %v9249, 1
    %v9511 = vsel %vm6726, %v9510, %v9509
    %v9512 = vrot.slane %v9251, 7
    %v9513 = vsel %vm6708, %v9512, %v9250
    %v9514 = vrot.slane %v9252, 6
    %v9515 = vsel %vm6711, %v9514, %v9513
    %v9516 = vrot.slane %v9253, 5
    %v9517 = vsel %vm6714, %v9516, %v9515
    %v9518 = vrot.slane %v9254, 4
    %v9519 = vsel %vm6717, %v9518, %v9517
    %v9520 = vrot.slane %v9255, 3
    %v9521 = vsel %vm6720, %v9520, %v9519
    %v9522 = vrot.slane %v9256, 2
    %v9523 = vsel %vm6723, %v9522, %v9521
    %v9524 = vrot.slane %v9257, 1
    %v9525 = vsel %vm6726, %v9524, %v9523
    %v9526 = vrot.slane %v9259, 7
    %v9527 = vsel %vm6708, %v9526, %v9258
    %v9528 = vrot.slane %v9260, 6
    %v9529 = vsel %vm6711, %v9528, %v9527
    %v9530 = vrot.slane %v9261, 5
    %v9531 = vsel %vm6714, %v9530, %v9529
    %v9532 = vrot.slane %v9262, 4
    %v9533 = vsel %vm6717, %v9532, %v9531
    %v9534 = vrot.slane %v9263, 3
    %v9535 = vsel %vm6720, %v9534, %v9533
    %v9536 = vrot.slane %v9264, 2
    %v9537 = vsel %vm6723, %v9536, %v9535
    %v9538 = vrot.slane %v9265, 1
    %v9539 = vsel %vm6726, %v9538, %v9537
    %v9540 = vrot.slane %v9267, 7
    %v9541 = vsel %vm6708, %v9540, %v9266
    %v9542 = vrot.slane %v9268, 6
    %v9543 = vsel %vm6711, %v9542, %v9541
    %v9544 = vrot.slane %v9269, 5
    %v9545 = vsel %vm6714, %v9544, %v9543
    %v9546 = vrot.slane %v9270, 4
    %v9547 = vsel %vm6717, %v9546, %v9545
    %v9548 = vrot.slane %v9271, 3
    %v9549 = vsel %vm6720, %v9548, %v9547
    %v9550 = vrot.slane %v9272, 2
    %v9551 = vsel %vm6723, %v9550, %v9549
    %v9552 = vrot.slane %v9273, 1
    %v9553 = vsel %vm6726, %v9552, %v9551
    %v9554 = vrot.slane %v9275, 7
    %v9555 = vsel %vm6708, %v9554, %v9274
    %v9556 = vrot.slane %v9276, 6
    %v9557 = vsel %vm6711, %v9556, %v9555
    %v9558 = vrot.slane %v9277, 5
    %v9559 = vsel %vm6714, %v9558, %v9557
    %v9560 = vrot.slane %v9278, 4
    %v9561 = vsel %vm6717, %v9560, %v9559
    %v9562 = vrot.slane %v9279, 3
    %v9563 = vsel %vm6720, %v9562, %v9561
    %v9564 = vrot.slane %v9280, 2
    %v9565 = vsel %vm6723, %v9564, %v9563
    %v9566 = vrot.slane %v9281, 1
    %v9567 = vsel %vm6726, %v9566, %v9565
    %v9568 = vrot.slane %v9283, 7
    %v9569 = vsel %vm6708, %v9568, %v9282
    %v9570 = vrot.slane %v9284, 6
    %v9571 = vsel %vm6711, %v9570, %v9569
    %v9572 = vrot.slane %v9285, 5
    %v9573 = vsel %vm6714, %v9572, %v9571
    %v9574 = vrot.slane %v9286, 4
    %v9575 = vsel %vm6717, %v9574, %v9573
    %v9576 = vrot.slane %v9287, 3
    %v9577 = vsel %vm6720, %v9576, %v9575
    %v9578 = vrot.slane %v9288, 2
    %v9579 = vsel %vm6723, %v9578, %v9577
    %v9580 = vrot.slane %v9289, 1
    %v9581 = vsel %vm6726, %v9580, %v9579
    %v9582 = vrot.slane %v9291, 7
    %v9583 = vsel %vm6708, %v9582, %v9290
    %v9584 = vrot.slane %v9292, 6
    %v9585 = vsel %vm6711, %v9584, %v9583
    %v9586 = vrot.slane %v9293, 5
    %v9587 = vsel %vm6714, %v9586, %v9585
    %v9588 = vrot.slane %v9294, 4
    %v9589 = vsel %vm6717, %v9588, %v9587
    %v9590 = vrot.slane %v9295, 3
    %v9591 = vsel %vm6720, %v9590, %v9589
    %v9592 = vrot.slane %v9296, 2
    %v9593 = vsel %vm6723, %v9592, %v9591
    %v9594 = vrot.slane %v9297, 1
    %v9595 = vsel %vm6726, %v9594, %v9593
    %v9596 = vrot.slane %v9299, 7
    %v9597 = vsel %vm6708, %v9596, %v9298
    %v9598 = vrot.slane %v9300, 6
    %v9599 = vsel %vm6711, %v9598, %v9597
    %v9600 = vrot.slane %v9301, 5
    %v9601 = vsel %vm6714, %v9600, %v9599
    %v9602 = vrot.slane %v9302, 4
    %v9603 = vsel %vm6717, %v9602, %v9601
    %v9604 = vrot.slane %v9303, 3
    %v9605 = vsel %vm6720, %v9604, %v9603
    %v9606 = vrot.slane %v9304, 2
    %v9607 = vsel %vm6723, %v9606, %v9605
    %v9608 = vrot.slane %v9305, 1
    %v9609 = vsel %vm6726, %v9608, %v9607
    %v9610 = vrot.slane %v9307, 7
    %v9611 = vsel %vm6708, %v9610, %v9306
    %v9612 = vrot.slane %v9308, 6
    %v9613 = vsel %vm6711, %v9612, %v9611
    %v9614 = vrot.slane %v9309, 5
    %v9615 = vsel %vm6714, %v9614, %v9613
    %v9616 = vrot.slane %v9310, 4
    %v9617 = vsel %vm6717, %v9616, %v9615
    %v9618 = vrot.slane %v9311, 3
    %v9619 = vsel %vm6720, %v9618, %v9617
    %v9620 = vrot.slane %v9312, 2
    %v9621 = vsel %vm6723, %v9620, %v9619
    %v9622 = vrot.slane %v9313, 1
    %v9623 = vsel %vm6726, %v9622, %v9621
    %v9624 = vrot.slane %v9315, 7
    %v9625 = vsel %vm6708, %v9624, %v9314
    %v9626 = vrot.slane %v9316, 6
    %v9627 = vsel %vm6711, %v9626, %v9625
    %v9628 = vrot.slane %v9317, 5
    %v9629 = vsel %vm6714, %v9628, %v9627
    %v9630 = vrot.slane %v9318, 4
    %v9631 = vsel %vm6717, %v9630, %v9629
    %v9632 = vrot.slane %v9319, 3
    %v9633 = vsel %vm6720, %v9632, %v9631
    %v9634 = vrot.slane %v9320, 2
    %v9635 = vsel %vm6723, %v9634, %v9633
    %v9636 = vrot.slane %v9321, 1
    %v9637 = vsel %vm6726, %v9636, %v9635
    %v9638 = vrot.slane %v9323, 7
    %v9639 = vsel %vm6708, %v9638, %v9322
    %v9640 = vrot.slane %v9324, 6
    %v9641 = vsel %vm6711, %v9640, %v9639
    %v9642 = vrot.slane %v9325, 5
    %v9643 = vsel %vm6714, %v9642, %v9641
    %v9644 = vrot.slane %v9326, 4
    %v9645 = vsel %vm6717, %v9644, %v9643
    %v9646 = vrot.slane %v9327, 3
    %v9647 = vsel %vm6720, %v9646, %v9645
    %v9648 = vrot.slane %v9328, 2
    %v9649 = vsel %vm6723, %v9648, %v9647
    %v9650 = vrot.slane %v9329, 1
    %v9651 = vsel %vm6726, %v9650, %v9649
    %v9652 = vrot.slane %v9331, 7
    %v9653 = vsel %vm6708, %v9652, %v9330
    %v9654 = vrot.slane %v9332, 6
    %v9655 = vsel %vm6711, %v9654, %v9653
    %v9656 = vrot.slane %v9333, 5
    %v9657 = vsel %vm6714, %v9656, %v9655
    %v9658 = vrot.slane %v9334, 4
    %v9659 = vsel %vm6717, %v9658, %v9657
    %v9660 = vrot.slane %v9335, 3
    %v9661 = vsel %vm6720, %v9660, %v9659
    %v9662 = vrot.slane %v9336, 2
    %v9663 = vsel %vm6723, %v9662, %v9661
    %v9664 = vrot.slane %v9337, 1
    %v9665 = vsel %vm6726, %v9664, %v9663
    %v9666 = vrot.slane %v9339, 7
    %v9667 = vsel %vm6708, %v9666, %v9338
    %v9668 = vrot.slane %v9340, 6
    %v9669 = vsel %vm6711, %v9668, %v9667
    %v9670 = vrot.slane %v9341, 5
    %v9671 = vsel %vm6714, %v9670, %v9669
    %v9672 = vrot.slane %v9342, 4
    %v9673 = vsel %vm6717, %v9672, %v9671
    %v9674 = vrot.slane %v9343, 3
    %v9675 = vsel %vm6720, %v9674, %v9673
    %v9676 = vrot.slane %v9344, 2
    %v9677 = vsel %vm6723, %v9676, %v9675
    %v9678 = vrot.slane %v9345, 1
    %v9679 = vsel %vm6726, %v9678, %v9677
    %v9680 = vrot.slane %v9347, 7
    %v9681 = vsel %vm6708, %v9680, %v9346
    %v9682 = vrot.slane %v9348, 6
    %v9683 = vsel %vm6711, %v9682, %v9681
    %v9684 = vrot.slane %v9349, 5
    %v9685 = vsel %vm6714, %v9684, %v9683
    %v9686 = vrot.slane %v9350, 4
    %v9687 = vsel %vm6717, %v9686, %v9685
    %v9688 = vrot.slane %v9351, 3
    %v9689 = vsel %vm6720, %v9688, %v9687
    %v9690 = vrot.slane %v9352, 2
    %v9691 = vsel %vm6723, %v9690, %v9689
    %v9692 = vrot.slane %v9353, 1
    %v9693 = vsel %vm6726, %v9692, %v9691
    %v9694 = vrot.slane %v9355, 7
    %v9695 = vsel %vm6708, %v9694, %v9354
    %v9696 = vrot.slane %v9356, 6
    %v9697 = vsel %vm6711, %v9696, %v9695
    %v9698 = vrot.slane %v9357, 5
    %v9699 = vsel %vm6714, %v9698, %v9697
    %v9700 = vrot.slane %v9358, 4
    %v9701 = vsel %vm6717, %v9700, %v9699
    %v9702 = vrot.slane %v9359, 3
    %v9703 = vsel %vm6720, %v9702, %v9701
    %v9704 = vrot.slane %v9360, 2
    %v9705 = vsel %vm6723, %v9704, %v9703
    %v9706 = vrot.slane %v9361, 1
    %v9707 = vsel %vm6726, %v9706, %v9705
    %v9708 = vrot.slane %v9363, 7
    %v9709 = vsel %vm6708, %v9708, %v9362
    %v9710 = vrot.slane %v9364, 6
    %v9711 = vsel %vm6711, %v9710, %v9709
    %v9712 = vrot.slane %v9365, 5
    %v9713 = vsel %vm6714, %v9712, %v9711
    %v9714 = vrot.slane %v9366, 4
    %v9715 = vsel %vm6717, %v9714, %v9713
    %v9716 = vrot.slane %v9367, 3
    %v9717 = vsel %vm6720, %v9716, %v9715
    %v9718 = vrot.slane %v9368, 2
    %v9719 = vsel %vm6723, %v9718, %v9717
    %v9720 = vrot.slane %v9369, 1
    %v9721 = vsel %vm6726, %v9720, %v9719
    %v9738 = vrot.slane %v9511, 4
    %v9739 = vadd.f32 %v9511, %v9738
    %v9740 = vrot.slane %v9739, 2
    %v9741 = vadd.f32 %v9739, %v9740
    %v9742 = vrot.slane %v9741, 1
    %v9743 = vadd.f32 %v9741, %v9742
    %v9744 = vrot.slane %v9525, 4
    %v9745 = vadd.f32 %v9525, %v9744
    %v9746 = vrot.slane %v9745, 2
    %v9747 = vadd.f32 %v9745, %v9746
    %v9748 = vrot.slane %v9747, 1
    %v9749 = vadd.f32 %v9747, %v9748
    %v9750 = vrot.slane %v9539, 4
    %v9751 = vadd.f32 %v9539, %v9750
    %v9752 = vrot.slane %v9751, 2
    %v9753 = vadd.f32 %v9751, %v9752
    %v9754 = vrot.slane %v9753, 1
    %v9755 = vadd.f32 %v9753, %v9754
    %v9756 = vrot.slane %v9553, 4
    %v9757 = vadd.f32 %v9553, %v9756
    %v9758 = vrot.slane %v9757, 2
    %v9759 = vadd.f32 %v9757, %v9758
    %v9760 = vrot.slane %v9759, 1
    %v9761 = vadd.f32 %v9759, %v9760
    %v9762 = vrot.slane %v9567, 4
    %v9763 = vadd.f32 %v9567, %v9762
    %v9764 = vrot.slane %v9763, 2
    %v9765 = vadd.f32 %v9763, %v9764
    %v9766 = vrot.slane %v9765, 1
    %v9767 = vadd.f32 %v9765, %v9766
    %v9768 = vrot.slane %v9581, 4
    %v9769 = vadd.f32 %v9581, %v9768
    %v9770 = vrot.slane %v9769, 2
    %v9771 = vadd.f32 %v9769, %v9770
    %v9772 = vrot.slane %v9771, 1
    %v9773 = vadd.f32 %v9771, %v9772
    %v9774 = vrot.slane %v9595, 4
    %v9775 = vadd.f32 %v9595, %v9774
    %v9776 = vrot.slane %v9775, 2
    %v9777 = vadd.f32 %v9775, %v9776
    %v9778 = vrot.slane %v9777, 1
    %v9779 = vadd.f32 %v9777, %v9778
    %v9780 = vrot.slane %v9609, 4
    %v9781 = vadd.f32 %v9609, %v9780
    %v9782 = vrot.slane %v9781, 2
    %v9783 = vadd.f32 %v9781, %v9782
    %v9784 = vrot.slane %v9783, 1
    %v9785 = vadd.f32 %v9783, %v9784
    %v9786 = vrot.slane %v9623, 4
    %v9787 = vadd.f32 %v9623, %v9786
    %v9788 = vrot.slane %v9787, 2
    %v9789 = vadd.f32 %v9787, %v9788
    %v9790 = vrot.slane %v9789, 1
    %v9791 = vadd.f32 %v9789, %v9790
    %v9792 = vrot.slane %v9637, 4
    %v9793 = vadd.f32 %v9637, %v9792
    %v9794 = vrot.slane %v9793, 2
    %v9795 = vadd.f32 %v9793, %v9794
    %v9796 = vrot.slane %v9795, 1
    %v9797 = vadd.f32 %v9795, %v9796
    %v9798 = vrot.slane %v9651, 4
    %v9799 = vadd.f32 %v9651, %v9798
    %v9800 = vrot.slane %v9799, 2
    %v9801 = vadd.f32 %v9799, %v9800
    %v9802 = vrot.slane %v9801, 1
    %v9803 = vadd.f32 %v9801, %v9802
    %v9804 = vrot.slane %v9665, 4
    %v9805 = vadd.f32 %v9665, %v9804
    %v9806 = vrot.slane %v9805, 2
    %v9807 = vadd.f32 %v9805, %v9806
    %v9808 = vrot.slane %v9807, 1
    %v9809 = vadd.f32 %v9807, %v9808
    %v9810 = vrot.slane %v9679, 4
    %v9811 = vadd.f32 %v9679, %v9810
    %v9812 = vrot.slane %v9811, 2
    %v9813 = vadd.f32 %v9811, %v9812
    %v9814 = vrot.slane %v9813, 1
    %v9815 = vadd.f32 %v9813, %v9814
    %v9816 = vrot.slane %v9693, 4
    %v9817 = vadd.f32 %v9693, %v9816
    %v9818 = vrot.slane %v9817, 2
    %v9819 = vadd.f32 %v9817, %v9818
    %v9820 = vrot.slane %v9819, 1
    %v9821 = vadd.f32 %v9819, %v9820
    %v9822 = vrot.slane %v9707, 4
    %v9823 = vadd.f32 %v9707, %v9822
    %v9824 = vrot.slane %v9823, 2
    %v9825 = vadd.f32 %v9823, %v9824
    %v9826 = vrot.slane %v9825, 1
    %v9827 = vadd.f32 %v9825, %v9826
    %v9828 = vrot.slane %v9721, 4
    %v9829 = vadd.f32 %v9721, %v9828
    %v9830 = vrot.slane %v9829, 2
    %v9831 = vadd.f32 %v9829, %v9830
    %v9832 = vrot.slane %v9831, 1
    %v9833 = vadd.f32 %v9831, %v9832
    %v9834 = vadd.f32 %v8106, %v9743
    %v9835 = vadd.f32 %v8107, %v9749
    %v9836 = vadd.f32 %v8108, %v9755
    %v9837 = vadd.f32 %v8109, %v9761
    %v9838 = vadd.f32 %v8110, %v9767
    %v9839 = vadd.f32 %v8111, %v9773
    %v9840 = vadd.f32 %v8112, %v9779
    %v9841 = vadd.f32 %v8113, %v9785
    %v9842 = vadd.f32 %v8114, %v9791
    %v9843 = vadd.f32 %v8115, %v9797
    %v9844 = vadd.f32 %v8116, %v9803
    %v9845 = vadd.f32 %v8117, %v9809
    %v9846 = vadd.f32 %v8118, %v9815
    %v9847 = vadd.f32 %v8119, %v9821
    %v9848 = vadd.f32 %v8120, %v9827
    %v9849 = vadd.f32 %v8121, %v9833
    %v9850 = vlaneseq
    %v9851 = vshrl.u32 %v9850, 7
    %v9852 = vsub.s32 0, %v9851
    %v9853 = vrot.slane %v9834, %v9852
    %v9854 = vlaneseq
    %v9855 = vshrl.u32 %v9854, 7
    %v9856 = vsub.s32 0, %v9855
    %v9857 = vrot.slane %v9835, %v9856
    %v9858 = vlaneseq
    %v9859 = vshrl.u32 %v9858, 7
    %v9860 = vsub.s32 0, %v9859
    %v9861 = vrot.slane %v9836, %v9860
    %v9862 = vlaneseq
    %v9863 = vshrl.u32 %v9862, 7
    %v9864 = vsub.s32 0, %v9863
    %v9865 = vrot.slane %v9837, %v9864
    %v9866 = vlaneseq
    %v9867 = vshrl.u32 %v9866, 7
    %v9868 = vsub.s32 0, %v9867
    %v9869 = vrot.slane %v9838, %v9868
    %v9870 = vlaneseq
    %v9871 = vshrl.u32 %v9870, 7
    %v9872 = vsub.s32 0, %v9871
    %v9873 = vrot.slane %v9839, %v9872
    %v9874 = vlaneseq
    %v9875 = vshrl.u32 %v9874, 7
    %v9876 = vsub.s32 0, %v9875
    %v9877 = vrot.slane %v9840, %v9876
    %v9878 = vlaneseq
    %v9879 = vshrl.u32 %v9878, 7
    %v9880 = vsub.s32 0, %v9879
    %v9881 = vrot.slane %v9841, %v9880
    %v9882 = vlaneseq
    %v9883 = vshrl.u32 %v9882, 7
    %v9884 = vsub.s32 0, %v9883
    %v9885 = vrot.slane %v9842, %v9884
    %v9886 = vlaneseq
    %v9887 = vshrl.u32 %v9886, 7
    %v9888 = vsub.s32 0, %v9887
    %v9889 = vrot.slane %v9843, %v9888
    %v9890 = vlaneseq
    %v9891 = vshrl.u32 %v9890, 7
    %v9892 = vsub.s32 0, %v9891
    %v9893 = vrot.slane %v9844, %v9892
    %v9894 = vlaneseq
    %v9895 = vshrl.u32 %v9894, 7
    %v9896 = vsub.s32 0, %v9895
    %v9897 = vrot.slane %v9845, %v9896
    %v9898 = vlaneseq
    %v9899 = vshrl.u32 %v9898, 7
    %v9900 = vsub.s32 0, %v9899
    %v9901 = vrot.slane %v9846, %v9900
    %v9902 = vlaneseq
    %v9903 = vshrl.u32 %v9902, 7
    %v9904 = vsub.s32 0, %v9903
    %v9905 = vrot.slane %v9847, %v9904
    %v9906 = vlaneseq
    %v9907 = vshrl.u32 %v9906, 7
    %v9908 = vsub.s32 0, %v9907
    %v9909 = vrot.slane %v9848, %v9908
    %v9910 = vlaneseq
    %v9911 = vshrl.u32 %v9910, 7
    %v9912 = vsub.s32 0, %v9911
    %v9913 = vrot.slane %v9849, %v9912
    %v9914 = vmul.f32 %v3300, %v9853
    %v9915 = vmul.f32 %v3324, %v9853
    %v9916 = vmul.f32 %v3348, %v9853
    %v9917 = vmul.f32 %v3372, %v9853
    %v9918 = vmul.f32 %v3396, %v9853
    %v9919 = vmul.f32 %v3420, %v9853
    %v9920 = vmul.f32 %v3444, %v9853
    %v9921 = vmul.f32 %v3468, %v9853
    %v9922 = vmul.f32 %v3498, %v9857
    %v9923 = vmul.f32 %v3522, %v9857
    %v9924 = vmul.f32 %v3546, %v9857
    %v9925 = vmul.f32 %v3570, %v9857
    %v9926 = vmul.f32 %v3594, %v9857
    %v9927 = vmul.f32 %v3618, %v9857
    %v9928 = vmul.f32 %v3642, %v9857
    %v9929 = vmul.f32 %v3666, %v9857
    %v9930 = vmul.f32 %v3696, %v9861
    %v9931 = vmul.f32 %v3720, %v9861
    %v9932 = vmul.f32 %v3744, %v9861
    %v9933 = vmul.f32 %v3768, %v9861
    %v9934 = vmul.f32 %v3792, %v9861
    %v9935 = vmul.f32 %v3816, %v9861
    %v9936 = vmul.f32 %v3840, %v9861
    %v9937 = vmul.f32 %v3864, %v9861
    %v9938 = vmul.f32 %v3894, %v9865
    %v9939 = vmul.f32 %v3918, %v9865
    %v9940 = vmul.f32 %v3942, %v9865
    %v9941 = vmul.f32 %v3966, %v9865
    %v9942 = vmul.f32 %v3990, %v9865
    %v9943 = vmul.f32 %v4014, %v9865
    %v9944 = vmul.f32 %v4038, %v9865
    %v9945 = vmul.f32 %v4062, %v9865
    %v9946 = vmul.f32 %v4092, %v9869
    %v9947 = vmul.f32 %v4116, %v9869
    %v9948 = vmul.f32 %v4140, %v9869
    %v9949 = vmul.f32 %v4164, %v9869
    %v9950 = vmul.f32 %v4188, %v9869
    %v9951 = vmul.f32 %v4212, %v9869
    %v9952 = vmul.f32 %v4236, %v9869
    %v9953 = vmul.f32 %v4260, %v9869
    %v9954 = vmul.f32 %v4290, %v9873
    %v9955 = vmul.f32 %v4314, %v9873
    %v9956 = vmul.f32 %v4338, %v9873
    %v9957 = vmul.f32 %v4362, %v9873
    %v9958 = vmul.f32 %v4386, %v9873
    %v9959 = vmul.f32 %v4410, %v9873
    %v9960 = vmul.f32 %v4434, %v9873
    %v9961 = vmul.f32 %v4458, %v9873
    %v9962 = vmul.f32 %v4488, %v9877
    %v9963 = vmul.f32 %v4512, %v9877
    %v9964 = vmul.f32 %v4536, %v9877
    %v9965 = vmul.f32 %v4560, %v9877
    %v9966 = vmul.f32 %v4584, %v9877
    %v9967 = vmul.f32 %v4608, %v9877
    %v9968 = vmul.f32 %v4632, %v9877
    %v9969 = vmul.f32 %v4656, %v9877
    %v9970 = vmul.f32 %v4686, %v9881
    %v9971 = vmul.f32 %v4710, %v9881
    %v9972 = vmul.f32 %v4734, %v9881
    %v9973 = vmul.f32 %v4758, %v9881
    %v9974 = vmul.f32 %v4782, %v9881
    %v9975 = vmul.f32 %v4806, %v9881
    %v9976 = vmul.f32 %v4830, %v9881
    %v9977 = vmul.f32 %v4854, %v9881
    %v9978 = vmul.f32 %v4884, %v9885
    %v9979 = vmul.f32 %v4908, %v9885
    %v9980 = vmul.f32 %v4932, %v9885
    %v9981 = vmul.f32 %v4956, %v9885
    %v9982 = vmul.f32 %v4980, %v9885
    %v9983 = vmul.f32 %v5004, %v9885
    %v9984 = vmul.f32 %v5028, %v9885
    %v9985 = vmul.f32 %v5052, %v9885
    %v9986 = vmul.f32 %v5082, %v9889
    %v9987 = vmul.f32 %v5106, %v9889
    %v9988 = vmul.f32 %v5130, %v9889
    %v9989 = vmul.f32 %v5154, %v9889
    %v9990 = vmul.f32 %v5178, %v9889
    %v9991 = vmul.f32 %v5202, %v9889
    %v9992 = vmul.f32 %v5226, %v9889
    %v9993 = vmul.f32 %v5250, %v9889
    %v9994 = vmul.f32 %v5280, %v9893
    %v9995 = vmul.f32 %v5304, %v9893
    %v9996 = vmul.f32 %v5328, %v9893
    %v9997 = vmul.f32 %v5352, %v9893
    %v9998 = vmul.f32 %v5376, %v9893
    %v9999 = vmul.f32 %v5400, %v9893
    %v10000 = vmul.f32 %v5424, %v9893
    %v10001 = vmul.f32 %v5448, %v9893
    %v10002 = vmul.f32 %v5478, %v9897
    %v10003 = vmul.f32 %v5502, %v9897
    %v10004 = vmul.f32 %v5526, %v9897
    %v10005 = vmul.f32 %v5550, %v9897
    %v10006 = vmul.f32 %v5574, %v9897
    %v10007 = vmul.f32 %v5598, %v9897
    %v10008 = vmul.f32 %v5622, %v9897
    %v10009 = vmul.f32 %v5646, %v9897
    %v10010 = vmul.f32 %v5676, %v9901
    %v10011 = vmul.f32 %v5700, %v9901
    %v10012 = vmul.f32 %v5724, %v9901
    %v10013 = vmul.f32 %v5748, %v9901
    %v10014 = vmul.f32 %v5772, %v9901
    %v10015 = vmul.f32 %v5796, %v9901
    %v10016 = vmul.f32 %v5820, %v9901
    %v10017 = vmul.f32 %v5844, %v9901
    %v10018 = vmul.f32 %v5874, %v9905
    %v10019 = vmul.f32 %v5898, %v9905
    %v10020 = vmul.f32 %v5922, %v9905
    %v10021 = vmul.f32 %v5946, %v9905
    %v10022 = vmul.f32 %v5970, %v9905
    %v10023 = vmul.f32 %v5994, %v9905
    %v10024 = vmul.f32 %v6018, %v9905
    %v10025 = vmul.f32 %v6042, %v9905
    %v10026 = vmul.f32 %v6072, %v9909
    %v10027 = vmul.f32 %v6096, %v9909
    %v10028 = vmul.f32 %v6120, %v9909
    %v10029 = vmul.f32 %v6144, %v9909
    %v10030 = vmul.f32 %v6168, %v9909
    %v10031 = vmul.f32 %v6192, %v9909
    %v10032 = vmul.f32 %v6216, %v9909
    %v10033 = vmul.f32 %v6240, %v9909
    %v10034 = vmul.f32 %v6270, %v9913
    %v10035 = vmul.f32 %v6294, %v9913
    %v10036 = vmul.f32 %v6318, %v9913
    %v10037 = vmul.f32 %v6342, %v9913
    %v10038 = vmul.f32 %v6366, %v9913
    %v10039 = vmul.f32 %v6390, %v9913
    %v10040 = vmul.f32 %v6414, %v9913
    %v10041 = vmul.f32 %v6438, %v9913
    %v10170 = vrot.slane %v9915, 7
    %v10171 = vsel %vm6708, %v10170, %v9914
    %v10172 = vrot.slane %v9916, 6
    %v10173 = vsel %vm6711, %v10172, %v10171
    %v10174 = vrot.slane %v9917, 5
    %v10175 = vsel %vm6714, %v10174, %v10173
    %v10176 = vrot.slane %v9918, 4
    %v10177 = vsel %vm6717, %v10176, %v10175
    %v10178 = vrot.slane %v9919, 3
    %v10179 = vsel %vm6720, %v10178, %v10177
    %v10180 = vrot.slane %v9920, 2
    %v10181 = vsel %vm6723, %v10180, %v10179
    %v10182 = vrot.slane %v9921, 1
    %v10183 = vsel %vm6726, %v10182, %v10181
    %v10184 = vrot.slane %v9923, 7
    %v10185 = vsel %vm6708, %v10184, %v9922
    %v10186 = vrot.slane %v9924, 6
    %v10187 = vsel %vm6711, %v10186, %v10185
    %v10188 = vrot.slane %v9925, 5
    %v10189 = vsel %vm6714, %v10188, %v10187
    %v10190 = vrot.slane %v9926, 4
    %v10191 = vsel %vm6717, %v10190, %v10189
    %v10192 = vrot.slane %v9927, 3
    %v10193 = vsel %vm6720, %v10192, %v10191
    %v10194 = vrot.slane %v9928, 2
    %v10195 = vsel %vm6723, %v10194, %v10193
    %v10196 = vrot.slane %v9929, 1
    %v10197 = vsel %vm6726, %v10196, %v10195
    %v10198 = vrot.slane %v9931, 7
    %v10199 = vsel %vm6708, %v10198, %v9930
    %v10200 = vrot.slane %v9932, 6
    %v10201 = vsel %vm6711, %v10200, %v10199
    %v10202 = vrot.slane %v9933, 5
    %v10203 = vsel %vm6714, %v10202, %v10201
    %v10204 = vrot.slane %v9934, 4
    %v10205 = vsel %vm6717, %v10204, %v10203
    %v10206 = vrot.slane %v9935, 3
    %v10207 = vsel %vm6720, %v10206, %v10205
    %v10208 = vrot.slane %v9936, 2
    %v10209 = vsel %vm6723, %v10208, %v10207
    %v10210 = vrot.slane %v9937, 1
    %v10211 = vsel %vm6726, %v10210, %v10209
    %v10212 = vrot.slane %v9939, 7
    %v10213 = vsel %vm6708, %v10212, %v9938
    %v10214 = vrot.slane %v9940, 6
    %v10215 = vsel %vm6711, %v10214, %v10213
    %v10216 = vrot.slane %v9941, 5
    %v10217 = vsel %vm6714, %v10216, %v10215
    %v10218 = vrot.slane %v9942, 4
    %v10219 = vsel %vm6717, %v10218, %v10217
    %v10220 = vrot.slane %v9943, 3
    %v10221 = vsel %vm6720, %v10220, %v10219
    %v10222 = vrot.slane %v9944, 2
    %v10223 = vsel %vm6723, %v10222, %v10221
    %v10224 = vrot.slane %v9945, 1
    %v10225 = vsel %vm6726, %v10224, %v10223
    %v10226 = vrot.slane %v9947, 7
    %v10227 = vsel %vm6708, %v10226, %v9946
    %v10228 = vrot.slane %v9948, 6
    %v10229 = vsel %vm6711, %v10228, %v10227
    %v10230 = vrot.slane %v9949, 5
    %v10231 = vsel %vm6714, %v10230, %v10229
    %v10232 = vrot.slane %v9950, 4
    %v10233 = vsel %vm6717, %v10232, %v10231
    %v10234 = vrot.slane %v9951, 3
    %v10235 = vsel %vm6720, %v10234, %v10233
    %v10236 = vrot.slane %v9952, 2
    %v10237 = vsel %vm6723, %v10236, %v10235
    %v10238 = vrot.slane %v9953, 1
    %v10239 = vsel %vm6726, %v10238, %v10237
    %v10240 = vrot.slane %v9955, 7
    %v10241 = vsel %vm6708, %v10240, %v9954
    %v10242 = vrot.slane %v9956, 6
    %v10243 = vsel %vm6711, %v10242, %v10241
    %v10244 = vrot.slane %v9957, 5
    %v10245 = vsel %vm6714, %v10244, %v10243
    %v10246 = vrot.slane %v9958, 4
    %v10247 = vsel %vm6717, %v10246, %v10245
    %v10248 = vrot.slane %v9959, 3
    %v10249 = vsel %vm6720, %v10248, %v10247
    %v10250 = vrot.slane %v9960, 2
    %v10251 = vsel %vm6723, %v10250, %v10249
    %v10252 = vrot.slane %v9961, 1
    %v10253 = vsel %vm6726, %v10252, %v10251
    %v10254 = vrot.slane %v9963, 7
    %v10255 = vsel %vm6708, %v10254, %v9962
    %v10256 = vrot.slane %v9964, 6
    %v10257 = vsel %vm6711, %v10256, %v10255
    %v10258 = vrot.slane %v9965, 5
    %v10259 = vsel %vm6714, %v10258, %v10257
    %v10260 = vrot.slane %v9966, 4
    %v10261 = vsel %vm6717, %v10260, %v10259
    %v10262 = vrot.slane %v9967, 3
    %v10263 = vsel %vm6720, %v10262, %v10261
    %v10264 = vrot.slane %v9968, 2
    %v10265 = vsel %vm6723, %v10264, %v10263
    %v10266 = vrot.slane %v9969, 1
    %v10267 = vsel %vm6726, %v10266, %v10265
    %v10268 = vrot.slane %v9971, 7
    %v10269 = vsel %vm6708, %v10268, %v9970
    %v10270 = vrot.slane %v9972, 6
    %v10271 = vsel %vm6711, %v10270, %v10269
    %v10272 = vrot.slane %v9973, 5
    %v10273 = vsel %vm6714, %v10272, %v10271
    %v10274 = vrot.slane %v9974, 4
    %v10275 = vsel %vm6717, %v10274, %v10273
    %v10276 = vrot.slane %v9975, 3
    %v10277 = vsel %vm6720, %v10276, %v10275
    %v10278 = vrot.slane %v9976, 2
    %v10279 = vsel %vm6723, %v10278, %v10277
    %v10280 = vrot.slane %v9977, 1
    %v10281 = vsel %vm6726, %v10280, %v10279
    %v10282 = vrot.slane %v9979, 7
    %v10283 = vsel %vm6708, %v10282, %v9978
    %v10284 = vrot.slane %v9980, 6
    %v10285 = vsel %vm6711, %v10284, %v10283
    %v10286 = vrot.slane %v9981, 5
    %v10287 = vsel %vm6714, %v10286, %v10285
    %v10288 = vrot.slane %v9982, 4
    %v10289 = vsel %vm6717, %v10288, %v10287
    %v10290 = vrot.slane %v9983, 3
    %v10291 = vsel %vm6720, %v10290, %v10289
    %v10292 = vrot.slane %v9984, 2
    %v10293 = vsel %vm6723, %v10292, %v10291
    %v10294 = vrot.slane %v9985, 1
    %v10295 = vsel %vm6726, %v10294, %v10293
    %v10296 = vrot.slane %v9987, 7
    %v10297 = vsel %vm6708, %v10296, %v9986
    %v10298 = vrot.slane %v9988, 6
    %v10299 = vsel %vm6711, %v10298, %v10297
    %v10300 = vrot.slane %v9989, 5
    %v10301 = vsel %vm6714, %v10300, %v10299
    %v10302 = vrot.slane %v9990, 4
    %v10303 = vsel %vm6717, %v10302, %v10301
    %v10304 = vrot.slane %v9991, 3
    %v10305 = vsel %vm6720, %v10304, %v10303
    %v10306 = vrot.slane %v9992, 2
    %v10307 = vsel %vm6723, %v10306, %v10305
    %v10308 = vrot.slane %v9993, 1
    %v10309 = vsel %vm6726, %v10308, %v10307
    %v10310 = vrot.slane %v9995, 7
    %v10311 = vsel %vm6708, %v10310, %v9994
    %v10312 = vrot.slane %v9996, 6
    %v10313 = vsel %vm6711, %v10312, %v10311
    %v10314 = vrot.slane %v9997, 5
    %v10315 = vsel %vm6714, %v10314, %v10313
    %v10316 = vrot.slane %v9998, 4
    %v10317 = vsel %vm6717, %v10316, %v10315
    %v10318 = vrot.slane %v9999, 3
    %v10319 = vsel %vm6720, %v10318, %v10317
    %v10320 = vrot.slane %v10000, 2
    %v10321 = vsel %vm6723, %v10320, %v10319
    %v10322 = vrot.slane %v10001, 1
    %v10323 = vsel %vm6726, %v10322, %v10321
    %v10324 = vrot.slane %v10003, 7
    %v10325 = vsel %vm6708, %v10324, %v10002
    %v10326 = vrot.slane %v10004, 6
    %v10327 = vsel %vm6711, %v10326, %v10325
    %v10328 = vrot.slane %v10005, 5
    %v10329 = vsel %vm6714, %v10328, %v10327
    %v10330 = vrot.slane %v10006, 4
    %v10331 = vsel %vm6717, %v10330, %v10329
    %v10332 = vrot.slane %v10007, 3
    %v10333 = vsel %vm6720, %v10332, %v10331
    %v10334 = vrot.slane %v10008, 2
    %v10335 = vsel %vm6723, %v10334, %v10333
    %v10336 = vrot.slane %v10009, 1
    %v10337 = vsel %vm6726, %v10336, %v10335
    %v10338 = vrot.slane %v10011, 7
    %v10339 = vsel %vm6708, %v10338, %v10010
    %v10340 = vrot.slane %v10012, 6
    %v10341 = vsel %vm6711, %v10340, %v10339
    %v10342 = vrot.slane %v10013, 5
    %v10343 = vsel %vm6714, %v10342, %v10341
    %v10344 = vrot.slane %v10014, 4
    %v10345 = vsel %vm6717, %v10344, %v10343
    %v10346 = vrot.slane %v10015, 3
    %v10347 = vsel %vm6720, %v10346, %v10345
    %v10348 = vrot.slane %v10016, 2
    %v10349 = vsel %vm6723, %v10348, %v10347
    %v10350 = vrot.slane %v10017, 1
    %v10351 = vsel %vm6726, %v10350, %v10349
    %v10352 = vrot.slane %v10019, 7
    %v10353 = vsel %vm6708, %v10352, %v10018
    %v10354 = vrot.slane %v10020, 6
    %v10355 = vsel %vm6711, %v10354, %v10353
    %v10356 = vrot.slane %v10021, 5
    %v10357 = vsel %vm6714, %v10356, %v10355
    %v10358 = vrot.slane %v10022, 4
    %v10359 = vsel %vm6717, %v10358, %v10357
    %v10360 = vrot.slane %v10023, 3
    %v10361 = vsel %vm6720, %v10360, %v10359
    %v10362 = vrot.slane %v10024, 2
    %v10363 = vsel %vm6723, %v10362, %v10361
    %v10364 = vrot.slane %v10025, 1
    %v10365 = vsel %vm6726, %v10364, %v10363
    %v10366 = vrot.slane %v10027, 7
    %v10367 = vsel %vm6708, %v10366, %v10026
    %v10368 = vrot.slane %v10028, 6
    %v10369 = vsel %vm6711, %v10368, %v10367
    %v10370 = vrot.slane %v10029, 5
    %v10371 = vsel %vm6714, %v10370, %v10369
    %v10372 = vrot.slane %v10030, 4
    %v10373 = vsel %vm6717, %v10372, %v10371
    %v10374 = vrot.slane %v10031, 3
    %v10375 = vsel %vm6720, %v10374, %v10373
    %v10376 = vrot.slane %v10032, 2
    %v10377 = vsel %vm6723, %v10376, %v10375
    %v10378 = vrot.slane %v10033, 1
    %v10379 = vsel %vm6726, %v10378, %v10377
    %v10380 = vrot.slane %v10035, 7
    %v10381 = vsel %vm6708, %v10380, %v10034
    %v10382 = vrot.slane %v10036, 6
    %v10383 = vsel %vm6711, %v10382, %v10381
    %v10384 = vrot.slane %v10037, 5
    %v10385 = vsel %vm6714, %v10384, %v10383
    %v10386 = vrot.slane %v10038, 4
    %v10387 = vsel %vm6717, %v10386, %v10385
    %v10388 = vrot.slane %v10039, 3
    %v10389 = vsel %vm6720, %v10388, %v10387
    %v10390 = vrot.slane %v10040, 2
    %v10391 = vsel %vm6723, %v10390, %v10389
    %v10392 = vrot.slane %v10041, 1
    %v10393 = vsel %vm6726, %v10392, %v10391
    %10410 = vadd.xlane.f32.xlu0 %v10183
    %v10411 = vpop.xlane.xlu0 %10410
    %10412 = vadd.xlane.f32.xlu0 %v10197
    %v10413 = vpop.xlane.xlu0 %10412
    %10414 = vadd.xlane.f32.xlu0 %v10211
    %v10415 = vpop.xlane.xlu0 %10414
    %10416 = vadd.xlane.f32.xlu0 %v10225
    %v10417 = vpop.xlane.xlu0 %10416
    %10418 = vadd.xlane.f32.xlu0 %v10239
    %v10419 = vpop.xlane.xlu0 %10418
    %10420 = vadd.xlane.f32.xlu0 %v10253
    %v10421 = vpop.xlane.xlu0 %10420
    %10422 = vadd.xlane.f32.xlu0 %v10267
    %v10423 = vpop.xlane.xlu0 %10422
    %10424 = vadd.xlane.f32.xlu0 %v10281
    %v10425 = vpop.xlane.xlu0 %10424
    %10426 = vadd.xlane.f32.xlu0 %v10295
    %v10427 = vpop.xlane.xlu0 %10426
    %10428 = vadd.xlane.f32.xlu0 %v10309
    %v10429 = vpop.xlane.xlu0 %10428
    %10430 = vadd.xlane.f32.xlu0 %v10323
    %v10431 = vpop.xlane.xlu0 %10430
    %10432 = vadd.xlane.f32.xlu0 %v10337
    %v10433 = vpop.xlane.xlu0 %10432
    %10434 = vadd.xlane.f32.xlu0 %v10351
    %v10435 = vpop.xlane.xlu0 %10434
    %10436 = vadd.xlane.f32.xlu0 %v10365
    %v10437 = vpop.xlane.xlu0 %10436
    %10438 = vadd.xlane.f32.xlu0 %v10379
    %v10439 = vpop.xlane.xlu0 %10438
    %10440 = vadd.xlane.f32.xlu0 %v10393
    %v10441 = vpop.xlane.xlu0 %10440
    %v10442 = vrot.slane %v10411, 4
    %v10443 = vmax.f32 %v10411, %v10442
    %v10444 = vrot.slane %v10443, 2
    %v10445 = vmax.f32 %v10443, %v10444
    %v10446 = vrot.slane %v10445, 1
    %v10447 = vmax.f32 %v10445, %v10446
    %v10448 = vrot.slane %v10413, 4
    %v10449 = vmax.f32 %v10413, %v10448
    %v10450 = vrot.slane %v10449, 2
    %v10451 = vmax.f32 %v10449, %v10450
    %v10452 = vrot.slane %v10451, 1
    %v10453 = vmax.f32 %v10451, %v10452
    %v10454 = vrot.slane %v10415, 4
    %v10455 = vmax.f32 %v10415, %v10454
    %v10456 = vrot.slane %v10455, 2
    %v10457 = vmax.f32 %v10455, %v10456
    %v10458 = vrot.slane %v10457, 1
    %v10459 = vmax.f32 %v10457, %v10458
    %v10460 = vrot.slane %v10417, 4
    %v10461 = vmax.f32 %v10417, %v10460
    %v10462 = vrot.slane %v10461, 2
    %v10463 = vmax.f32 %v10461, %v10462
    %v10464 = vrot.slane %v10463, 1
    %v10465 = vmax.f32 %v10463, %v10464
    %v10466 = vrot.slane %v10419, 4
    %v10467 = vmax.f32 %v10419, %v10466
    %v10468 = vrot.slane %v10467, 2
    %v10469 = vmax.f32 %v10467, %v10468
    %v10470 = vrot.slane %v10469, 1
    %v10471 = vmax.f32 %v10469, %v10470
    %v10472 = vrot.slane %v10421, 4
    %v10473 = vmax.f32 %v10421, %v10472
    %v10474 = vrot.slane %v10473, 2
    %v10475 = vmax.f32 %v10473, %v10474
    %v10476 = vrot.slane %v10475, 1
    %v10477 = vmax.f32 %v10475, %v10476
    %v10478 = vrot.slane %v10423, 4
    %v10479 = vmax.f32 %v10423, %v10478
    %v10480 = vrot.slane %v10479, 2
    %v10481 = vmax.f32 %v10479, %v10480
    %v10482 = vrot.slane %v10481, 1
    %v10483 = vmax.f32 %v10481, %v10482
    %v10484 = vrot.slane %v10425, 4
    %v10485 = vmax.f32 %v10425, %v10484
    %v10486 = vrot.slane %v10485, 2
    %v10487 = vmax.f32 %v10485, %v10486
    %v10488 = vrot.slane %v10487, 1
    %v10489 = vmax.f32 %v10487, %v10488
    %v10490 = vrot.slane %v10427, 4
    %v10491 = vmax.f32 %v10427, %v10490
    %v10492 = vrot.slane %v10491, 2
    %v10493 = vmax.f32 %v10491, %v10492
    %v10494 = vrot.slane %v10493, 1
    %v10495 = vmax.f32 %v10493, %v10494
    %v10496 = vrot.slane %v10429, 4
    %v10497 = vmax.f32 %v10429, %v10496
    %v10498 = vrot.slane %v10497, 2
    %v10499 = vmax.f32 %v10497, %v10498
    %v10500 = vrot.slane %v10499, 1
    %v10501 = vmax.f32 %v10499, %v10500
    %v10502 = vrot.slane %v10431, 4
    %v10503 = vmax.f32 %v10431, %v10502
    %v10504 = vrot.slane %v10503, 2
    %v10505 = vmax.f32 %v10503, %v10504
    %v10506 = vrot.slane %v10505, 1
    %v10507 = vmax.f32 %v10505, %v10506
    %v10508 = vrot.slane %v10433, 4
    %v10509 = vmax.f32 %v10433, %v10508
    %v10510 = vrot.slane %v10509, 2
    %v10511 = vmax.f32 %v10509, %v10510
    %v10512 = vrot.slane %v10511, 1
    %v10513 = vmax.f32 %v10511, %v10512
    %v10514 = vrot.slane %v10435, 4
    %v10515 = vmax.f32 %v10435, %v10514
    %v10516 = vrot.slane %v10515, 2
    %v10517 = vmax.f32 %v10515, %v10516
    %v10518 = vrot.slane %v10517, 1
    %v10519 = vmax.f32 %v10517, %v10518
    %v10520 = vrot.slane %v10437, 4
    %v10521 = vmax.f32 %v10437, %v10520
    %v10522 = vrot.slane %v10521, 2
    %v10523 = vmax.f32 %v10521, %v10522
    %v10524 = vrot.slane %v10523, 1
    %v10525 = vmax.f32 %v10523, %v10524
    %v10526 = vrot.slane %v10439, 4
    %v10527 = vmax.f32 %v10439, %v10526
    %v10528 = vrot.slane %v10527, 2
    %v10529 = vmax.f32 %v10527, %v10528
    %v10530 = vrot.slane %v10529, 1
    %v10531 = vmax.f32 %v10529, %v10530
    %v10532 = vrot.slane %v10441, 4
    %v10533 = vmax.f32 %v10441, %v10532
    %v10534 = vrot.slane %v10533, 2
    %v10535 = vmax.f32 %v10533, %v10534
    %v10536 = vrot.slane %v10535, 1
    %v10537 = vmax.f32 %v10535, %v10536
    %v10538 = vsub.f32 %v10411, %v10447
    %v10539 = vsub.f32 %v10413, %v10453
    %v10540 = vsub.f32 %v10415, %v10459
    %v10541 = vsub.f32 %v10417, %v10465
    %v10542 = vsub.f32 %v10419, %v10471
    %v10543 = vsub.f32 %v10421, %v10477
    %v10544 = vsub.f32 %v10423, %v10483
    %v10545 = vsub.f32 %v10425, %v10489
    %v10546 = vsub.f32 %v10427, %v10495
    %v10547 = vsub.f32 %v10429, %v10501
    %v10548 = vsub.f32 %v10431, %v10507
    %v10549 = vsub.f32 %v10433, %v10513
    %v10550 = vsub.f32 %v10435, %v10519
    %v10551 = vsub.f32 %v10437, %v10525
    %v10552 = vsub.f32 %v10439, %v10531
    %v10553 = vsub.f32 %v10441, %v10537
    %v10554 = vmul.f32 %v10538, 1.442695
    %v10555 = vpow.pop %v10554
    %v10556 = vmul.f32 %v10539, 1.442695
    %v10557 = vpow.pop %v10556
    %v10558 = vmul.f32 %v10540, 1.442695
    %v10559 = vpow.pop %v10558
    %v10560 = vmul.f32 %v10541, 1.442695
    %v10561 = vpow.pop %v10560
    %v10562 = vmul.f32 %v10542, 1.442695
    %v10563 = vpow.pop %v10562
    %v10564 = vmul.f32 %v10543, 1.442695
    %v10565 = vpow.pop %v10564
    %v10566 = vmul.f32 %v10544, 1.442695
    %v10567 = vpow.pop %v10566
    %v10568 = vmul.f32 %v10545, 1.442695
    %v10569 = vpow.pop %v10568
    %v10570 = vmul.f32 %v10546, 1.442695
    %v10571 = vpow.pop %v10570
    %v10572 = vmul.f32 %v10547, 1.442695
    %v10573 = vpow.pop %v10572
    %v10574 = vmul.f32 %v10548, 1.442695
    %v10575 = vpow.pop %v10574
    %v10576 = vmul.f32 %v10549, 1.442695
    %v10577 = vpow.pop %v10576
    %v10578 = vmul.f32 %v10550, 1.442695
    %v10579 = vpow.pop %v10578
    %v10580 = vmul.f32 %v10551, 1.442695
    %v10581 = vpow.pop %v10580
    %v10582 = vmul.f32 %v10552, 1.442695
    %v10583 = vpow.pop %v10582
    %v10584 = vmul.f32 %v10553, 1.442695
    %v10585 = vpow.pop %v10584
    %v10586 = vrot.slane %v10555, 4
    %v10587 = vadd.f32 %v10555, %v10586
    %v10588 = vrot.slane %v10587, 2
    %v10589 = vadd.f32 %v10587, %v10588
    %v10590 = vrot.slane %v10589, 1
    %v10591 = vadd.f32 %v10589, %v10590
    %v10592 = vrot.slane %v10557, 4
    %v10593 = vadd.f32 %v10557, %v10592
    %v10594 = vrot.slane %v10593, 2
    %v10595 = vadd.f32 %v10593, %v10594
    %v10596 = vrot.slane %v10595, 1
    %v10597 = vadd.f32 %v10595, %v10596
    %v10598 = vrot.slane %v10559, 4
    %v10599 = vadd.f32 %v10559, %v10598
    %v10600 = vrot.slane %v10599, 2
    %v10601 = vadd.f32 %v10599, %v10600
    %v10602 = vrot.slane %v10601, 1
    %v10603 = vadd.f32 %v10601, %v10602
    %v10604 = vrot.slane %v10561, 4
    %v10605 = vadd.f32 %v10561, %v10604
    %v10606 = vrot.slane %v10605, 2
    %v10607 = vadd.f32 %v10605, %v10606
    %v10608 = vrot.slane %v10607, 1
    %v10609 = vadd.f32 %v10607, %v10608
    %v10610 = vrot.slane %v10563, 4
    %v10611 = vadd.f32 %v10563, %v10610
    %v10612 = vrot.slane %v10611, 2
    %v10613 = vadd.f32 %v10611, %v10612
    %v10614 = vrot.slane %v10613, 1
    %v10615 = vadd.f32 %v10613, %v10614
    %v10616 = vrot.slane %v10565, 4
    %v10617 = vadd.f32 %v10565, %v10616
    %v10618 = vrot.slane %v10617, 2
    %v10619 = vadd.f32 %v10617, %v10618
    %v10620 = vrot.slane %v10619, 1
    %v10621 = vadd.f32 %v10619, %v10620
    %v10622 = vrot.slane %v10567, 4
    %v10623 = vadd.f32 %v10567, %v10622
    %v10624 = vrot.slane %v10623, 2
    %v10625 = vadd.f32 %v10623, %v10624
    %v10626 = vrot.slane %v10625, 1
    %v10627 = vadd.f32 %v10625, %v10626
    %v10628 = vrot.slane %v10569, 4
    %v10629 = vadd.f32 %v10569, %v10628
    %v10630 = vrot.slane %v10629, 2
    %v10631 = vadd.f32 %v10629, %v10630
    %v10632 = vrot.slane %v10631, 1
    %v10633 = vadd.f32 %v10631, %v10632
    %v10634 = vrot.slane %v10571, 4
    %v10635 = vadd.f32 %v10571, %v10634
    %v10636 = vrot.slane %v10635, 2
    %v10637 = vadd.f32 %v10635, %v10636
    %v10638 = vrot.slane %v10637, 1
    %v10639 = vadd.f32 %v10637, %v10638
    %v10640 = vrot.slane %v10573, 4
    %v10641 = vadd.f32 %v10573, %v10640
    %v10642 = vrot.slane %v10641, 2
    %v10643 = vadd.f32 %v10641, %v10642
    %v10644 = vrot.slane %v10643, 1
    %v10645 = vadd.f32 %v10643, %v10644
    %v10646 = vrot.slane %v10575, 4
    %v10647 = vadd.f32 %v10575, %v10646
    %v10648 = vrot.slane %v10647, 2
    %v10649 = vadd.f32 %v10647, %v10648
    %v10650 = vrot.slane %v10649, 1
    %v10651 = vadd.f32 %v10649, %v10650
    %v10652 = vrot.slane %v10577, 4
    %v10653 = vadd.f32 %v10577, %v10652
    %v10654 = vrot.slane %v10653, 2
    %v10655 = vadd.f32 %v10653, %v10654
    %v10656 = vrot.slane %v10655, 1
    %v10657 = vadd.f32 %v10655, %v10656
    %v10658 = vrot.slane %v10579, 4
    %v10659 = vadd.f32 %v10579, %v10658
    %v10660 = vrot.slane %v10659, 2
    %v10661 = vadd.f32 %v10659, %v10660
    %v10662 = vrot.slane %v10661, 1
    %v10663 = vadd.f32 %v10661, %v10662
    %v10664 = vrot.slane %v10581, 4
    %v10665 = vadd.f32 %v10581, %v10664
    %v10666 = vrot.slane %v10665, 2
    %v10667 = vadd.f32 %v10665, %v10666
    %v10668 = vrot.slane %v10667, 1
    %v10669 = vadd.f32 %v10667, %v10668
    %v10670 = vrot.slane %v10583, 4
    %v10671 = vadd.f32 %v10583, %v10670
    %v10672 = vrot.slane %v10671, 2
    %v10673 = vadd.f32 %v10671, %v10672
    %v10674 = vrot.slane %v10673, 1
    %v10675 = vadd.f32 %v10673, %v10674
    %v10676 = vrot.slane %v10585, 4
    %v10677 = vadd.f32 %v10585, %v10676
    %v10678 = vrot.slane %v10677, 2
    %v10679 = vadd.f32 %v10677, %v10678
    %v10680 = vrot.slane %v10679, 1
    %v10681 = vadd.f32 %v10679, %v10680
    %v10682 = vrcp.pop %v10591
    %v10683 = vrcp.pop %v10597
    %v10684 = vrcp.pop %v10603
    %v10685 = vrcp.pop %v10609
    %v10686 = vrcp.pop %v10615
    %v10687 = vrcp.pop %v10621
    %v10688 = vrcp.pop %v10627
    %v10689 = vrcp.pop %v10633
    %v10690 = vrcp.pop %v10639
    %v10691 = vrcp.pop %v10645
    %v10692 = vrcp.pop %v10651
    %v10693 = vrcp.pop %v10657
    %v10694 = vrcp.pop %v10663
    %v10695 = vrcp.pop %v10669
    %v10696 = vrcp.pop %v10675
    %v10697 = vrcp.pop %v10681
    %v10698 = vmul.f32 %v10555, %v10682
    %v10699 = vmul.f32 %v10557, %v10683
    %v10700 = vmul.f32 %v10559, %v10684
    %v10701 = vmul.f32 %v10561, %v10685
    %v10702 = vmul.f32 %v10563, %v10686
    %v10703 = vmul.f32 %v10565, %v10687
    %v10704 = vmul.f32 %v10567, %v10688
    %v10705 = vmul.f32 %v10569, %v10689
    %v10706 = vmul.f32 %v10571, %v10690
    %v10707 = vmul.f32 %v10573, %v10691
    %v10708 = vmul.f32 %v10575, %v10692
    %v10709 = vmul.f32 %v10577, %v10693
    %v10710 = vmul.f32 %v10579, %v10694
    %v10711 = vmul.f32 %v10581, %v10695
    %v10712 = vmul.f32 %v10583, %v10696
    %v10713 = vmul.f32 %v10585, %v10697
    %v10730 = vrot.slane %v10698, 1
    %v10731 = vrot.slane %v10698, 2
    %v10732 = vrot.slane %v10698, 3
    %v10733 = vrot.slane %v10698, 4
    %v10734 = vrot.slane %v10698, 5
    %v10735 = vrot.slane %v10698, 6
    %v10736 = vrot.slane %v10698, 7
    %v10737 = vrot.slane %v10699, 1
    %v10738 = vrot.slane %v10699, 2
    %v10739 = vrot.slane %v10699, 3
    %v10740 = vrot.slane %v10699, 4
    %v10741 = vrot.slane %v10699, 5
    %v10742 = vrot.slane %v10699, 6
    %v10743 = vrot.slane %v10699, 7
    %v10744 = vrot.slane %v10700, 1
    %v10745 = vrot.slane %v10700, 2
    %v10746 = vrot.slane %v10700, 3
    %v10747 = vrot.slane %v10700, 4
    %v10748 = vrot.slane %v10700, 5
    %v10749 = vrot.slane %v10700, 6
    %v10750 = vrot.slane %v10700, 7
    %v10751 = vrot.slane %v10701, 1
    %v10752 = vrot.slane %v10701, 2
    %v10753 = vrot.slane %v10701, 3
    %v10754 = vrot.slane %v10701, 4
    %v10755 = vrot.slane %v10701, 5
    %v10756 = vrot.slane %v10701, 6
    %v10757 = vrot.slane %v10701, 7
    %v10758 = vrot.slane %v10702, 1
    %v10759 = vrot.slane %v10702, 2
    %v10760 = vrot.slane %v10702, 3
    %v10761 = vrot.slane %v10702, 4
    %v10762 = vrot.slane %v10702, 5
    %v10763 = vrot.slane %v10702, 6
    %v10764 = vrot.slane %v10702, 7
    %v10765 = vrot.slane %v10703, 1
    %v10766 = vrot.slane %v10703, 2
    %v10767 = vrot.slane %v10703, 3
    %v10768 = vrot.slane %v10703, 4
    %v10769 = vrot.slane %v10703, 5
    %v10770 = vrot.slane %v10703, 6
    %v10771 = vrot.slane %v10703, 7
    %v10772 = vrot.slane %v10704, 1
    %v10773 = vrot.slane %v10704, 2
    %v10774 = vrot.slane %v10704, 3
    %v10775 = vrot.slane %v10704, 4
    %v10776 = vrot.slane %v10704, 5
    %v10777 = vrot.slane %v10704, 6
    %v10778 = vrot.slane %v10704, 7
    %v10779 = vrot.slane %v10705, 1
    %v10780 = vrot.slane %v10705, 2
    %v10781 = vrot.slane %v10705, 3
    %v10782 = vrot.slane %v10705, 4
    %v10783 = vrot.slane %v10705, 5
    %v10784 = vrot.slane %v10705, 6
    %v10785 = vrot.slane %v10705, 7
    %v10786 = vrot.slane %v10706, 1
    %v10787 = vrot.slane %v10706, 2
    %v10788 = vrot.slane %v10706, 3
    %v10789 = vrot.slane %v10706, 4
    %v10790 = vrot.slane %v10706, 5
    %v10791 = vrot.slane %v10706, 6
    %v10792 = vrot.slane %v10706, 7
    %v10793 = vrot.slane %v10707, 1
    %v10794 = vrot.slane %v10707, 2
    %v10795 = vrot.slane %v10707, 3
    %v10796 = vrot.slane %v10707, 4
    %v10797 = vrot.slane %v10707, 5
    %v10798 = vrot.slane %v10707, 6
    %v10799 = vrot.slane %v10707, 7
    %v10800 = vrot.slane %v10708, 1
    %v10801 = vrot.slane %v10708, 2
    %v10802 = vrot.slane %v10708, 3
    %v10803 = vrot.slane %v10708, 4
    %v10804 = vrot.slane %v10708, 5
    %v10805 = vrot.slane %v10708, 6
    %v10806 = vrot.slane %v10708, 7
    %v10807 = vrot.slane %v10709, 1
    %v10808 = vrot.slane %v10709, 2
    %v10809 = vrot.slane %v10709, 3
    %v10810 = vrot.slane %v10709, 4
    %v10811 = vrot.slane %v10709, 5
    %v10812 = vrot.slane %v10709, 6
    %v10813 = vrot.slane %v10709, 7
    %v10814 = vrot.slane %v10710, 1
    %v10815 = vrot.slane %v10710, 2
    %v10816 = vrot.slane %v10710, 3
    %v10817 = vrot.slane %v10710, 4
    %v10818 = vrot.slane %v10710, 5
    %v10819 = vrot.slane %v10710, 6
    %v10820 = vrot.slane %v10710, 7
    %v10821 = vrot.slane %v10711, 1
    %v10822 = vrot.slane %v10711, 2
    %v10823 = vrot.slane %v10711, 3
    %v10824 = vrot.slane %v10711, 4
    %v10825 = vrot.slane %v10711, 5
    %v10826 = vrot.slane %v10711, 6
    %v10827 = vrot.slane %v10711, 7
    %v10828 = vrot.slane %v10712, 1
    %v10829 = vrot.slane %v10712, 2
    %v10830 = vrot.slane %v10712, 3
    %v10831 = vrot.slane %v10712, 4
    %v10832 = vrot.slane %v10712, 5
    %v10833 = vrot.slane %v10712, 6
    %v10834 = vrot.slane %v10712, 7
    %v10835 = vrot.slane %v10713, 1
    %v10836 = vrot.slane %v10713, 2
    %v10837 = vrot.slane %v10713, 3
    %v10838 = vrot.slane %v10713, 4
    %v10839 = vrot.slane %v10713, 5
    %v10840 = vrot.slane %v10713, 6
    %v10841 = vrot.slane %v10713, 7
    %v10970 = vmul.f32 %v3306, %v10698
    %v10971 = vmul.f32 %v3330, %v10730
    %v10972 = vmul.f32 %v3354, %v10731
    %v10973 = vmul.f32 %v3378, %v10732
    %v10974 = vmul.f32 %v3402, %v10733
    %v10975 = vmul.f32 %v3426, %v10734
    %v10976 = vmul.f32 %v3450, %v10735
    %v10977 = vmul.f32 %v3474, %v10736
    %v10978 = vmul.f32 %v3504, %v10699
    %v10979 = vmul.f32 %v3528, %v10737
    %v10980 = vmul.f32 %v3552, %v10738
    %v10981 = vmul.f32 %v3576, %v10739
    %v10982 = vmul.f32 %v3600, %v10740
    %v10983 = vmul.f32 %v3624, %v10741
    %v10984 = vmul.f32 %v3648, %v10742
    %v10985 = vmul.f32 %v3672, %v10743
    %v10986 = vmul.f32 %v3702, %v10700
    %v10987 = vmul.f32 %v3726, %v10744
    %v10988 = vmul.f32 %v3750, %v10745
    %v10989 = vmul.f32 %v3774, %v10746
    %v10990 = vmul.f32 %v3798, %v10747
    %v10991 = vmul.f32 %v3822, %v10748
    %v10992 = vmul.f32 %v3846, %v10749
    %v10993 = vmul.f32 %v3870, %v10750
    %v10994 = vmul.f32 %v3900, %v10701
    %v10995 = vmul.f32 %v3924, %v10751
    %v10996 = vmul.f32 %v3948, %v10752
    %v10997 = vmul.f32 %v3972, %v10753
    %v10998 = vmul.f32 %v3996, %v10754
    %v10999 = vmul.f32 %v4020, %v10755
    %v11000 = vmul.f32 %v4044, %v10756
    %v11001 = vmul.f32 %v4068, %v10757
    %v11002 = vmul.f32 %v4098, %v10702
    %v11003 = vmul.f32 %v4122, %v10758
    %v11004 = vmul.f32 %v4146, %v10759
    %v11005 = vmul.f32 %v4170, %v10760
    %v11006 = vmul.f32 %v4194, %v10761
    %v11007 = vmul.f32 %v4218, %v10762
    %v11008 = vmul.f32 %v4242, %v10763
    %v11009 = vmul.f32 %v4266, %v10764
    %v11010 = vmul.f32 %v4296, %v10703
    %v11011 = vmul.f32 %v4320, %v10765
    %v11012 = vmul.f32 %v4344, %v10766
    %v11013 = vmul.f32 %v4368, %v10767
    %v11014 = vmul.f32 %v4392, %v10768
    %v11015 = vmul.f32 %v4416, %v10769
    %v11016 = vmul.f32 %v4440, %v10770
    %v11017 = vmul.f32 %v4464, %v10771
    %v11018 = vmul.f32 %v4494, %v10704
    %v11019 = vmul.f32 %v4518, %v10772
    %v11020 = vmul.f32 %v4542, %v10773
    %v11021 = vmul.f32 %v4566, %v10774
    %v11022 = vmul.f32 %v4590, %v10775
    %v11023 = vmul.f32 %v4614, %v10776
    %v11024 = vmul.f32 %v4638, %v10777
    %v11025 = vmul.f32 %v4662, %v10778
    %v11026 = vmul.f32 %v4692, %v10705
    %v11027 = vmul.f32 %v4716, %v10779
    %v11028 = vmul.f32 %v4740, %v10780
    %v11029 = vmul.f32 %v4764, %v10781
    %v11030 = vmul.f32 %v4788, %v10782
    %v11031 = vmul.f32 %v4812, %v10783
    %v11032 = vmul.f32 %v4836, %v10784
    %v11033 = vmul.f32 %v4860, %v10785
    %v11034 = vmul.f32 %v4890, %v10706
    %v11035 = vmul.f32 %v4914, %v10786
    %v11036 = vmul.f32 %v4938, %v10787
    %v11037 = vmul.f32 %v4962, %v10788
    %v11038 = vmul.f32 %v4986, %v10789
    %v11039 = vmul.f32 %v5010, %v10790
    %v11040 = vmul.f32 %v5034, %v10791
    %v11041 = vmul.f32 %v5058, %v10792
    %v11042 = vmul.f32 %v5088, %v10707
    %v11043 = vmul.f32 %v5112, %v10793
    %v11044 = vmul.f32 %v5136, %v10794
    %v11045 = vmul.f32 %v5160, %v10795
    %v11046 = vmul.f32 %v5184, %v10796
    %v11047 = vmul.f32 %v5208, %v10797
    %v11048 = vmul.f32 %v5232, %v10798
    %v11049 = vmul.f32 %v5256, %v10799
    %v11050 = vmul.f32 %v5286, %v10708
    %v11051 = vmul.f32 %v5310, %v10800
    %v11052 = vmul.f32 %v5334, %v10801
    %v11053 = vmul.f32 %v5358, %v10802
    %v11054 = vmul.f32 %v5382, %v10803
    %v11055 = vmul.f32 %v5406, %v10804
    %v11056 = vmul.f32 %v5430, %v10805
    %v11057 = vmul.f32 %v5454, %v10806
    %v11058 = vmul.f32 %v5484, %v10709
    %v11059 = vmul.f32 %v5508, %v10807
    %v11060 = vmul.f32 %v5532, %v10808
    %v11061 = vmul.f32 %v5556, %v10809
    %v11062 = vmul.f32 %v5580, %v10810
    %v11063 = vmul.f32 %v5604, %v10811
    %v11064 = vmul.f32 %v5628, %v10812
    %v11065 = vmul.f32 %v5652, %v10813
    %v11066 = vmul.f32 %v5682, %v10710
    %v11067 = vmul.f32 %v5706, %v10814
    %v11068 = vmul.f32 %v5730, %v10815
    %v11069 = vmul.f32 %v5754, %v10816
    %v11070 = vmul.f32 %v5778, %v10817
    %v11071 = vmul.f32 %v5802, %v10818
    %v11072 = vmul.f32 %v5826, %v10819
    %v11073 = vmul.f32 %v5850, %v10820
    %v11074 = vmul.f32 %v5880, %v10711
    %v11075 = vmul.f32 %v5904, %v10821
    %v11076 = vmul.f32 %v5928, %v10822
    %v11077 = vmul.f32 %v5952, %v10823
    %v11078 = vmul.f32 %v5976, %v10824
    %v11079 = vmul.f32 %v6000, %v10825
    %v11080 = vmul.f32 %v6024, %v10826
    %v11081 = vmul.f32 %v6048, %v10827
    %v11082 = vmul.f32 %v6078, %v10712
    %v11083 = vmul.f32 %v6102, %v10828
    %v11084 = vmul.f32 %v6126, %v10829
    %v11085 = vmul.f32 %v6150, %v10830
    %v11086 = vmul.f32 %v6174, %v10831
    %v11087 = vmul.f32 %v6198, %v10832
    %v11088 = vmul.f32 %v6222, %v10833
    %v11089 = vmul.f32 %v6246, %v10834
    %v11090 = vmul.f32 %v6276, %v10713
    %v11091 = vmul.f32 %v6300, %v10835
    %v11092 = vmul.f32 %v6324, %v10836
    %v11093 = vmul.f32 %v6348, %v10837
    %v11094 = vmul.f32 %v6372, %v10838
    %v11095 = vmul.f32 %v6396, %v10839
    %v11096 = vmul.f32 %v6420, %v10840
    %v11097 = vmul.f32 %v6444, %v10841
    %v11226 = vrot.slane %v10971, 7
    %v11227 = vsel %vm6708, %v11226, %v10970
    %v11228 = vrot.slane %v10972, 6
    %v11229 = vsel %vm6711, %v11228, %v11227
    %v11230 = vrot.slane %v10973, 5
    %v11231 = vsel %vm6714, %v11230, %v11229
    %v11232 = vrot.slane %v10974, 4
    %v11233 = vsel %vm6717, %v11232, %v11231
    %v11234 = vrot.slane %v10975, 3
    %v11235 = vsel %vm6720, %v11234, %v11233
    %v11236 = vrot.slane %v10976, 2
    %v11237 = vsel %vm6723, %v11236, %v11235
    %v11238 = vrot.slane %v10977, 1
    %v11239 = vsel %vm6726, %v11238, %v11237
    %v11240 = vrot.slane %v10979, 7
    %v11241 = vsel %vm6708, %v11240, %v10978
    %v11242 = vrot.slane %v10980, 6
    %v11243 = vsel %vm6711, %v11242, %v11241
    %v11244 = vrot.slane %v10981, 5
    %v11245 = vsel %vm6714, %v11244, %v11243
    %v11246 = vrot.slane %v10982, 4
    %v11247 = vsel %vm6717, %v11246, %v11245
    %v11248 = vrot.slane %v10983, 3
    %v11249 = vsel %vm6720, %v11248, %v11247
    %v11250 = vrot.slane %v10984, 2
    %v11251 = vsel %vm6723, %v11250, %v11249
    %v11252 = vrot.slane %v10985, 1
    %v11253 = vsel %vm6726, %v11252, %v11251
    %v11254 = vrot.slane %v10987, 7
    %v11255 = vsel %vm6708, %v11254, %v10986
    %v11256 = vrot.slane %v10988, 6
    %v11257 = vsel %vm6711, %v11256, %v11255
    %v11258 = vrot.slane %v10989, 5
    %v11259 = vsel %vm6714, %v11258, %v11257
    %v11260 = vrot.slane %v10990, 4
    %v11261 = vsel %vm6717, %v11260, %v11259
    %v11262 = vrot.slane %v10991, 3
    %v11263 = vsel %vm6720, %v11262, %v11261
    %v11264 = vrot.slane %v10992, 2
    %v11265 = vsel %vm6723, %v11264, %v11263
    %v11266 = vrot.slane %v10993, 1
    %v11267 = vsel %vm6726, %v11266, %v11265
    %v11268 = vrot.slane %v10995, 7
    %v11269 = vsel %vm6708, %v11268, %v10994
    %v11270 = vrot.slane %v10996, 6
    %v11271 = vsel %vm6711, %v11270, %v11269
    %v11272 = vrot.slane %v10997, 5
    %v11273 = vsel %vm6714, %v11272, %v11271
    %v11274 = vrot.slane %v10998, 4
    %v11275 = vsel %vm6717, %v11274, %v11273
    %v11276 = vrot.slane %v10999, 3
    %v11277 = vsel %vm6720, %v11276, %v11275
    %v11278 = vrot.slane %v11000, 2
    %v11279 = vsel %vm6723, %v11278, %v11277
    %v11280 = vrot.slane %v11001, 1
    %v11281 = vsel %vm6726, %v11280, %v11279
    %v11282 = vrot.slane %v11003, 7
    %v11283 = vsel %vm6708, %v11282, %v11002
    %v11284 = vrot.slane %v11004, 6
    %v11285 = vsel %vm6711, %v11284, %v11283
    %v11286 = vrot.slane %v11005, 5
    %v11287 = vsel %vm6714, %v11286, %v11285
    %v11288 = vrot.slane %v11006, 4
    %v11289 = vsel %vm6717, %v11288, %v11287
    %v11290 = vrot.slane %v11007, 3
    %v11291 = vsel %vm6720, %v11290, %v11289
    %v11292 = vrot.slane %v11008, 2
    %v11293 = vsel %vm6723, %v11292, %v11291
    %v11294 = vrot.slane %v11009, 1
    %v11295 = vsel %vm6726, %v11294, %v11293
    %v11296 = vrot.slane %v11011, 7
    %v11297 = vsel %vm6708, %v11296, %v11010
    %v11298 = vrot.slane %v11012, 6
    %v11299 = vsel %vm6711, %v11298, %v11297
    %v11300 = vrot.slane %v11013, 5
    %v11301 = vsel %vm6714, %v11300, %v11299
    %v11302 = vrot.slane %v11014, 4
    %v11303 = vsel %vm6717, %v11302, %v11301
    %v11304 = vrot.slane %v11015, 3
    %v11305 = vsel %vm6720, %v11304, %v11303
    %v11306 = vrot.slane %v11016, 2
    %v11307 = vsel %vm6723, %v11306, %v11305
    %v11308 = vrot.slane %v11017, 1
    %v11309 = vsel %vm6726, %v11308, %v11307
    %v11310 = vrot.slane %v11019, 7
    %v11311 = vsel %vm6708, %v11310, %v11018
    %v11312 = vrot.slane %v11020, 6
    %v11313 = vsel %vm6711, %v11312, %v11311
    %v11314 = vrot.slane %v11021, 5
    %v11315 = vsel %vm6714, %v11314, %v11313
    %v11316 = vrot.slane %v11022, 4
    %v11317 = vsel %vm6717, %v11316, %v11315
    %v11318 = vrot.slane %v11023, 3
    %v11319 = vsel %vm6720, %v11318, %v11317
    %v11320 = vrot.slane %v11024, 2
    %v11321 = vsel %vm6723, %v11320, %v11319
    %v11322 = vrot.slane %v11025, 1
    %v11323 = vsel %vm6726, %v11322, %v11321
    %v11324 = vrot.slane %v11027, 7
    %v11325 = vsel %vm6708, %v11324, %v11026
    %v11326 = vrot.slane %v11028, 6
    %v11327 = vsel %vm6711, %v11326, %v11325
    %v11328 = vrot.slane %v11029, 5
    %v11329 = vsel %vm6714, %v11328, %v11327
    %v11330 = vrot.slane %v11030, 4
    %v11331 = vsel %vm6717, %v11330, %v11329
    %v11332 = vrot.slane %v11031, 3
    %v11333 = vsel %vm6720, %v11332, %v11331
    %v11334 = vrot.slane %v11032, 2
    %v11335 = vsel %vm6723, %v11334, %v11333
    %v11336 = vrot.slane %v11033, 1
    %v11337 = vsel %vm6726, %v11336, %v11335
    %v11338 = vrot.slane %v11035, 7
    %v11339 = vsel %vm6708, %v11338, %v11034
    %v11340 = vrot.slane %v11036, 6
    %v11341 = vsel %vm6711, %v11340, %v11339
    %v11342 = vrot.slane %v11037, 5
    %v11343 = vsel %vm6714, %v11342, %v11341
    %v11344 = vrot.slane %v11038, 4
    %v11345 = vsel %vm6717, %v11344, %v11343
    %v11346 = vrot.slane %v11039, 3
    %v11347 = vsel %vm6720, %v11346, %v11345
    %v11348 = vrot.slane %v11040, 2
    %v11349 = vsel %vm6723, %v11348, %v11347
    %v11350 = vrot.slane %v11041, 1
    %v11351 = vsel %vm6726, %v11350, %v11349
    %v11352 = vrot.slane %v11043, 7
    %v11353 = vsel %vm6708, %v11352, %v11042
    %v11354 = vrot.slane %v11044, 6
    %v11355 = vsel %vm6711, %v11354, %v11353
    %v11356 = vrot.slane %v11045, 5
    %v11357 = vsel %vm6714, %v11356, %v11355
    %v11358 = vrot.slane %v11046, 4
    %v11359 = vsel %vm6717, %v11358, %v11357
    %v11360 = vrot.slane %v11047, 3
    %v11361 = vsel %vm6720, %v11360, %v11359
    %v11362 = vrot.slane %v11048, 2
    %v11363 = vsel %vm6723, %v11362, %v11361
    %v11364 = vrot.slane %v11049, 1
    %v11365 = vsel %vm6726, %v11364, %v11363
    %v11366 = vrot.slane %v11051, 7
    %v11367 = vsel %vm6708, %v11366, %v11050
    %v11368 = vrot.slane %v11052, 6
    %v11369 = vsel %vm6711, %v11368, %v11367
    %v11370 = vrot.slane %v11053, 5
    %v11371 = vsel %vm6714, %v11370, %v11369
    %v11372 = vrot.slane %v11054, 4
    %v11373 = vsel %vm6717, %v11372, %v11371
    %v11374 = vrot.slane %v11055, 3
    %v11375 = vsel %vm6720, %v11374, %v11373
    %v11376 = vrot.slane %v11056, 2
    %v11377 = vsel %vm6723, %v11376, %v11375
    %v11378 = vrot.slane %v11057, 1
    %v11379 = vsel %vm6726, %v11378, %v11377
    %v11380 = vrot.slane %v11059, 7
    %v11381 = vsel %vm6708, %v11380, %v11058
    %v11382 = vrot.slane %v11060, 6
    %v11383 = vsel %vm6711, %v11382, %v11381
    %v11384 = vrot.slane %v11061, 5
    %v11385 = vsel %vm6714, %v11384, %v11383
    %v11386 = vrot.slane %v11062, 4
    %v11387 = vsel %vm6717, %v11386, %v11385
    %v11388 = vrot.slane %v11063, 3
    %v11389 = vsel %vm6720, %v11388, %v11387
    %v11390 = vrot.slane %v11064, 2
    %v11391 = vsel %vm6723, %v11390, %v11389
    %v11392 = vrot.slane %v11065, 1
    %v11393 = vsel %vm6726, %v11392, %v11391
    %v11394 = vrot.slane %v11067, 7
    %v11395 = vsel %vm6708, %v11394, %v11066
    %v11396 = vrot.slane %v11068, 6
    %v11397 = vsel %vm6711, %v11396, %v11395
    %v11398 = vrot.slane %v11069, 5
    %v11399 = vsel %vm6714, %v11398, %v11397
    %v11400 = vrot.slane %v11070, 4
    %v11401 = vsel %vm6717, %v11400, %v11399
    %v11402 = vrot.slane %v11071, 3
    %v11403 = vsel %vm6720, %v11402, %v11401
    %v11404 = vrot.slane %v11072, 2
    %v11405 = vsel %vm6723, %v11404, %v11403
    %v11406 = vrot.slane %v11073, 1
    %v11407 = vsel %vm6726, %v11406, %v11405
    %v11408 = vrot.slane %v11075, 7
    %v11409 = vsel %vm6708, %v11408, %v11074
    %v11410 = vrot.slane %v11076, 6
    %v11411 = vsel %vm6711, %v11410, %v11409
    %v11412 = vrot.slane %v11077, 5
    %v11413 = vsel %vm6714, %v11412, %v11411
    %v11414 = vrot.slane %v11078, 4
    %v11415 = vsel %vm6717, %v11414, %v11413
    %v11416 = vrot.slane %v11079, 3
    %v11417 = vsel %vm6720, %v11416, %v11415
    %v11418 = vrot.slane %v11080, 2
    %v11419 = vsel %vm6723, %v11418, %v11417
    %v11420 = vrot.slane %v11081, 1
    %v11421 = vsel %vm6726, %v11420, %v11419
    %v11422 = vrot.slane %v11083, 7
    %v11423 = vsel %vm6708, %v11422, %v11082
    %v11424 = vrot.slane %v11084, 6
    %v11425 = vsel %vm6711, %v11424, %v11423
    %v11426 = vrot.slane %v11085, 5
    %v11427 = vsel %vm6714, %v11426, %v11425
    %v11428 = vrot.slane %v11086, 4
    %v11429 = vsel %vm6717, %v11428, %v11427
    %v11430 = vrot.slane %v11087, 3
    %v11431 = vsel %vm6720, %v11430, %v11429
    %v11432 = vrot.slane %v11088, 2
    %v11433 = vsel %vm6723, %v11432, %v11431
    %v11434 = vrot.slane %v11089, 1
    %v11435 = vsel %vm6726, %v11434, %v11433
    %v11436 = vrot.slane %v11091, 7
    %v11437 = vsel %vm6708, %v11436, %v11090
    %v11438 = vrot.slane %v11092, 6
    %v11439 = vsel %vm6711, %v11438, %v11437
    %v11440 = vrot.slane %v11093, 5
    %v11441 = vsel %vm6714, %v11440, %v11439
    %v11442 = vrot.slane %v11094, 4
    %v11443 = vsel %vm6717, %v11442, %v11441
    %v11444 = vrot.slane %v11095, 3
    %v11445 = vsel %vm6720, %v11444, %v11443
    %v11446 = vrot.slane %v11096, 2
    %v11447 = vsel %vm6723, %v11446, %v11445
    %v11448 = vrot.slane %v11097, 1
    %v11449 = vsel %vm6726, %v11448, %v11447
    %v11466 = vrot.slane %v11239, 4
    %v11467 = vadd.f32 %v11239, %v11466
    %v11468 = vrot.slane %v11467, 2
    %v11469 = vadd.f32 %v11467, %v11468
    %v11470 = vrot.slane %v11469, 1
    %v11471 = vadd.f32 %v11469, %v11470
    %v11472 = vrot.slane %v11253, 4
    %v11473 = vadd.f32 %v11253, %v11472
    %v11474 = vrot.slane %v11473, 2
    %v11475 = vadd.f32 %v11473, %v11474
    %v11476 = vrot.slane %v11475, 1
    %v11477 = vadd.f32 %v11475, %v11476
    %v11478 = vrot.slane %v11267, 4
    %v11479 = vadd.f32 %v11267, %v11478
    %v11480 = vrot.slane %v11479, 2
    %v11481 = vadd.f32 %v11479, %v11480
    %v11482 = vrot.slane %v11481, 1
    %v11483 = vadd.f32 %v11481, %v11482
    %v11484 = vrot.slane %v11281, 4
    %v11485 = vadd.f32 %v11281, %v11484
    %v11486 = vrot.slane %v11485, 2
    %v11487 = vadd.f32 %v11485, %v11486
    %v11488 = vrot.slane %v11487, 1
    %v11489 = vadd.f32 %v11487, %v11488
    %v11490 = vrot.slane %v11295, 4
    %v11491 = vadd.f32 %v11295, %v11490
    %v11492 = vrot.slane %v11491, 2
    %v11493 = vadd.f32 %v11491, %v11492
    %v11494 = vrot.slane %v11493, 1
    %v11495 = vadd.f32 %v11493, %v11494
    %v11496 = vrot.slane %v11309, 4
    %v11497 = vadd.f32 %v11309, %v11496
    %v11498 = vrot.slane %v11497, 2
    %v11499 = vadd.f32 %v11497, %v11498
    %v11500 = vrot.slane %v11499, 1
    %v11501 = vadd.f32 %v11499, %v11500
    %v11502 = vrot.slane %v11323, 4
    %v11503 = vadd.f32 %v11323, %v11502
    %v11504 = vrot.slane %v11503, 2
    %v11505 = vadd.f32 %v11503, %v11504
    %v11506 = vrot.slane %v11505, 1
    %v11507 = vadd.f32 %v11505, %v11506
    %v11508 = vrot.slane %v11337, 4
    %v11509 = vadd.f32 %v11337, %v11508
    %v11510 = vrot.slane %v11509, 2
    %v11511 = vadd.f32 %v11509, %v11510
    %v11512 = vrot.slane %v11511, 1
    %v11513 = vadd.f32 %v11511, %v11512
    %v11514 = vrot.slane %v11351, 4
    %v11515 = vadd.f32 %v11351, %v11514
    %v11516 = vrot.slane %v11515, 2
    %v11517 = vadd.f32 %v11515, %v11516
    %v11518 = vrot.slane %v11517, 1
    %v11519 = vadd.f32 %v11517, %v11518
    %v11520 = vrot.slane %v11365, 4
    %v11521 = vadd.f32 %v11365, %v11520
    %v11522 = vrot.slane %v11521, 2
    %v11523 = vadd.f32 %v11521, %v11522
    %v11524 = vrot.slane %v11523, 1
    %v11525 = vadd.f32 %v11523, %v11524
    %v11526 = vrot.slane %v11379, 4
    %v11527 = vadd.f32 %v11379, %v11526
    %v11528 = vrot.slane %v11527, 2
    %v11529 = vadd.f32 %v11527, %v11528
    %v11530 = vrot.slane %v11529, 1
    %v11531 = vadd.f32 %v11529, %v11530
    %v11532 = vrot.slane %v11393, 4
    %v11533 = vadd.f32 %v11393, %v11532
    %v11534 = vrot.slane %v11533, 2
    %v11535 = vadd.f32 %v11533, %v11534
    %v11536 = vrot.slane %v11535, 1
    %v11537 = vadd.f32 %v11535, %v11536
    %v11538 = vrot.slane %v11407, 4
    %v11539 = vadd.f32 %v11407, %v11538
    %v11540 = vrot.slane %v11539, 2
    %v11541 = vadd.f32 %v11539, %v11540
    %v11542 = vrot.slane %v11541, 1
    %v11543 = vadd.f32 %v11541, %v11542
    %v11544 = vrot.slane %v11421, 4
    %v11545 = vadd.f32 %v11421, %v11544
    %v11546 = vrot.slane %v11545, 2
    %v11547 = vadd.f32 %v11545, %v11546
    %v11548 = vrot.slane %v11547, 1
    %v11549 = vadd.f32 %v11547, %v11548
    %v11550 = vrot.slane %v11435, 4
    %v11551 = vadd.f32 %v11435, %v11550
    %v11552 = vrot.slane %v11551, 2
    %v11553 = vadd.f32 %v11551, %v11552
    %v11554 = vrot.slane %v11553, 1
    %v11555 = vadd.f32 %v11553, %v11554
    %v11556 = vrot.slane %v11449, 4
    %v11557 = vadd.f32 %v11449, %v11556
    %v11558 = vrot.slane %v11557, 2
    %v11559 = vadd.f32 %v11557, %v11558
    %v11560 = vrot.slane %v11559, 1
    %v11561 = vadd.f32 %v11559, %v11560
    %v11562 = vadd.f32 %v9834, %v11471
    %v11563 = vadd.f32 %v9835, %v11477
    %v11564 = vadd.f32 %v9836, %v11483
    %v11565 = vadd.f32 %v9837, %v11489
    %v11566 = vadd.f32 %v9838, %v11495
    %v11567 = vadd.f32 %v9839, %v11501
    %v11568 = vadd.f32 %v9840, %v11507
    %v11569 = vadd.f32 %v9841, %v11513
    %v11570 = vadd.f32 %v9842, %v11519
    %v11571 = vadd.f32 %v9843, %v11525
    %v11572 = vadd.f32 %v9844, %v11531
    %v11573 = vadd.f32 %v9845, %v11537
    %v11574 = vadd.f32 %v9846, %v11543
    %v11575 = vadd.f32 %v9847, %v11549
    %v11576 = vadd.f32 %v9848, %v11555
    %v11577 = vadd.f32 %v9849, %v11561
    %v11578 = vpack.c.bf16 %v11562, %v11562
    %v11579 = vpack.c.bf16 %v11563, %v11563
    %v11580 = vpack.c.bf16 %v11564, %v11564
    %v11581 = vpack.c.bf16 %v11565, %v11565
    %v11582 = vpack.c.bf16 %v11566, %v11566
    %v11583 = vpack.c.bf16 %v11567, %v11567
    %v11584 = vpack.c.bf16 %v11568, %v11568
    %v11585 = vpack.c.bf16 %v11569, %v11569
    %v11586 = vpack.c.bf16 %v11570, %v11570
    %v11587 = vpack.c.bf16 %v11571, %v11571
    %v11588 = vpack.c.bf16 %v11572, %v11572
    %v11589 = vpack.c.bf16 %v11573, %v11573
    %v11590 = vpack.c.bf16 %v11574, %v11574
    %v11591 = vpack.c.bf16 %v11575, %v11575
    %v11592 = vpack.c.bf16 %v11576, %v11576
    %v11593 = vpack.c.bf16 %v11577, %v11577
    %v11610 = vunpack.c.l.b16 %v11578
    %v11611 = vunpack.c.l.b16 %v11579
    %v11612 = vunpack.c.l.b16 %v11580
    %v11613 = vunpack.c.l.b16 %v11581
    %v11614 = vunpack.c.l.b16 %v11582
    %v11615 = vunpack.c.l.b16 %v11583
    %v11616 = vunpack.c.l.b16 %v11584
    %v11617 = vunpack.c.l.b16 %v11585
    %v11618 = vunpack.c.l.b16 %v11586
    %v11619 = vunpack.c.l.b16 %v11587
    %v11620 = vunpack.c.l.b16 %v11588
    %v11621 = vunpack.c.l.b16 %v11589
    %v11622 = vunpack.c.l.b16 %v11590
    %v11623 = vunpack.c.l.b16 %v11591
    %v11624 = vunpack.c.l.b16 %v11592
    %v11625 = vunpack.c.l.b16 %v11593
    %v11626 = vrot.slane %v11611, 7
    %v11627 = vsel %vm6708, %v11626, %v11610
    %v11628 = vrot.slane %v11612, 6
    %v11629 = vsel %vm6711, %v11628, %v11627
    %v11630 = vrot.slane %v11613, 5
    %v11631 = vsel %vm6714, %v11630, %v11629
    %v11632 = vrot.slane %v11614, 4
    %v11633 = vsel %vm6717, %v11632, %v11631
    %v11634 = vrot.slane %v11615, 3
    %v11635 = vsel %vm6720, %v11634, %v11633
    %v11636 = vrot.slane %v11616, 2
    %v11637 = vsel %vm6723, %v11636, %v11635
    %v11638 = vrot.slane %v11617, 1
    %v11639 = vsel %vm6726, %v11638, %v11637
    %v11640 = vrot.slane %v11619, 7
    %v11641 = vsel %vm6708, %v11640, %v11618
    %v11642 = vrot.slane %v11620, 6
    %v11643 = vsel %vm6711, %v11642, %v11641
    %v11644 = vrot.slane %v11621, 5
    %v11645 = vsel %vm6714, %v11644, %v11643
    %v11646 = vrot.slane %v11622, 4
    %v11647 = vsel %vm6717, %v11646, %v11645
    %v11648 = vrot.slane %v11623, 3
    %v11649 = vsel %vm6720, %v11648, %v11647
    %v11650 = vrot.slane %v11624, 2
    %v11651 = vsel %vm6723, %v11650, %v11649
    %v11652 = vrot.slane %v11625, 1
    %v11653 = vsel %vm6726, %v11652, %v11651
    %v11654 = vpack.c.b16 %v11653, %v11639
    %11656 = vmatprep.subr.bf16.mxu0 0
    %11657 = vmatpush1.bf16.xpose.msra.mxu0 %v1264
    %11658 = vmatprep.subr.bf16.mxu0 0
    %11659 = vmatpush1.bf16.xpose.msra.mxu0 %v1260
    %11660 = vmatprep.subr.bf16.mxu0 0
    %11661 = vmatpush1.bf16.xpose.msra.mxu0 %v1256
    %11662 = vmatprep.subr.bf16.mxu0 0
    %11663 = vmatpush1.bf16.xpose.msra.mxu0 %v1252
    %11664 = vmatprep.subr.bf16.mxu0 0
    %11665 = vmatpush1.bf16.xpose.msra.mxu0 %v1248
    %11666 = vmatprep.subr.bf16.mxu0 0
    %11667 = vmatpush1.bf16.xpose.msra.mxu0 %v1244
    %11668 = vmatprep.subr.bf16.mxu0 0
    %11669 = vmatpush1.bf16.xpose.msra.mxu0 %v1240
    %11670 = vmatprep.subr.bf16.mxu0 0
    %11671 = vmatpush1.bf16.xpose.msra.mxu0 %v1236
    %11672 = vmatprep.subr.bf16.mxu0 0
    %11673 = vmatpush2.bf16.xpose.msra.mxu0 0
    %11674 = vmatprep.subr.bf16.mxu0 0
    %11675 = vmatpush2.bf16.xpose.msra.mxu0 0
    %11676 = vmatprep.subr.bf16.mxu0 0
    %11677 = vmatpush2.bf16.xpose.msra.mxu0 0
    %11678 = vmatprep.subr.bf16.mxu0 0
    %11679 = vmatpush2.bf16.xpose.msra.mxu0 0
    %11680 = vmatprep.subr.bf16.mxu0 0
    %11681 = vmatpush2.bf16.xpose.msra.mxu0 0
    %11682 = vmatprep.subr.bf16.mxu0 0
    %11683 = vmatpush2.bf16.xpose.msra.mxu0 0
    %11684 = vmatprep.subr.bf16.mxu0 0
    %11685 = vmatpush2.bf16.xpose.msra.mxu0 0
    %11686 = vmatprep.subr.bf16.mxu0 0
    %11687 = vmatpush2.bf16.xpose.msra.mxu0 0
    %11688 = vmatprep.mubr.bf16.mxu0 0
    %11689 = vmatmul.mubr.bf16.gmra.mxu0 %v11654
    %v11690 = vpop.f32.mrf.mxu0
    %v11691 = vadd.f32 0.0, %v11690
    %v11692 = vpop.f32.mrf.mxu0
    %v11693 = vpop.f32.mrf.mxu0
    %v11694 = vadd.f32 0.0, %v11693
    %v11695 = vpop.f32.mrf.mxu0
    %11696 = vdwg.mxu0
    %11697 = vst [vmem:[#allocation2] sm:$0xff] %v11691
    %11698 = vst [vmem:[#allocation2 + $0x8] sm:$0xff] %v11694
    %vm11699 = vcmp.lt.s32.totalorder %v200, 32
    %v11700 = vsel %vm11699, %v11691, -1e+30
    %v11701 = vsel %vm11699, %v11694, -1e+30
    %11702 = vmax.xlane.f32.xlu0 %v11700
    %v11703 = vpop.xlane.xlu0 %11702
    %11704 = vmax.xlane.f32.xlu0 %v11701
    %v11705 = vpop.xlane.xlu0 %11704
    %v11706 = vsub.f32 %v11700, %v11703
    %v11707 = vsub.f32 %v11701, %v11705
    %v11708 = vmul.f32 %v11706, 1.442695
    %v11709 = vpow.pop %v11708
    %v11710 = vmul.f32 %v11707, 1.442695
    %v11711 = vpow.pop %v11710
    %11712 = vadd.xlane.f32.xlu0 %v11709
    %v11713 = vpop.xlane.xlu0 %11712
    %11714 = vadd.xlane.f32.xlu0 %v11711
    %v11715 = vpop.xlane.xlu0 %11714
    %v11716 = vrcp.pop %v11713
    %v11717 = vmul.f32 %v11709, %v11716
    %v11718 = vrcp.pop %v11715
    %v11719 = vmul.f32 %v11711, %v11718
    %11720 = vst [vmem:[#allocation4] sm:$0xff] %v11717
    %11721 = vst [vmem:[#allocation4 + $0x8] sm:$0xff] %v11719
    // Predicated region
    $region14: #{tpu_custom_call.1} parent=1 // pred_check
      _
    $region15: #{tpu_custom_call.1} parent=1 // pred_check_branch
      %11723 = sbr.rel (0) target = $region17
    $region16: #{tpu_custom_call.1} parent=1 // pred_region
      %s11725 = ssub.s32 256, 256
      %11726 = vsyncadd [#allocation3], %s11725
      %s11727 = sshll.u32 [#allocation2], 4
      %s11728 = int_to_ptr.vmem [resolvable:$true] %s11727
      %11733 = dma.vmem_to_hbm [thread:$0]  %s11728, 256, %s3, [#allocation3], 128, 128, 8
    $region17: #{tpu_custom_call.1} parent=1 // pred_fallthru
      _
    // Predicated region
    $region18: #{tpu_custom_call.1} parent=1 // pred_check
      _
    $region19: #{tpu_custom_call.1} parent=1 // pred_check_branch
      %11735 = sbr.rel (0) target = $region21
    $region20: #{tpu_custom_call.1} parent=1 // pred_region
      %s11737 = ssub.s32 256, 256
      %11738 = vsyncadd [#allocation5], %s11737
      %s11739 = sshll.u32 [#allocation4], 4
      %s11740 = int_to_ptr.vmem [resolvable:$true] %s11739
      %11745 = dma.vmem_to_hbm [thread:$0]  %s11740, 256, %s4, [#allocation5], 128, 128, 8
    $region21: #{tpu_custom_call.1} parent=1 // pred_fallthru
      _
    // Predicated region
    $region22: #{tpu_custom_call.1} parent=1 // pred_check
      _
    $region23: #{tpu_custom_call.1} parent=1 // pred_check_branch
      %11747 = sbr.rel (0) target = $region25
    $region24: #{tpu_custom_call.1} parent=1 // pred_region
      %11748 = dma.done [#allocation3], 256
    $region25: #{tpu_custom_call.1} parent=1 // pred_fallthru
      _
    // Predicated region
    $region26: #{tpu_custom_call.1} parent=1 // pred_check
      _
    $region27: #{tpu_custom_call.1} parent=1 // pred_check_branch
      %11750 = sbr.rel (0) target = $region29
    $region28: #{tpu_custom_call.1} parent=1 // pred_region
      %11751 = dma.done [#allocation5], 256
    $region29: #{tpu_custom_call.1} parent=1 // pred_fallthru
      _
    %11752 = vsyncpa [#allocation3], 1
    %11753 = vsyncpa [#allocation5], 1

</llo_original>
